<compile_context>
chip_gen: v7x
topology: tpu7x:2x2x1
jax: 0.10.0
libtpu: 0.0.40
codegen_flags: <defaults>
</compile_context>

<pallas_src>
import jax
import jax.numpy as jnp
from jax import lax
from jax.experimental import pallas as pl
from jax.experimental.pallas import tpu as pltpu


def _largest_divisor(n, candidates):
    for c in candidates:
        if n % c == 0:
            return c
    return n  # fall back to the full extent (always a legal block shape)


# ------------------- fused embedding gather + input projection -------------------
def _make_embed_proj_kernel(rows):
    """Gather `rows` embedding rows per grid step (double-buffered DMA) and project
    them to gate space: gates_x = emb[ids] @ W_ih^T + (b_ih + b_hh)."""

    def kernel(ids_ref, table_ref, wih_ref, b_ref, out_ref, x_buf, sem):
        i = pl.program_id(0)
        nblk = pl.num_programs(0)

        def start_block(blk_idx, slot):
            base = blk_idx * rows
            for r in range(rows):
                idx = ids_ref[base + r]
                pltpu.make_async_copy(
                    table_ref.at[pl.ds(idx, 1)],
                    x_buf.at[slot, pl.ds(r, 1)],
                    sem.at[slot],
                ).start()

        def wait_block(slot):
            # All row copies of this slot signal the same semaphore; `rows` row-sized
            # waits guarantee every row has landed (valid for byte- or count-semantics).
            for r in range(rows):
                pltpu.make_async_copy(
                    table_ref.at[pl.ds(0, 1)],
                    x_buf.at[slot, pl.ds(r, 1)],
                    sem.at[slot],
                ).wait()

        # Prime slot 0 on the first block.
        @pl.when(i == 0)
        def _():
            start_block(0, 0)

        # Prefetch the next block's rows into the other slot (hides gather latency
        # behind the MXU work of the current block).
        @pl.when(i + 1 < nblk)
        def _():
            start_block(i + 1, (i + 1) % 2)

        slot = i % 2
        wait_block(slot)
        out_ref[...] = (
            jnp.dot(x_buf[slot], wih_ref[...], preferred_element_type=jnp.float32)
            + b_ref[...]
        ).astype(out_ref.dtype)

    return kernel


def embed_and_project(table, w_ih_t, bias, ids_flat):
    """ids_flat: (N,) int32 (N a multiple of 8).  Returns (N, 4H) = emb[ids] @ W_ih^T + b."""
    _, E = table.shape
    H4 = w_ih_t.shape[1]
    N = ids_flat.shape[0]
    rows = _largest_divisor(N, (128, 64, 32, 16, 8))  # 128 fills MXU M on all gens
    return pl.pallas_call(
        _make_embed_proj_kernel(rows),
        out_shape=jax.ShapeDtypeStruct((N, H4), jnp.float32),
        grid_spec=pltpu.PrefetchScalarGridSpec(
            num_scalar_prefetch=1,
            grid=(N // rows,),
            in_specs=[
                pl.BlockSpec(memory_space=pl.ANY),              # embedding table in HBM
                pl.BlockSpec((E, H4), lambda i, ids: (0, 0)),   # W_ih^T resident
                pl.BlockSpec((1, H4), lambda i, ids: (0, 0)),   # fused bias resident
            ],
            out_specs=pl.BlockSpec((rows, H4), lambda i, ids: (i, 0)),
            scratch_shapes=[pltpu.VMEM((2, rows, E), table.dtype),   # double buffer
                            pltpu.SemaphoreType.DMA((2,))],
        ),
        # The axis is embarrassingly parallel, but the cross-step prefetch (prime slot 0
        # at step 0, prefetch i+1 at step i) requires in-order execution -> "arbitrary".
        compiler_params=pltpu.CompilerParams(dimension_semantics=("arbitrary",)),
    )(ids_flat, table, w_ih_t, bias)


# --------------------------------- LSTM recurrence ---------------------------------
def _make_lstm_kernel(tc, hidden):
    def kernel(gx_ref, whh_hbm, h0_ref, c0_ref, out_ref, cN_ref,
               whh_vmem, h_sc, c_sc, sem):
        blk = pl.program_id(0)
        H = hidden

        @pl.when(blk == 0)
        def _():
            # Single-buffered resident W_hh^T: copied from HBM exactly once.
            cp = pltpu.make_async_copy(whh_hbm, whh_vmem, sem)
            cp.start()
            cp.wait()
            h_sc[...] = h0_ref[0]
            c_sc[...] = c0_ref[0]

        def step(t, carry):
            h, c = carry
            gates = gx_ref[t] + jnp.dot(h.astype(whh_vmem.dtype), whh_vmem[...],
                                        preferred_element_type=jnp.float32)  # (B, 4H)
            i_g = jax.nn.sigmoid(gates[:, 0:H])
            f_g = jax.nn.sigmoid(gates[:, H:2 * H])
            g_g = jnp.tanh(gates[:, 2 * H:3 * H])
            o_g = jax.nn.sigmoid(gates[:, 3 * H:4 * H])
            c = f_g * c + i_g * g_g
            h = o_g * jnp.tanh(c)
            out_ref[t] = h.astype(out_ref.dtype)
            return h, c

        # Time-blocked recurrence: tc steps per grid invocation, h/c stay as loop carries.
        h, c = lax.fori_loop(0, tc, step, (h_sc[...], c_sc[...]), unroll=2)
        h_sc[...] = h
        c_sc[...] = c

        # Only the final cell state is consumed -> store once at the last block.
        @pl.when(blk == pl.num_programs(0) - 1)
        def _():
            cN_ref[0] = c.astype(cN_ref.dtype)

    return kernel


def lstm_recurrence(gates_x, w_hh_t, h0, c0):
    T, B, H4 = gates_x.shape
    H = H4 // 4
    tc = _largest_divisor(T, (16, 8, 4, 2))   # time steps per grid invocation
    out_shapes = (jax.ShapeDtypeStruct((T, B, H), jnp.float32),   # all hidden states
                  jax.ShapeDtypeStruct((1, B, H), jnp.float32))   # final cell state
    return pl.pallas_call(
        _make_lstm_kernel(tc, H),
        out_shape=out_shapes,
        grid_spec=pltpu.PrefetchScalarGridSpec(
            num_scalar_prefetch=0,
            grid=(T // tc,),
            in_specs=[
                pl.BlockSpec((tc, B, H4), lambda b: (b, 0, 0)),   # gates_x block per step
                pl.BlockSpec(memory_space=pl.ANY),                # W_hh^T in HBM (copied once)
                pl.BlockSpec((1, B, H), lambda b: (0, 0, 0)),
                pl.BlockSpec((1, B, H), lambda b: (0, 0, 0)),
            ],
            out_specs=[
                pl.BlockSpec((tc, B, H), lambda b: (b, 0, 0)),
                pl.BlockSpec((1, B, H), lambda b: (0, 0, 0)),
            ],
            scratch_shapes=[
                pltpu.VMEM((H, H4), w_hh_t.dtype),   # single-buffered resident W_hh^T
                pltpu.VMEM((B, H), jnp.float32),     # h carry across grid blocks
                pltpu.VMEM((B, H), jnp.float32),     # c carry across grid blocks
                pltpu.SemaphoreType.DMA(()),
            ],
        ),
        compiler_params=pltpu.CompilerParams(dimension_semantics=("arbitrary",)),
    )(gates_x, w_hh_t, h0, c0)


# ----------------------------------- tiled linear -----------------------------------
def _linear_kernel(x_ref, w_ref, b_ref, o_ref):
    o_ref[...] = (jnp.dot(x_ref[...].astype(w_ref.dtype), w_ref[...],
                          preferred_element_type=jnp.float32)
                  + b_ref[...]).astype(o_ref.dtype)


def linear_forward(x, w_t, b2d):
    N, H = x.shape
    Vp = w_t.shape[1]                          # already padded to a multiple of 128
    N_pad = ((N + 7) // 8) * 8                 # keep row tiles sublane-legal
    if N_pad != N:
        x = jnp.pad(x, ((0, N_pad - N), (0, 0)))
    tn = _largest_divisor(N_pad, (512, 256, 128, 64, 32, 16, 8))   # big row tiles ->
    tv = _largest_divisor(Vp, (512, 256, 128))                     # fewer W_out re-streams
    out = pl.pallas_call(
        _linear_kernel,
        out_shape=jax.ShapeDtypeStruct((N_pad, Vp), jnp.float32),
        grid_spec=pltpu.PrefetchScalarGridSpec(
            num_scalar_prefetch=0,
            grid=(N_pad // tn, Vp // tv),
            in_specs=[pl.BlockSpec((tn, H), lambda i, j: (i, 0)),
                      pl.BlockSpec((H, tv), lambda i, j: (0, j)),   # W_out^T, pre-transposed
                      pl.BlockSpec((1, tv), lambda i, j: (0, j))],
            out_specs=pl.BlockSpec((tn, tv), lambda i, j: (i, j)),
        ),
        compiler_params=pltpu.CompilerParams(
            dimension_semantics=("parallel", "parallel")),
    )(x, w_t, b2d)
    return out[:N] if N_pad != N else out


# ------------------------------- wrapper / full forward -------------------------------
def prepare_params(pt, weights_dtype=jnp.bfloat16):
    """One-time weight prep: pre-transpose all weights (kernels never transpose), pad the
    vocab dim to a multiple of 128 (lane-dense tiles, no (H, V) fallback block), and cast
    weights to bf16 by default (MXU takes bf16 inputs with f32 accumulation on v5e/v6e/v7x,
    halving weight DMA/VMEM).  Pass weights_dtype=jnp.float32 for exact-match validation."""
    V = pt["w_out"].shape[0]
    Vp = ((V + 127) // 128) * 128
    w_out_t = jnp.transpose(pt["w_out"])                 # (H, V)
    b_out = pt["b_out"].reshape(1, -1)
    if Vp != V:
        w_out_t = jnp.pad(w_out_t, ((0, 0), (0, Vp - V)))
        b_out = jnp.pad(b_out, ((0, 0), (0, Vp - V)))
    return {
        "vocab_size": V,
        "embed": pt["embed"].astype(weights_dtype),
        "w_ih_t": jnp.transpose(pt["w_ih"]).astype(weights_dtype),   # (E, 4H)
        "w_hh_t": jnp.transpose(pt["w_hh"]).astype(weights_dtype),   # (H, 4H)
        "b": (pt["b_ih"] + pt["b_hh"]).reshape(1, -1).astype(jnp.float32),
        "w_out_t": w_out_t.astype(weights_dtype),                    # (H, Vp)
        "b_out": b_out.astype(jnp.float32),                          # (1, Vp)
    }


def lstm_model_forward(params, x_ids, h):
    h0, c0 = h                                   # (1, B, H) each
    B, T = x_ids.shape
    H = params["w_hh_t"].shape[0]
    H4 = params["w_hh_t"].shape[1]
    V = params["vocab_size"]

    # Pad the batch to a full sublane tile so per-step vregs / MXU rows are filled.
    B_pad = ((B + 7) // 8) * 8
    ids_tm = jnp.transpose(x_ids.astype(jnp.int32), (1, 0))        # (T, B) time-major ids
    if B_pad != B:
        ids_tm = jnp.pad(ids_tm, ((0, 0), (0, B_pad - B)))
        h0 = jnp.pad(h0, ((0, 0), (0, B_pad - B), (0, 0)))
        c0 = jnp.pad(c0, ((0, 0), (0, B_pad - B), (0, 0)))
    ids_flat = ids_tm.reshape(-1)                                   # (T*B_pad,), mult of 8

    # Embedding gather fused with the recurrence-free input projection; output lands in
    # time-major order, so no (B,T,E)->(T,B,E) transpose between kernels.
    gates_x = embed_and_project(params["embed"], params["w_ih_t"], params["b"], ids_flat)
    gates_x = gates_x.reshape(T, B_pad, H4)

    out_tbh, cN = lstm_recurrence(gates_x, params["w_hh_t"], h0, c0)

    hN = out_tbh[T - 1:T, :B, :]                                    # (1, B, H): last hidden
    cN = cN[:, :B, :]
    # batch_first flatten to match out.reshape(B*T, H).  Kept as a wrapper relayout:
    # feeding the time-major tensor straight into the vocab projection would need either
    # sub-8 batch blocks (illegal (8,128) tiling) or logits for the padded batch rows plus
    # an extra (B*T, V)-sized slice — both cost more HBM traffic than this (B*T, H) move.
    out_flat = jnp.transpose(out_tbh[:, :B, :], (1, 0, 2)).reshape(B * T, H)
    logits = linear_forward(out_flat, params["w_out_t"], params["b_out"])   # (B*T, Vp)
    logits = logits[:, :V]
    return logits, (hN, cN)


# ------------------------------ pure-JAX reference ------------------------------
def reference_forward(pt, x_ids, h):
    h0, c0 = h
    emb = pt["embed"][x_ids]                     # (B, T, E)
    H = pt["w_hh"].shape[1]
    b = pt["b_ih"] + pt["b_hh"]

    def step(carry, x_t):
        hh, cc = carry
        gates = x_t @ pt["w_ih"].T + hh @ pt["w_hh"].T + b
        i = jax.nn.sigmoid(gates[:, :H])
        f = jax.nn.sigmoid(gates[:, H:2 * H])
        g = jnp.tanh(gates[:, 2 * H:3 * H])
        o = jax.nn.sigmoid(gates[:, 3 * H:])
        cc = f * cc + i * g
        hh = o * jnp.tanh(cc)
        return (hh, cc), hh

    (hN, cN), outs = jax.lax.scan(step, (h0[0], c0[0]), jnp.transpose(emb, (1, 0, 2)))
    out = jnp.transpose(outs, (1, 0, 2)).reshape(-1, H)
    logits = out @ pt["w_out"].T + pt["b_out"]
    return logits, (hN[None], cN[None])


# ------------------------------------- main -------------------------------------
if __name__ == "__main__":
    # Small, TPU-friendly shapes consistent with the module structure
    # (real model: embed=128, hidden=1024, vocab=len(corpus.dictionary), batch=50).
    V, E, H = 512, 128, 128
    B, T = 2, 8

    key = jax.random.PRNGKey(0)
    keys = jax.random.split(key, 10)
    kk = 1.0 / jnp.sqrt(H)

    params_torch = {
        "embed": jax.random.normal(keys[0], (V, E), jnp.float32),
        "w_ih": jax.random.uniform(keys[1], (4 * H, E), jnp.float32, -kk, kk),
        "w_hh": jax.random.uniform(keys[2], (4 * H, H), jnp.float32, -kk, kk),
        "b_ih": jax.random.uniform(keys[3], (4 * H,), jnp.float32, -kk, kk),
        "b_hh": jax.random.uniform(keys[4], (4 * H,), jnp.float32, -kk, kk),
        "w_out": jax.random.uniform(keys[5], (V, H), jnp.float32, -kk, kk),
        "b_out": jax.random.uniform(keys[6], (V,), jnp.float32, -kk, kk),
    }

    x_ids = jax.random.randint(keys[7], (B, T), 0, V, dtype=jnp.int32)
    h0 = jax.random.normal(keys[8], (1, B, H), jnp.float32)
    c0 = jax.random.normal(keys[9], (1, B, H), jnp.float32)

    # f32 weights so the reference comparison is exact.
    params_f32 = prepare_params(params_torch, weights_dtype=jnp.float32)
    logits, (hN, cN) = lstm_model_forward(params_f32, x_ids, (h0, c0))
    jax.block_until_ready((logits, hN, cN))

    ref_logits, (ref_h, ref_c) = reference_forward(params_torch, x_ids, (h0, c0))
    assert logits.shape == (B * T, V)
    assert hN.shape == (1, B, H) and cN.shape == (1, B, H)
    assert jnp.allclose(logits, ref_logits, atol=1e-4, rtol=1e-4)
    assert jnp.allclose(hN, ref_h, atol=1e-4, rtol=1e-4)
    assert jnp.allclose(cN, ref_c, atol=1e-4, rtol=1e-4)

    # Default (real-model) bf16-weight path: sanity-run only (numerics intentionally looser).
    params_bf16 = prepare_params(params_torch)
    logits_bf, (hN_bf, cN_bf) = lstm_model_forward(params_bf16, x_ids, (h0, c0))
    jax.block_until_ready((logits_bf, hN_bf, cN_bf))
    assert logits_bf.shape == (B * T, V)
    assert bool(jnp.all(jnp.isfinite(logits_bf)))

    print("KERNEL_OK")
</pallas_src>

<mosaic_0001>
module attributes {stable_mosaic.version = 11 : i64} {
  func.func @kernel(%arg0: i32, %arg1: memref<64xi32, #tpu.memory_space<smem>>, %arg2: memref<512x128xf32, #tpu.memory_space<any>>, %arg3: memref<128x512xf32, #tpu.memory_space<vmem>>, %arg4: memref<1x512xf32, #tpu.memory_space<vmem>>, %arg5: memref<64x512xf32, #tpu.memory_space<vmem>>, %arg6: memref<2x64x128xf32, #tpu.memory_space<vmem>>, %arg7: memref<2x!tpu.dma_semaphore, #tpu.memory_space<semaphore_mem>>) attributes {dimension_semantics = [#tpu.dimension_semantics<arbitrary>], iteration_bounds = array<i64: 1>, scalar_prefetch = 1 : i64, scratch_operands = 2 : i64, tpu.core_type = #tpu.core_type<tc>, window_params = [{}, {pipeline_mode = #tpu.pipeline_mode<synchronous>, transform_indices = @transform_1, window_bounds = array<i64: 128, 512>}, {pipeline_mode = #tpu.pipeline_mode<synchronous>, transform_indices = @transform_2, window_bounds = array<i64: 1, 512>}, {transform_indices = @transform_3, window_bounds = array<i64: 64, 512>}]} {
    %c0_i32 = arith.constant 0 : i32
    %0 = arith.cmpi eq, %arg0, %c0_i32 : i32
    %1 = arith.extui %0 : i1 to i32
    %c0_i32_0 = arith.constant 0 : i32
    %2 = arith.cmpi ne, %1, %c0_i32_0 : i32
    scf.if %2 {
      %c0_210 = arith.constant 0 : index
      %346 = memref.load %arg1[%c0_210] : memref<64xi32, #tpu.memory_space<smem>>
      %c0_i32_211 = arith.constant 0 : i32
      %c0_i32_212 = arith.constant 0 : i32
      %c0_i32_213 = arith.constant 0 : i32
      %347 = tpu.memref_slice %arg2[%346, %c0_i32_213] : memref<512x128xf32, #tpu.memory_space<any>> -> memref<1x128xf32, #tpu.memory_space<any>>
      %c0_i32_214 = arith.constant 0 : i32
      %c0_i32_215 = arith.constant 0 : i32
      %348 = tpu.memref_slice %arg6[%c0_i32_211, %c0_i32_214, %c0_i32_215] : memref<2x64x128xf32, #tpu.memory_space<vmem>> -> memref<1x1x128xf32, #tpu.memory_space<vmem>>
      %349 = tpu.memref_squeeze %348 : memref<1x1x128xf32, #tpu.memory_space<vmem>> -> memref<1x128xf32, #tpu.memory_space<vmem>>
      %350 = tpu.memref_slice %arg7[%c0_i32_212] : memref<2x!tpu.dma_semaphore, #tpu.memory_space<semaphore_mem>> -> memref<1x!tpu.dma_semaphore, #tpu.memory_space<semaphore_mem>>
      %351 = tpu.memref_squeeze %350 : memref<1x!tpu.dma_semaphore, #tpu.memory_space<semaphore_mem>> -> memref<!tpu.dma_semaphore, #tpu.memory_space<semaphore_mem>>
      tpu.enqueue_dma source(%347 : memref<1x128xf32, #tpu.memory_space<any>>) target(%349 : memref<1x128xf32, #tpu.memory_space<vmem>>) target_semaphore(%351 : memref<!tpu.dma_semaphore, #tpu.memory_space<semaphore_mem>>)
      %c1 = arith.constant 1 : index
      %352 = memref.load %arg1[%c1] : memref<64xi32, #tpu.memory_space<smem>>
      %c0_i32_216 = arith.constant 0 : i32
      %c0_i32_217 = arith.constant 0 : i32
      %c0_i32_218 = arith.constant 0 : i32
      %353 = tpu.memref_slice %arg2[%352, %c0_i32_218] : memref<512x128xf32, #tpu.memory_space<any>> -> memref<1x128xf32, #tpu.memory_space<any>>
      %c1_i32_219 = arith.constant 1 : i32
      %c0_i32_220 = arith.constant 0 : i32
      %354 = tpu.memref_slice %arg6[%c0_i32_216, %c1_i32_219, %c0_i32_220] : memref<2x64x128xf32, #tpu.memory_space<vmem>> -> memref<1x1x128xf32, #tpu.memory_space<vmem>>
      %355 = tpu.memref_squeeze %354 : memref<1x1x128xf32, #tpu.memory_space<vmem>> -> memref<1x128xf32, #tpu.memory_space<vmem>>
      %356 = tpu.memref_slice %arg7[%c0_i32_217] : memref<2x!tpu.dma_semaphore, #tpu.memory_space<semaphore_mem>> -> memref<1x!tpu.dma_semaphore, #tpu.memory_space<semaphore_mem>>
      %357 = tpu.memref_squeeze %356 : memref<1x!tpu.dma_semaphore, #tpu.memory_space<semaphore_mem>> -> memref<!tpu.dma_semaphore, #tpu.memory_space<semaphore_mem>>
      tpu.enqueue_dma source(%353 : memref<1x128xf32, #tpu.memory_space<any>>) target(%355 : memref<1x128xf32, #tpu.memory_space<vmem>>) target_semaphore(%357 : memref<!tpu.dma_semaphore, #tpu.memory_space<semaphore_mem>>)
      %c2 = arith.constant 2 : index
      %358 = memref.load %arg1[%c2] : memref<64xi32, #tpu.memory_space<smem>>
      %c0_i32_221 = arith.constant 0 : i32
      %c0_i32_222 = arith.constant 0 : i32
      %c0_i32_223 = arith.constant 0 : i32
      %359 = tpu.memref_slice %arg2[%358, %c0_i32_223] : memref<512x128xf32, #tpu.memory_space<any>> -> memref<1x128xf32, #tpu.memory_space<any>>
      %c2_i32_224 = arith.constant 2 : i32
      %c0_i32_225 = arith.constant 0 : i32
      %360 = tpu.memref_slice %arg6[%c0_i32_221, %c2_i32_224, %c0_i32_225] : memref<2x64x128xf32, #tpu.memory_space<vmem>> -> memref<1x1x128xf32, #tpu.memory_space<vmem>>
      %361 = tpu.memref_squeeze %360 : memref<1x1x128xf32, #tpu.memory_space<vmem>> -> memref<1x128xf32, #tpu.memory_space<vmem>>
      %362 = tpu.memref_slice %arg7[%c0_i32_222] : memref<2x!tpu.dma_semaphore, #tpu.memory_space<semaphore_mem>> -> memref<1x!tpu.dma_semaphore, #tpu.memory_space<semaphore_mem>>
      %363 = tpu.memref_squeeze %362 : memref<1x!tpu.dma_semaphore, #tpu.memory_space<semaphore_mem>> -> memref<!tpu.dma_semaphore, #tpu.memory_space<semaphore_mem>>
      tpu.enqueue_dma source(%359 : memref<1x128xf32, #tpu.memory_space<any>>) target(%361 : memref<1x128xf32, #tpu.memory_space<vmem>>) target_semaphore(%363 : memref<!tpu.dma_semaphore, #tpu.memory_space<semaphore_mem>>)
      %c3 = arith.constant 3 : index
      %364 = memref.load %arg1[%c3] : memref<64xi32, #tpu.memory_space<smem>>
      %c0_i32_226 = arith.constant 0 : i32
      %c0_i32_227 = arith.constant 0 : i32
      %c0_i32_228 = arith.constant 0 : i32
      %365 = tpu.memref_slice %arg2[%364, %c0_i32_228] : memref<512x128xf32, #tpu.memory_space<any>> -> memref<1x128xf32, #tpu.memory_space<any>>
      %c3_i32_229 = arith.constant 3 : i32
      %c0_i32_230 = arith.constant 0 : i32
      %366 = tpu.memref_slice %arg6[%c0_i32_226, %c3_i32_229, %c0_i32_230] : memref<2x64x128xf32, #tpu.memory_space<vmem>> -> memref<1x1x128xf32, #tpu.memory_space<vmem>>
      %367 = tpu.memref_squeeze %366 : memref<1x1x128xf32, #tpu.memory_space<vmem>> -> memref<1x128xf32, #tpu.memory_space<vmem>>
      %368 = tpu.memref_slice %arg7[%c0_i32_227] : memref<2x!tpu.dma_semaphore, #tpu.memory_space<semaphore_mem>> -> memref<1x!tpu.dma_semaphore, #tpu.memory_space<semaphore_mem>>
      %369 = tpu.memref_squeeze %368 : memref<1x!tpu.dma_semaphore, #tpu.memory_space<semaphore_mem>> -> memref<!tpu.dma_semaphore, #tpu.memory_space<semaphore_mem>>
      tpu.enqueue_dma source(%365 : memref<1x128xf32, #tpu.memory_space<any>>) target(%367 : memref<1x128xf32, #tpu.memory_space<vmem>>) target_semaphore(%369 : memref<!tpu.dma_semaphore, #tpu.memory_space<semaphore_mem>>)
      %c4 = arith.constant 4 : index
      %370 = memref.load %arg1[%c4] : memref<64xi32, #tpu.memory_space<smem>>
      %c0_i32_231 = arith.constant 0 : i32
      %c0_i32_232 = arith.constant 0 : i32
      %c0_i32_233 = arith.constant 0 : i32
      %371 = tpu.memref_slice %arg2[%370, %c0_i32_233] : memref<512x128xf32, #tpu.memory_space<any>> -> memref<1x128xf32, #tpu.memory_space<any>>
      %c4_i32_234 = arith.constant 4 : i32
      %c0_i32_235 = arith.constant 0 : i32
      %372 = tpu.memref_slice %arg6[%c0_i32_231, %c4_i32_234, %c0_i32_235] : memref<2x64x128xf32, #tpu.memory_space<vmem>> -> memref<1x1x128xf32, #tpu.memory_space<vmem>>
      %373 = tpu.memref_squeeze %372 : memref<1x1x128xf32, #tpu.memory_space<vmem>> -> memref<1x128xf32, #tpu.memory_space<vmem>>
      %374 = tpu.memref_slice %arg7[%c0_i32_232] : memref<2x!tpu.dma_semaphore, #tpu.memory_space<semaphore_mem>> -> memref<1x!tpu.dma_semaphore, #tpu.memory_space<semaphore_mem>>
      %375 = tpu.memref_squeeze %374 : memref<1x!tpu.dma_semaphore, #tpu.memory_space<semaphore_mem>> -> memref<!tpu.dma_semaphore, #tpu.memory_space<semaphore_mem>>
      tpu.enqueue_dma source(%371 : memref<1x128xf32, #tpu.memory_space<any>>) target(%373 : memref<1x128xf32, #tpu.memory_space<vmem>>) target_semaphore(%375 : memref<!tpu.dma_semaphore, #tpu.memory_space<semaphore_mem>>)
      %c5 = arith.constant 5 : index
      %376 = memref.load %arg1[%c5] : memref<64xi32, #tpu.memory_space<smem>>
      %c0_i32_236 = arith.constant 0 : i32
      %c0_i32_237 = arith.constant 0 : i32
      %c0_i32_238 = arith.constant 0 : i32
      %377 = tpu.memref_slice %arg2[%376, %c0_i32_238] : memref<512x128xf32, #tpu.memory_space<any>> -> memref<1x128xf32, #tpu.memory_space<any>>
      %c5_i32_239 = arith.constant 5 : i32
      %c0_i32_240 = arith.constant 0 : i32
      %378 = tpu.memref_slice %arg6[%c0_i32_236, %c5_i32_239, %c0_i32_240] : memref<2x64x128xf32, #tpu.memory_space<vmem>> -> memref<1x1x128xf32, #tpu.memory_space<vmem>>
      %379 = tpu.memref_squeeze %378 : memref<1x1x128xf32, #tpu.memory_space<vmem>> -> memref<1x128xf32, #tpu.memory_space<vmem>>
      %380 = tpu.memref_slice %arg7[%c0_i32_237] : memref<2x!tpu.dma_semaphore, #tpu.memory_space<semaphore_mem>> -> memref<1x!tpu.dma_semaphore, #tpu.memory_space<semaphore_mem>>
      %381 = tpu.memref_squeeze %380 : memref<1x!tpu.dma_semaphore, #tpu.memory_space<semaphore_mem>> -> memref<!tpu.dma_semaphore, #tpu.memory_space<semaphore_mem>>
      tpu.enqueue_dma source(%377 : memref<1x128xf32, #tpu.memory_space<any>>) target(%379 : memref<1x128xf32, #tpu.memory_space<vmem>>) target_semaphore(%381 : memref<!tpu.dma_semaphore, #tpu.memory_space<semaphore_mem>>)
      %c6 = arith.constant 6 : index
      %382 = memref.load %arg1[%c6] : memref<64xi32, #tpu.memory_space<smem>>
      %c0_i32_241 = arith.constant 0 : i32
      %c0_i32_242 = arith.constant 0 : i32
      %c0_i32_243 = arith.constant 0 : i32
      %383 = tpu.memref_slice %arg2[%382, %c0_i32_243] : memref<512x128xf32, #tpu.memory_space<any>> -> memref<1x128xf32, #tpu.memory_space<any>>
      %c6_i32_244 = arith.constant 6 : i32
      %c0_i32_245 = arith.constant 0 : i32
      %384 = tpu.memref_slice %arg6[%c0_i32_241, %c6_i32_244, %c0_i32_245] : memref<2x64x128xf32, #tpu.memory_space<vmem>> -> memref<1x1x128xf32, #tpu.memory_space<vmem>>
      %385 = tpu.memref_squeeze %384 : memref<1x1x128xf32, #tpu.memory_space<vmem>> -> memref<1x128xf32, #tpu.memory_space<vmem>>
      %386 = tpu.memref_slice %arg7[%c0_i32_242] : memref<2x!tpu.dma_semaphore, #tpu.memory_space<semaphore_mem>> -> memref<1x!tpu.dma_semaphore, #tpu.memory_space<semaphore_mem>>
      %387 = tpu.memref_squeeze %386 : memref<1x!tpu.dma_semaphore, #tpu.memory_space<semaphore_mem>> -> memref<!tpu.dma_semaphore, #tpu.memory_space<semaphore_mem>>
      tpu.enqueue_dma source(%383 : memref<1x128xf32, #tpu.memory_space<any>>) target(%385 : memref<1x128xf32, #tpu.memory_space<vmem>>) target_semaphore(%387 : memref<!tpu.dma_semaphore, #tpu.memory_space<semaphore_mem>>)
      %c7 = arith.constant 7 : index
      %388 = memref.load %arg1[%c7] : memref<64xi32, #tpu.memory_space<smem>>
      %c0_i32_246 = arith.constant 0 : i32
      %c0_i32_247 = arith.constant 0 : i32
      %c0_i32_248 = arith.constant 0 : i32
      %389 = tpu.memref_slice %arg2[%388, %c0_i32_248] : memref<512x128xf32, #tpu.memory_space<any>> -> memref<1x128xf32, #tpu.memory_space<any>>
      %c7_i32_249 = arith.constant 7 : i32
      %c0_i32_250 = arith.constant 0 : i32
      %390 = tpu.memref_slice %arg6[%c0_i32_246, %c7_i32_249, %c0_i32_250] : memref<2x64x128xf32, #tpu.memory_space<vmem>> -> memref<1x1x128xf32, #tpu.memory_space<vmem>>
      %391 = tpu.memref_squeeze %390 : memref<1x1x128xf32, #tpu.memory_space<vmem>> -> memref<1x128xf32, #tpu.memory_space<vmem>>
      %392 = tpu.memref_slice %arg7[%c0_i32_247] : memref<2x!tpu.dma_semaphore, #tpu.memory_space<semaphore_mem>> -> memref<1x!tpu.dma_semaphore, #tpu.memory_space<semaphore_mem>>
      %393 = tpu.memref_squeeze %392 : memref<1x!tpu.dma_semaphore, #tpu.memory_space<semaphore_mem>> -> memref<!tpu.dma_semaphore, #tpu.memory_space<semaphore_mem>>
      tpu.enqueue_dma source(%389 : memref<1x128xf32, #tpu.memory_space<any>>) target(%391 : memref<1x128xf32, #tpu.memory_space<vmem>>) target_semaphore(%393 : memref<!tpu.dma_semaphore, #tpu.memory_space<semaphore_mem>>)
      %c8 = arith.constant 8 : index
      %394 = memref.load %arg1[%c8] : memref<64xi32, #tpu.memory_space<smem>>
      %c0_i32_251 = arith.constant 0 : i32
      %c0_i32_252 = arith.constant 0 : i32
      %c0_i32_253 = arith.constant 0 : i32
      %395 = tpu.memref_slice %arg2[%394, %c0_i32_253] : memref<512x128xf32, #tpu.memory_space<any>> -> memref<1x128xf32, #tpu.memory_space<any>>
      %c8_i32_254 = arith.constant 8 : i32
      %c0_i32_255 = arith.constant 0 : i32
      %396 = tpu.memref_slice %arg6[%c0_i32_251, %c8_i32_254, %c0_i32_255] : memref<2x64x128xf32, #tpu.memory_space<vmem>> -> memref<1x1x128xf32, #tpu.memory_space<vmem>>
      %397 = tpu.memref_squeeze %396 : memref<1x1x128xf32, #tpu.memory_space<vmem>> -> memref<1x128xf32, #tpu.memory_space<vmem>>
      %398 = tpu.memref_slice %arg7[%c0_i32_252] : memref<2x!tpu.dma_semaphore, #tpu.memory_space<semaphore_mem>> -> memref<1x!tpu.dma_semaphore, #tpu.memory_space<semaphore_mem>>
      %399 = tpu.memref_squeeze %398 : memref<1x!tpu.dma_semaphore, #tpu.memory_space<semaphore_mem>> -> memref<!tpu.dma_semaphore, #tpu.memory_space<semaphore_mem>>
      tpu.enqueue_dma source(%395 : memref<1x128xf32, #tpu.memory_space<any>>) target(%397 : memref<1x128xf32, #tpu.memory_space<vmem>>) target_semaphore(%399 : memref<!tpu.dma_semaphore, #tpu.memory_space<semaphore_mem>>)
      %c9 = arith.constant 9 : index
      %400 = memref.load %arg1[%c9] : memref<64xi32, #tpu.memory_space<smem>>
      %c0_i32_256 = arith.constant 0 : i32
      %c0_i32_257 = arith.constant 0 : i32
      %c0_i32_258 = arith.constant 0 : i32
      %401 = tpu.memref_slice %arg2[%400, %c0_i32_258] : memref<512x128xf32, #tpu.memory_space<any>> -> memref<1x128xf32, #tpu.memory_space<any>>
      %c9_i32_259 = arith.constant 9 : i32
      %c0_i32_260 = arith.constant 0 : i32
      %402 = tpu.memref_slice %arg6[%c0_i32_256, %c9_i32_259, %c0_i32_260] : memref<2x64x128xf32, #tpu.memory_space<vmem>> -> memref<1x1x128xf32, #tpu.memory_space<vmem>>
      %403 = tpu.memref_squeeze %402 : memref<1x1x128xf32, #tpu.memory_space<vmem>> -> memref<1x128xf32, #tpu.memory_space<vmem>>
      %404 = tpu.memref_slice %arg7[%c0_i32_257] : memref<2x!tpu.dma_semaphore, #tpu.memory_space<semaphore_mem>> -> memref<1x!tpu.dma_semaphore, #tpu.memory_space<semaphore_mem>>
      %405 = tpu.memref_squeeze %404 : memref<1x!tpu.dma_semaphore, #tpu.memory_space<semaphore_mem>> -> memref<!tpu.dma_semaphore, #tpu.memory_space<semaphore_mem>>
      tpu.enqueue_dma source(%401 : memref<1x128xf32, #tpu.memory_space<any>>) target(%403 : memref<1x128xf32, #tpu.memory_space<vmem>>) target_semaphore(%405 : memref<!tpu.dma_semaphore, #tpu.memory_space<semaphore_mem>>)
      %c10 = arith.constant 10 : index
      %406 = memref.load %arg1[%c10] : memref<64xi32, #tpu.memory_space<smem>>
      %c0_i32_261 = arith.constant 0 : i32
      %c0_i32_262 = arith.constant 0 : i32
      %c0_i32_263 = arith.constant 0 : i32
      %407 = tpu.memref_slice %arg2[%406, %c0_i32_263] : memref<512x128xf32, #tpu.memory_space<any>> -> memref<1x128xf32, #tpu.memory_space<any>>
      %c10_i32_264 = arith.constant 10 : i32
      %c0_i32_265 = arith.constant 0 : i32
      %408 = tpu.memref_slice %arg6[%c0_i32_261, %c10_i32_264, %c0_i32_265] : memref<2x64x128xf32, #tpu.memory_space<vmem>> -> memref<1x1x128xf32, #tpu.memory_space<vmem>>
      %409 = tpu.memref_squeeze %408 : memref<1x1x128xf32, #tpu.memory_space<vmem>> -> memref<1x128xf32, #tpu.memory_space<vmem>>
      %410 = tpu.memref_slice %arg7[%c0_i32_262] : memref<2x!tpu.dma_semaphore, #tpu.memory_space<semaphore_mem>> -> memref<1x!tpu.dma_semaphore, #tpu.memory_space<semaphore_mem>>
      %411 = tpu.memref_squeeze %410 : memref<1x!tpu.dma_semaphore, #tpu.memory_space<semaphore_mem>> -> memref<!tpu.dma_semaphore, #tpu.memory_space<semaphore_mem>>
      tpu.enqueue_dma source(%407 : memref<1x128xf32, #tpu.memory_space<any>>) target(%409 : memref<1x128xf32, #tpu.memory_space<vmem>>) target_semaphore(%411 : memref<!tpu.dma_semaphore, #tpu.memory_space<semaphore_mem>>)
      %c11 = arith.constant 11 : index
      %412 = memref.load %arg1[%c11] : memref<64xi32, #tpu.memory_space<smem>>
      %c0_i32_266 = arith.constant 0 : i32
      %c0_i32_267 = arith.constant 0 : i32
      %c0_i32_268 = arith.constant 0 : i32
      %413 = tpu.memref_slice %arg2[%412, %c0_i32_268] : memref<512x128xf32, #tpu.memory_space<any>> -> memref<1x128xf32, #tpu.memory_space<any>>
      %c11_i32_269 = arith.constant 11 : i32
      %c0_i32_270 = arith.constant 0 : i32
      %414 = tpu.memref_slice %arg6[%c0_i32_266, %c11_i32_269, %c0_i32_270] : memref<2x64x128xf32, #tpu.memory_space<vmem>> -> memref<1x1x128xf32, #tpu.memory_space<vmem>>
      %415 = tpu.memref_squeeze %414 : memref<1x1x128xf32, #tpu.memory_space<vmem>> -> memref<1x128xf32, #tpu.memory_space<vmem>>
      %416 = tpu.memref_slice %arg7[%c0_i32_267] : memref<2x!tpu.dma_semaphore, #tpu.memory_space<semaphore_mem>> -> memref<1x!tpu.dma_semaphore, #tpu.memory_space<semaphore_mem>>
      %417 = tpu.memref_squeeze %416 : memref<1x!tpu.dma_semaphore, #tpu.memory_space<semaphore_mem>> -> memref<!tpu.dma_semaphore, #tpu.memory_space<semaphore_mem>>
      tpu.enqueue_dma source(%413 : memref<1x128xf32, #tpu.memory_space<any>>) target(%415 : memref<1x128xf32, #tpu.memory_space<vmem>>) target_semaphore(%417 : memref<!tpu.dma_semaphore, #tpu.memory_space<semaphore_mem>>)
      %c12 = arith.constant 12 : index
      %418 = memref.load %arg1[%c12] : memref<64xi32, #tpu.memory_space<smem>>
      %c0_i32_271 = arith.constant 0 : i32
      %c0_i32_272 = arith.constant 0 : i32
      %c0_i32_273 = arith.constant 0 : i32
      %419 = tpu.memref_slice %arg2[%418, %c0_i32_273] : memref<512x128xf32, #tpu.memory_space<any>> -> memref<1x128xf32, #tpu.memory_space<any>>
      %c12_i32_274 = arith.constant 12 : i32
      %c0_i32_275 = arith.constant 0 : i32
      %420 = tpu.memref_slice %arg6[%c0_i32_271, %c12_i32_274, %c0_i32_275] : memref<2x64x128xf32, #tpu.memory_space<vmem>> -> memref<1x1x128xf32, #tpu.memory_space<vmem>>
      %421 = tpu.memref_squeeze %420 : memref<1x1x128xf32, #tpu.memory_space<vmem>> -> memref<1x128xf32, #tpu.memory_space<vmem>>
      %422 = tpu.memref_slice %arg7[%c0_i32_272] : memref<2x!tpu.dma_semaphore, #tpu.memory_space<semaphore_mem>> -> memref<1x!tpu.dma_semaphore, #tpu.memory_space<semaphore_mem>>
      %423 = tpu.memref_squeeze %422 : memref<1x!tpu.dma_semaphore, #tpu.memory_space<semaphore_mem>> -> memref<!tpu.dma_semaphore, #tpu.memory_space<semaphore_mem>>
      tpu.enqueue_dma source(%419 : memref<1x128xf32, #tpu.memory_space<any>>) target(%421 : memref<1x128xf32, #tpu.memory_space<vmem>>) target_semaphore(%423 : memref<!tpu.dma_semaphore, #tpu.memory_space<semaphore_mem>>)
      %c13 = arith.constant 13 : index
      %424 = memref.load %arg1[%c13] : memref<64xi32, #tpu.memory_space<smem>>
      %c0_i32_276 = arith.constant 0 : i32
      %c0_i32_277 = arith.constant 0 : i32
      %c0_i32_278 = arith.constant 0 : i32
      %425 = tpu.memref_slice %arg2[%424, %c0_i32_278] : memref<512x128xf32, #tpu.memory_space<any>> -> memref<1x128xf32, #tpu.memory_space<any>>
      %c13_i32_279 = arith.constant 13 : i32
      %c0_i32_280 = arith.constant 0 : i32
      %426 = tpu.memref_slice %arg6[%c0_i32_276, %c13_i32_279, %c0_i32_280] : memref<2x64x128xf32, #tpu.memory_space<vmem>> -> memref<1x1x128xf32, #tpu.memory_space<vmem>>
      %427 = tpu.memref_squeeze %426 : memref<1x1x128xf32, #tpu.memory_space<vmem>> -> memref<1x128xf32, #tpu.memory_space<vmem>>
      %428 = tpu.memref_slice %arg7[%c0_i32_277] : memref<2x!tpu.dma_semaphore, #tpu.memory_space<semaphore_mem>> -> memref<1x!tpu.dma_semaphore, #tpu.memory_space<semaphore_mem>>
      %429 = tpu.memref_squeeze %428 : memref<1x!tpu.dma_semaphore, #tpu.memory_space<semaphore_mem>> -> memref<!tpu.dma_semaphore, #tpu.memory_space<semaphore_mem>>
      tpu.enqueue_dma source(%425 : memref<1x128xf32, #tpu.memory_space<any>>) target(%427 : memref<1x128xf32, #tpu.memory_space<vmem>>) target_semaphore(%429 : memref<!tpu.dma_semaphore, #tpu.memory_space<semaphore_mem>>)
      %c14 = arith.constant 14 : index
      %430 = memref.load %arg1[%c14] : memref<64xi32, #tpu.memory_space<smem>>
      %c0_i32_281 = arith.constant 0 : i32
      %c0_i32_282 = arith.constant 0 : i32
      %c0_i32_283 = arith.constant 0 : i32
      %431 = tpu.memref_slice %arg2[%430, %c0_i32_283] : memref<512x128xf32, #tpu.memory_space<any>> -> memref<1x128xf32, #tpu.memory_space<any>>
      %c14_i32_284 = arith.constant 14 : i32
      %c0_i32_285 = arith.constant 0 : i32
      %432 = tpu.memref_slice %arg6[%c0_i32_281, %c14_i32_284, %c0_i32_285] : memref<2x64x128xf32, #tpu.memory_space<vmem>> -> memref<1x1x128xf32, #tpu.memory_space<vmem>>
      %433 = tpu.memref_squeeze %432 : memref<1x1x128xf32, #tpu.memory_space<vmem>> -> memref<1x128xf32, #tpu.memory_space<vmem>>
      %434 = tpu.memref_slice %arg7[%c0_i32_282] : memref<2x!tpu.dma_semaphore, #tpu.memory_space<semaphore_mem>> -> memref<1x!tpu.dma_semaphore, #tpu.memory_space<semaphore_mem>>
      %435 = tpu.memref_squeeze %434 : memref<1x!tpu.dma_semaphore, #tpu.memory_space<semaphore_mem>> -> memref<!tpu.dma_semaphore, #tpu.memory_space<semaphore_mem>>
      tpu.enqueue_dma source(%431 : memref<1x128xf32, #tpu.memory_space<any>>) target(%433 : memref<1x128xf32, #tpu.memory_space<vmem>>) target_semaphore(%435 : memref<!tpu.dma_semaphore, #tpu.memory_space<semaphore_mem>>)
      %c15 = arith.constant 15 : index
      %436 = memref.load %arg1[%c15] : memref<64xi32, #tpu.memory_space<smem>>
      %c0_i32_286 = arith.constant 0 : i32
      %c0_i32_287 = arith.constant 0 : i32
      %c0_i32_288 = arith.constant 0 : i32
      %437 = tpu.memref_slice %arg2[%436, %c0_i32_288] : memref<512x128xf32, #tpu.memory_space<any>> -> memref<1x128xf32, #tpu.memory_space<any>>
      %c15_i32_289 = arith.constant 15 : i32
      %c0_i32_290 = arith.constant 0 : i32
      %438 = tpu.memref_slice %arg6[%c0_i32_286, %c15_i32_289, %c0_i32_290] : memref<2x64x128xf32, #tpu.memory_space<vmem>> -> memref<1x1x128xf32, #tpu.memory_space<vmem>>
      %439 = tpu.memref_squeeze %438 : memref<1x1x128xf32, #tpu.memory_space<vmem>> -> memref<1x128xf32, #tpu.memory_space<vmem>>
      %440 = tpu.memref_slice %arg7[%c0_i32_287] : memref<2x!tpu.dma_semaphore, #tpu.memory_space<semaphore_mem>> -> memref<1x!tpu.dma_semaphore, #tpu.memory_space<semaphore_mem>>
      %441 = tpu.memref_squeeze %440 : memref<1x!tpu.dma_semaphore, #tpu.memory_space<semaphore_mem>> -> memref<!tpu.dma_semaphore, #tpu.memory_space<semaphore_mem>>
      tpu.enqueue_dma source(%437 : memref<1x128xf32, #tpu.memory_space<any>>) target(%439 : memref<1x128xf32, #tpu.memory_space<vmem>>) target_semaphore(%441 : memref<!tpu.dma_semaphore, #tpu.memory_space<semaphore_mem>>)
      %c16 = arith.constant 16 : index
      %442 = memref.load %arg1[%c16] : memref<64xi32, #tpu.memory_space<smem>>
      %c0_i32_291 = arith.constant 0 : i32
      %c0_i32_292 = arith.constant 0 : i32
      %c0_i32_293 = arith.constant 0 : i32
      %443 = tpu.memref_slice %arg2[%442, %c0_i32_293] : memref<512x128xf32, #tpu.memory_space<any>> -> memref<1x128xf32, #tpu.memory_space<any>>
      %c16_i32_294 = arith.constant 16 : i32
      %c0_i32_295 = arith.constant 0 : i32
      %444 = tpu.memref_slice %arg6[%c0_i32_291, %c16_i32_294, %c0_i32_295] : memref<2x64x128xf32, #tpu.memory_space<vmem>> -> memref<1x1x128xf32, #tpu.memory_space<vmem>>
      %445 = tpu.memref_squeeze %444 : memref<1x1x128xf32, #tpu.memory_space<vmem>> -> memref<1x128xf32, #tpu.memory_space<vmem>>
      %446 = tpu.memref_slice %arg7[%c0_i32_292] : memref<2x!tpu.dma_semaphore, #tpu.memory_space<semaphore_mem>> -> memref<1x!tpu.dma_semaphore, #tpu.memory_space<semaphore_mem>>
      %447 = tpu.memref_squeeze %446 : memref<1x!tpu.dma_semaphore, #tpu.memory_space<semaphore_mem>> -> memref<!tpu.dma_semaphore, #tpu.memory_space<semaphore_mem>>
      tpu.enqueue_dma source(%443 : memref<1x128xf32, #tpu.memory_space<any>>) target(%445 : memref<1x128xf32, #tpu.memory_space<vmem>>) target_semaphore(%447 : memref<!tpu.dma_semaphore, #tpu.memory_space<semaphore_mem>>)
      %c17 = arith.constant 17 : index
      %448 = memref.load %arg1[%c17] : memref<64xi32, #tpu.memory_space<smem>>
      %c0_i32_296 = arith.constant 0 : i32
      %c0_i32_297 = arith.constant 0 : i32
      %c0_i32_298 = arith.constant 0 : i32
      %449 = tpu.memref_slice %arg2[%448, %c0_i32_298] : memref<512x128xf32, #tpu.memory_space<any>> -> memref<1x128xf32, #tpu.memory_space<any>>
      %c17_i32_299 = arith.constant 17 : i32
      %c0_i32_300 = arith.constant 0 : i32
      %450 = tpu.memref_slice %arg6[%c0_i32_296, %c17_i32_299, %c0_i32_300] : memref<2x64x128xf32, #tpu.memory_space<vmem>> -> memref<1x1x128xf32, #tpu.memory_space<vmem>>
      %451 = tpu.memref_squeeze %450 : memref<1x1x128xf32, #tpu.memory_space<vmem>> -> memref<1x128xf32, #tpu.memory_space<vmem>>
      %452 = tpu.memref_slice %arg7[%c0_i32_297] : memref<2x!tpu.dma_semaphore, #tpu.memory_space<semaphore_mem>> -> memref<1x!tpu.dma_semaphore, #tpu.memory_space<semaphore_mem>>
      %453 = tpu.memref_squeeze %452 : memref<1x!tpu.dma_semaphore, #tpu.memory_space<semaphore_mem>> -> memref<!tpu.dma_semaphore, #tpu.memory_space<semaphore_mem>>
      tpu.enqueue_dma source(%449 : memref<1x128xf32, #tpu.memory_space<any>>) target(%451 : memref<1x128xf32, #tpu.memory_space<vmem>>) target_semaphore(%453 : memref<!tpu.dma_semaphore, #tpu.memory_space<semaphore_mem>>)
      %c18 = arith.constant 18 : index
      %454 = memref.load %arg1[%c18] : memref<64xi32, #tpu.memory_space<smem>>
      %c0_i32_301 = arith.constant 0 : i32
      %c0_i32_302 = arith.constant 0 : i32
      %c0_i32_303 = arith.constant 0 : i32
      %455 = tpu.memref_slice %arg2[%454, %c0_i32_303] : memref<512x128xf32, #tpu.memory_space<any>> -> memref<1x128xf32, #tpu.memory_space<any>>
      %c18_i32_304 = arith.constant 18 : i32
      %c0_i32_305 = arith.constant 0 : i32
      %456 = tpu.memref_slice %arg6[%c0_i32_301, %c18_i32_304, %c0_i32_305] : memref<2x64x128xf32, #tpu.memory_space<vmem>> -> memref<1x1x128xf32, #tpu.memory_space<vmem>>
      %457 = tpu.memref_squeeze %456 : memref<1x1x128xf32, #tpu.memory_space<vmem>> -> memref<1x128xf32, #tpu.memory_space<vmem>>
      %458 = tpu.memref_slice %arg7[%c0_i32_302] : memref<2x!tpu.dma_semaphore, #tpu.memory_space<semaphore_mem>> -> memref<1x!tpu.dma_semaphore, #tpu.memory_space<semaphore_mem>>
      %459 = tpu.memref_squeeze %458 : memref<1x!tpu.dma_semaphore, #tpu.memory_space<semaphore_mem>> -> memref<!tpu.dma_semaphore, #tpu.memory_space<semaphore_mem>>
      tpu.enqueue_dma source(%455 : memref<1x128xf32, #tpu.memory_space<any>>) target(%457 : memref<1x128xf32, #tpu.memory_space<vmem>>) target_semaphore(%459 : memref<!tpu.dma_semaphore, #tpu.memory_space<semaphore_mem>>)
      %c19 = arith.constant 19 : index
      %460 = memref.load %arg1[%c19] : memref<64xi32, #tpu.memory_space<smem>>
      %c0_i32_306 = arith.constant 0 : i32
      %c0_i32_307 = arith.constant 0 : i32
      %c0_i32_308 = arith.constant 0 : i32
      %461 = tpu.memref_slice %arg2[%460, %c0_i32_308] : memref<512x128xf32, #tpu.memory_space<any>> -> memref<1x128xf32, #tpu.memory_space<any>>
      %c19_i32_309 = arith.constant 19 : i32
      %c0_i32_310 = arith.constant 0 : i32
      %462 = tpu.memref_slice %arg6[%c0_i32_306, %c19_i32_309, %c0_i32_310] : memref<2x64x128xf32, #tpu.memory_space<vmem>> -> memref<1x1x128xf32, #tpu.memory_space<vmem>>
      %463 = tpu.memref_squeeze %462 : memref<1x1x128xf32, #tpu.memory_space<vmem>> -> memref<1x128xf32, #tpu.memory_space<vmem>>
      %464 = tpu.memref_slice %arg7[%c0_i32_307] : memref<2x!tpu.dma_semaphore, #tpu.memory_space<semaphore_mem>> -> memref<1x!tpu.dma_semaphore, #tpu.memory_space<semaphore_mem>>
      %465 = tpu.memref_squeeze %464 : memref<1x!tpu.dma_semaphore, #tpu.memory_space<semaphore_mem>> -> memref<!tpu.dma_semaphore, #tpu.memory_space<semaphore_mem>>
      tpu.enqueue_dma source(%461 : memref<1x128xf32, #tpu.memory_space<any>>) target(%463 : memref<1x128xf32, #tpu.memory_space<vmem>>) target_semaphore(%465 : memref<!tpu.dma_semaphore, #tpu.memory_space<semaphore_mem>>)
      %c20 = arith.constant 20 : index
      %466 = memref.load %arg1[%c20] : memref<64xi32, #tpu.memory_space<smem>>
      %c0_i32_311 = arith.constant 0 : i32
      %c0_i32_312 = arith.constant 0 : i32
      %c0_i32_313 = arith.constant 0 : i32
      %467 = tpu.memref_slice %arg2[%466, %c0_i32_313] : memref<512x128xf32, #tpu.memory_space<any>> -> memref<1x128xf32, #tpu.memory_space<any>>
      %c20_i32_314 = arith.constant 20 : i32
      %c0_i32_315 = arith.constant 0 : i32
      %468 = tpu.memref_slice %arg6[%c0_i32_311, %c20_i32_314, %c0_i32_315] : memref<2x64x128xf32, #tpu.memory_space<vmem>> -> memref<1x1x128xf32, #tpu.memory_space<vmem>>
      %469 = tpu.memref_squeeze %468 : memref<1x1x128xf32, #tpu.memory_space<vmem>> -> memref<1x128xf32, #tpu.memory_space<vmem>>
      %470 = tpu.memref_slice %arg7[%c0_i32_312] : memref<2x!tpu.dma_semaphore, #tpu.memory_space<semaphore_mem>> -> memref<1x!tpu.dma_semaphore, #tpu.memory_space<semaphore_mem>>
      %471 = tpu.memref_squeeze %470 : memref<1x!tpu.dma_semaphore, #tpu.memory_space<semaphore_mem>> -> memref<!tpu.dma_semaphore, #tpu.memory_space<semaphore_mem>>
      tpu.enqueue_dma source(%467 : memref<1x128xf32, #tpu.memory_space<any>>) target(%469 : memref<1x128xf32, #tpu.memory_space<vmem>>) target_semaphore(%471 : memref<!tpu.dma_semaphore, #tpu.memory_space<semaphore_mem>>)
      %c21 = arith.constant 21 : index
      %472 = memref.load %arg1[%c21] : memref<64xi32, #tpu.memory_space<smem>>
      %c0_i32_316 = arith.constant 0 : i32
      %c0_i32_317 = arith.constant 0 : i32
      %c0_i32_318 = arith.constant 0 : i32
      %473 = tpu.memref_slice %arg2[%472, %c0_i32_318] : memref<512x128xf32, #tpu.memory_space<any>> -> memref<1x128xf32, #tpu.memory_space<any>>
      %c21_i32_319 = arith.constant 21 : i32
      %c0_i32_320 = arith.constant 0 : i32
      %474 = tpu.memref_slice %arg6[%c0_i32_316, %c21_i32_319, %c0_i32_320] : memref<2x64x128xf32, #tpu.memory_space<vmem>> -> memref<1x1x128xf32, #tpu.memory_space<vmem>>
      %475 = tpu.memref_squeeze %474 : memref<1x1x128xf32, #tpu.memory_space<vmem>> -> memref<1x128xf32, #tpu.memory_space<vmem>>
      %476 = tpu.memref_slice %arg7[%c0_i32_317] : memref<2x!tpu.dma_semaphore, #tpu.memory_space<semaphore_mem>> -> memref<1x!tpu.dma_semaphore, #tpu.memory_space<semaphore_mem>>
      %477 = tpu.memref_squeeze %476 : memref<1x!tpu.dma_semaphore, #tpu.memory_space<semaphore_mem>> -> memref<!tpu.dma_semaphore, #tpu.memory_space<semaphore_mem>>
      tpu.enqueue_dma source(%473 : memref<1x128xf32, #tpu.memory_space<any>>) target(%475 : memref<1x128xf32, #tpu.memory_space<vmem>>) target_semaphore(%477 : memref<!tpu.dma_semaphore, #tpu.memory_space<semaphore_mem>>)
      %c22 = arith.constant 22 : index
      %478 = memref.load %arg1[%c22] : memref<64xi32, #tpu.memory_space<smem>>
      %c0_i32_321 = arith.constant 0 : i32
      %c0_i32_322 = arith.constant 0 : i32
      %c0_i32_323 = arith.constant 0 : i32
      %479 = tpu.memref_slice %arg2[%478, %c0_i32_323] : memref<512x128xf32, #tpu.memory_space<any>> -> memref<1x128xf32, #tpu.memory_space<any>>
      %c22_i32_324 = arith.constant 22 : i32
      %c0_i32_325 = arith.constant 0 : i32
      %480 = tpu.memref_slice %arg6[%c0_i32_321, %c22_i32_324, %c0_i32_325] : memref<2x64x128xf32, #tpu.memory_space<vmem>> -> memref<1x1x128xf32, #tpu.memory_space<vmem>>
      %481 = tpu.memref_squeeze %480 : memref<1x1x128xf32, #tpu.memory_space<vmem>> -> memref<1x128xf32, #tpu.memory_space<vmem>>
      %482 = tpu.memref_slice %arg7[%c0_i32_322] : memref<2x!tpu.dma_semaphore, #tpu.memory_space<semaphore_mem>> -> memref<1x!tpu.dma_semaphore, #tpu.memory_space<semaphore_mem>>
      %483 = tpu.memref_squeeze %482 : memref<1x!tpu.dma_semaphore, #tpu.memory_space<semaphore_mem>> -> memref<!tpu.dma_semaphore, #tpu.memory_space<semaphore_mem>>
      tpu.enqueue_dma source(%479 : memref<1x128xf32, #tpu.memory_space<any>>) target(%481 : memref<1x128xf32, #tpu.memory_space<vmem>>) target_semaphore(%483 : memref<!tpu.dma_semaphore, #tpu.memory_space<semaphore_mem>>)
      %c23 = arith.constant 23 : index
      %484 = memref.load %arg1[%c23] : memref<64xi32, #tpu.memory_space<smem>>
      %c0_i32_326 = arith.constant 0 : i32
      %c0_i32_327 = arith.constant 0 : i32
      %c0_i32_328 = arith.constant 0 : i32
      %485 = tpu.memref_slice %arg2[%484, %c0_i32_328] : memref<512x128xf32, #tpu.memory_space<any>> -> memref<1x128xf32, #tpu.memory_space<any>>
      %c23_i32_329 = arith.constant 23 : i32
      %c0_i32_330 = arith.constant 0 : i32
      %486 = tpu.memref_slice %arg6[%c0_i32_326, %c23_i32_329, %c0_i32_330] : memref<2x64x128xf32, #tpu.memory_space<vmem>> -> memref<1x1x128xf32, #tpu.memory_space<vmem>>
      %487 = tpu.memref_squeeze %486 : memref<1x1x128xf32, #tpu.memory_space<vmem>> -> memref<1x128xf32, #tpu.memory_space<vmem>>
      %488 = tpu.memref_slice %arg7[%c0_i32_327] : memref<2x!tpu.dma_semaphore, #tpu.memory_space<semaphore_mem>> -> memref<1x!tpu.dma_semaphore, #tpu.memory_space<semaphore_mem>>
      %489 = tpu.memref_squeeze %488 : memref<1x!tpu.dma_semaphore, #tpu.memory_space<semaphore_mem>> -> memref<!tpu.dma_semaphore, #tpu.memory_space<semaphore_mem>>
      tpu.enqueue_dma source(%485 : memref<1x128xf32, #tpu.memory_space<any>>) target(%487 : memref<1x128xf32, #tpu.memory_space<vmem>>) target_semaphore(%489 : memref<!tpu.dma_semaphore, #tpu.memory_space<semaphore_mem>>)
      %c24 = arith.constant 24 : index
      %490 = memref.load %arg1[%c24] : memref<64xi32, #tpu.memory_space<smem>>
      %c0_i32_331 = arith.constant 0 : i32
      %c0_i32_332 = arith.constant 0 : i32
      %c0_i32_333 = arith.constant 0 : i32
      %491 = tpu.memref_slice %arg2[%490, %c0_i32_333] : memref<512x128xf32, #tpu.memory_space<any>> -> memref<1x128xf32, #tpu.memory_space<any>>
      %c24_i32_334 = arith.constant 24 : i32
      %c0_i32_335 = arith.constant 0 : i32
      %492 = tpu.memref_slice %arg6[%c0_i32_331, %c24_i32_334, %c0_i32_335] : memref<2x64x128xf32, #tpu.memory_space<vmem>> -> memref<1x1x128xf32, #tpu.memory_space<vmem>>
      %493 = tpu.memref_squeeze %492 : memref<1x1x128xf32, #tpu.memory_space<vmem>> -> memref<1x128xf32, #tpu.memory_space<vmem>>
      %494 = tpu.memref_slice %arg7[%c0_i32_332] : memref<2x!tpu.dma_semaphore, #tpu.memory_space<semaphore_mem>> -> memref<1x!tpu.dma_semaphore, #tpu.memory_space<semaphore_mem>>
      %495 = tpu.memref_squeeze %494 : memref<1x!tpu.dma_semaphore, #tpu.memory_space<semaphore_mem>> -> memref<!tpu.dma_semaphore, #tpu.memory_space<semaphore_mem>>
      tpu.enqueue_dma source(%491 : memref<1x128xf32, #tpu.memory_space<any>>) target(%493 : memref<1x128xf32, #tpu.memory_space<vmem>>) target_semaphore(%495 : memref<!tpu.dma_semaphore, #tpu.memory_space<semaphore_mem>>)
      %c25 = arith.constant 25 : index
      %496 = memref.load %arg1[%c25] : memref<64xi32, #tpu.memory_space<smem>>
      %c0_i32_336 = arith.constant 0 : i32
      %c0_i32_337 = arith.constant 0 : i32
      %c0_i32_338 = arith.constant 0 : i32
      %497 = tpu.memref_slice %arg2[%496, %c0_i32_338] : memref<512x128xf32, #tpu.memory_space<any>> -> memref<1x128xf32, #tpu.memory_space<any>>
      %c25_i32_339 = arith.constant 25 : i32
      %c0_i32_340 = arith.constant 0 : i32
      %498 = tpu.memref_slice %arg6[%c0_i32_336, %c25_i32_339, %c0_i32_340] : memref<2x64x128xf32, #tpu.memory_space<vmem>> -> memref<1x1x128xf32, #tpu.memory_space<vmem>>
      %499 = tpu.memref_squeeze %498 : memref<1x1x128xf32, #tpu.memory_space<vmem>> -> memref<1x128xf32, #tpu.memory_space<vmem>>
      %500 = tpu.memref_slice %arg7[%c0_i32_337] : memref<2x!tpu.dma_semaphore, #tpu.memory_space<semaphore_mem>> -> memref<1x!tpu.dma_semaphore, #tpu.memory_space<semaphore_mem>>
      %501 = tpu.memref_squeeze %500 : memref<1x!tpu.dma_semaphore, #tpu.memory_space<semaphore_mem>> -> memref<!tpu.dma_semaphore, #tpu.memory_space<semaphore_mem>>
      tpu.enqueue_dma source(%497 : memref<1x128xf32, #tpu.memory_space<any>>) target(%499 : memref<1x128xf32, #tpu.memory_space<vmem>>) target_semaphore(%501 : memref<!tpu.dma_semaphore, #tpu.memory_space<semaphore_mem>>)
      %c26 = arith.constant 26 : index
      %502 = memref.load %arg1[%c26] : memref<64xi32, #tpu.memory_space<smem>>
      %c0_i32_341 = arith.constant 0 : i32
      %c0_i32_342 = arith.constant 0 : i32
      %c0_i32_343 = arith.constant 0 : i32
      %503 = tpu.memref_slice %arg2[%502, %c0_i32_343] : memref<512x128xf32, #tpu.memory_space<any>> -> memref<1x128xf32, #tpu.memory_space<any>>
      %c26_i32_344 = arith.constant 26 : i32
      %c0_i32_345 = arith.constant 0 : i32
      %504 = tpu.memref_slice %arg6[%c0_i32_341, %c26_i32_344, %c0_i32_345] : memref<2x64x128xf32, #tpu.memory_space<vmem>> -> memref<1x1x128xf32, #tpu.memory_space<vmem>>
      %505 = tpu.memref_squeeze %504 : memref<1x1x128xf32, #tpu.memory_space<vmem>> -> memref<1x128xf32, #tpu.memory_space<vmem>>
      %506 = tpu.memref_slice %arg7[%c0_i32_342] : memref<2x!tpu.dma_semaphore, #tpu.memory_space<semaphore_mem>> -> memref<1x!tpu.dma_semaphore, #tpu.memory_space<semaphore_mem>>
      %507 = tpu.memref_squeeze %506 : memref<1x!tpu.dma_semaphore, #tpu.memory_space<semaphore_mem>> -> memref<!tpu.dma_semaphore, #tpu.memory_space<semaphore_mem>>
      tpu.enqueue_dma source(%503 : memref<1x128xf32, #tpu.memory_space<any>>) target(%505 : memref<1x128xf32, #tpu.memory_space<vmem>>) target_semaphore(%507 : memref<!tpu.dma_semaphore, #tpu.memory_space<semaphore_mem>>)
      %c27 = arith.constant 27 : index
      %508 = memref.load %arg1[%c27] : memref<64xi32, #tpu.memory_space<smem>>
      %c0_i32_346 = arith.constant 0 : i32
      %c0_i32_347 = arith.constant 0 : i32
      %c0_i32_348 = arith.constant 0 : i32
      %509 = tpu.memref_slice %arg2[%508, %c0_i32_348] : memref<512x128xf32, #tpu.memory_space<any>> -> memref<1x128xf32, #tpu.memory_space<any>>
      %c27_i32_349 = arith.constant 27 : i32
      %c0_i32_350 = arith.constant 0 : i32
      %510 = tpu.memref_slice %arg6[%c0_i32_346, %c27_i32_349, %c0_i32_350] : memref<2x64x128xf32, #tpu.memory_space<vmem>> -> memref<1x1x128xf32, #tpu.memory_space<vmem>>
      %511 = tpu.memref_squeeze %510 : memref<1x1x128xf32, #tpu.memory_space<vmem>> -> memref<1x128xf32, #tpu.memory_space<vmem>>
      %512 = tpu.memref_slice %arg7[%c0_i32_347] : memref<2x!tpu.dma_semaphore, #tpu.memory_space<semaphore_mem>> -> memref<1x!tpu.dma_semaphore, #tpu.memory_space<semaphore_mem>>
      %513 = tpu.memref_squeeze %512 : memref<1x!tpu.dma_semaphore, #tpu.memory_space<semaphore_mem>> -> memref<!tpu.dma_semaphore, #tpu.memory_space<semaphore_mem>>
      tpu.enqueue_dma source(%509 : memref<1x128xf32, #tpu.memory_space<any>>) target(%511 : memref<1x128xf32, #tpu.memory_space<vmem>>) target_semaphore(%513 : memref<!tpu.dma_semaphore, #tpu.memory_space<semaphore_mem>>)
      %c28 = arith.constant 28 : index
      %514 = memref.load %arg1[%c28] : memref<64xi32, #tpu.memory_space<smem>>
      %c0_i32_351 = arith.constant 0 : i32
      %c0_i32_352 = arith.constant 0 : i32
      %c0_i32_353 = arith.constant 0 : i32
      %515 = tpu.memref_slice %arg2[%514, %c0_i32_353] : memref<512x128xf32, #tpu.memory_space<any>> -> memref<1x128xf32, #tpu.memory_space<any>>
      %c28_i32_354 = arith.constant 28 : i32
      %c0_i32_355 = arith.constant 0 : i32
      %516 = tpu.memref_slice %arg6[%c0_i32_351, %c28_i32_354, %c0_i32_355] : memref<2x64x128xf32, #tpu.memory_space<vmem>> -> memref<1x1x128xf32, #tpu.memory_space<vmem>>
      %517 = tpu.memref_squeeze %516 : memref<1x1x128xf32, #tpu.memory_space<vmem>> -> memref<1x128xf32, #tpu.memory_space<vmem>>
      %518 = tpu.memref_slice %arg7[%c0_i32_352] : memref<2x!tpu.dma_semaphore, #tpu.memory_space<semaphore_mem>> -> memref<1x!tpu.dma_semaphore, #tpu.memory_space<semaphore_mem>>
      %519 = tpu.memref_squeeze %518 : memref<1x!tpu.dma_semaphore, #tpu.memory_space<semaphore_mem>> -> memref<!tpu.dma_semaphore, #tpu.memory_space<semaphore_mem>>
      tpu.enqueue_dma source(%515 : memref<1x128xf32, #tpu.memory_space<any>>) target(%517 : memref<1x128xf32, #tpu.memory_space<vmem>>) target_semaphore(%519 : memref<!tpu.dma_semaphore, #tpu.memory_space<semaphore_mem>>)
      %c29 = arith.constant 29 : index
      %520 = memref.load %arg1[%c29] : memref<64xi32, #tpu.memory_space<smem>>
      %c0_i32_356 = arith.constant 0 : i32
      %c0_i32_357 = arith.constant 0 : i32
      %c0_i32_358 = arith.constant 0 : i32
      %521 = tpu.memref_slice %arg2[%520, %c0_i32_358] : memref<512x128xf32, #tpu.memory_space<any>> -> memref<1x128xf32, #tpu.memory_space<any>>
      %c29_i32_359 = arith.constant 29 : i32
      %c0_i32_360 = arith.constant 0 : i32
      %522 = tpu.memref_slice %arg6[%c0_i32_356, %c29_i32_359, %c0_i32_360] : memref<2x64x128xf32, #tpu.memory_space<vmem>> -> memref<1x1x128xf32, #tpu.memory_space<vmem>>
      %523 = tpu.memref_squeeze %522 : memref<1x1x128xf32, #tpu.memory_space<vmem>> -> memref<1x128xf32, #tpu.memory_space<vmem>>
      %524 = tpu.memref_slice %arg7[%c0_i32_357] : memref<2x!tpu.dma_semaphore, #tpu.memory_space<semaphore_mem>> -> memref<1x!tpu.dma_semaphore, #tpu.memory_space<semaphore_mem>>
      %525 = tpu.memref_squeeze %524 : memref<1x!tpu.dma_semaphore, #tpu.memory_space<semaphore_mem>> -> memref<!tpu.dma_semaphore, #tpu.memory_space<semaphore_mem>>
      tpu.enqueue_dma source(%521 : memref<1x128xf32, #tpu.memory_space<any>>) target(%523 : memref<1x128xf32, #tpu.memory_space<vmem>>) target_semaphore(%525 : memref<!tpu.dma_semaphore, #tpu.memory_space<semaphore_mem>>)
      %c30 = arith.constant 30 : index
      %526 = memref.load %arg1[%c30] : memref<64xi32, #tpu.memory_space<smem>>
      %c0_i32_361 = arith.constant 0 : i32
      %c0_i32_362 = arith.constant 0 : i32
      %c0_i32_363 = arith.constant 0 : i32
      %527 = tpu.memref_slice %arg2[%526, %c0_i32_363] : memref<512x128xf32, #tpu.memory_space<any>> -> memref<1x128xf32, #tpu.memory_space<any>>
      %c30_i32_364 = arith.constant 30 : i32
      %c0_i32_365 = arith.constant 0 : i32
      %528 = tpu.memref_slice %arg6[%c0_i32_361, %c30_i32_364, %c0_i32_365] : memref<2x64x128xf32, #tpu.memory_space<vmem>> -> memref<1x1x128xf32, #tpu.memory_space<vmem>>
      %529 = tpu.memref_squeeze %528 : memref<1x1x128xf32, #tpu.memory_space<vmem>> -> memref<1x128xf32, #tpu.memory_space<vmem>>
      %530 = tpu.memref_slice %arg7[%c0_i32_362] : memref<2x!tpu.dma_semaphore, #tpu.memory_space<semaphore_mem>> -> memref<1x!tpu.dma_semaphore, #tpu.memory_space<semaphore_mem>>
      %531 = tpu.memref_squeeze %530 : memref<1x!tpu.dma_semaphore, #tpu.memory_space<semaphore_mem>> -> memref<!tpu.dma_semaphore, #tpu.memory_space<semaphore_mem>>
      tpu.enqueue_dma source(%527 : memref<1x128xf32, #tpu.memory_space<any>>) target(%529 : memref<1x128xf32, #tpu.memory_space<vmem>>) target_semaphore(%531 : memref<!tpu.dma_semaphore, #tpu.memory_space<semaphore_mem>>)
      %c31 = arith.constant 31 : index
      %532 = memref.load %arg1[%c31] : memref<64xi32, #tpu.memory_space<smem>>
      %c0_i32_366 = arith.constant 0 : i32
      %c0_i32_367 = arith.constant 0 : i32
      %c0_i32_368 = arith.constant 0 : i32
      %533 = tpu.memref_slice %arg2[%532, %c0_i32_368] : memref<512x128xf32, #tpu.memory_space<any>> -> memref<1x128xf32, #tpu.memory_space<any>>
      %c31_i32_369 = arith.constant 31 : i32
      %c0_i32_370 = arith.constant 0 : i32
      %534 = tpu.memref_slice %arg6[%c0_i32_366, %c31_i32_369, %c0_i32_370] : memref<2x64x128xf32, #tpu.memory_space<vmem>> -> memref<1x1x128xf32, #tpu.memory_space<vmem>>
      %535 = tpu.memref_squeeze %534 : memref<1x1x128xf32, #tpu.memory_space<vmem>> -> memref<1x128xf32, #tpu.memory_space<vmem>>
      %536 = tpu.memref_slice %arg7[%c0_i32_367] : memref<2x!tpu.dma_semaphore, #tpu.memory_space<semaphore_mem>> -> memref<1x!tpu.dma_semaphore, #tpu.memory_space<semaphore_mem>>
      %537 = tpu.memref_squeeze %536 : memref<1x!tpu.dma_semaphore, #tpu.memory_space<semaphore_mem>> -> memref<!tpu.dma_semaphore, #tpu.memory_space<semaphore_mem>>
      tpu.enqueue_dma source(%533 : memref<1x128xf32, #tpu.memory_space<any>>) target(%535 : memref<1x128xf32, #tpu.memory_space<vmem>>) target_semaphore(%537 : memref<!tpu.dma_semaphore, #tpu.memory_space<semaphore_mem>>)
      %c32 = arith.constant 32 : index
      %538 = memref.load %arg1[%c32] : memref<64xi32, #tpu.memory_space<smem>>
      %c0_i32_371 = arith.constant 0 : i32
      %c0_i32_372 = arith.constant 0 : i32
      %c0_i32_373 = arith.constant 0 : i32
      %539 = tpu.memref_slice %arg2[%538, %c0_i32_373] : memref<512x128xf32, #tpu.memory_space<any>> -> memref<1x128xf32, #tpu.memory_space<any>>
      %c32_i32_374 = arith.constant 32 : i32
      %c0_i32_375 = arith.constant 0 : i32
      %540 = tpu.memref_slice %arg6[%c0_i32_371, %c32_i32_374, %c0_i32_375] : memref<2x64x128xf32, #tpu.memory_space<vmem>> -> memref<1x1x128xf32, #tpu.memory_space<vmem>>
      %541 = tpu.memref_squeeze %540 : memref<1x1x128xf32, #tpu.memory_space<vmem>> -> memref<1x128xf32, #tpu.memory_space<vmem>>
      %542 = tpu.memref_slice %arg7[%c0_i32_372] : memref<2x!tpu.dma_semaphore, #tpu.memory_space<semaphore_mem>> -> memref<1x!tpu.dma_semaphore, #tpu.memory_space<semaphore_mem>>
      %543 = tpu.memref_squeeze %542 : memref<1x!tpu.dma_semaphore, #tpu.memory_space<semaphore_mem>> -> memref<!tpu.dma_semaphore, #tpu.memory_space<semaphore_mem>>
      tpu.enqueue_dma source(%539 : memref<1x128xf32, #tpu.memory_space<any>>) target(%541 : memref<1x128xf32, #tpu.memory_space<vmem>>) target_semaphore(%543 : memref<!tpu.dma_semaphore, #tpu.memory_space<semaphore_mem>>)
      %c33 = arith.constant 33 : index
      %544 = memref.load %arg1[%c33] : memref<64xi32, #tpu.memory_space<smem>>
      %c0_i32_376 = arith.constant 0 : i32
      %c0_i32_377 = arith.constant 0 : i32
      %c0_i32_378 = arith.constant 0 : i32
      %545 = tpu.memref_slice %arg2[%544, %c0_i32_378] : memref<512x128xf32, #tpu.memory_space<any>> -> memref<1x128xf32, #tpu.memory_space<any>>
      %c33_i32_379 = arith.constant 33 : i32
      %c0_i32_380 = arith.constant 0 : i32
      %546 = tpu.memref_slice %arg6[%c0_i32_376, %c33_i32_379, %c0_i32_380] : memref<2x64x128xf32, #tpu.memory_space<vmem>> -> memref<1x1x128xf32, #tpu.memory_space<vmem>>
      %547 = tpu.memref_squeeze %546 : memref<1x1x128xf32, #tpu.memory_space<vmem>> -> memref<1x128xf32, #tpu.memory_space<vmem>>
      %548 = tpu.memref_slice %arg7[%c0_i32_377] : memref<2x!tpu.dma_semaphore, #tpu.memory_space<semaphore_mem>> -> memref<1x!tpu.dma_semaphore, #tpu.memory_space<semaphore_mem>>
      %549 = tpu.memref_squeeze %548 : memref<1x!tpu.dma_semaphore, #tpu.memory_space<semaphore_mem>> -> memref<!tpu.dma_semaphore, #tpu.memory_space<semaphore_mem>>
      tpu.enqueue_dma source(%545 : memref<1x128xf32, #tpu.memory_space<any>>) target(%547 : memref<1x128xf32, #tpu.memory_space<vmem>>) target_semaphore(%549 : memref<!tpu.dma_semaphore, #tpu.memory_space<semaphore_mem>>)
      %c34 = arith.constant 34 : index
      %550 = memref.load %arg1[%c34] : memref<64xi32, #tpu.memory_space<smem>>
      %c0_i32_381 = arith.constant 0 : i32
      %c0_i32_382 = arith.constant 0 : i32
      %c0_i32_383 = arith.constant 0 : i32
      %551 = tpu.memref_slice %arg2[%550, %c0_i32_383] : memref<512x128xf32, #tpu.memory_space<any>> -> memref<1x128xf32, #tpu.memory_space<any>>
      %c34_i32_384 = arith.constant 34 : i32
      %c0_i32_385 = arith.constant 0 : i32
      %552 = tpu.memref_slice %arg6[%c0_i32_381, %c34_i32_384, %c0_i32_385] : memref<2x64x128xf32, #tpu.memory_space<vmem>> -> memref<1x1x128xf32, #tpu.memory_space<vmem>>
      %553 = tpu.memref_squeeze %552 : memref<1x1x128xf32, #tpu.memory_space<vmem>> -> memref<1x128xf32, #tpu.memory_space<vmem>>
      %554 = tpu.memref_slice %arg7[%c0_i32_382] : memref<2x!tpu.dma_semaphore, #tpu.memory_space<semaphore_mem>> -> memref<1x!tpu.dma_semaphore, #tpu.memory_space<semaphore_mem>>
      %555 = tpu.memref_squeeze %554 : memref<1x!tpu.dma_semaphore, #tpu.memory_space<semaphore_mem>> -> memref<!tpu.dma_semaphore, #tpu.memory_space<semaphore_mem>>
      tpu.enqueue_dma source(%551 : memref<1x128xf32, #tpu.memory_space<any>>) target(%553 : memref<1x128xf32, #tpu.memory_space<vmem>>) target_semaphore(%555 : memref<!tpu.dma_semaphore, #tpu.memory_space<semaphore_mem>>)
      %c35 = arith.constant 35 : index
      %556 = memref.load %arg1[%c35] : memref<64xi32, #tpu.memory_space<smem>>
      %c0_i32_386 = arith.constant 0 : i32
      %c0_i32_387 = arith.constant 0 : i32
      %c0_i32_388 = arith.constant 0 : i32
      %557 = tpu.memref_slice %arg2[%556, %c0_i32_388] : memref<512x128xf32, #tpu.memory_space<any>> -> memref<1x128xf32, #tpu.memory_space<any>>
      %c35_i32_389 = arith.constant 35 : i32
      %c0_i32_390 = arith.constant 0 : i32
      %558 = tpu.memref_slice %arg6[%c0_i32_386, %c35_i32_389, %c0_i32_390] : memref<2x64x128xf32, #tpu.memory_space<vmem>> -> memref<1x1x128xf32, #tpu.memory_space<vmem>>
      %559 = tpu.memref_squeeze %558 : memref<1x1x128xf32, #tpu.memory_space<vmem>> -> memref<1x128xf32, #tpu.memory_space<vmem>>
      %560 = tpu.memref_slice %arg7[%c0_i32_387] : memref<2x!tpu.dma_semaphore, #tpu.memory_space<semaphore_mem>> -> memref<1x!tpu.dma_semaphore, #tpu.memory_space<semaphore_mem>>
      %561 = tpu.memref_squeeze %560 : memref<1x!tpu.dma_semaphore, #tpu.memory_space<semaphore_mem>> -> memref<!tpu.dma_semaphore, #tpu.memory_space<semaphore_mem>>
      tpu.enqueue_dma source(%557 : memref<1x128xf32, #tpu.memory_space<any>>) target(%559 : memref<1x128xf32, #tpu.memory_space<vmem>>) target_semaphore(%561 : memref<!tpu.dma_semaphore, #tpu.memory_space<semaphore_mem>>)
      %c36 = arith.constant 36 : index
      %562 = memref.load %arg1[%c36] : memref<64xi32, #tpu.memory_space<smem>>
      %c0_i32_391 = arith.constant 0 : i32
      %c0_i32_392 = arith.constant 0 : i32
      %c0_i32_393 = arith.constant 0 : i32
      %563 = tpu.memref_slice %arg2[%562, %c0_i32_393] : memref<512x128xf32, #tpu.memory_space<any>> -> memref<1x128xf32, #tpu.memory_space<any>>
      %c36_i32_394 = arith.constant 36 : i32
      %c0_i32_395 = arith.constant 0 : i32
      %564 = tpu.memref_slice %arg6[%c0_i32_391, %c36_i32_394, %c0_i32_395] : memref<2x64x128xf32, #tpu.memory_space<vmem>> -> memref<1x1x128xf32, #tpu.memory_space<vmem>>
      %565 = tpu.memref_squeeze %564 : memref<1x1x128xf32, #tpu.memory_space<vmem>> -> memref<1x128xf32, #tpu.memory_space<vmem>>
      %566 = tpu.memref_slice %arg7[%c0_i32_392] : memref<2x!tpu.dma_semaphore, #tpu.memory_space<semaphore_mem>> -> memref<1x!tpu.dma_semaphore, #tpu.memory_space<semaphore_mem>>
      %567 = tpu.memref_squeeze %566 : memref<1x!tpu.dma_semaphore, #tpu.memory_space<semaphore_mem>> -> memref<!tpu.dma_semaphore, #tpu.memory_space<semaphore_mem>>
      tpu.enqueue_dma source(%563 : memref<1x128xf32, #tpu.memory_space<any>>) target(%565 : memref<1x128xf32, #tpu.memory_space<vmem>>) target_semaphore(%567 : memref<!tpu.dma_semaphore, #tpu.memory_space<semaphore_mem>>)
      %c37 = arith.constant 37 : index
      %568 = memref.load %arg1[%c37] : memref<64xi32, #tpu.memory_space<smem>>
      %c0_i32_396 = arith.constant 0 : i32
      %c0_i32_397 = arith.constant 0 : i32
      %c0_i32_398 = arith.constant 0 : i32
      %569 = tpu.memref_slice %arg2[%568, %c0_i32_398] : memref<512x128xf32, #tpu.memory_space<any>> -> memref<1x128xf32, #tpu.memory_space<any>>
      %c37_i32_399 = arith.constant 37 : i32
      %c0_i32_400 = arith.constant 0 : i32
      %570 = tpu.memref_slice %arg6[%c0_i32_396, %c37_i32_399, %c0_i32_400] : memref<2x64x128xf32, #tpu.memory_space<vmem>> -> memref<1x1x128xf32, #tpu.memory_space<vmem>>
      %571 = tpu.memref_squeeze %570 : memref<1x1x128xf32, #tpu.memory_space<vmem>> -> memref<1x128xf32, #tpu.memory_space<vmem>>
      %572 = tpu.memref_slice %arg7[%c0_i32_397] : memref<2x!tpu.dma_semaphore, #tpu.memory_space<semaphore_mem>> -> memref<1x!tpu.dma_semaphore, #tpu.memory_space<semaphore_mem>>
      %573 = tpu.memref_squeeze %572 : memref<1x!tpu.dma_semaphore, #tpu.memory_space<semaphore_mem>> -> memref<!tpu.dma_semaphore, #tpu.memory_space<semaphore_mem>>
      tpu.enqueue_dma source(%569 : memref<1x128xf32, #tpu.memory_space<any>>) target(%571 : memref<1x128xf32, #tpu.memory_space<vmem>>) target_semaphore(%573 : memref<!tpu.dma_semaphore, #tpu.memory_space<semaphore_mem>>)
      %c38 = arith.constant 38 : index
      %574 = memref.load %arg1[%c38] : memref<64xi32, #tpu.memory_space<smem>>
      %c0_i32_401 = arith.constant 0 : i32
      %c0_i32_402 = arith.constant 0 : i32
      %c0_i32_403 = arith.constant 0 : i32
      %575 = tpu.memref_slice %arg2[%574, %c0_i32_403] : memref<512x128xf32, #tpu.memory_space<any>> -> memref<1x128xf32, #tpu.memory_space<any>>
      %c38_i32_404 = arith.constant 38 : i32
      %c0_i32_405 = arith.constant 0 : i32
      %576 = tpu.memref_slice %arg6[%c0_i32_401, %c38_i32_404, %c0_i32_405] : memref<2x64x128xf32, #tpu.memory_space<vmem>> -> memref<1x1x128xf32, #tpu.memory_space<vmem>>
      %577 = tpu.memref_squeeze %576 : memref<1x1x128xf32, #tpu.memory_space<vmem>> -> memref<1x128xf32, #tpu.memory_space<vmem>>
      %578 = tpu.memref_slice %arg7[%c0_i32_402] : memref<2x!tpu.dma_semaphore, #tpu.memory_space<semaphore_mem>> -> memref<1x!tpu.dma_semaphore, #tpu.memory_space<semaphore_mem>>
      %579 = tpu.memref_squeeze %578 : memref<1x!tpu.dma_semaphore, #tpu.memory_space<semaphore_mem>> -> memref<!tpu.dma_semaphore, #tpu.memory_space<semaphore_mem>>
      tpu.enqueue_dma source(%575 : memref<1x128xf32, #tpu.memory_space<any>>) target(%577 : memref<1x128xf32, #tpu.memory_space<vmem>>) target_semaphore(%579 : memref<!tpu.dma_semaphore, #tpu.memory_space<semaphore_mem>>)
      %c39 = arith.constant 39 : index
      %580 = memref.load %arg1[%c39] : memref<64xi32, #tpu.memory_space<smem>>
      %c0_i32_406 = arith.constant 0 : i32
      %c0_i32_407 = arith.constant 0 : i32
      %c0_i32_408 = arith.constant 0 : i32
      %581 = tpu.memref_slice %arg2[%580, %c0_i32_408] : memref<512x128xf32, #tpu.memory_space<any>> -> memref<1x128xf32, #tpu.memory_space<any>>
      %c39_i32_409 = arith.constant 39 : i32
      %c0_i32_410 = arith.constant 0 : i32
      %582 = tpu.memref_slice %arg6[%c0_i32_406, %c39_i32_409, %c0_i32_410] : memref<2x64x128xf32, #tpu.memory_space<vmem>> -> memref<1x1x128xf32, #tpu.memory_space<vmem>>
      %583 = tpu.memref_squeeze %582 : memref<1x1x128xf32, #tpu.memory_space<vmem>> -> memref<1x128xf32, #tpu.memory_space<vmem>>
      %584 = tpu.memref_slice %arg7[%c0_i32_407] : memref<2x!tpu.dma_semaphore, #tpu.memory_space<semaphore_mem>> -> memref<1x!tpu.dma_semaphore, #tpu.memory_space<semaphore_mem>>
      %585 = tpu.memref_squeeze %584 : memref<1x!tpu.dma_semaphore, #tpu.memory_space<semaphore_mem>> -> memref<!tpu.dma_semaphore, #tpu.memory_space<semaphore_mem>>
      tpu.enqueue_dma source(%581 : memref<1x128xf32, #tpu.memory_space<any>>) target(%583 : memref<1x128xf32, #tpu.memory_space<vmem>>) target_semaphore(%585 : memref<!tpu.dma_semaphore, #tpu.memory_space<semaphore_mem>>)
      %c40 = arith.constant 40 : index
      %586 = memref.load %arg1[%c40] : memref<64xi32, #tpu.memory_space<smem>>
      %c0_i32_411 = arith.constant 0 : i32
      %c0_i32_412 = arith.constant 0 : i32
      %c0_i32_413 = arith.constant 0 : i32
      %587 = tpu.memref_slice %arg2[%586, %c0_i32_413] : memref<512x128xf32, #tpu.memory_space<any>> -> memref<1x128xf32, #tpu.memory_space<any>>
      %c40_i32_414 = arith.constant 40 : i32
      %c0_i32_415 = arith.constant 0 : i32
      %588 = tpu.memref_slice %arg6[%c0_i32_411, %c40_i32_414, %c0_i32_415] : memref<2x64x128xf32, #tpu.memory_space<vmem>> -> memref<1x1x128xf32, #tpu.memory_space<vmem>>
      %589 = tpu.memref_squeeze %588 : memref<1x1x128xf32, #tpu.memory_space<vmem>> -> memref<1x128xf32, #tpu.memory_space<vmem>>
      %590 = tpu.memref_slice %arg7[%c0_i32_412] : memref<2x!tpu.dma_semaphore, #tpu.memory_space<semaphore_mem>> -> memref<1x!tpu.dma_semaphore, #tpu.memory_space<semaphore_mem>>
      %591 = tpu.memref_squeeze %590 : memref<1x!tpu.dma_semaphore, #tpu.memory_space<semaphore_mem>> -> memref<!tpu.dma_semaphore, #tpu.memory_space<semaphore_mem>>
      tpu.enqueue_dma source(%587 : memref<1x128xf32, #tpu.memory_space<any>>) target(%589 : memref<1x128xf32, #tpu.memory_space<vmem>>) target_semaphore(%591 : memref<!tpu.dma_semaphore, #tpu.memory_space<semaphore_mem>>)
      %c41 = arith.constant 41 : index
      %592 = memref.load %arg1[%c41] : memref<64xi32, #tpu.memory_space<smem>>
      %c0_i32_416 = arith.constant 0 : i32
      %c0_i32_417 = arith.constant 0 : i32
      %c0_i32_418 = arith.constant 0 : i32
      %593 = tpu.memref_slice %arg2[%592, %c0_i32_418] : memref<512x128xf32, #tpu.memory_space<any>> -> memref<1x128xf32, #tpu.memory_space<any>>
      %c41_i32_419 = arith.constant 41 : i32
      %c0_i32_420 = arith.constant 0 : i32
      %594 = tpu.memref_slice %arg6[%c0_i32_416, %c41_i32_419, %c0_i32_420] : memref<2x64x128xf32, #tpu.memory_space<vmem>> -> memref<1x1x128xf32, #tpu.memory_space<vmem>>
      %595 = tpu.memref_squeeze %594 : memref<1x1x128xf32, #tpu.memory_space<vmem>> -> memref<1x128xf32, #tpu.memory_space<vmem>>
      %596 = tpu.memref_slice %arg7[%c0_i32_417] : memref<2x!tpu.dma_semaphore, #tpu.memory_space<semaphore_mem>> -> memref<1x!tpu.dma_semaphore, #tpu.memory_space<semaphore_mem>>
      %597 = tpu.memref_squeeze %596 : memref<1x!tpu.dma_semaphore, #tpu.memory_space<semaphore_mem>> -> memref<!tpu.dma_semaphore, #tpu.memory_space<semaphore_mem>>
      tpu.enqueue_dma source(%593 : memref<1x128xf32, #tpu.memory_space<any>>) target(%595 : memref<1x128xf32, #tpu.memory_space<vmem>>) target_semaphore(%597 : memref<!tpu.dma_semaphore, #tpu.memory_space<semaphore_mem>>)
      %c42 = arith.constant 42 : index
      %598 = memref.load %arg1[%c42] : memref<64xi32, #tpu.memory_space<smem>>
      %c0_i32_421 = arith.constant 0 : i32
      %c0_i32_422 = arith.constant 0 : i32
      %c0_i32_423 = arith.constant 0 : i32
      %599 = tpu.memref_slice %arg2[%598, %c0_i32_423] : memref<512x128xf32, #tpu.memory_space<any>> -> memref<1x128xf32, #tpu.memory_space<any>>
      %c42_i32_424 = arith.constant 42 : i32
      %c0_i32_425 = arith.constant 0 : i32
      %600 = tpu.memref_slice %arg6[%c0_i32_421, %c42_i32_424, %c0_i32_425] : memref<2x64x128xf32, #tpu.memory_space<vmem>> -> memref<1x1x128xf32, #tpu.memory_space<vmem>>
      %601 = tpu.memref_squeeze %600 : memref<1x1x128xf32, #tpu.memory_space<vmem>> -> memref<1x128xf32, #tpu.memory_space<vmem>>
      %602 = tpu.memref_slice %arg7[%c0_i32_422] : memref<2x!tpu.dma_semaphore, #tpu.memory_space<semaphore_mem>> -> memref<1x!tpu.dma_semaphore, #tpu.memory_space<semaphore_mem>>
      %603 = tpu.memref_squeeze %602 : memref<1x!tpu.dma_semaphore, #tpu.memory_space<semaphore_mem>> -> memref<!tpu.dma_semaphore, #tpu.memory_space<semaphore_mem>>
      tpu.enqueue_dma source(%599 : memref<1x128xf32, #tpu.memory_space<any>>) target(%601 : memref<1x128xf32, #tpu.memory_space<vmem>>) target_semaphore(%603 : memref<!tpu.dma_semaphore, #tpu.memory_space<semaphore_mem>>)
      %c43 = arith.constant 43 : index
      %604 = memref.load %arg1[%c43] : memref<64xi32, #tpu.memory_space<smem>>
      %c0_i32_426 = arith.constant 0 : i32
      %c0_i32_427 = arith.constant 0 : i32
      %c0_i32_428 = arith.constant 0 : i32
      %605 = tpu.memref_slice %arg2[%604, %c0_i32_428] : memref<512x128xf32, #tpu.memory_space<any>> -> memref<1x128xf32, #tpu.memory_space<any>>
      %c43_i32_429 = arith.constant 43 : i32
      %c0_i32_430 = arith.constant 0 : i32
      %606 = tpu.memref_slice %arg6[%c0_i32_426, %c43_i32_429, %c0_i32_430] : memref<2x64x128xf32, #tpu.memory_space<vmem>> -> memref<1x1x128xf32, #tpu.memory_space<vmem>>
      %607 = tpu.memref_squeeze %606 : memref<1x1x128xf32, #tpu.memory_space<vmem>> -> memref<1x128xf32, #tpu.memory_space<vmem>>
      %608 = tpu.memref_slice %arg7[%c0_i32_427] : memref<2x!tpu.dma_semaphore, #tpu.memory_space<semaphore_mem>> -> memref<1x!tpu.dma_semaphore, #tpu.memory_space<semaphore_mem>>
      %609 = tpu.memref_squeeze %608 : memref<1x!tpu.dma_semaphore, #tpu.memory_space<semaphore_mem>> -> memref<!tpu.dma_semaphore, #tpu.memory_space<semaphore_mem>>
      tpu.enqueue_dma source(%605 : memref<1x128xf32, #tpu.memory_space<any>>) target(%607 : memref<1x128xf32, #tpu.memory_space<vmem>>) target_semaphore(%609 : memref<!tpu.dma_semaphore, #tpu.memory_space<semaphore_mem>>)
      %c44 = arith.constant 44 : index
      %610 = memref.load %arg1[%c44] : memref<64xi32, #tpu.memory_space<smem>>
      %c0_i32_431 = arith.constant 0 : i32
      %c0_i32_432 = arith.constant 0 : i32
      %c0_i32_433 = arith.constant 0 : i32
      %611 = tpu.memref_slice %arg2[%610, %c0_i32_433] : memref<512x128xf32, #tpu.memory_space<any>> -> memref<1x128xf32, #tpu.memory_space<any>>
      %c44_i32_434 = arith.constant 44 : i32
      %c0_i32_435 = arith.constant 0 : i32
      %612 = tpu.memref_slice %arg6[%c0_i32_431, %c44_i32_434, %c0_i32_435] : memref<2x64x128xf32, #tpu.memory_space<vmem>> -> memref<1x1x128xf32, #tpu.memory_space<vmem>>
      %613 = tpu.memref_squeeze %612 : memref<1x1x128xf32, #tpu.memory_space<vmem>> -> memref<1x128xf32, #tpu.memory_space<vmem>>
      %614 = tpu.memref_slice %arg7[%c0_i32_432] : memref<2x!tpu.dma_semaphore, #tpu.memory_space<semaphore_mem>> -> memref<1x!tpu.dma_semaphore, #tpu.memory_space<semaphore_mem>>
      %615 = tpu.memref_squeeze %614 : memref<1x!tpu.dma_semaphore, #tpu.memory_space<semaphore_mem>> -> memref<!tpu.dma_semaphore, #tpu.memory_space<semaphore_mem>>
      tpu.enqueue_dma source(%611 : memref<1x128xf32, #tpu.memory_space<any>>) target(%613 : memref<1x128xf32, #tpu.memory_space<vmem>>) target_semaphore(%615 : memref<!tpu.dma_semaphore, #tpu.memory_space<semaphore_mem>>)
      %c45 = arith.constant 45 : index
      %616 = memref.load %arg1[%c45] : memref<64xi32, #tpu.memory_space<smem>>
      %c0_i32_436 = arith.constant 0 : i32
      %c0_i32_437 = arith.constant 0 : i32
      %c0_i32_438 = arith.constant 0 : i32
      %617 = tpu.memref_slice %arg2[%616, %c0_i32_438] : memref<512x128xf32, #tpu.memory_space<any>> -> memref<1x128xf32, #tpu.memory_space<any>>
      %c45_i32_439 = arith.constant 45 : i32
      %c0_i32_440 = arith.constant 0 : i32
      %618 = tpu.memref_slice %arg6[%c0_i32_436, %c45_i32_439, %c0_i32_440] : memref<2x64x128xf32, #tpu.memory_space<vmem>> -> memref<1x1x128xf32, #tpu.memory_space<vmem>>
      %619 = tpu.memref_squeeze %618 : memref<1x1x128xf32, #tpu.memory_space<vmem>> -> memref<1x128xf32, #tpu.memory_space<vmem>>
      %620 = tpu.memref_slice %arg7[%c0_i32_437] : memref<2x!tpu.dma_semaphore, #tpu.memory_space<semaphore_mem>> -> memref<1x!tpu.dma_semaphore, #tpu.memory_space<semaphore_mem>>
      %621 = tpu.memref_squeeze %620 : memref<1x!tpu.dma_semaphore, #tpu.memory_space<semaphore_mem>> -> memref<!tpu.dma_semaphore, #tpu.memory_space<semaphore_mem>>
      tpu.enqueue_dma source(%617 : memref<1x128xf32, #tpu.memory_space<any>>) target(%619 : memref<1x128xf32, #tpu.memory_space<vmem>>) target_semaphore(%621 : memref<!tpu.dma_semaphore, #tpu.memory_space<semaphore_mem>>)
      %c46 = arith.constant 46 : index
      %622 = memref.load %arg1[%c46] : memref<64xi32, #tpu.memory_space<smem>>
      %c0_i32_441 = arith.constant 0 : i32
      %c0_i32_442 = arith.constant 0 : i32
      %c0_i32_443 = arith.constant 0 : i32
      %623 = tpu.memref_slice %arg2[%622, %c0_i32_443] : memref<512x128xf32, #tpu.memory_space<any>> -> memref<1x128xf32, #tpu.memory_space<any>>
      %c46_i32_444 = arith.constant 46 : i32
      %c0_i32_445 = arith.constant 0 : i32
      %624 = tpu.memref_slice %arg6[%c0_i32_441, %c46_i32_444, %c0_i32_445] : memref<2x64x128xf32, #tpu.memory_space<vmem>> -> memref<1x1x128xf32, #tpu.memory_space<vmem>>
      %625 = tpu.memref_squeeze %624 : memref<1x1x128xf32, #tpu.memory_space<vmem>> -> memref<1x128xf32, #tpu.memory_space<vmem>>
      %626 = tpu.memref_slice %arg7[%c0_i32_442] : memref<2x!tpu.dma_semaphore, #tpu.memory_space<semaphore_mem>> -> memref<1x!tpu.dma_semaphore, #tpu.memory_space<semaphore_mem>>
      %627 = tpu.memref_squeeze %626 : memref<1x!tpu.dma_semaphore, #tpu.memory_space<semaphore_mem>> -> memref<!tpu.dma_semaphore, #tpu.memory_space<semaphore_mem>>
      tpu.enqueue_dma source(%623 : memref<1x128xf32, #tpu.memory_space<any>>) target(%625 : memref<1x128xf32, #tpu.memory_space<vmem>>) target_semaphore(%627 : memref<!tpu.dma_semaphore, #tpu.memory_space<semaphore_mem>>)
      %c47 = arith.constant 47 : index
      %628 = memref.load %arg1[%c47] : memref<64xi32, #tpu.memory_space<smem>>
      %c0_i32_446 = arith.constant 0 : i32
      %c0_i32_447 = arith.constant 0 : i32
      %c0_i32_448 = arith.constant 0 : i32
      %629 = tpu.memref_slice %arg2[%628, %c0_i32_448] : memref<512x128xf32, #tpu.memory_space<any>> -> memref<1x128xf32, #tpu.memory_space<any>>
      %c47_i32_449 = arith.constant 47 : i32
      %c0_i32_450 = arith.constant 0 : i32
      %630 = tpu.memref_slice %arg6[%c0_i32_446, %c47_i32_449, %c0_i32_450] : memref<2x64x128xf32, #tpu.memory_space<vmem>> -> memref<1x1x128xf32, #tpu.memory_space<vmem>>
      %631 = tpu.memref_squeeze %630 : memref<1x1x128xf32, #tpu.memory_space<vmem>> -> memref<1x128xf32, #tpu.memory_space<vmem>>
      %632 = tpu.memref_slice %arg7[%c0_i32_447] : memref<2x!tpu.dma_semaphore, #tpu.memory_space<semaphore_mem>> -> memref<1x!tpu.dma_semaphore, #tpu.memory_space<semaphore_mem>>
      %633 = tpu.memref_squeeze %632 : memref<1x!tpu.dma_semaphore, #tpu.memory_space<semaphore_mem>> -> memref<!tpu.dma_semaphore, #tpu.memory_space<semaphore_mem>>
      tpu.enqueue_dma source(%629 : memref<1x128xf32, #tpu.memory_space<any>>) target(%631 : memref<1x128xf32, #tpu.memory_space<vmem>>) target_semaphore(%633 : memref<!tpu.dma_semaphore, #tpu.memory_space<semaphore_mem>>)
      %c48 = arith.constant 48 : index
      %634 = memref.load %arg1[%c48] : memref<64xi32, #tpu.memory_space<smem>>
      %c0_i32_451 = arith.constant 0 : i32
      %c0_i32_452 = arith.constant 0 : i32
      %c0_i32_453 = arith.constant 0 : i32
      %635 = tpu.memref_slice %arg2[%634, %c0_i32_453] : memref<512x128xf32, #tpu.memory_space<any>> -> memref<1x128xf32, #tpu.memory_space<any>>
      %c48_i32_454 = arith.constant 48 : i32
      %c0_i32_455 = arith.constant 0 : i32
      %636 = tpu.memref_slice %arg6[%c0_i32_451, %c48_i32_454, %c0_i32_455] : memref<2x64x128xf32, #tpu.memory_space<vmem>> -> memref<1x1x128xf32, #tpu.memory_space<vmem>>
      %637 = tpu.memref_squeeze %636 : memref<1x1x128xf32, #tpu.memory_space<vmem>> -> memref<1x128xf32, #tpu.memory_space<vmem>>
      %638 = tpu.memref_slice %arg7[%c0_i32_452] : memref<2x!tpu.dma_semaphore, #tpu.memory_space<semaphore_mem>> -> memref<1x!tpu.dma_semaphore, #tpu.memory_space<semaphore_mem>>
      %639 = tpu.memref_squeeze %638 : memref<1x!tpu.dma_semaphore, #tpu.memory_space<semaphore_mem>> -> memref<!tpu.dma_semaphore, #tpu.memory_space<semaphore_mem>>
      tpu.enqueue_dma source(%635 : memref<1x128xf32, #tpu.memory_space<any>>) target(%637 : memref<1x128xf32, #tpu.memory_space<vmem>>) target_semaphore(%639 : memref<!tpu.dma_semaphore, #tpu.memory_space<semaphore_mem>>)
      %c49 = arith.constant 49 : index
      %640 = memref.load %arg1[%c49] : memref<64xi32, #tpu.memory_space<smem>>
      %c0_i32_456 = arith.constant 0 : i32
      %c0_i32_457 = arith.constant 0 : i32
      %c0_i32_458 = arith.constant 0 : i32
      %641 = tpu.memref_slice %arg2[%640, %c0_i32_458] : memref<512x128xf32, #tpu.memory_space<any>> -> memref<1x128xf32, #tpu.memory_space<any>>
      %c49_i32_459 = arith.constant 49 : i32
      %c0_i32_460 = arith.constant 0 : i32
      %642 = tpu.memref_slice %arg6[%c0_i32_456, %c49_i32_459, %c0_i32_460] : memref<2x64x128xf32, #tpu.memory_space<vmem>> -> memref<1x1x128xf32, #tpu.memory_space<vmem>>
      %643 = tpu.memref_squeeze %642 : memref<1x1x128xf32, #tpu.memory_space<vmem>> -> memref<1x128xf32, #tpu.memory_space<vmem>>
      %644 = tpu.memref_slice %arg7[%c0_i32_457] : memref<2x!tpu.dma_semaphore, #tpu.memory_space<semaphore_mem>> -> memref<1x!tpu.dma_semaphore, #tpu.memory_space<semaphore_mem>>
      %645 = tpu.memref_squeeze %644 : memref<1x!tpu.dma_semaphore, #tpu.memory_space<semaphore_mem>> -> memref<!tpu.dma_semaphore, #tpu.memory_space<semaphore_mem>>
      tpu.enqueue_dma source(%641 : memref<1x128xf32, #tpu.memory_space<any>>) target(%643 : memref<1x128xf32, #tpu.memory_space<vmem>>) target_semaphore(%645 : memref<!tpu.dma_semaphore, #tpu.memory_space<semaphore_mem>>)
      %c50 = arith.constant 50 : index
      %646 = memref.load %arg1[%c50] : memref<64xi32, #tpu.memory_space<smem>>
      %c0_i32_461 = arith.constant 0 : i32
      %c0_i32_462 = arith.constant 0 : i32
      %c0_i32_463 = arith.constant 0 : i32
      %647 = tpu.memref_slice %arg2[%646, %c0_i32_463] : memref<512x128xf32, #tpu.memory_space<any>> -> memref<1x128xf32, #tpu.memory_space<any>>
      %c50_i32_464 = arith.constant 50 : i32
      %c0_i32_465 = arith.constant 0 : i32
      %648 = tpu.memref_slice %arg6[%c0_i32_461, %c50_i32_464, %c0_i32_465] : memref<2x64x128xf32, #tpu.memory_space<vmem>> -> memref<1x1x128xf32, #tpu.memory_space<vmem>>
      %649 = tpu.memref_squeeze %648 : memref<1x1x128xf32, #tpu.memory_space<vmem>> -> memref<1x128xf32, #tpu.memory_space<vmem>>
      %650 = tpu.memref_slice %arg7[%c0_i32_462] : memref<2x!tpu.dma_semaphore, #tpu.memory_space<semaphore_mem>> -> memref<1x!tpu.dma_semaphore, #tpu.memory_space<semaphore_mem>>
      %651 = tpu.memref_squeeze %650 : memref<1x!tpu.dma_semaphore, #tpu.memory_space<semaphore_mem>> -> memref<!tpu.dma_semaphore, #tpu.memory_space<semaphore_mem>>
      tpu.enqueue_dma source(%647 : memref<1x128xf32, #tpu.memory_space<any>>) target(%649 : memref<1x128xf32, #tpu.memory_space<vmem>>) target_semaphore(%651 : memref<!tpu.dma_semaphore, #tpu.memory_space<semaphore_mem>>)
      %c51 = arith.constant 51 : index
      %652 = memref.load %arg1[%c51] : memref<64xi32, #tpu.memory_space<smem>>
      %c0_i32_466 = arith.constant 0 : i32
      %c0_i32_467 = arith.constant 0 : i32
      %c0_i32_468 = arith.constant 0 : i32
      %653 = tpu.memref_slice %arg2[%652, %c0_i32_468] : memref<512x128xf32, #tpu.memory_space<any>> -> memref<1x128xf32, #tpu.memory_space<any>>
      %c51_i32_469 = arith.constant 51 : i32
      %c0_i32_470 = arith.constant 0 : i32
      %654 = tpu.memref_slice %arg6[%c0_i32_466, %c51_i32_469, %c0_i32_470] : memref<2x64x128xf32, #tpu.memory_space<vmem>> -> memref<1x1x128xf32, #tpu.memory_space<vmem>>
      %655 = tpu.memref_squeeze %654 : memref<1x1x128xf32, #tpu.memory_space<vmem>> -> memref<1x128xf32, #tpu.memory_space<vmem>>
      %656 = tpu.memref_slice %arg7[%c0_i32_467] : memref<2x!tpu.dma_semaphore, #tpu.memory_space<semaphore_mem>> -> memref<1x!tpu.dma_semaphore, #tpu.memory_space<semaphore_mem>>
      %657 = tpu.memref_squeeze %656 : memref<1x!tpu.dma_semaphore, #tpu.memory_space<semaphore_mem>> -> memref<!tpu.dma_semaphore, #tpu.memory_space<semaphore_mem>>
      tpu.enqueue_dma source(%653 : memref<1x128xf32, #tpu.memory_space<any>>) target(%655 : memref<1x128xf32, #tpu.memory_space<vmem>>) target_semaphore(%657 : memref<!tpu.dma_semaphore, #tpu.memory_space<semaphore_mem>>)
      %c52 = arith.constant 52 : index
      %658 = memref.load %arg1[%c52] : memref<64xi32, #tpu.memory_space<smem>>
      %c0_i32_471 = arith.constant 0 : i32
      %c0_i32_472 = arith.constant 0 : i32
      %c0_i32_473 = arith.constant 0 : i32
      %659 = tpu.memref_slice %arg2[%658, %c0_i32_473] : memref<512x128xf32, #tpu.memory_space<any>> -> memref<1x128xf32, #tpu.memory_space<any>>
      %c52_i32_474 = arith.constant 52 : i32
      %c0_i32_475 = arith.constant 0 : i32
      %660 = tpu.memref_slice %arg6[%c0_i32_471, %c52_i32_474, %c0_i32_475] : memref<2x64x128xf32, #tpu.memory_space<vmem>> -> memref<1x1x128xf32, #tpu.memory_space<vmem>>
      %661 = tpu.memref_squeeze %660 : memref<1x1x128xf32, #tpu.memory_space<vmem>> -> memref<1x128xf32, #tpu.memory_space<vmem>>
      %662 = tpu.memref_slice %arg7[%c0_i32_472] : memref<2x!tpu.dma_semaphore, #tpu.memory_space<semaphore_mem>> -> memref<1x!tpu.dma_semaphore, #tpu.memory_space<semaphore_mem>>
      %663 = tpu.memref_squeeze %662 : memref<1x!tpu.dma_semaphore, #tpu.memory_space<semaphore_mem>> -> memref<!tpu.dma_semaphore, #tpu.memory_space<semaphore_mem>>
      tpu.enqueue_dma source(%659 : memref<1x128xf32, #tpu.memory_space<any>>) target(%661 : memref<1x128xf32, #tpu.memory_space<vmem>>) target_semaphore(%663 : memref<!tpu.dma_semaphore, #tpu.memory_space<semaphore_mem>>)
      %c53 = arith.constant 53 : index
      %664 = memref.load %arg1[%c53] : memref<64xi32, #tpu.memory_space<smem>>
      %c0_i32_476 = arith.constant 0 : i32
      %c0_i32_477 = arith.constant 0 : i32
      %c0_i32_478 = arith.constant 0 : i32
      %665 = tpu.memref_slice %arg2[%664, %c0_i32_478] : memref<512x128xf32, #tpu.memory_space<any>> -> memref<1x128xf32, #tpu.memory_space<any>>
      %c53_i32_479 = arith.constant 53 : i32
      %c0_i32_480 = arith.constant 0 : i32
      %666 = tpu.memref_slice %arg6[%c0_i32_476, %c53_i32_479, %c0_i32_480] : memref<2x64x128xf32, #tpu.memory_space<vmem>> -> memref<1x1x128xf32, #tpu.memory_space<vmem>>
      %667 = tpu.memref_squeeze %666 : memref<1x1x128xf32, #tpu.memory_space<vmem>> -> memref<1x128xf32, #tpu.memory_space<vmem>>
      %668 = tpu.memref_slice %arg7[%c0_i32_477] : memref<2x!tpu.dma_semaphore, #tpu.memory_space<semaphore_mem>> -> memref<1x!tpu.dma_semaphore, #tpu.memory_space<semaphore_mem>>
      %669 = tpu.memref_squeeze %668 : memref<1x!tpu.dma_semaphore, #tpu.memory_space<semaphore_mem>> -> memref<!tpu.dma_semaphore, #tpu.memory_space<semaphore_mem>>
      tpu.enqueue_dma source(%665 : memref<1x128xf32, #tpu.memory_space<any>>) target(%667 : memref<1x128xf32, #tpu.memory_space<vmem>>) target_semaphore(%669 : memref<!tpu.dma_semaphore, #tpu.memory_space<semaphore_mem>>)
      %c54 = arith.constant 54 : index
      %670 = memref.load %arg1[%c54] : memref<64xi32, #tpu.memory_space<smem>>
      %c0_i32_481 = arith.constant 0 : i32
      %c0_i32_482 = arith.constant 0 : i32
      %c0_i32_483 = arith.constant 0 : i32
      %671 = tpu.memref_slice %arg2[%670, %c0_i32_483] : memref<512x128xf32, #tpu.memory_space<any>> -> memref<1x128xf32, #tpu.memory_space<any>>
      %c54_i32_484 = arith.constant 54 : i32
      %c0_i32_485 = arith.constant 0 : i32
      %672 = tpu.memref_slice %arg6[%c0_i32_481, %c54_i32_484, %c0_i32_485] : memref<2x64x128xf32, #tpu.memory_space<vmem>> -> memref<1x1x128xf32, #tpu.memory_space<vmem>>
      %673 = tpu.memref_squeeze %672 : memref<1x1x128xf32, #tpu.memory_space<vmem>> -> memref<1x128xf32, #tpu.memory_space<vmem>>
      %674 = tpu.memref_slice %arg7[%c0_i32_482] : memref<2x!tpu.dma_semaphore, #tpu.memory_space<semaphore_mem>> -> memref<1x!tpu.dma_semaphore, #tpu.memory_space<semaphore_mem>>
      %675 = tpu.memref_squeeze %674 : memref<1x!tpu.dma_semaphore, #tpu.memory_space<semaphore_mem>> -> memref<!tpu.dma_semaphore, #tpu.memory_space<semaphore_mem>>
      tpu.enqueue_dma source(%671 : memref<1x128xf32, #tpu.memory_space<any>>) target(%673 : memref<1x128xf32, #tpu.memory_space<vmem>>) target_semaphore(%675 : memref<!tpu.dma_semaphore, #tpu.memory_space<semaphore_mem>>)
      %c55 = arith.constant 55 : index
      %676 = memref.load %arg1[%c55] : memref<64xi32, #tpu.memory_space<smem>>
      %c0_i32_486 = arith.constant 0 : i32
      %c0_i32_487 = arith.constant 0 : i32
      %c0_i32_488 = arith.constant 0 : i32
      %677 = tpu.memref_slice %arg2[%676, %c0_i32_488] : memref<512x128xf32, #tpu.memory_space<any>> -> memref<1x128xf32, #tpu.memory_space<any>>
      %c55_i32_489 = arith.constant 55 : i32
      %c0_i32_490 = arith.constant 0 : i32
      %678 = tpu.memref_slice %arg6[%c0_i32_486, %c55_i32_489, %c0_i32_490] : memref<2x64x128xf32, #tpu.memory_space<vmem>> -> memref<1x1x128xf32, #tpu.memory_space<vmem>>
      %679 = tpu.memref_squeeze %678 : memref<1x1x128xf32, #tpu.memory_space<vmem>> -> memref<1x128xf32, #tpu.memory_space<vmem>>
      %680 = tpu.memref_slice %arg7[%c0_i32_487] : memref<2x!tpu.dma_semaphore, #tpu.memory_space<semaphore_mem>> -> memref<1x!tpu.dma_semaphore, #tpu.memory_space<semaphore_mem>>
      %681 = tpu.memref_squeeze %680 : memref<1x!tpu.dma_semaphore, #tpu.memory_space<semaphore_mem>> -> memref<!tpu.dma_semaphore, #tpu.memory_space<semaphore_mem>>
      tpu.enqueue_dma source(%677 : memref<1x128xf32, #tpu.memory_space<any>>) target(%679 : memref<1x128xf32, #tpu.memory_space<vmem>>) target_semaphore(%681 : memref<!tpu.dma_semaphore, #tpu.memory_space<semaphore_mem>>)
      %c56 = arith.constant 56 : index
      %682 = memref.load %arg1[%c56] : memref<64xi32, #tpu.memory_space<smem>>
      %c0_i32_491 = arith.constant 0 : i32
      %c0_i32_492 = arith.constant 0 : i32
      %c0_i32_493 = arith.constant 0 : i32
      %683 = tpu.memref_slice %arg2[%682, %c0_i32_493] : memref<512x128xf32, #tpu.memory_space<any>> -> memref<1x128xf32, #tpu.memory_space<any>>
      %c56_i32_494 = arith.constant 56 : i32
      %c0_i32_495 = arith.constant 0 : i32
      %684 = tpu.memref_slice %arg6[%c0_i32_491, %c56_i32_494, %c0_i32_495] : memref<2x64x128xf32, #tpu.memory_space<vmem>> -> memref<1x1x128xf32, #tpu.memory_space<vmem>>
      %685 = tpu.memref_squeeze %684 : memref<1x1x128xf32, #tpu.memory_space<vmem>> -> memref<1x128xf32, #tpu.memory_space<vmem>>
      %686 = tpu.memref_slice %arg7[%c0_i32_492] : memref<2x!tpu.dma_semaphore, #tpu.memory_space<semaphore_mem>> -> memref<1x!tpu.dma_semaphore, #tpu.memory_space<semaphore_mem>>
      %687 = tpu.memref_squeeze %686 : memref<1x!tpu.dma_semaphore, #tpu.memory_space<semaphore_mem>> -> memref<!tpu.dma_semaphore, #tpu.memory_space<semaphore_mem>>
      tpu.enqueue_dma source(%683 : memref<1x128xf32, #tpu.memory_space<any>>) target(%685 : memref<1x128xf32, #tpu.memory_space<vmem>>) target_semaphore(%687 : memref<!tpu.dma_semaphore, #tpu.memory_space<semaphore_mem>>)
      %c57 = arith.constant 57 : index
      %688 = memref.load %arg1[%c57] : memref<64xi32, #tpu.memory_space<smem>>
      %c0_i32_496 = arith.constant 0 : i32
      %c0_i32_497 = arith.constant 0 : i32
      %c0_i32_498 = arith.constant 0 : i32
      %689 = tpu.memref_slice %arg2[%688, %c0_i32_498] : memref<512x128xf32, #tpu.memory_space<any>> -> memref<1x128xf32, #tpu.memory_space<any>>
      %c57_i32_499 = arith.constant 57 : i32
      %c0_i32_500 = arith.constant 0 : i32
      %690 = tpu.memref_slice %arg6[%c0_i32_496, %c57_i32_499, %c0_i32_500] : memref<2x64x128xf32, #tpu.memory_space<vmem>> -> memref<1x1x128xf32, #tpu.memory_space<vmem>>
      %691 = tpu.memref_squeeze %690 : memref<1x1x128xf32, #tpu.memory_space<vmem>> -> memref<1x128xf32, #tpu.memory_space<vmem>>
      %692 = tpu.memref_slice %arg7[%c0_i32_497] : memref<2x!tpu.dma_semaphore, #tpu.memory_space<semaphore_mem>> -> memref<1x!tpu.dma_semaphore, #tpu.memory_space<semaphore_mem>>
      %693 = tpu.memref_squeeze %692 : memref<1x!tpu.dma_semaphore, #tpu.memory_space<semaphore_mem>> -> memref<!tpu.dma_semaphore, #tpu.memory_space<semaphore_mem>>
      tpu.enqueue_dma source(%689 : memref<1x128xf32, #tpu.memory_space<any>>) target(%691 : memref<1x128xf32, #tpu.memory_space<vmem>>) target_semaphore(%693 : memref<!tpu.dma_semaphore, #tpu.memory_space<semaphore_mem>>)
      %c58 = arith.constant 58 : index
      %694 = memref.load %arg1[%c58] : memref<64xi32, #tpu.memory_space<smem>>
      %c0_i32_501 = arith.constant 0 : i32
      %c0_i32_502 = arith.constant 0 : i32
      %c0_i32_503 = arith.constant 0 : i32
      %695 = tpu.memref_slice %arg2[%694, %c0_i32_503] : memref<512x128xf32, #tpu.memory_space<any>> -> memref<1x128xf32, #tpu.memory_space<any>>
      %c58_i32_504 = arith.constant 58 : i32
      %c0_i32_505 = arith.constant 0 : i32
      %696 = tpu.memref_slice %arg6[%c0_i32_501, %c58_i32_504, %c0_i32_505] : memref<2x64x128xf32, #tpu.memory_space<vmem>> -> memref<1x1x128xf32, #tpu.memory_space<vmem>>
      %697 = tpu.memref_squeeze %696 : memref<1x1x128xf32, #tpu.memory_space<vmem>> -> memref<1x128xf32, #tpu.memory_space<vmem>>
      %698 = tpu.memref_slice %arg7[%c0_i32_502] : memref<2x!tpu.dma_semaphore, #tpu.memory_space<semaphore_mem>> -> memref<1x!tpu.dma_semaphore, #tpu.memory_space<semaphore_mem>>
      %699 = tpu.memref_squeeze %698 : memref<1x!tpu.dma_semaphore, #tpu.memory_space<semaphore_mem>> -> memref<!tpu.dma_semaphore, #tpu.memory_space<semaphore_mem>>
      tpu.enqueue_dma source(%695 : memref<1x128xf32, #tpu.memory_space<any>>) target(%697 : memref<1x128xf32, #tpu.memory_space<vmem>>) target_semaphore(%699 : memref<!tpu.dma_semaphore, #tpu.memory_space<semaphore_mem>>)
      %c59 = arith.constant 59 : index
      %700 = memref.load %arg1[%c59] : memref<64xi32, #tpu.memory_space<smem>>
      %c0_i32_506 = arith.constant 0 : i32
      %c0_i32_507 = arith.constant 0 : i32
      %c0_i32_508 = arith.constant 0 : i32
      %701 = tpu.memref_slice %arg2[%700, %c0_i32_508] : memref<512x128xf32, #tpu.memory_space<any>> -> memref<1x128xf32, #tpu.memory_space<any>>
      %c59_i32_509 = arith.constant 59 : i32
      %c0_i32_510 = arith.constant 0 : i32
      %702 = tpu.memref_slice %arg6[%c0_i32_506, %c59_i32_509, %c0_i32_510] : memref<2x64x128xf32, #tpu.memory_space<vmem>> -> memref<1x1x128xf32, #tpu.memory_space<vmem>>
      %703 = tpu.memref_squeeze %702 : memref<1x1x128xf32, #tpu.memory_space<vmem>> -> memref<1x128xf32, #tpu.memory_space<vmem>>
      %704 = tpu.memref_slice %arg7[%c0_i32_507] : memref<2x!tpu.dma_semaphore, #tpu.memory_space<semaphore_mem>> -> memref<1x!tpu.dma_semaphore, #tpu.memory_space<semaphore_mem>>
      %705 = tpu.memref_squeeze %704 : memref<1x!tpu.dma_semaphore, #tpu.memory_space<semaphore_mem>> -> memref<!tpu.dma_semaphore, #tpu.memory_space<semaphore_mem>>
      tpu.enqueue_dma source(%701 : memref<1x128xf32, #tpu.memory_space<any>>) target(%703 : memref<1x128xf32, #tpu.memory_space<vmem>>) target_semaphore(%705 : memref<!tpu.dma_semaphore, #tpu.memory_space<semaphore_mem>>)
      %c60 = arith.constant 60 : index
      %706 = memref.load %arg1[%c60] : memref<64xi32, #tpu.memory_space<smem>>
      %c0_i32_511 = arith.constant 0 : i32
      %c0_i32_512 = arith.constant 0 : i32
      %c0_i32_513 = arith.constant 0 : i32
      %707 = tpu.memref_slice %arg2[%706, %c0_i32_513] : memref<512x128xf32, #tpu.memory_space<any>> -> memref<1x128xf32, #tpu.memory_space<any>>
      %c60_i32_514 = arith.constant 60 : i32
      %c0_i32_515 = arith.constant 0 : i32
      %708 = tpu.memref_slice %arg6[%c0_i32_511, %c60_i32_514, %c0_i32_515] : memref<2x64x128xf32, #tpu.memory_space<vmem>> -> memref<1x1x128xf32, #tpu.memory_space<vmem>>
      %709 = tpu.memref_squeeze %708 : memref<1x1x128xf32, #tpu.memory_space<vmem>> -> memref<1x128xf32, #tpu.memory_space<vmem>>
      %710 = tpu.memref_slice %arg7[%c0_i32_512] : memref<2x!tpu.dma_semaphore, #tpu.memory_space<semaphore_mem>> -> memref<1x!tpu.dma_semaphore, #tpu.memory_space<semaphore_mem>>
      %711 = tpu.memref_squeeze %710 : memref<1x!tpu.dma_semaphore, #tpu.memory_space<semaphore_mem>> -> memref<!tpu.dma_semaphore, #tpu.memory_space<semaphore_mem>>
      tpu.enqueue_dma source(%707 : memref<1x128xf32, #tpu.memory_space<any>>) target(%709 : memref<1x128xf32, #tpu.memory_space<vmem>>) target_semaphore(%711 : memref<!tpu.dma_semaphore, #tpu.memory_space<semaphore_mem>>)
      %c61 = arith.constant 61 : index
      %712 = memref.load %arg1[%c61] : memref<64xi32, #tpu.memory_space<smem>>
      %c0_i32_516 = arith.constant 0 : i32
      %c0_i32_517 = arith.constant 0 : i32
      %c0_i32_518 = arith.constant 0 : i32
      %713 = tpu.memref_slice %arg2[%712, %c0_i32_518] : memref<512x128xf32, #tpu.memory_space<any>> -> memref<1x128xf32, #tpu.memory_space<any>>
      %c61_i32_519 = arith.constant 61 : i32
      %c0_i32_520 = arith.constant 0 : i32
      %714 = tpu.memref_slice %arg6[%c0_i32_516, %c61_i32_519, %c0_i32_520] : memref<2x64x128xf32, #tpu.memory_space<vmem>> -> memref<1x1x128xf32, #tpu.memory_space<vmem>>
      %715 = tpu.memref_squeeze %714 : memref<1x1x128xf32, #tpu.memory_space<vmem>> -> memref<1x128xf32, #tpu.memory_space<vmem>>
      %716 = tpu.memref_slice %arg7[%c0_i32_517] : memref<2x!tpu.dma_semaphore, #tpu.memory_space<semaphore_mem>> -> memref<1x!tpu.dma_semaphore, #tpu.memory_space<semaphore_mem>>
      %717 = tpu.memref_squeeze %716 : memref<1x!tpu.dma_semaphore, #tpu.memory_space<semaphore_mem>> -> memref<!tpu.dma_semaphore, #tpu.memory_space<semaphore_mem>>
      tpu.enqueue_dma source(%713 : memref<1x128xf32, #tpu.memory_space<any>>) target(%715 : memref<1x128xf32, #tpu.memory_space<vmem>>) target_semaphore(%717 : memref<!tpu.dma_semaphore, #tpu.memory_space<semaphore_mem>>)
      %c62 = arith.constant 62 : index
      %718 = memref.load %arg1[%c62] : memref<64xi32, #tpu.memory_space<smem>>
      %c0_i32_521 = arith.constant 0 : i32
      %c0_i32_522 = arith.constant 0 : i32
      %c0_i32_523 = arith.constant 0 : i32
      %719 = tpu.memref_slice %arg2[%718, %c0_i32_523] : memref<512x128xf32, #tpu.memory_space<any>> -> memref<1x128xf32, #tpu.memory_space<any>>
      %c62_i32_524 = arith.constant 62 : i32
      %c0_i32_525 = arith.constant 0 : i32
      %720 = tpu.memref_slice %arg6[%c0_i32_521, %c62_i32_524, %c0_i32_525] : memref<2x64x128xf32, #tpu.memory_space<vmem>> -> memref<1x1x128xf32, #tpu.memory_space<vmem>>
      %721 = tpu.memref_squeeze %720 : memref<1x1x128xf32, #tpu.memory_space<vmem>> -> memref<1x128xf32, #tpu.memory_space<vmem>>
      %722 = tpu.memref_slice %arg7[%c0_i32_522] : memref<2x!tpu.dma_semaphore, #tpu.memory_space<semaphore_mem>> -> memref<1x!tpu.dma_semaphore, #tpu.memory_space<semaphore_mem>>
      %723 = tpu.memref_squeeze %722 : memref<1x!tpu.dma_semaphore, #tpu.memory_space<semaphore_mem>> -> memref<!tpu.dma_semaphore, #tpu.memory_space<semaphore_mem>>
      tpu.enqueue_dma source(%719 : memref<1x128xf32, #tpu.memory_space<any>>) target(%721 : memref<1x128xf32, #tpu.memory_space<vmem>>) target_semaphore(%723 : memref<!tpu.dma_semaphore, #tpu.memory_space<semaphore_mem>>)
      %c63 = arith.constant 63 : index
      %724 = memref.load %arg1[%c63] : memref<64xi32, #tpu.memory_space<smem>>
      %c0_i32_526 = arith.constant 0 : i32
      %c0_i32_527 = arith.constant 0 : i32
      %c0_i32_528 = arith.constant 0 : i32
      %725 = tpu.memref_slice %arg2[%724, %c0_i32_528] : memref<512x128xf32, #tpu.memory_space<any>> -> memref<1x128xf32, #tpu.memory_space<any>>
      %c63_i32_529 = arith.constant 63 : i32
      %c0_i32_530 = arith.constant 0 : i32
      %726 = tpu.memref_slice %arg6[%c0_i32_526, %c63_i32_529, %c0_i32_530] : memref<2x64x128xf32, #tpu.memory_space<vmem>> -> memref<1x1x128xf32, #tpu.memory_space<vmem>>
      %727 = tpu.memref_squeeze %726 : memref<1x1x128xf32, #tpu.memory_space<vmem>> -> memref<1x128xf32, #tpu.memory_space<vmem>>
      %728 = tpu.memref_slice %arg7[%c0_i32_527] : memref<2x!tpu.dma_semaphore, #tpu.memory_space<semaphore_mem>> -> memref<1x!tpu.dma_semaphore, #tpu.memory_space<semaphore_mem>>
      %729 = tpu.memref_squeeze %728 : memref<1x!tpu.dma_semaphore, #tpu.memory_space<semaphore_mem>> -> memref<!tpu.dma_semaphore, #tpu.memory_space<semaphore_mem>>
      tpu.enqueue_dma source(%725 : memref<1x128xf32, #tpu.memory_space<any>>) target(%727 : memref<1x128xf32, #tpu.memory_space<vmem>>) target_semaphore(%729 : memref<!tpu.dma_semaphore, #tpu.memory_space<semaphore_mem>>)
    } else {
    }
    %c1_i32 = arith.constant 1 : i32
    %3 = arith.addi %arg0, %c1_i32 : i32
    %c1_i32_1 = arith.constant 1 : i32
    %4 = arith.cmpi slt, %3, %c1_i32_1 : i32
    %5 = arith.extui %4 : i1 to i32
    %c0_i32_2 = arith.constant 0 : i32
    %6 = arith.cmpi ne, %5, %c0_i32_2 : i32
    scf.if %6 {
      %c1_i32_210 = arith.constant 1 : i32
      %346 = arith.addi %arg0, %c1_i32_210 : i32
      %c1_i32_211 = arith.constant 1 : i32
      %347 = arith.addi %arg0, %c1_i32_211 : i32
      %c2_i32_212 = arith.constant 2 : i32
      %c0_i32_213 = arith.constant 0 : i32
      %348 = arith.cmpi eq, %c2_i32_212, %c0_i32_213 : i32
      %c1_i32_214 = arith.constant 1 : i32
      %349 = arith.select %348, %c1_i32_214, %c2_i32_212 : i32
      %350 = arith.remsi %347, %349 : i32
      %c0_i32_215 = arith.constant 0 : i32
      %351 = arith.cmpi ne, %350, %c0_i32_215 : i32
      %c0_i32_216 = arith.constant 0 : i32
      %352 = arith.cmpi slt, %350, %c0_i32_216 : i32
      %c0_i32_217 = arith.constant 0 : i32
      %353 = arith.cmpi slt, %349, %c0_i32_217 : i32
      %354 = arith.xori %352, %353 : i1
      %355 = arith.andi %354, %351 : i1
      %356 = arith.addi %350, %349 : i32
      %357 = arith.select %355, %356, %350 : i32
      %c64_i32 = arith.constant 64 : i32
      %358 = arith.muli %346, %c64_i32 : i32
      %c0_i32_218 = arith.constant 0 : i32
      %359 = arith.addi %358, %c0_i32_218 : i32
      %360 = arith.index_cast %359 : i32 to index
      %361 = memref.load %arg1[%360] : memref<64xi32, #tpu.memory_space<smem>>
      %c0_i32_219 = arith.constant 0 : i32
      %362 = tpu.memref_slice %arg2[%361, %c0_i32_219] : memref<512x128xf32, #tpu.memory_space<any>> -> memref<1x128xf32, #tpu.memory_space<any>>
      %c0_i32_220 = arith.constant 0 : i32
      %c0_i32_221 = arith.constant 0 : i32
      %363 = tpu.memref_slice %arg6[%357, %c0_i32_220, %c0_i32_221] : memref<2x64x128xf32, #tpu.memory_space<vmem>> -> memref<1x1x128xf32, #tpu.memory_space<vmem>>
      %364 = tpu.memref_squeeze %363 : memref<1x1x128xf32, #tpu.memory_space<vmem>> -> memref<1x128xf32, #tpu.memory_space<vmem>>
      %365 = tpu.memref_slice %arg7[%357] : memref<2x!tpu.dma_semaphore, #tpu.memory_space<semaphore_mem>> -> memref<1x!tpu.dma_semaphore, #tpu.memory_space<semaphore_mem>>
      %366 = tpu.memref_squeeze %365 : memref<1x!tpu.dma_semaphore, #tpu.memory_space<semaphore_mem>> -> memref<!tpu.dma_semaphore, #tpu.memory_space<semaphore_mem>>
      tpu.enqueue_dma source(%362 : memref<1x128xf32, #tpu.memory_space<any>>) target(%364 : memref<1x128xf32, #tpu.memory_space<vmem>>) target_semaphore(%366 : memref<!tpu.dma_semaphore, #tpu.memory_space<semaphore_mem>>)
      %c1_i32_222 = arith.constant 1 : i32
      %367 = arith.addi %358, %c1_i32_222 : i32
      %368 = arith.index_cast %367 : i32 to index
      %369 = memref.load %arg1[%368] : memref<64xi32, #tpu.memory_space<smem>>
      %c0_i32_223 = arith.constant 0 : i32
      %370 = tpu.memref_slice %arg2[%369, %c0_i32_223] : memref<512x128xf32, #tpu.memory_space<any>> -> memref<1x128xf32, #tpu.memory_space<any>>
      %c1_i32_224 = arith.constant 1 : i32
      %c0_i32_225 = arith.constant 0 : i32
      %371 = tpu.memref_slice %arg6[%357, %c1_i32_224, %c0_i32_225] : memref<2x64x128xf32, #tpu.memory_space<vmem>> -> memref<1x1x128xf32, #tpu.memory_space<vmem>>
      %372 = tpu.memref_squeeze %371 : memref<1x1x128xf32, #tpu.memory_space<vmem>> -> memref<1x128xf32, #tpu.memory_space<vmem>>
      %373 = tpu.memref_slice %arg7[%357] : memref<2x!tpu.dma_semaphore, #tpu.memory_space<semaphore_mem>> -> memref<1x!tpu.dma_semaphore, #tpu.memory_space<semaphore_mem>>
      %374 = tpu.memref_squeeze %373 : memref<1x!tpu.dma_semaphore, #tpu.memory_space<semaphore_mem>> -> memref<!tpu.dma_semaphore, #tpu.memory_space<semaphore_mem>>
      tpu.enqueue_dma source(%370 : memref<1x128xf32, #tpu.memory_space<any>>) target(%372 : memref<1x128xf32, #tpu.memory_space<vmem>>) target_semaphore(%374 : memref<!tpu.dma_semaphore, #tpu.memory_space<semaphore_mem>>)
      %c2_i32_226 = arith.constant 2 : i32
      %375 = arith.addi %358, %c2_i32_226 : i32
      %376 = arith.index_cast %375 : i32 to index
      %377 = memref.load %arg1[%376] : memref<64xi32, #tpu.memory_space<smem>>
      %c0_i32_227 = arith.constant 0 : i32
      %378 = tpu.memref_slice %arg2[%377, %c0_i32_227] : memref<512x128xf32, #tpu.memory_space<any>> -> memref<1x128xf32, #tpu.memory_space<any>>
      %c2_i32_228 = arith.constant 2 : i32
      %c0_i32_229 = arith.constant 0 : i32
      %379 = tpu.memref_slice %arg6[%357, %c2_i32_228, %c0_i32_229] : memref<2x64x128xf32, #tpu.memory_space<vmem>> -> memref<1x1x128xf32, #tpu.memory_space<vmem>>
      %380 = tpu.memref_squeeze %379 : memref<1x1x128xf32, #tpu.memory_space<vmem>> -> memref<1x128xf32, #tpu.memory_space<vmem>>
      %381 = tpu.memref_slice %arg7[%357] : memref<2x!tpu.dma_semaphore, #tpu.memory_space<semaphore_mem>> -> memref<1x!tpu.dma_semaphore, #tpu.memory_space<semaphore_mem>>
      %382 = tpu.memref_squeeze %381 : memref<1x!tpu.dma_semaphore, #tpu.memory_space<semaphore_mem>> -> memref<!tpu.dma_semaphore, #tpu.memory_space<semaphore_mem>>
      tpu.enqueue_dma source(%378 : memref<1x128xf32, #tpu.memory_space<any>>) target(%380 : memref<1x128xf32, #tpu.memory_space<vmem>>) target_semaphore(%382 : memref<!tpu.dma_semaphore, #tpu.memory_space<semaphore_mem>>)
      %c3_i32_230 = arith.constant 3 : i32
      %383 = arith.addi %358, %c3_i32_230 : i32
      %384 = arith.index_cast %383 : i32 to index
      %385 = memref.load %arg1[%384] : memref<64xi32, #tpu.memory_space<smem>>
      %c0_i32_231 = arith.constant 0 : i32
      %386 = tpu.memref_slice %arg2[%385, %c0_i32_231] : memref<512x128xf32, #tpu.memory_space<any>> -> memref<1x128xf32, #tpu.memory_space<any>>
      %c3_i32_232 = arith.constant 3 : i32
      %c0_i32_233 = arith.constant 0 : i32
      %387 = tpu.memref_slice %arg6[%357, %c3_i32_232, %c0_i32_233] : memref<2x64x128xf32, #tpu.memory_space<vmem>> -> memref<1x1x128xf32, #tpu.memory_space<vmem>>
      %388 = tpu.memref_squeeze %387 : memref<1x1x128xf32, #tpu.memory_space<vmem>> -> memref<1x128xf32, #tpu.memory_space<vmem>>
      %389 = tpu.memref_slice %arg7[%357] : memref<2x!tpu.dma_semaphore, #tpu.memory_space<semaphore_mem>> -> memref<1x!tpu.dma_semaphore, #tpu.memory_space<semaphore_mem>>
      %390 = tpu.memref_squeeze %389 : memref<1x!tpu.dma_semaphore, #tpu.memory_space<semaphore_mem>> -> memref<!tpu.dma_semaphore, #tpu.memory_space<semaphore_mem>>
      tpu.enqueue_dma source(%386 : memref<1x128xf32, #tpu.memory_space<any>>) target(%388 : memref<1x128xf32, #tpu.memory_space<vmem>>) target_semaphore(%390 : memref<!tpu.dma_semaphore, #tpu.memory_space<semaphore_mem>>)
      %c4_i32_234 = arith.constant 4 : i32
      %391 = arith.addi %358, %c4_i32_234 : i32
      %392 = arith.index_cast %391 : i32 to index
      %393 = memref.load %arg1[%392] : memref<64xi32, #tpu.memory_space<smem>>
      %c0_i32_235 = arith.constant 0 : i32
      %394 = tpu.memref_slice %arg2[%393, %c0_i32_235] : memref<512x128xf32, #tpu.memory_space<any>> -> memref<1x128xf32, #tpu.memory_space<any>>
      %c4_i32_236 = arith.constant 4 : i32
      %c0_i32_237 = arith.constant 0 : i32
      %395 = tpu.memref_slice %arg6[%357, %c4_i32_236, %c0_i32_237] : memref<2x64x128xf32, #tpu.memory_space<vmem>> -> memref<1x1x128xf32, #tpu.memory_space<vmem>>
      %396 = tpu.memref_squeeze %395 : memref<1x1x128xf32, #tpu.memory_space<vmem>> -> memref<1x128xf32, #tpu.memory_space<vmem>>
      %397 = tpu.memref_slice %arg7[%357] : memref<2x!tpu.dma_semaphore, #tpu.memory_space<semaphore_mem>> -> memref<1x!tpu.dma_semaphore, #tpu.memory_space<semaphore_mem>>
      %398 = tpu.memref_squeeze %397 : memref<1x!tpu.dma_semaphore, #tpu.memory_space<semaphore_mem>> -> memref<!tpu.dma_semaphore, #tpu.memory_space<semaphore_mem>>
      tpu.enqueue_dma source(%394 : memref<1x128xf32, #tpu.memory_space<any>>) target(%396 : memref<1x128xf32, #tpu.memory_space<vmem>>) target_semaphore(%398 : memref<!tpu.dma_semaphore, #tpu.memory_space<semaphore_mem>>)
      %c5_i32_238 = arith.constant 5 : i32
      %399 = arith.addi %358, %c5_i32_238 : i32
      %400 = arith.index_cast %399 : i32 to index
      %401 = memref.load %arg1[%400] : memref<64xi32, #tpu.memory_space<smem>>
      %c0_i32_239 = arith.constant 0 : i32
      %402 = tpu.memref_slice %arg2[%401, %c0_i32_239] : memref<512x128xf32, #tpu.memory_space<any>> -> memref<1x128xf32, #tpu.memory_space<any>>
      %c5_i32_240 = arith.constant 5 : i32
      %c0_i32_241 = arith.constant 0 : i32
      %403 = tpu.memref_slice %arg6[%357, %c5_i32_240, %c0_i32_241] : memref<2x64x128xf32, #tpu.memory_space<vmem>> -> memref<1x1x128xf32, #tpu.memory_space<vmem>>
      %404 = tpu.memref_squeeze %403 : memref<1x1x128xf32, #tpu.memory_space<vmem>> -> memref<1x128xf32, #tpu.memory_space<vmem>>
      %405 = tpu.memref_slice %arg7[%357] : memref<2x!tpu.dma_semaphore, #tpu.memory_space<semaphore_mem>> -> memref<1x!tpu.dma_semaphore, #tpu.memory_space<semaphore_mem>>
      %406 = tpu.memref_squeeze %405 : memref<1x!tpu.dma_semaphore, #tpu.memory_space<semaphore_mem>> -> memref<!tpu.dma_semaphore, #tpu.memory_space<semaphore_mem>>
      tpu.enqueue_dma source(%402 : memref<1x128xf32, #tpu.memory_space<any>>) target(%404 : memref<1x128xf32, #tpu.memory_space<vmem>>) target_semaphore(%406 : memref<!tpu.dma_semaphore, #tpu.memory_space<semaphore_mem>>)
      %c6_i32_242 = arith.constant 6 : i32
      %407 = arith.addi %358, %c6_i32_242 : i32
      %408 = arith.index_cast %407 : i32 to index
      %409 = memref.load %arg1[%408] : memref<64xi32, #tpu.memory_space<smem>>
      %c0_i32_243 = arith.constant 0 : i32
      %410 = tpu.memref_slice %arg2[%409, %c0_i32_243] : memref<512x128xf32, #tpu.memory_space<any>> -> memref<1x128xf32, #tpu.memory_space<any>>
      %c6_i32_244 = arith.constant 6 : i32
      %c0_i32_245 = arith.constant 0 : i32
      %411 = tpu.memref_slice %arg6[%357, %c6_i32_244, %c0_i32_245] : memref<2x64x128xf32, #tpu.memory_space<vmem>> -> memref<1x1x128xf32, #tpu.memory_space<vmem>>
      %412 = tpu.memref_squeeze %411 : memref<1x1x128xf32, #tpu.memory_space<vmem>> -> memref<1x128xf32, #tpu.memory_space<vmem>>
      %413 = tpu.memref_slice %arg7[%357] : memref<2x!tpu.dma_semaphore, #tpu.memory_space<semaphore_mem>> -> memref<1x!tpu.dma_semaphore, #tpu.memory_space<semaphore_mem>>
      %414 = tpu.memref_squeeze %413 : memref<1x!tpu.dma_semaphore, #tpu.memory_space<semaphore_mem>> -> memref<!tpu.dma_semaphore, #tpu.memory_space<semaphore_mem>>
      tpu.enqueue_dma source(%410 : memref<1x128xf32, #tpu.memory_space<any>>) target(%412 : memref<1x128xf32, #tpu.memory_space<vmem>>) target_semaphore(%414 : memref<!tpu.dma_semaphore, #tpu.memory_space<semaphore_mem>>)
      %c7_i32_246 = arith.constant 7 : i32
      %415 = arith.addi %358, %c7_i32_246 : i32
      %416 = arith.index_cast %415 : i32 to index
      %417 = memref.load %arg1[%416] : memref<64xi32, #tpu.memory_space<smem>>
      %c0_i32_247 = arith.constant 0 : i32
      %418 = tpu.memref_slice %arg2[%417, %c0_i32_247] : memref<512x128xf32, #tpu.memory_space<any>> -> memref<1x128xf32, #tpu.memory_space<any>>
      %c7_i32_248 = arith.constant 7 : i32
      %c0_i32_249 = arith.constant 0 : i32
      %419 = tpu.memref_slice %arg6[%357, %c7_i32_248, %c0_i32_249] : memref<2x64x128xf32, #tpu.memory_space<vmem>> -> memref<1x1x128xf32, #tpu.memory_space<vmem>>
      %420 = tpu.memref_squeeze %419 : memref<1x1x128xf32, #tpu.memory_space<vmem>> -> memref<1x128xf32, #tpu.memory_space<vmem>>
      %421 = tpu.memref_slice %arg7[%357] : memref<2x!tpu.dma_semaphore, #tpu.memory_space<semaphore_mem>> -> memref<1x!tpu.dma_semaphore, #tpu.memory_space<semaphore_mem>>
      %422 = tpu.memref_squeeze %421 : memref<1x!tpu.dma_semaphore, #tpu.memory_space<semaphore_mem>> -> memref<!tpu.dma_semaphore, #tpu.memory_space<semaphore_mem>>
      tpu.enqueue_dma source(%418 : memref<1x128xf32, #tpu.memory_space<any>>) target(%420 : memref<1x128xf32, #tpu.memory_space<vmem>>) target_semaphore(%422 : memref<!tpu.dma_semaphore, #tpu.memory_space<semaphore_mem>>)
      %c8_i32_250 = arith.constant 8 : i32
      %423 = arith.addi %358, %c8_i32_250 : i32
      %424 = arith.index_cast %423 : i32 to index
      %425 = memref.load %arg1[%424] : memref<64xi32, #tpu.memory_space<smem>>
      %c0_i32_251 = arith.constant 0 : i32
      %426 = tpu.memref_slice %arg2[%425, %c0_i32_251] : memref<512x128xf32, #tpu.memory_space<any>> -> memref<1x128xf32, #tpu.memory_space<any>>
      %c8_i32_252 = arith.constant 8 : i32
      %c0_i32_253 = arith.constant 0 : i32
      %427 = tpu.memref_slice %arg6[%357, %c8_i32_252, %c0_i32_253] : memref<2x64x128xf32, #tpu.memory_space<vmem>> -> memref<1x1x128xf32, #tpu.memory_space<vmem>>
      %428 = tpu.memref_squeeze %427 : memref<1x1x128xf32, #tpu.memory_space<vmem>> -> memref<1x128xf32, #tpu.memory_space<vmem>>
      %429 = tpu.memref_slice %arg7[%357] : memref<2x!tpu.dma_semaphore, #tpu.memory_space<semaphore_mem>> -> memref<1x!tpu.dma_semaphore, #tpu.memory_space<semaphore_mem>>
      %430 = tpu.memref_squeeze %429 : memref<1x!tpu.dma_semaphore, #tpu.memory_space<semaphore_mem>> -> memref<!tpu.dma_semaphore, #tpu.memory_space<semaphore_mem>>
      tpu.enqueue_dma source(%426 : memref<1x128xf32, #tpu.memory_space<any>>) target(%428 : memref<1x128xf32, #tpu.memory_space<vmem>>) target_semaphore(%430 : memref<!tpu.dma_semaphore, #tpu.memory_space<semaphore_mem>>)
      %c9_i32_254 = arith.constant 9 : i32
      %431 = arith.addi %358, %c9_i32_254 : i32
      %432 = arith.index_cast %431 : i32 to index
      %433 = memref.load %arg1[%432] : memref<64xi32, #tpu.memory_space<smem>>
      %c0_i32_255 = arith.constant 0 : i32
      %434 = tpu.memref_slice %arg2[%433, %c0_i32_255] : memref<512x128xf32, #tpu.memory_space<any>> -> memref<1x128xf32, #tpu.memory_space<any>>
      %c9_i32_256 = arith.constant 9 : i32
      %c0_i32_257 = arith.constant 0 : i32
      %435 = tpu.memref_slice %arg6[%357, %c9_i32_256, %c0_i32_257] : memref<2x64x128xf32, #tpu.memory_space<vmem>> -> memref<1x1x128xf32, #tpu.memory_space<vmem>>
      %436 = tpu.memref_squeeze %435 : memref<1x1x128xf32, #tpu.memory_space<vmem>> -> memref<1x128xf32, #tpu.memory_space<vmem>>
      %437 = tpu.memref_slice %arg7[%357] : memref<2x!tpu.dma_semaphore, #tpu.memory_space<semaphore_mem>> -> memref<1x!tpu.dma_semaphore, #tpu.memory_space<semaphore_mem>>
      %438 = tpu.memref_squeeze %437 : memref<1x!tpu.dma_semaphore, #tpu.memory_space<semaphore_mem>> -> memref<!tpu.dma_semaphore, #tpu.memory_space<semaphore_mem>>
      tpu.enqueue_dma source(%434 : memref<1x128xf32, #tpu.memory_space<any>>) target(%436 : memref<1x128xf32, #tpu.memory_space<vmem>>) target_semaphore(%438 : memref<!tpu.dma_semaphore, #tpu.memory_space<semaphore_mem>>)
      %c10_i32_258 = arith.constant 10 : i32
      %439 = arith.addi %358, %c10_i32_258 : i32
      %440 = arith.index_cast %439 : i32 to index
      %441 = memref.load %arg1[%440] : memref<64xi32, #tpu.memory_space<smem>>
      %c0_i32_259 = arith.constant 0 : i32
      %442 = tpu.memref_slice %arg2[%441, %c0_i32_259] : memref<512x128xf32, #tpu.memory_space<any>> -> memref<1x128xf32, #tpu.memory_space<any>>
      %c10_i32_260 = arith.constant 10 : i32
      %c0_i32_261 = arith.constant 0 : i32
      %443 = tpu.memref_slice %arg6[%357, %c10_i32_260, %c0_i32_261] : memref<2x64x128xf32, #tpu.memory_space<vmem>> -> memref<1x1x128xf32, #tpu.memory_space<vmem>>
      %444 = tpu.memref_squeeze %443 : memref<1x1x128xf32, #tpu.memory_space<vmem>> -> memref<1x128xf32, #tpu.memory_space<vmem>>
      %445 = tpu.memref_slice %arg7[%357] : memref<2x!tpu.dma_semaphore, #tpu.memory_space<semaphore_mem>> -> memref<1x!tpu.dma_semaphore, #tpu.memory_space<semaphore_mem>>
      %446 = tpu.memref_squeeze %445 : memref<1x!tpu.dma_semaphore, #tpu.memory_space<semaphore_mem>> -> memref<!tpu.dma_semaphore, #tpu.memory_space<semaphore_mem>>
      tpu.enqueue_dma source(%442 : memref<1x128xf32, #tpu.memory_space<any>>) target(%444 : memref<1x128xf32, #tpu.memory_space<vmem>>) target_semaphore(%446 : memref<!tpu.dma_semaphore, #tpu.memory_space<semaphore_mem>>)
      %c11_i32_262 = arith.constant 11 : i32
      %447 = arith.addi %358, %c11_i32_262 : i32
      %448 = arith.index_cast %447 : i32 to index
      %449 = memref.load %arg1[%448] : memref<64xi32, #tpu.memory_space<smem>>
      %c0_i32_263 = arith.constant 0 : i32
      %450 = tpu.memref_slice %arg2[%449, %c0_i32_263] : memref<512x128xf32, #tpu.memory_space<any>> -> memref<1x128xf32, #tpu.memory_space<any>>
      %c11_i32_264 = arith.constant 11 : i32
      %c0_i32_265 = arith.constant 0 : i32
      %451 = tpu.memref_slice %arg6[%357, %c11_i32_264, %c0_i32_265] : memref<2x64x128xf32, #tpu.memory_space<vmem>> -> memref<1x1x128xf32, #tpu.memory_space<vmem>>
      %452 = tpu.memref_squeeze %451 : memref<1x1x128xf32, #tpu.memory_space<vmem>> -> memref<1x128xf32, #tpu.memory_space<vmem>>
      %453 = tpu.memref_slice %arg7[%357] : memref<2x!tpu.dma_semaphore, #tpu.memory_space<semaphore_mem>> -> memref<1x!tpu.dma_semaphore, #tpu.memory_space<semaphore_mem>>
      %454 = tpu.memref_squeeze %453 : memref<1x!tpu.dma_semaphore, #tpu.memory_space<semaphore_mem>> -> memref<!tpu.dma_semaphore, #tpu.memory_space<semaphore_mem>>
      tpu.enqueue_dma source(%450 : memref<1x128xf32, #tpu.memory_space<any>>) target(%452 : memref<1x128xf32, #tpu.memory_space<vmem>>) target_semaphore(%454 : memref<!tpu.dma_semaphore, #tpu.memory_space<semaphore_mem>>)
      %c12_i32_266 = arith.constant 12 : i32
      %455 = arith.addi %358, %c12_i32_266 : i32
      %456 = arith.index_cast %455 : i32 to index
      %457 = memref.load %arg1[%456] : memref<64xi32, #tpu.memory_space<smem>>
      %c0_i32_267 = arith.constant 0 : i32
      %458 = tpu.memref_slice %arg2[%457, %c0_i32_267] : memref<512x128xf32, #tpu.memory_space<any>> -> memref<1x128xf32, #tpu.memory_space<any>>
      %c12_i32_268 = arith.constant 12 : i32
      %c0_i32_269 = arith.constant 0 : i32
      %459 = tpu.memref_slice %arg6[%357, %c12_i32_268, %c0_i32_269] : memref<2x64x128xf32, #tpu.memory_space<vmem>> -> memref<1x1x128xf32, #tpu.memory_space<vmem>>
      %460 = tpu.memref_squeeze %459 : memref<1x1x128xf32, #tpu.memory_space<vmem>> -> memref<1x128xf32, #tpu.memory_space<vmem>>
      %461 = tpu.memref_slice %arg7[%357] : memref<2x!tpu.dma_semaphore, #tpu.memory_space<semaphore_mem>> -> memref<1x!tpu.dma_semaphore, #tpu.memory_space<semaphore_mem>>
      %462 = tpu.memref_squeeze %461 : memref<1x!tpu.dma_semaphore, #tpu.memory_space<semaphore_mem>> -> memref<!tpu.dma_semaphore, #tpu.memory_space<semaphore_mem>>
      tpu.enqueue_dma source(%458 : memref<1x128xf32, #tpu.memory_space<any>>) target(%460 : memref<1x128xf32, #tpu.memory_space<vmem>>) target_semaphore(%462 : memref<!tpu.dma_semaphore, #tpu.memory_space<semaphore_mem>>)
      %c13_i32_270 = arith.constant 13 : i32
      %463 = arith.addi %358, %c13_i32_270 : i32
      %464 = arith.index_cast %463 : i32 to index
      %465 = memref.load %arg1[%464] : memref<64xi32, #tpu.memory_space<smem>>
      %c0_i32_271 = arith.constant 0 : i32
      %466 = tpu.memref_slice %arg2[%465, %c0_i32_271] : memref<512x128xf32, #tpu.memory_space<any>> -> memref<1x128xf32, #tpu.memory_space<any>>
      %c13_i32_272 = arith.constant 13 : i32
      %c0_i32_273 = arith.constant 0 : i32
      %467 = tpu.memref_slice %arg6[%357, %c13_i32_272, %c0_i32_273] : memref<2x64x128xf32, #tpu.memory_space<vmem>> -> memref<1x1x128xf32, #tpu.memory_space<vmem>>
      %468 = tpu.memref_squeeze %467 : memref<1x1x128xf32, #tpu.memory_space<vmem>> -> memref<1x128xf32, #tpu.memory_space<vmem>>
      %469 = tpu.memref_slice %arg7[%357] : memref<2x!tpu.dma_semaphore, #tpu.memory_space<semaphore_mem>> -> memref<1x!tpu.dma_semaphore, #tpu.memory_space<semaphore_mem>>
      %470 = tpu.memref_squeeze %469 : memref<1x!tpu.dma_semaphore, #tpu.memory_space<semaphore_mem>> -> memref<!tpu.dma_semaphore, #tpu.memory_space<semaphore_mem>>
      tpu.enqueue_dma source(%466 : memref<1x128xf32, #tpu.memory_space<any>>) target(%468 : memref<1x128xf32, #tpu.memory_space<vmem>>) target_semaphore(%470 : memref<!tpu.dma_semaphore, #tpu.memory_space<semaphore_mem>>)
      %c14_i32_274 = arith.constant 14 : i32
      %471 = arith.addi %358, %c14_i32_274 : i32
      %472 = arith.index_cast %471 : i32 to index
      %473 = memref.load %arg1[%472] : memref<64xi32, #tpu.memory_space<smem>>
      %c0_i32_275 = arith.constant 0 : i32
      %474 = tpu.memref_slice %arg2[%473, %c0_i32_275] : memref<512x128xf32, #tpu.memory_space<any>> -> memref<1x128xf32, #tpu.memory_space<any>>
      %c14_i32_276 = arith.constant 14 : i32
      %c0_i32_277 = arith.constant 0 : i32
      %475 = tpu.memref_slice %arg6[%357, %c14_i32_276, %c0_i32_277] : memref<2x64x128xf32, #tpu.memory_space<vmem>> -> memref<1x1x128xf32, #tpu.memory_space<vmem>>
      %476 = tpu.memref_squeeze %475 : memref<1x1x128xf32, #tpu.memory_space<vmem>> -> memref<1x128xf32, #tpu.memory_space<vmem>>
      %477 = tpu.memref_slice %arg7[%357] : memref<2x!tpu.dma_semaphore, #tpu.memory_space<semaphore_mem>> -> memref<1x!tpu.dma_semaphore, #tpu.memory_space<semaphore_mem>>
      %478 = tpu.memref_squeeze %477 : memref<1x!tpu.dma_semaphore, #tpu.memory_space<semaphore_mem>> -> memref<!tpu.dma_semaphore, #tpu.memory_space<semaphore_mem>>
      tpu.enqueue_dma source(%474 : memref<1x128xf32, #tpu.memory_space<any>>) target(%476 : memref<1x128xf32, #tpu.memory_space<vmem>>) target_semaphore(%478 : memref<!tpu.dma_semaphore, #tpu.memory_space<semaphore_mem>>)
      %c15_i32_278 = arith.constant 15 : i32
      %479 = arith.addi %358, %c15_i32_278 : i32
      %480 = arith.index_cast %479 : i32 to index
      %481 = memref.load %arg1[%480] : memref<64xi32, #tpu.memory_space<smem>>
      %c0_i32_279 = arith.constant 0 : i32
      %482 = tpu.memref_slice %arg2[%481, %c0_i32_279] : memref<512x128xf32, #tpu.memory_space<any>> -> memref<1x128xf32, #tpu.memory_space<any>>
      %c15_i32_280 = arith.constant 15 : i32
      %c0_i32_281 = arith.constant 0 : i32
      %483 = tpu.memref_slice %arg6[%357, %c15_i32_280, %c0_i32_281] : memref<2x64x128xf32, #tpu.memory_space<vmem>> -> memref<1x1x128xf32, #tpu.memory_space<vmem>>
      %484 = tpu.memref_squeeze %483 : memref<1x1x128xf32, #tpu.memory_space<vmem>> -> memref<1x128xf32, #tpu.memory_space<vmem>>
      %485 = tpu.memref_slice %arg7[%357] : memref<2x!tpu.dma_semaphore, #tpu.memory_space<semaphore_mem>> -> memref<1x!tpu.dma_semaphore, #tpu.memory_space<semaphore_mem>>
      %486 = tpu.memref_squeeze %485 : memref<1x!tpu.dma_semaphore, #tpu.memory_space<semaphore_mem>> -> memref<!tpu.dma_semaphore, #tpu.memory_space<semaphore_mem>>
      tpu.enqueue_dma source(%482 : memref<1x128xf32, #tpu.memory_space<any>>) target(%484 : memref<1x128xf32, #tpu.memory_space<vmem>>) target_semaphore(%486 : memref<!tpu.dma_semaphore, #tpu.memory_space<semaphore_mem>>)
      %c16_i32_282 = arith.constant 16 : i32
      %487 = arith.addi %358, %c16_i32_282 : i32
      %488 = arith.index_cast %487 : i32 to index
      %489 = memref.load %arg1[%488] : memref<64xi32, #tpu.memory_space<smem>>
      %c0_i32_283 = arith.constant 0 : i32
      %490 = tpu.memref_slice %arg2[%489, %c0_i32_283] : memref<512x128xf32, #tpu.memory_space<any>> -> memref<1x128xf32, #tpu.memory_space<any>>
      %c16_i32_284 = arith.constant 16 : i32
      %c0_i32_285 = arith.constant 0 : i32
      %491 = tpu.memref_slice %arg6[%357, %c16_i32_284, %c0_i32_285] : memref<2x64x128xf32, #tpu.memory_space<vmem>> -> memref<1x1x128xf32, #tpu.memory_space<vmem>>
      %492 = tpu.memref_squeeze %491 : memref<1x1x128xf32, #tpu.memory_space<vmem>> -> memref<1x128xf32, #tpu.memory_space<vmem>>
      %493 = tpu.memref_slice %arg7[%357] : memref<2x!tpu.dma_semaphore, #tpu.memory_space<semaphore_mem>> -> memref<1x!tpu.dma_semaphore, #tpu.memory_space<semaphore_mem>>
      %494 = tpu.memref_squeeze %493 : memref<1x!tpu.dma_semaphore, #tpu.memory_space<semaphore_mem>> -> memref<!tpu.dma_semaphore, #tpu.memory_space<semaphore_mem>>
      tpu.enqueue_dma source(%490 : memref<1x128xf32, #tpu.memory_space<any>>) target(%492 : memref<1x128xf32, #tpu.memory_space<vmem>>) target_semaphore(%494 : memref<!tpu.dma_semaphore, #tpu.memory_space<semaphore_mem>>)
      %c17_i32_286 = arith.constant 17 : i32
      %495 = arith.addi %358, %c17_i32_286 : i32
      %496 = arith.index_cast %495 : i32 to index
      %497 = memref.load %arg1[%496] : memref<64xi32, #tpu.memory_space<smem>>
      %c0_i32_287 = arith.constant 0 : i32
      %498 = tpu.memref_slice %arg2[%497, %c0_i32_287] : memref<512x128xf32, #tpu.memory_space<any>> -> memref<1x128xf32, #tpu.memory_space<any>>
      %c17_i32_288 = arith.constant 17 : i32
      %c0_i32_289 = arith.constant 0 : i32
      %499 = tpu.memref_slice %arg6[%357, %c17_i32_288, %c0_i32_289] : memref<2x64x128xf32, #tpu.memory_space<vmem>> -> memref<1x1x128xf32, #tpu.memory_space<vmem>>
      %500 = tpu.memref_squeeze %499 : memref<1x1x128xf32, #tpu.memory_space<vmem>> -> memref<1x128xf32, #tpu.memory_space<vmem>>
      %501 = tpu.memref_slice %arg7[%357] : memref<2x!tpu.dma_semaphore, #tpu.memory_space<semaphore_mem>> -> memref<1x!tpu.dma_semaphore, #tpu.memory_space<semaphore_mem>>
      %502 = tpu.memref_squeeze %501 : memref<1x!tpu.dma_semaphore, #tpu.memory_space<semaphore_mem>> -> memref<!tpu.dma_semaphore, #tpu.memory_space<semaphore_mem>>
      tpu.enqueue_dma source(%498 : memref<1x128xf32, #tpu.memory_space<any>>) target(%500 : memref<1x128xf32, #tpu.memory_space<vmem>>) target_semaphore(%502 : memref<!tpu.dma_semaphore, #tpu.memory_space<semaphore_mem>>)
      %c18_i32_290 = arith.constant 18 : i32
      %503 = arith.addi %358, %c18_i32_290 : i32
      %504 = arith.index_cast %503 : i32 to index
      %505 = memref.load %arg1[%504] : memref<64xi32, #tpu.memory_space<smem>>
      %c0_i32_291 = arith.constant 0 : i32
      %506 = tpu.memref_slice %arg2[%505, %c0_i32_291] : memref<512x128xf32, #tpu.memory_space<any>> -> memref<1x128xf32, #tpu.memory_space<any>>
      %c18_i32_292 = arith.constant 18 : i32
      %c0_i32_293 = arith.constant 0 : i32
      %507 = tpu.memref_slice %arg6[%357, %c18_i32_292, %c0_i32_293] : memref<2x64x128xf32, #tpu.memory_space<vmem>> -> memref<1x1x128xf32, #tpu.memory_space<vmem>>
      %508 = tpu.memref_squeeze %507 : memref<1x1x128xf32, #tpu.memory_space<vmem>> -> memref<1x128xf32, #tpu.memory_space<vmem>>
      %509 = tpu.memref_slice %arg7[%357] : memref<2x!tpu.dma_semaphore, #tpu.memory_space<semaphore_mem>> -> memref<1x!tpu.dma_semaphore, #tpu.memory_space<semaphore_mem>>
      %510 = tpu.memref_squeeze %509 : memref<1x!tpu.dma_semaphore, #tpu.memory_space<semaphore_mem>> -> memref<!tpu.dma_semaphore, #tpu.memory_space<semaphore_mem>>
      tpu.enqueue_dma source(%506 : memref<1x128xf32, #tpu.memory_space<any>>) target(%508 : memref<1x128xf32, #tpu.memory_space<vmem>>) target_semaphore(%510 : memref<!tpu.dma_semaphore, #tpu.memory_space<semaphore_mem>>)
      %c19_i32_294 = arith.constant 19 : i32
      %511 = arith.addi %358, %c19_i32_294 : i32
      %512 = arith.index_cast %511 : i32 to index
      %513 = memref.load %arg1[%512] : memref<64xi32, #tpu.memory_space<smem>>
      %c0_i32_295 = arith.constant 0 : i32
      %514 = tpu.memref_slice %arg2[%513, %c0_i32_295] : memref<512x128xf32, #tpu.memory_space<any>> -> memref<1x128xf32, #tpu.memory_space<any>>
      %c19_i32_296 = arith.constant 19 : i32
      %c0_i32_297 = arith.constant 0 : i32
      %515 = tpu.memref_slice %arg6[%357, %c19_i32_296, %c0_i32_297] : memref<2x64x128xf32, #tpu.memory_space<vmem>> -> memref<1x1x128xf32, #tpu.memory_space<vmem>>
      %516 = tpu.memref_squeeze %515 : memref<1x1x128xf32, #tpu.memory_space<vmem>> -> memref<1x128xf32, #tpu.memory_space<vmem>>
      %517 = tpu.memref_slice %arg7[%357] : memref<2x!tpu.dma_semaphore, #tpu.memory_space<semaphore_mem>> -> memref<1x!tpu.dma_semaphore, #tpu.memory_space<semaphore_mem>>
      %518 = tpu.memref_squeeze %517 : memref<1x!tpu.dma_semaphore, #tpu.memory_space<semaphore_mem>> -> memref<!tpu.dma_semaphore, #tpu.memory_space<semaphore_mem>>
      tpu.enqueue_dma source(%514 : memref<1x128xf32, #tpu.memory_space<any>>) target(%516 : memref<1x128xf32, #tpu.memory_space<vmem>>) target_semaphore(%518 : memref<!tpu.dma_semaphore, #tpu.memory_space<semaphore_mem>>)
      %c20_i32_298 = arith.constant 20 : i32
      %519 = arith.addi %358, %c20_i32_298 : i32
      %520 = arith.index_cast %519 : i32 to index
      %521 = memref.load %arg1[%520] : memref<64xi32, #tpu.memory_space<smem>>
      %c0_i32_299 = arith.constant 0 : i32
      %522 = tpu.memref_slice %arg2[%521, %c0_i32_299] : memref<512x128xf32, #tpu.memory_space<any>> -> memref<1x128xf32, #tpu.memory_space<any>>
      %c20_i32_300 = arith.constant 20 : i32
      %c0_i32_301 = arith.constant 0 : i32
      %523 = tpu.memref_slice %arg6[%357, %c20_i32_300, %c0_i32_301] : memref<2x64x128xf32, #tpu.memory_space<vmem>> -> memref<1x1x128xf32, #tpu.memory_space<vmem>>
      %524 = tpu.memref_squeeze %523 : memref<1x1x128xf32, #tpu.memory_space<vmem>> -> memref<1x128xf32, #tpu.memory_space<vmem>>
      %525 = tpu.memref_slice %arg7[%357] : memref<2x!tpu.dma_semaphore, #tpu.memory_space<semaphore_mem>> -> memref<1x!tpu.dma_semaphore, #tpu.memory_space<semaphore_mem>>
      %526 = tpu.memref_squeeze %525 : memref<1x!tpu.dma_semaphore, #tpu.memory_space<semaphore_mem>> -> memref<!tpu.dma_semaphore, #tpu.memory_space<semaphore_mem>>
      tpu.enqueue_dma source(%522 : memref<1x128xf32, #tpu.memory_space<any>>) target(%524 : memref<1x128xf32, #tpu.memory_space<vmem>>) target_semaphore(%526 : memref<!tpu.dma_semaphore, #tpu.memory_space<semaphore_mem>>)
      %c21_i32_302 = arith.constant 21 : i32
      %527 = arith.addi %358, %c21_i32_302 : i32
      %528 = arith.index_cast %527 : i32 to index
      %529 = memref.load %arg1[%528] : memref<64xi32, #tpu.memory_space<smem>>
      %c0_i32_303 = arith.constant 0 : i32
      %530 = tpu.memref_slice %arg2[%529, %c0_i32_303] : memref<512x128xf32, #tpu.memory_space<any>> -> memref<1x128xf32, #tpu.memory_space<any>>
      %c21_i32_304 = arith.constant 21 : i32
      %c0_i32_305 = arith.constant 0 : i32
      %531 = tpu.memref_slice %arg6[%357, %c21_i32_304, %c0_i32_305] : memref<2x64x128xf32, #tpu.memory_space<vmem>> -> memref<1x1x128xf32, #tpu.memory_space<vmem>>
      %532 = tpu.memref_squeeze %531 : memref<1x1x128xf32, #tpu.memory_space<vmem>> -> memref<1x128xf32, #tpu.memory_space<vmem>>
      %533 = tpu.memref_slice %arg7[%357] : memref<2x!tpu.dma_semaphore, #tpu.memory_space<semaphore_mem>> -> memref<1x!tpu.dma_semaphore, #tpu.memory_space<semaphore_mem>>
      %534 = tpu.memref_squeeze %533 : memref<1x!tpu.dma_semaphore, #tpu.memory_space<semaphore_mem>> -> memref<!tpu.dma_semaphore, #tpu.memory_space<semaphore_mem>>
      tpu.enqueue_dma source(%530 : memref<1x128xf32, #tpu.memory_space<any>>) target(%532 : memref<1x128xf32, #tpu.memory_space<vmem>>) target_semaphore(%534 : memref<!tpu.dma_semaphore, #tpu.memory_space<semaphore_mem>>)
      %c22_i32_306 = arith.constant 22 : i32
      %535 = arith.addi %358, %c22_i32_306 : i32
      %536 = arith.index_cast %535 : i32 to index
      %537 = memref.load %arg1[%536] : memref<64xi32, #tpu.memory_space<smem>>
      %c0_i32_307 = arith.constant 0 : i32
      %538 = tpu.memref_slice %arg2[%537, %c0_i32_307] : memref<512x128xf32, #tpu.memory_space<any>> -> memref<1x128xf32, #tpu.memory_space<any>>
      %c22_i32_308 = arith.constant 22 : i32
      %c0_i32_309 = arith.constant 0 : i32
      %539 = tpu.memref_slice %arg6[%357, %c22_i32_308, %c0_i32_309] : memref<2x64x128xf32, #tpu.memory_space<vmem>> -> memref<1x1x128xf32, #tpu.memory_space<vmem>>
      %540 = tpu.memref_squeeze %539 : memref<1x1x128xf32, #tpu.memory_space<vmem>> -> memref<1x128xf32, #tpu.memory_space<vmem>>
      %541 = tpu.memref_slice %arg7[%357] : memref<2x!tpu.dma_semaphore, #tpu.memory_space<semaphore_mem>> -> memref<1x!tpu.dma_semaphore, #tpu.memory_space<semaphore_mem>>
      %542 = tpu.memref_squeeze %541 : memref<1x!tpu.dma_semaphore, #tpu.memory_space<semaphore_mem>> -> memref<!tpu.dma_semaphore, #tpu.memory_space<semaphore_mem>>
      tpu.enqueue_dma source(%538 : memref<1x128xf32, #tpu.memory_space<any>>) target(%540 : memref<1x128xf32, #tpu.memory_space<vmem>>) target_semaphore(%542 : memref<!tpu.dma_semaphore, #tpu.memory_space<semaphore_mem>>)
      %c23_i32_310 = arith.constant 23 : i32
      %543 = arith.addi %358, %c23_i32_310 : i32
      %544 = arith.index_cast %543 : i32 to index
      %545 = memref.load %arg1[%544] : memref<64xi32, #tpu.memory_space<smem>>
      %c0_i32_311 = arith.constant 0 : i32
      %546 = tpu.memref_slice %arg2[%545, %c0_i32_311] : memref<512x128xf32, #tpu.memory_space<any>> -> memref<1x128xf32, #tpu.memory_space<any>>
      %c23_i32_312 = arith.constant 23 : i32
      %c0_i32_313 = arith.constant 0 : i32
      %547 = tpu.memref_slice %arg6[%357, %c23_i32_312, %c0_i32_313] : memref<2x64x128xf32, #tpu.memory_space<vmem>> -> memref<1x1x128xf32, #tpu.memory_space<vmem>>
      %548 = tpu.memref_squeeze %547 : memref<1x1x128xf32, #tpu.memory_space<vmem>> -> memref<1x128xf32, #tpu.memory_space<vmem>>
      %549 = tpu.memref_slice %arg7[%357] : memref<2x!tpu.dma_semaphore, #tpu.memory_space<semaphore_mem>> -> memref<1x!tpu.dma_semaphore, #tpu.memory_space<semaphore_mem>>
      %550 = tpu.memref_squeeze %549 : memref<1x!tpu.dma_semaphore, #tpu.memory_space<semaphore_mem>> -> memref<!tpu.dma_semaphore, #tpu.memory_space<semaphore_mem>>
      tpu.enqueue_dma source(%546 : memref<1x128xf32, #tpu.memory_space<any>>) target(%548 : memref<1x128xf32, #tpu.memory_space<vmem>>) target_semaphore(%550 : memref<!tpu.dma_semaphore, #tpu.memory_space<semaphore_mem>>)
      %c24_i32_314 = arith.constant 24 : i32
      %551 = arith.addi %358, %c24_i32_314 : i32
      %552 = arith.index_cast %551 : i32 to index
      %553 = memref.load %arg1[%552] : memref<64xi32, #tpu.memory_space<smem>>
      %c0_i32_315 = arith.constant 0 : i32
      %554 = tpu.memref_slice %arg2[%553, %c0_i32_315] : memref<512x128xf32, #tpu.memory_space<any>> -> memref<1x128xf32, #tpu.memory_space<any>>
      %c24_i32_316 = arith.constant 24 : i32
      %c0_i32_317 = arith.constant 0 : i32
      %555 = tpu.memref_slice %arg6[%357, %c24_i32_316, %c0_i32_317] : memref<2x64x128xf32, #tpu.memory_space<vmem>> -> memref<1x1x128xf32, #tpu.memory_space<vmem>>
      %556 = tpu.memref_squeeze %555 : memref<1x1x128xf32, #tpu.memory_space<vmem>> -> memref<1x128xf32, #tpu.memory_space<vmem>>
      %557 = tpu.memref_slice %arg7[%357] : memref<2x!tpu.dma_semaphore, #tpu.memory_space<semaphore_mem>> -> memref<1x!tpu.dma_semaphore, #tpu.memory_space<semaphore_mem>>
      %558 = tpu.memref_squeeze %557 : memref<1x!tpu.dma_semaphore, #tpu.memory_space<semaphore_mem>> -> memref<!tpu.dma_semaphore, #tpu.memory_space<semaphore_mem>>
      tpu.enqueue_dma source(%554 : memref<1x128xf32, #tpu.memory_space<any>>) target(%556 : memref<1x128xf32, #tpu.memory_space<vmem>>) target_semaphore(%558 : memref<!tpu.dma_semaphore, #tpu.memory_space<semaphore_mem>>)
      %c25_i32_318 = arith.constant 25 : i32
      %559 = arith.addi %358, %c25_i32_318 : i32
      %560 = arith.index_cast %559 : i32 to index
      %561 = memref.load %arg1[%560] : memref<64xi32, #tpu.memory_space<smem>>
      %c0_i32_319 = arith.constant 0 : i32
      %562 = tpu.memref_slice %arg2[%561, %c0_i32_319] : memref<512x128xf32, #tpu.memory_space<any>> -> memref<1x128xf32, #tpu.memory_space<any>>
      %c25_i32_320 = arith.constant 25 : i32
      %c0_i32_321 = arith.constant 0 : i32
      %563 = tpu.memref_slice %arg6[%357, %c25_i32_320, %c0_i32_321] : memref<2x64x128xf32, #tpu.memory_space<vmem>> -> memref<1x1x128xf32, #tpu.memory_space<vmem>>
      %564 = tpu.memref_squeeze %563 : memref<1x1x128xf32, #tpu.memory_space<vmem>> -> memref<1x128xf32, #tpu.memory_space<vmem>>
      %565 = tpu.memref_slice %arg7[%357] : memref<2x!tpu.dma_semaphore, #tpu.memory_space<semaphore_mem>> -> memref<1x!tpu.dma_semaphore, #tpu.memory_space<semaphore_mem>>
      %566 = tpu.memref_squeeze %565 : memref<1x!tpu.dma_semaphore, #tpu.memory_space<semaphore_mem>> -> memref<!tpu.dma_semaphore, #tpu.memory_space<semaphore_mem>>
      tpu.enqueue_dma source(%562 : memref<1x128xf32, #tpu.memory_space<any>>) target(%564 : memref<1x128xf32, #tpu.memory_space<vmem>>) target_semaphore(%566 : memref<!tpu.dma_semaphore, #tpu.memory_space<semaphore_mem>>)
      %c26_i32_322 = arith.constant 26 : i32
      %567 = arith.addi %358, %c26_i32_322 : i32
      %568 = arith.index_cast %567 : i32 to index
      %569 = memref.load %arg1[%568] : memref<64xi32, #tpu.memory_space<smem>>
      %c0_i32_323 = arith.constant 0 : i32
      %570 = tpu.memref_slice %arg2[%569, %c0_i32_323] : memref<512x128xf32, #tpu.memory_space<any>> -> memref<1x128xf32, #tpu.memory_space<any>>
      %c26_i32_324 = arith.constant 26 : i32
      %c0_i32_325 = arith.constant 0 : i32
      %571 = tpu.memref_slice %arg6[%357, %c26_i32_324, %c0_i32_325] : memref<2x64x128xf32, #tpu.memory_space<vmem>> -> memref<1x1x128xf32, #tpu.memory_space<vmem>>
      %572 = tpu.memref_squeeze %571 : memref<1x1x128xf32, #tpu.memory_space<vmem>> -> memref<1x128xf32, #tpu.memory_space<vmem>>
      %573 = tpu.memref_slice %arg7[%357] : memref<2x!tpu.dma_semaphore, #tpu.memory_space<semaphore_mem>> -> memref<1x!tpu.dma_semaphore, #tpu.memory_space<semaphore_mem>>
      %574 = tpu.memref_squeeze %573 : memref<1x!tpu.dma_semaphore, #tpu.memory_space<semaphore_mem>> -> memref<!tpu.dma_semaphore, #tpu.memory_space<semaphore_mem>>
      tpu.enqueue_dma source(%570 : memref<1x128xf32, #tpu.memory_space<any>>) target(%572 : memref<1x128xf32, #tpu.memory_space<vmem>>) target_semaphore(%574 : memref<!tpu.dma_semaphore, #tpu.memory_space<semaphore_mem>>)
      %c27_i32_326 = arith.constant 27 : i32
      %575 = arith.addi %358, %c27_i32_326 : i32
      %576 = arith.index_cast %575 : i32 to index
      %577 = memref.load %arg1[%576] : memref<64xi32, #tpu.memory_space<smem>>
      %c0_i32_327 = arith.constant 0 : i32
      %578 = tpu.memref_slice %arg2[%577, %c0_i32_327] : memref<512x128xf32, #tpu.memory_space<any>> -> memref<1x128xf32, #tpu.memory_space<any>>
      %c27_i32_328 = arith.constant 27 : i32
      %c0_i32_329 = arith.constant 0 : i32
      %579 = tpu.memref_slice %arg6[%357, %c27_i32_328, %c0_i32_329] : memref<2x64x128xf32, #tpu.memory_space<vmem>> -> memref<1x1x128xf32, #tpu.memory_space<vmem>>
      %580 = tpu.memref_squeeze %579 : memref<1x1x128xf32, #tpu.memory_space<vmem>> -> memref<1x128xf32, #tpu.memory_space<vmem>>
      %581 = tpu.memref_slice %arg7[%357] : memref<2x!tpu.dma_semaphore, #tpu.memory_space<semaphore_mem>> -> memref<1x!tpu.dma_semaphore, #tpu.memory_space<semaphore_mem>>
      %582 = tpu.memref_squeeze %581 : memref<1x!tpu.dma_semaphore, #tpu.memory_space<semaphore_mem>> -> memref<!tpu.dma_semaphore, #tpu.memory_space<semaphore_mem>>
      tpu.enqueue_dma source(%578 : memref<1x128xf32, #tpu.memory_space<any>>) target(%580 : memref<1x128xf32, #tpu.memory_space<vmem>>) target_semaphore(%582 : memref<!tpu.dma_semaphore, #tpu.memory_space<semaphore_mem>>)
      %c28_i32_330 = arith.constant 28 : i32
      %583 = arith.addi %358, %c28_i32_330 : i32
      %584 = arith.index_cast %583 : i32 to index
      %585 = memref.load %arg1[%584] : memref<64xi32, #tpu.memory_space<smem>>
      %c0_i32_331 = arith.constant 0 : i32
      %586 = tpu.memref_slice %arg2[%585, %c0_i32_331] : memref<512x128xf32, #tpu.memory_space<any>> -> memref<1x128xf32, #tpu.memory_space<any>>
      %c28_i32_332 = arith.constant 28 : i32
      %c0_i32_333 = arith.constant 0 : i32
      %587 = tpu.memref_slice %arg6[%357, %c28_i32_332, %c0_i32_333] : memref<2x64x128xf32, #tpu.memory_space<vmem>> -> memref<1x1x128xf32, #tpu.memory_space<vmem>>
      %588 = tpu.memref_squeeze %587 : memref<1x1x128xf32, #tpu.memory_space<vmem>> -> memref<1x128xf32, #tpu.memory_space<vmem>>
      %589 = tpu.memref_slice %arg7[%357] : memref<2x!tpu.dma_semaphore, #tpu.memory_space<semaphore_mem>> -> memref<1x!tpu.dma_semaphore, #tpu.memory_space<semaphore_mem>>
      %590 = tpu.memref_squeeze %589 : memref<1x!tpu.dma_semaphore, #tpu.memory_space<semaphore_mem>> -> memref<!tpu.dma_semaphore, #tpu.memory_space<semaphore_mem>>
      tpu.enqueue_dma source(%586 : memref<1x128xf32, #tpu.memory_space<any>>) target(%588 : memref<1x128xf32, #tpu.memory_space<vmem>>) target_semaphore(%590 : memref<!tpu.dma_semaphore, #tpu.memory_space<semaphore_mem>>)
      %c29_i32_334 = arith.constant 29 : i32
      %591 = arith.addi %358, %c29_i32_334 : i32
      %592 = arith.index_cast %591 : i32 to index
      %593 = memref.load %arg1[%592] : memref<64xi32, #tpu.memory_space<smem>>
      %c0_i32_335 = arith.constant 0 : i32
      %594 = tpu.memref_slice %arg2[%593, %c0_i32_335] : memref<512x128xf32, #tpu.memory_space<any>> -> memref<1x128xf32, #tpu.memory_space<any>>
      %c29_i32_336 = arith.constant 29 : i32
      %c0_i32_337 = arith.constant 0 : i32
      %595 = tpu.memref_slice %arg6[%357, %c29_i32_336, %c0_i32_337] : memref<2x64x128xf32, #tpu.memory_space<vmem>> -> memref<1x1x128xf32, #tpu.memory_space<vmem>>
      %596 = tpu.memref_squeeze %595 : memref<1x1x128xf32, #tpu.memory_space<vmem>> -> memref<1x128xf32, #tpu.memory_space<vmem>>
      %597 = tpu.memref_slice %arg7[%357] : memref<2x!tpu.dma_semaphore, #tpu.memory_space<semaphore_mem>> -> memref<1x!tpu.dma_semaphore, #tpu.memory_space<semaphore_mem>>
      %598 = tpu.memref_squeeze %597 : memref<1x!tpu.dma_semaphore, #tpu.memory_space<semaphore_mem>> -> memref<!tpu.dma_semaphore, #tpu.memory_space<semaphore_mem>>
      tpu.enqueue_dma source(%594 : memref<1x128xf32, #tpu.memory_space<any>>) target(%596 : memref<1x128xf32, #tpu.memory_space<vmem>>) target_semaphore(%598 : memref<!tpu.dma_semaphore, #tpu.memory_space<semaphore_mem>>)
      %c30_i32_338 = arith.constant 30 : i32
      %599 = arith.addi %358, %c30_i32_338 : i32
      %600 = arith.index_cast %599 : i32 to index
      %601 = memref.load %arg1[%600] : memref<64xi32, #tpu.memory_space<smem>>
      %c0_i32_339 = arith.constant 0 : i32
      %602 = tpu.memref_slice %arg2[%601, %c0_i32_339] : memref<512x128xf32, #tpu.memory_space<any>> -> memref<1x128xf32, #tpu.memory_space<any>>
      %c30_i32_340 = arith.constant 30 : i32
      %c0_i32_341 = arith.constant 0 : i32
      %603 = tpu.memref_slice %arg6[%357, %c30_i32_340, %c0_i32_341] : memref<2x64x128xf32, #tpu.memory_space<vmem>> -> memref<1x1x128xf32, #tpu.memory_space<vmem>>
      %604 = tpu.memref_squeeze %603 : memref<1x1x128xf32, #tpu.memory_space<vmem>> -> memref<1x128xf32, #tpu.memory_space<vmem>>
      %605 = tpu.memref_slice %arg7[%357] : memref<2x!tpu.dma_semaphore, #tpu.memory_space<semaphore_mem>> -> memref<1x!tpu.dma_semaphore, #tpu.memory_space<semaphore_mem>>
      %606 = tpu.memref_squeeze %605 : memref<1x!tpu.dma_semaphore, #tpu.memory_space<semaphore_mem>> -> memref<!tpu.dma_semaphore, #tpu.memory_space<semaphore_mem>>
      tpu.enqueue_dma source(%602 : memref<1x128xf32, #tpu.memory_space<any>>) target(%604 : memref<1x128xf32, #tpu.memory_space<vmem>>) target_semaphore(%606 : memref<!tpu.dma_semaphore, #tpu.memory_space<semaphore_mem>>)
      %c31_i32_342 = arith.constant 31 : i32
      %607 = arith.addi %358, %c31_i32_342 : i32
      %608 = arith.index_cast %607 : i32 to index
      %609 = memref.load %arg1[%608] : memref<64xi32, #tpu.memory_space<smem>>
      %c0_i32_343 = arith.constant 0 : i32
      %610 = tpu.memref_slice %arg2[%609, %c0_i32_343] : memref<512x128xf32, #tpu.memory_space<any>> -> memref<1x128xf32, #tpu.memory_space<any>>
      %c31_i32_344 = arith.constant 31 : i32
      %c0_i32_345 = arith.constant 0 : i32
      %611 = tpu.memref_slice %arg6[%357, %c31_i32_344, %c0_i32_345] : memref<2x64x128xf32, #tpu.memory_space<vmem>> -> memref<1x1x128xf32, #tpu.memory_space<vmem>>
      %612 = tpu.memref_squeeze %611 : memref<1x1x128xf32, #tpu.memory_space<vmem>> -> memref<1x128xf32, #tpu.memory_space<vmem>>
      %613 = tpu.memref_slice %arg7[%357] : memref<2x!tpu.dma_semaphore, #tpu.memory_space<semaphore_mem>> -> memref<1x!tpu.dma_semaphore, #tpu.memory_space<semaphore_mem>>
      %614 = tpu.memref_squeeze %613 : memref<1x!tpu.dma_semaphore, #tpu.memory_space<semaphore_mem>> -> memref<!tpu.dma_semaphore, #tpu.memory_space<semaphore_mem>>
      tpu.enqueue_dma source(%610 : memref<1x128xf32, #tpu.memory_space<any>>) target(%612 : memref<1x128xf32, #tpu.memory_space<vmem>>) target_semaphore(%614 : memref<!tpu.dma_semaphore, #tpu.memory_space<semaphore_mem>>)
      %c32_i32_346 = arith.constant 32 : i32
      %615 = arith.addi %358, %c32_i32_346 : i32
      %616 = arith.index_cast %615 : i32 to index
      %617 = memref.load %arg1[%616] : memref<64xi32, #tpu.memory_space<smem>>
      %c0_i32_347 = arith.constant 0 : i32
      %618 = tpu.memref_slice %arg2[%617, %c0_i32_347] : memref<512x128xf32, #tpu.memory_space<any>> -> memref<1x128xf32, #tpu.memory_space<any>>
      %c32_i32_348 = arith.constant 32 : i32
      %c0_i32_349 = arith.constant 0 : i32
      %619 = tpu.memref_slice %arg6[%357, %c32_i32_348, %c0_i32_349] : memref<2x64x128xf32, #tpu.memory_space<vmem>> -> memref<1x1x128xf32, #tpu.memory_space<vmem>>
      %620 = tpu.memref_squeeze %619 : memref<1x1x128xf32, #tpu.memory_space<vmem>> -> memref<1x128xf32, #tpu.memory_space<vmem>>
      %621 = tpu.memref_slice %arg7[%357] : memref<2x!tpu.dma_semaphore, #tpu.memory_space<semaphore_mem>> -> memref<1x!tpu.dma_semaphore, #tpu.memory_space<semaphore_mem>>
      %622 = tpu.memref_squeeze %621 : memref<1x!tpu.dma_semaphore, #tpu.memory_space<semaphore_mem>> -> memref<!tpu.dma_semaphore, #tpu.memory_space<semaphore_mem>>
      tpu.enqueue_dma source(%618 : memref<1x128xf32, #tpu.memory_space<any>>) target(%620 : memref<1x128xf32, #tpu.memory_space<vmem>>) target_semaphore(%622 : memref<!tpu.dma_semaphore, #tpu.memory_space<semaphore_mem>>)
      %c33_i32_350 = arith.constant 33 : i32
      %623 = arith.addi %358, %c33_i32_350 : i32
      %624 = arith.index_cast %623 : i32 to index
      %625 = memref.load %arg1[%624] : memref<64xi32, #tpu.memory_space<smem>>
      %c0_i32_351 = arith.constant 0 : i32
      %626 = tpu.memref_slice %arg2[%625, %c0_i32_351] : memref<512x128xf32, #tpu.memory_space<any>> -> memref<1x128xf32, #tpu.memory_space<any>>
      %c33_i32_352 = arith.constant 33 : i32
      %c0_i32_353 = arith.constant 0 : i32
      %627 = tpu.memref_slice %arg6[%357, %c33_i32_352, %c0_i32_353] : memref<2x64x128xf32, #tpu.memory_space<vmem>> -> memref<1x1x128xf32, #tpu.memory_space<vmem>>
      %628 = tpu.memref_squeeze %627 : memref<1x1x128xf32, #tpu.memory_space<vmem>> -> memref<1x128xf32, #tpu.memory_space<vmem>>
      %629 = tpu.memref_slice %arg7[%357] : memref<2x!tpu.dma_semaphore, #tpu.memory_space<semaphore_mem>> -> memref<1x!tpu.dma_semaphore, #tpu.memory_space<semaphore_mem>>
      %630 = tpu.memref_squeeze %629 : memref<1x!tpu.dma_semaphore, #tpu.memory_space<semaphore_mem>> -> memref<!tpu.dma_semaphore, #tpu.memory_space<semaphore_mem>>
      tpu.enqueue_dma source(%626 : memref<1x128xf32, #tpu.memory_space<any>>) target(%628 : memref<1x128xf32, #tpu.memory_space<vmem>>) target_semaphore(%630 : memref<!tpu.dma_semaphore, #tpu.memory_space<semaphore_mem>>)
      %c34_i32_354 = arith.constant 34 : i32
      %631 = arith.addi %358, %c34_i32_354 : i32
      %632 = arith.index_cast %631 : i32 to index
      %633 = memref.load %arg1[%632] : memref<64xi32, #tpu.memory_space<smem>>
      %c0_i32_355 = arith.constant 0 : i32
      %634 = tpu.memref_slice %arg2[%633, %c0_i32_355] : memref<512x128xf32, #tpu.memory_space<any>> -> memref<1x128xf32, #tpu.memory_space<any>>
      %c34_i32_356 = arith.constant 34 : i32
      %c0_i32_357 = arith.constant 0 : i32
      %635 = tpu.memref_slice %arg6[%357, %c34_i32_356, %c0_i32_357] : memref<2x64x128xf32, #tpu.memory_space<vmem>> -> memref<1x1x128xf32, #tpu.memory_space<vmem>>
      %636 = tpu.memref_squeeze %635 : memref<1x1x128xf32, #tpu.memory_space<vmem>> -> memref<1x128xf32, #tpu.memory_space<vmem>>
      %637 = tpu.memref_slice %arg7[%357] : memref<2x!tpu.dma_semaphore, #tpu.memory_space<semaphore_mem>> -> memref<1x!tpu.dma_semaphore, #tpu.memory_space<semaphore_mem>>
      %638 = tpu.memref_squeeze %637 : memref<1x!tpu.dma_semaphore, #tpu.memory_space<semaphore_mem>> -> memref<!tpu.dma_semaphore, #tpu.memory_space<semaphore_mem>>
      tpu.enqueue_dma source(%634 : memref<1x128xf32, #tpu.memory_space<any>>) target(%636 : memref<1x128xf32, #tpu.memory_space<vmem>>) target_semaphore(%638 : memref<!tpu.dma_semaphore, #tpu.memory_space<semaphore_mem>>)
      %c35_i32_358 = arith.constant 35 : i32
      %639 = arith.addi %358, %c35_i32_358 : i32
      %640 = arith.index_cast %639 : i32 to index
      %641 = memref.load %arg1[%640] : memref<64xi32, #tpu.memory_space<smem>>
      %c0_i32_359 = arith.constant 0 : i32
      %642 = tpu.memref_slice %arg2[%641, %c0_i32_359] : memref<512x128xf32, #tpu.memory_space<any>> -> memref<1x128xf32, #tpu.memory_space<any>>
      %c35_i32_360 = arith.constant 35 : i32
      %c0_i32_361 = arith.constant 0 : i32
      %643 = tpu.memref_slice %arg6[%357, %c35_i32_360, %c0_i32_361] : memref<2x64x128xf32, #tpu.memory_space<vmem>> -> memref<1x1x128xf32, #tpu.memory_space<vmem>>
      %644 = tpu.memref_squeeze %643 : memref<1x1x128xf32, #tpu.memory_space<vmem>> -> memref<1x128xf32, #tpu.memory_space<vmem>>
      %645 = tpu.memref_slice %arg7[%357] : memref<2x!tpu.dma_semaphore, #tpu.memory_space<semaphore_mem>> -> memref<1x!tpu.dma_semaphore, #tpu.memory_space<semaphore_mem>>
      %646 = tpu.memref_squeeze %645 : memref<1x!tpu.dma_semaphore, #tpu.memory_space<semaphore_mem>> -> memref<!tpu.dma_semaphore, #tpu.memory_space<semaphore_mem>>
      tpu.enqueue_dma source(%642 : memref<1x128xf32, #tpu.memory_space<any>>) target(%644 : memref<1x128xf32, #tpu.memory_space<vmem>>) target_semaphore(%646 : memref<!tpu.dma_semaphore, #tpu.memory_space<semaphore_mem>>)
      %c36_i32_362 = arith.constant 36 : i32
      %647 = arith.addi %358, %c36_i32_362 : i32
      %648 = arith.index_cast %647 : i32 to index
      %649 = memref.load %arg1[%648] : memref<64xi32, #tpu.memory_space<smem>>
      %c0_i32_363 = arith.constant 0 : i32
      %650 = tpu.memref_slice %arg2[%649, %c0_i32_363] : memref<512x128xf32, #tpu.memory_space<any>> -> memref<1x128xf32, #tpu.memory_space<any>>
      %c36_i32_364 = arith.constant 36 : i32
      %c0_i32_365 = arith.constant 0 : i32
      %651 = tpu.memref_slice %arg6[%357, %c36_i32_364, %c0_i32_365] : memref<2x64x128xf32, #tpu.memory_space<vmem>> -> memref<1x1x128xf32, #tpu.memory_space<vmem>>
      %652 = tpu.memref_squeeze %651 : memref<1x1x128xf32, #tpu.memory_space<vmem>> -> memref<1x128xf32, #tpu.memory_space<vmem>>
      %653 = tpu.memref_slice %arg7[%357] : memref<2x!tpu.dma_semaphore, #tpu.memory_space<semaphore_mem>> -> memref<1x!tpu.dma_semaphore, #tpu.memory_space<semaphore_mem>>
      %654 = tpu.memref_squeeze %653 : memref<1x!tpu.dma_semaphore, #tpu.memory_space<semaphore_mem>> -> memref<!tpu.dma_semaphore, #tpu.memory_space<semaphore_mem>>
      tpu.enqueue_dma source(%650 : memref<1x128xf32, #tpu.memory_space<any>>) target(%652 : memref<1x128xf32, #tpu.memory_space<vmem>>) target_semaphore(%654 : memref<!tpu.dma_semaphore, #tpu.memory_space<semaphore_mem>>)
      %c37_i32_366 = arith.constant 37 : i32
      %655 = arith.addi %358, %c37_i32_366 : i32
      %656 = arith.index_cast %655 : i32 to index
      %657 = memref.load %arg1[%656] : memref<64xi32, #tpu.memory_space<smem>>
      %c0_i32_367 = arith.constant 0 : i32
      %658 = tpu.memref_slice %arg2[%657, %c0_i32_367] : memref<512x128xf32, #tpu.memory_space<any>> -> memref<1x128xf32, #tpu.memory_space<any>>
      %c37_i32_368 = arith.constant 37 : i32
      %c0_i32_369 = arith.constant 0 : i32
      %659 = tpu.memref_slice %arg6[%357, %c37_i32_368, %c0_i32_369] : memref<2x64x128xf32, #tpu.memory_space<vmem>> -> memref<1x1x128xf32, #tpu.memory_space<vmem>>
      %660 = tpu.memref_squeeze %659 : memref<1x1x128xf32, #tpu.memory_space<vmem>> -> memref<1x128xf32, #tpu.memory_space<vmem>>
      %661 = tpu.memref_slice %arg7[%357] : memref<2x!tpu.dma_semaphore, #tpu.memory_space<semaphore_mem>> -> memref<1x!tpu.dma_semaphore, #tpu.memory_space<semaphore_mem>>
      %662 = tpu.memref_squeeze %661 : memref<1x!tpu.dma_semaphore, #tpu.memory_space<semaphore_mem>> -> memref<!tpu.dma_semaphore, #tpu.memory_space<semaphore_mem>>
      tpu.enqueue_dma source(%658 : memref<1x128xf32, #tpu.memory_space<any>>) target(%660 : memref<1x128xf32, #tpu.memory_space<vmem>>) target_semaphore(%662 : memref<!tpu.dma_semaphore, #tpu.memory_space<semaphore_mem>>)
      %c38_i32_370 = arith.constant 38 : i32
      %663 = arith.addi %358, %c38_i32_370 : i32
      %664 = arith.index_cast %663 : i32 to index
      %665 = memref.load %arg1[%664] : memref<64xi32, #tpu.memory_space<smem>>
      %c0_i32_371 = arith.constant 0 : i32
      %666 = tpu.memref_slice %arg2[%665, %c0_i32_371] : memref<512x128xf32, #tpu.memory_space<any>> -> memref<1x128xf32, #tpu.memory_space<any>>
      %c38_i32_372 = arith.constant 38 : i32
      %c0_i32_373 = arith.constant 0 : i32
      %667 = tpu.memref_slice %arg6[%357, %c38_i32_372, %c0_i32_373] : memref<2x64x128xf32, #tpu.memory_space<vmem>> -> memref<1x1x128xf32, #tpu.memory_space<vmem>>
      %668 = tpu.memref_squeeze %667 : memref<1x1x128xf32, #tpu.memory_space<vmem>> -> memref<1x128xf32, #tpu.memory_space<vmem>>
      %669 = tpu.memref_slice %arg7[%357] : memref<2x!tpu.dma_semaphore, #tpu.memory_space<semaphore_mem>> -> memref<1x!tpu.dma_semaphore, #tpu.memory_space<semaphore_mem>>
      %670 = tpu.memref_squeeze %669 : memref<1x!tpu.dma_semaphore, #tpu.memory_space<semaphore_mem>> -> memref<!tpu.dma_semaphore, #tpu.memory_space<semaphore_mem>>
      tpu.enqueue_dma source(%666 : memref<1x128xf32, #tpu.memory_space<any>>) target(%668 : memref<1x128xf32, #tpu.memory_space<vmem>>) target_semaphore(%670 : memref<!tpu.dma_semaphore, #tpu.memory_space<semaphore_mem>>)
      %c39_i32_374 = arith.constant 39 : i32
      %671 = arith.addi %358, %c39_i32_374 : i32
      %672 = arith.index_cast %671 : i32 to index
      %673 = memref.load %arg1[%672] : memref<64xi32, #tpu.memory_space<smem>>
      %c0_i32_375 = arith.constant 0 : i32
      %674 = tpu.memref_slice %arg2[%673, %c0_i32_375] : memref<512x128xf32, #tpu.memory_space<any>> -> memref<1x128xf32, #tpu.memory_space<any>>
      %c39_i32_376 = arith.constant 39 : i32
      %c0_i32_377 = arith.constant 0 : i32
      %675 = tpu.memref_slice %arg6[%357, %c39_i32_376, %c0_i32_377] : memref<2x64x128xf32, #tpu.memory_space<vmem>> -> memref<1x1x128xf32, #tpu.memory_space<vmem>>
      %676 = tpu.memref_squeeze %675 : memref<1x1x128xf32, #tpu.memory_space<vmem>> -> memref<1x128xf32, #tpu.memory_space<vmem>>
      %677 = tpu.memref_slice %arg7[%357] : memref<2x!tpu.dma_semaphore, #tpu.memory_space<semaphore_mem>> -> memref<1x!tpu.dma_semaphore, #tpu.memory_space<semaphore_mem>>
      %678 = tpu.memref_squeeze %677 : memref<1x!tpu.dma_semaphore, #tpu.memory_space<semaphore_mem>> -> memref<!tpu.dma_semaphore, #tpu.memory_space<semaphore_mem>>
      tpu.enqueue_dma source(%674 : memref<1x128xf32, #tpu.memory_space<any>>) target(%676 : memref<1x128xf32, #tpu.memory_space<vmem>>) target_semaphore(%678 : memref<!tpu.dma_semaphore, #tpu.memory_space<semaphore_mem>>)
      %c40_i32_378 = arith.constant 40 : i32
      %679 = arith.addi %358, %c40_i32_378 : i32
      %680 = arith.index_cast %679 : i32 to index
      %681 = memref.load %arg1[%680] : memref<64xi32, #tpu.memory_space<smem>>
      %c0_i32_379 = arith.constant 0 : i32
      %682 = tpu.memref_slice %arg2[%681, %c0_i32_379] : memref<512x128xf32, #tpu.memory_space<any>> -> memref<1x128xf32, #tpu.memory_space<any>>
      %c40_i32_380 = arith.constant 40 : i32
      %c0_i32_381 = arith.constant 0 : i32
      %683 = tpu.memref_slice %arg6[%357, %c40_i32_380, %c0_i32_381] : memref<2x64x128xf32, #tpu.memory_space<vmem>> -> memref<1x1x128xf32, #tpu.memory_space<vmem>>
      %684 = tpu.memref_squeeze %683 : memref<1x1x128xf32, #tpu.memory_space<vmem>> -> memref<1x128xf32, #tpu.memory_space<vmem>>
      %685 = tpu.memref_slice %arg7[%357] : memref<2x!tpu.dma_semaphore, #tpu.memory_space<semaphore_mem>> -> memref<1x!tpu.dma_semaphore, #tpu.memory_space<semaphore_mem>>
      %686 = tpu.memref_squeeze %685 : memref<1x!tpu.dma_semaphore, #tpu.memory_space<semaphore_mem>> -> memref<!tpu.dma_semaphore, #tpu.memory_space<semaphore_mem>>
      tpu.enqueue_dma source(%682 : memref<1x128xf32, #tpu.memory_space<any>>) target(%684 : memref<1x128xf32, #tpu.memory_space<vmem>>) target_semaphore(%686 : memref<!tpu.dma_semaphore, #tpu.memory_space<semaphore_mem>>)
      %c41_i32_382 = arith.constant 41 : i32
      %687 = arith.addi %358, %c41_i32_382 : i32
      %688 = arith.index_cast %687 : i32 to index
      %689 = memref.load %arg1[%688] : memref<64xi32, #tpu.memory_space<smem>>
      %c0_i32_383 = arith.constant 0 : i32
      %690 = tpu.memref_slice %arg2[%689, %c0_i32_383] : memref<512x128xf32, #tpu.memory_space<any>> -> memref<1x128xf32, #tpu.memory_space<any>>
      %c41_i32_384 = arith.constant 41 : i32
      %c0_i32_385 = arith.constant 0 : i32
      %691 = tpu.memref_slice %arg6[%357, %c41_i32_384, %c0_i32_385] : memref<2x64x128xf32, #tpu.memory_space<vmem>> -> memref<1x1x128xf32, #tpu.memory_space<vmem>>
      %692 = tpu.memref_squeeze %691 : memref<1x1x128xf32, #tpu.memory_space<vmem>> -> memref<1x128xf32, #tpu.memory_space<vmem>>
      %693 = tpu.memref_slice %arg7[%357] : memref<2x!tpu.dma_semaphore, #tpu.memory_space<semaphore_mem>> -> memref<1x!tpu.dma_semaphore, #tpu.memory_space<semaphore_mem>>
      %694 = tpu.memref_squeeze %693 : memref<1x!tpu.dma_semaphore, #tpu.memory_space<semaphore_mem>> -> memref<!tpu.dma_semaphore, #tpu.memory_space<semaphore_mem>>
      tpu.enqueue_dma source(%690 : memref<1x128xf32, #tpu.memory_space<any>>) target(%692 : memref<1x128xf32, #tpu.memory_space<vmem>>) target_semaphore(%694 : memref<!tpu.dma_semaphore, #tpu.memory_space<semaphore_mem>>)
      %c42_i32_386 = arith.constant 42 : i32
      %695 = arith.addi %358, %c42_i32_386 : i32
      %696 = arith.index_cast %695 : i32 to index
      %697 = memref.load %arg1[%696] : memref<64xi32, #tpu.memory_space<smem>>
      %c0_i32_387 = arith.constant 0 : i32
      %698 = tpu.memref_slice %arg2[%697, %c0_i32_387] : memref<512x128xf32, #tpu.memory_space<any>> -> memref<1x128xf32, #tpu.memory_space<any>>
      %c42_i32_388 = arith.constant 42 : i32
      %c0_i32_389 = arith.constant 0 : i32
      %699 = tpu.memref_slice %arg6[%357, %c42_i32_388, %c0_i32_389] : memref<2x64x128xf32, #tpu.memory_space<vmem>> -> memref<1x1x128xf32, #tpu.memory_space<vmem>>
      %700 = tpu.memref_squeeze %699 : memref<1x1x128xf32, #tpu.memory_space<vmem>> -> memref<1x128xf32, #tpu.memory_space<vmem>>
      %701 = tpu.memref_slice %arg7[%357] : memref<2x!tpu.dma_semaphore, #tpu.memory_space<semaphore_mem>> -> memref<1x!tpu.dma_semaphore, #tpu.memory_space<semaphore_mem>>
      %702 = tpu.memref_squeeze %701 : memref<1x!tpu.dma_semaphore, #tpu.memory_space<semaphore_mem>> -> memref<!tpu.dma_semaphore, #tpu.memory_space<semaphore_mem>>
      tpu.enqueue_dma source(%698 : memref<1x128xf32, #tpu.memory_space<any>>) target(%700 : memref<1x128xf32, #tpu.memory_space<vmem>>) target_semaphore(%702 : memref<!tpu.dma_semaphore, #tpu.memory_space<semaphore_mem>>)
      %c43_i32_390 = arith.constant 43 : i32
      %703 = arith.addi %358, %c43_i32_390 : i32
      %704 = arith.index_cast %703 : i32 to index
      %705 = memref.load %arg1[%704] : memref<64xi32, #tpu.memory_space<smem>>
      %c0_i32_391 = arith.constant 0 : i32
      %706 = tpu.memref_slice %arg2[%705, %c0_i32_391] : memref<512x128xf32, #tpu.memory_space<any>> -> memref<1x128xf32, #tpu.memory_space<any>>
      %c43_i32_392 = arith.constant 43 : i32
      %c0_i32_393 = arith.constant 0 : i32
      %707 = tpu.memref_slice %arg6[%357, %c43_i32_392, %c0_i32_393] : memref<2x64x128xf32, #tpu.memory_space<vmem>> -> memref<1x1x128xf32, #tpu.memory_space<vmem>>
      %708 = tpu.memref_squeeze %707 : memref<1x1x128xf32, #tpu.memory_space<vmem>> -> memref<1x128xf32, #tpu.memory_space<vmem>>
      %709 = tpu.memref_slice %arg7[%357] : memref<2x!tpu.dma_semaphore, #tpu.memory_space<semaphore_mem>> -> memref<1x!tpu.dma_semaphore, #tpu.memory_space<semaphore_mem>>
      %710 = tpu.memref_squeeze %709 : memref<1x!tpu.dma_semaphore, #tpu.memory_space<semaphore_mem>> -> memref<!tpu.dma_semaphore, #tpu.memory_space<semaphore_mem>>
      tpu.enqueue_dma source(%706 : memref<1x128xf32, #tpu.memory_space<any>>) target(%708 : memref<1x128xf32, #tpu.memory_space<vmem>>) target_semaphore(%710 : memref<!tpu.dma_semaphore, #tpu.memory_space<semaphore_mem>>)
      %c44_i32_394 = arith.constant 44 : i32
      %711 = arith.addi %358, %c44_i32_394 : i32
      %712 = arith.index_cast %711 : i32 to index
      %713 = memref.load %arg1[%712] : memref<64xi32, #tpu.memory_space<smem>>
      %c0_i32_395 = arith.constant 0 : i32
      %714 = tpu.memref_slice %arg2[%713, %c0_i32_395] : memref<512x128xf32, #tpu.memory_space<any>> -> memref<1x128xf32, #tpu.memory_space<any>>
      %c44_i32_396 = arith.constant 44 : i32
      %c0_i32_397 = arith.constant 0 : i32
      %715 = tpu.memref_slice %arg6[%357, %c44_i32_396, %c0_i32_397] : memref<2x64x128xf32, #tpu.memory_space<vmem>> -> memref<1x1x128xf32, #tpu.memory_space<vmem>>
      %716 = tpu.memref_squeeze %715 : memref<1x1x128xf32, #tpu.memory_space<vmem>> -> memref<1x128xf32, #tpu.memory_space<vmem>>
      %717 = tpu.memref_slice %arg7[%357] : memref<2x!tpu.dma_semaphore, #tpu.memory_space<semaphore_mem>> -> memref<1x!tpu.dma_semaphore, #tpu.memory_space<semaphore_mem>>
      %718 = tpu.memref_squeeze %717 : memref<1x!tpu.dma_semaphore, #tpu.memory_space<semaphore_mem>> -> memref<!tpu.dma_semaphore, #tpu.memory_space<semaphore_mem>>
      tpu.enqueue_dma source(%714 : memref<1x128xf32, #tpu.memory_space<any>>) target(%716 : memref<1x128xf32, #tpu.memory_space<vmem>>) target_semaphore(%718 : memref<!tpu.dma_semaphore, #tpu.memory_space<semaphore_mem>>)
      %c45_i32_398 = arith.constant 45 : i32
      %719 = arith.addi %358, %c45_i32_398 : i32
      %720 = arith.index_cast %719 : i32 to index
      %721 = memref.load %arg1[%720] : memref<64xi32, #tpu.memory_space<smem>>
      %c0_i32_399 = arith.constant 0 : i32
      %722 = tpu.memref_slice %arg2[%721, %c0_i32_399] : memref<512x128xf32, #tpu.memory_space<any>> -> memref<1x128xf32, #tpu.memory_space<any>>
      %c45_i32_400 = arith.constant 45 : i32
      %c0_i32_401 = arith.constant 0 : i32
      %723 = tpu.memref_slice %arg6[%357, %c45_i32_400, %c0_i32_401] : memref<2x64x128xf32, #tpu.memory_space<vmem>> -> memref<1x1x128xf32, #tpu.memory_space<vmem>>
      %724 = tpu.memref_squeeze %723 : memref<1x1x128xf32, #tpu.memory_space<vmem>> -> memref<1x128xf32, #tpu.memory_space<vmem>>
      %725 = tpu.memref_slice %arg7[%357] : memref<2x!tpu.dma_semaphore, #tpu.memory_space<semaphore_mem>> -> memref<1x!tpu.dma_semaphore, #tpu.memory_space<semaphore_mem>>
      %726 = tpu.memref_squeeze %725 : memref<1x!tpu.dma_semaphore, #tpu.memory_space<semaphore_mem>> -> memref<!tpu.dma_semaphore, #tpu.memory_space<semaphore_mem>>
      tpu.enqueue_dma source(%722 : memref<1x128xf32, #tpu.memory_space<any>>) target(%724 : memref<1x128xf32, #tpu.memory_space<vmem>>) target_semaphore(%726 : memref<!tpu.dma_semaphore, #tpu.memory_space<semaphore_mem>>)
      %c46_i32_402 = arith.constant 46 : i32
      %727 = arith.addi %358, %c46_i32_402 : i32
      %728 = arith.index_cast %727 : i32 to index
      %729 = memref.load %arg1[%728] : memref<64xi32, #tpu.memory_space<smem>>
      %c0_i32_403 = arith.constant 0 : i32
      %730 = tpu.memref_slice %arg2[%729, %c0_i32_403] : memref<512x128xf32, #tpu.memory_space<any>> -> memref<1x128xf32, #tpu.memory_space<any>>
      %c46_i32_404 = arith.constant 46 : i32
      %c0_i32_405 = arith.constant 0 : i32
      %731 = tpu.memref_slice %arg6[%357, %c46_i32_404, %c0_i32_405] : memref<2x64x128xf32, #tpu.memory_space<vmem>> -> memref<1x1x128xf32, #tpu.memory_space<vmem>>
      %732 = tpu.memref_squeeze %731 : memref<1x1x128xf32, #tpu.memory_space<vmem>> -> memref<1x128xf32, #tpu.memory_space<vmem>>
      %733 = tpu.memref_slice %arg7[%357] : memref<2x!tpu.dma_semaphore, #tpu.memory_space<semaphore_mem>> -> memref<1x!tpu.dma_semaphore, #tpu.memory_space<semaphore_mem>>
      %734 = tpu.memref_squeeze %733 : memref<1x!tpu.dma_semaphore, #tpu.memory_space<semaphore_mem>> -> memref<!tpu.dma_semaphore, #tpu.memory_space<semaphore_mem>>
      tpu.enqueue_dma source(%730 : memref<1x128xf32, #tpu.memory_space<any>>) target(%732 : memref<1x128xf32, #tpu.memory_space<vmem>>) target_semaphore(%734 : memref<!tpu.dma_semaphore, #tpu.memory_space<semaphore_mem>>)
      %c47_i32_406 = arith.constant 47 : i32
      %735 = arith.addi %358, %c47_i32_406 : i32
      %736 = arith.index_cast %735 : i32 to index
      %737 = memref.load %arg1[%736] : memref<64xi32, #tpu.memory_space<smem>>
      %c0_i32_407 = arith.constant 0 : i32
      %738 = tpu.memref_slice %arg2[%737, %c0_i32_407] : memref<512x128xf32, #tpu.memory_space<any>> -> memref<1x128xf32, #tpu.memory_space<any>>
      %c47_i32_408 = arith.constant 47 : i32
      %c0_i32_409 = arith.constant 0 : i32
      %739 = tpu.memref_slice %arg6[%357, %c47_i32_408, %c0_i32_409] : memref<2x64x128xf32, #tpu.memory_space<vmem>> -> memref<1x1x128xf32, #tpu.memory_space<vmem>>
      %740 = tpu.memref_squeeze %739 : memref<1x1x128xf32, #tpu.memory_space<vmem>> -> memref<1x128xf32, #tpu.memory_space<vmem>>
      %741 = tpu.memref_slice %arg7[%357] : memref<2x!tpu.dma_semaphore, #tpu.memory_space<semaphore_mem>> -> memref<1x!tpu.dma_semaphore, #tpu.memory_space<semaphore_mem>>
      %742 = tpu.memref_squeeze %741 : memref<1x!tpu.dma_semaphore, #tpu.memory_space<semaphore_mem>> -> memref<!tpu.dma_semaphore, #tpu.memory_space<semaphore_mem>>
      tpu.enqueue_dma source(%738 : memref<1x128xf32, #tpu.memory_space<any>>) target(%740 : memref<1x128xf32, #tpu.memory_space<vmem>>) target_semaphore(%742 : memref<!tpu.dma_semaphore, #tpu.memory_space<semaphore_mem>>)
      %c48_i32_410 = arith.constant 48 : i32
      %743 = arith.addi %358, %c48_i32_410 : i32
      %744 = arith.index_cast %743 : i32 to index
      %745 = memref.load %arg1[%744] : memref<64xi32, #tpu.memory_space<smem>>
      %c0_i32_411 = arith.constant 0 : i32
      %746 = tpu.memref_slice %arg2[%745, %c0_i32_411] : memref<512x128xf32, #tpu.memory_space<any>> -> memref<1x128xf32, #tpu.memory_space<any>>
      %c48_i32_412 = arith.constant 48 : i32
      %c0_i32_413 = arith.constant 0 : i32
      %747 = tpu.memref_slice %arg6[%357, %c48_i32_412, %c0_i32_413] : memref<2x64x128xf32, #tpu.memory_space<vmem>> -> memref<1x1x128xf32, #tpu.memory_space<vmem>>
      %748 = tpu.memref_squeeze %747 : memref<1x1x128xf32, #tpu.memory_space<vmem>> -> memref<1x128xf32, #tpu.memory_space<vmem>>
      %749 = tpu.memref_slice %arg7[%357] : memref<2x!tpu.dma_semaphore, #tpu.memory_space<semaphore_mem>> -> memref<1x!tpu.dma_semaphore, #tpu.memory_space<semaphore_mem>>
      %750 = tpu.memref_squeeze %749 : memref<1x!tpu.dma_semaphore, #tpu.memory_space<semaphore_mem>> -> memref<!tpu.dma_semaphore, #tpu.memory_space<semaphore_mem>>
      tpu.enqueue_dma source(%746 : memref<1x128xf32, #tpu.memory_space<any>>) target(%748 : memref<1x128xf32, #tpu.memory_space<vmem>>) target_semaphore(%750 : memref<!tpu.dma_semaphore, #tpu.memory_space<semaphore_mem>>)
      %c49_i32_414 = arith.constant 49 : i32
      %751 = arith.addi %358, %c49_i32_414 : i32
      %752 = arith.index_cast %751 : i32 to index
      %753 = memref.load %arg1[%752] : memref<64xi32, #tpu.memory_space<smem>>
      %c0_i32_415 = arith.constant 0 : i32
      %754 = tpu.memref_slice %arg2[%753, %c0_i32_415] : memref<512x128xf32, #tpu.memory_space<any>> -> memref<1x128xf32, #tpu.memory_space<any>>
      %c49_i32_416 = arith.constant 49 : i32
      %c0_i32_417 = arith.constant 0 : i32
      %755 = tpu.memref_slice %arg6[%357, %c49_i32_416, %c0_i32_417] : memref<2x64x128xf32, #tpu.memory_space<vmem>> -> memref<1x1x128xf32, #tpu.memory_space<vmem>>
      %756 = tpu.memref_squeeze %755 : memref<1x1x128xf32, #tpu.memory_space<vmem>> -> memref<1x128xf32, #tpu.memory_space<vmem>>
      %757 = tpu.memref_slice %arg7[%357] : memref<2x!tpu.dma_semaphore, #tpu.memory_space<semaphore_mem>> -> memref<1x!tpu.dma_semaphore, #tpu.memory_space<semaphore_mem>>
      %758 = tpu.memref_squeeze %757 : memref<1x!tpu.dma_semaphore, #tpu.memory_space<semaphore_mem>> -> memref<!tpu.dma_semaphore, #tpu.memory_space<semaphore_mem>>
      tpu.enqueue_dma source(%754 : memref<1x128xf32, #tpu.memory_space<any>>) target(%756 : memref<1x128xf32, #tpu.memory_space<vmem>>) target_semaphore(%758 : memref<!tpu.dma_semaphore, #tpu.memory_space<semaphore_mem>>)
      %c50_i32_418 = arith.constant 50 : i32
      %759 = arith.addi %358, %c50_i32_418 : i32
      %760 = arith.index_cast %759 : i32 to index
      %761 = memref.load %arg1[%760] : memref<64xi32, #tpu.memory_space<smem>>
      %c0_i32_419 = arith.constant 0 : i32
      %762 = tpu.memref_slice %arg2[%761, %c0_i32_419] : memref<512x128xf32, #tpu.memory_space<any>> -> memref<1x128xf32, #tpu.memory_space<any>>
      %c50_i32_420 = arith.constant 50 : i32
      %c0_i32_421 = arith.constant 0 : i32
      %763 = tpu.memref_slice %arg6[%357, %c50_i32_420, %c0_i32_421] : memref<2x64x128xf32, #tpu.memory_space<vmem>> -> memref<1x1x128xf32, #tpu.memory_space<vmem>>
      %764 = tpu.memref_squeeze %763 : memref<1x1x128xf32, #tpu.memory_space<vmem>> -> memref<1x128xf32, #tpu.memory_space<vmem>>
      %765 = tpu.memref_slice %arg7[%357] : memref<2x!tpu.dma_semaphore, #tpu.memory_space<semaphore_mem>> -> memref<1x!tpu.dma_semaphore, #tpu.memory_space<semaphore_mem>>
      %766 = tpu.memref_squeeze %765 : memref<1x!tpu.dma_semaphore, #tpu.memory_space<semaphore_mem>> -> memref<!tpu.dma_semaphore, #tpu.memory_space<semaphore_mem>>
      tpu.enqueue_dma source(%762 : memref<1x128xf32, #tpu.memory_space<any>>) target(%764 : memref<1x128xf32, #tpu.memory_space<vmem>>) target_semaphore(%766 : memref<!tpu.dma_semaphore, #tpu.memory_space<semaphore_mem>>)
      %c51_i32_422 = arith.constant 51 : i32
      %767 = arith.addi %358, %c51_i32_422 : i32
      %768 = arith.index_cast %767 : i32 to index
      %769 = memref.load %arg1[%768] : memref<64xi32, #tpu.memory_space<smem>>
      %c0_i32_423 = arith.constant 0 : i32
      %770 = tpu.memref_slice %arg2[%769, %c0_i32_423] : memref<512x128xf32, #tpu.memory_space<any>> -> memref<1x128xf32, #tpu.memory_space<any>>
      %c51_i32_424 = arith.constant 51 : i32
      %c0_i32_425 = arith.constant 0 : i32
      %771 = tpu.memref_slice %arg6[%357, %c51_i32_424, %c0_i32_425] : memref<2x64x128xf32, #tpu.memory_space<vmem>> -> memref<1x1x128xf32, #tpu.memory_space<vmem>>
      %772 = tpu.memref_squeeze %771 : memref<1x1x128xf32, #tpu.memory_space<vmem>> -> memref<1x128xf32, #tpu.memory_space<vmem>>
      %773 = tpu.memref_slice %arg7[%357] : memref<2x!tpu.dma_semaphore, #tpu.memory_space<semaphore_mem>> -> memref<1x!tpu.dma_semaphore, #tpu.memory_space<semaphore_mem>>
      %774 = tpu.memref_squeeze %773 : memref<1x!tpu.dma_semaphore, #tpu.memory_space<semaphore_mem>> -> memref<!tpu.dma_semaphore, #tpu.memory_space<semaphore_mem>>
      tpu.enqueue_dma source(%770 : memref<1x128xf32, #tpu.memory_space<any>>) target(%772 : memref<1x128xf32, #tpu.memory_space<vmem>>) target_semaphore(%774 : memref<!tpu.dma_semaphore, #tpu.memory_space<semaphore_mem>>)
      %c52_i32_426 = arith.constant 52 : i32
      %775 = arith.addi %358, %c52_i32_426 : i32
      %776 = arith.index_cast %775 : i32 to index
      %777 = memref.load %arg1[%776] : memref<64xi32, #tpu.memory_space<smem>>
      %c0_i32_427 = arith.constant 0 : i32
      %778 = tpu.memref_slice %arg2[%777, %c0_i32_427] : memref<512x128xf32, #tpu.memory_space<any>> -> memref<1x128xf32, #tpu.memory_space<any>>
      %c52_i32_428 = arith.constant 52 : i32
      %c0_i32_429 = arith.constant 0 : i32
      %779 = tpu.memref_slice %arg6[%357, %c52_i32_428, %c0_i32_429] : memref<2x64x128xf32, #tpu.memory_space<vmem>> -> memref<1x1x128xf32, #tpu.memory_space<vmem>>
      %780 = tpu.memref_squeeze %779 : memref<1x1x128xf32, #tpu.memory_space<vmem>> -> memref<1x128xf32, #tpu.memory_space<vmem>>
      %781 = tpu.memref_slice %arg7[%357] : memref<2x!tpu.dma_semaphore, #tpu.memory_space<semaphore_mem>> -> memref<1x!tpu.dma_semaphore, #tpu.memory_space<semaphore_mem>>
      %782 = tpu.memref_squeeze %781 : memref<1x!tpu.dma_semaphore, #tpu.memory_space<semaphore_mem>> -> memref<!tpu.dma_semaphore, #tpu.memory_space<semaphore_mem>>
      tpu.enqueue_dma source(%778 : memref<1x128xf32, #tpu.memory_space<any>>) target(%780 : memref<1x128xf32, #tpu.memory_space<vmem>>) target_semaphore(%782 : memref<!tpu.dma_semaphore, #tpu.memory_space<semaphore_mem>>)
      %c53_i32_430 = arith.constant 53 : i32
      %783 = arith.addi %358, %c53_i32_430 : i32
      %784 = arith.index_cast %783 : i32 to index
      %785 = memref.load %arg1[%784] : memref<64xi32, #tpu.memory_space<smem>>
      %c0_i32_431 = arith.constant 0 : i32
      %786 = tpu.memref_slice %arg2[%785, %c0_i32_431] : memref<512x128xf32, #tpu.memory_space<any>> -> memref<1x128xf32, #tpu.memory_space<any>>
      %c53_i32_432 = arith.constant 53 : i32
      %c0_i32_433 = arith.constant 0 : i32
      %787 = tpu.memref_slice %arg6[%357, %c53_i32_432, %c0_i32_433] : memref<2x64x128xf32, #tpu.memory_space<vmem>> -> memref<1x1x128xf32, #tpu.memory_space<vmem>>
      %788 = tpu.memref_squeeze %787 : memref<1x1x128xf32, #tpu.memory_space<vmem>> -> memref<1x128xf32, #tpu.memory_space<vmem>>
      %789 = tpu.memref_slice %arg7[%357] : memref<2x!tpu.dma_semaphore, #tpu.memory_space<semaphore_mem>> -> memref<1x!tpu.dma_semaphore, #tpu.memory_space<semaphore_mem>>
      %790 = tpu.memref_squeeze %789 : memref<1x!tpu.dma_semaphore, #tpu.memory_space<semaphore_mem>> -> memref<!tpu.dma_semaphore, #tpu.memory_space<semaphore_mem>>
      tpu.enqueue_dma source(%786 : memref<1x128xf32, #tpu.memory_space<any>>) target(%788 : memref<1x128xf32, #tpu.memory_space<vmem>>) target_semaphore(%790 : memref<!tpu.dma_semaphore, #tpu.memory_space<semaphore_mem>>)
      %c54_i32_434 = arith.constant 54 : i32
      %791 = arith.addi %358, %c54_i32_434 : i32
      %792 = arith.index_cast %791 : i32 to index
      %793 = memref.load %arg1[%792] : memref<64xi32, #tpu.memory_space<smem>>
      %c0_i32_435 = arith.constant 0 : i32
      %794 = tpu.memref_slice %arg2[%793, %c0_i32_435] : memref<512x128xf32, #tpu.memory_space<any>> -> memref<1x128xf32, #tpu.memory_space<any>>
      %c54_i32_436 = arith.constant 54 : i32
      %c0_i32_437 = arith.constant 0 : i32
      %795 = tpu.memref_slice %arg6[%357, %c54_i32_436, %c0_i32_437] : memref<2x64x128xf32, #tpu.memory_space<vmem>> -> memref<1x1x128xf32, #tpu.memory_space<vmem>>
      %796 = tpu.memref_squeeze %795 : memref<1x1x128xf32, #tpu.memory_space<vmem>> -> memref<1x128xf32, #tpu.memory_space<vmem>>
      %797 = tpu.memref_slice %arg7[%357] : memref<2x!tpu.dma_semaphore, #tpu.memory_space<semaphore_mem>> -> memref<1x!tpu.dma_semaphore, #tpu.memory_space<semaphore_mem>>
      %798 = tpu.memref_squeeze %797 : memref<1x!tpu.dma_semaphore, #tpu.memory_space<semaphore_mem>> -> memref<!tpu.dma_semaphore, #tpu.memory_space<semaphore_mem>>
      tpu.enqueue_dma source(%794 : memref<1x128xf32, #tpu.memory_space<any>>) target(%796 : memref<1x128xf32, #tpu.memory_space<vmem>>) target_semaphore(%798 : memref<!tpu.dma_semaphore, #tpu.memory_space<semaphore_mem>>)
      %c55_i32_438 = arith.constant 55 : i32
      %799 = arith.addi %358, %c55_i32_438 : i32
      %800 = arith.index_cast %799 : i32 to index
      %801 = memref.load %arg1[%800] : memref<64xi32, #tpu.memory_space<smem>>
      %c0_i32_439 = arith.constant 0 : i32
      %802 = tpu.memref_slice %arg2[%801, %c0_i32_439] : memref<512x128xf32, #tpu.memory_space<any>> -> memref<1x128xf32, #tpu.memory_space<any>>
      %c55_i32_440 = arith.constant 55 : i32
      %c0_i32_441 = arith.constant 0 : i32
      %803 = tpu.memref_slice %arg6[%357, %c55_i32_440, %c0_i32_441] : memref<2x64x128xf32, #tpu.memory_space<vmem>> -> memref<1x1x128xf32, #tpu.memory_space<vmem>>
      %804 = tpu.memref_squeeze %803 : memref<1x1x128xf32, #tpu.memory_space<vmem>> -> memref<1x128xf32, #tpu.memory_space<vmem>>
      %805 = tpu.memref_slice %arg7[%357] : memref<2x!tpu.dma_semaphore, #tpu.memory_space<semaphore_mem>> -> memref<1x!tpu.dma_semaphore, #tpu.memory_space<semaphore_mem>>
      %806 = tpu.memref_squeeze %805 : memref<1x!tpu.dma_semaphore, #tpu.memory_space<semaphore_mem>> -> memref<!tpu.dma_semaphore, #tpu.memory_space<semaphore_mem>>
      tpu.enqueue_dma source(%802 : memref<1x128xf32, #tpu.memory_space<any>>) target(%804 : memref<1x128xf32, #tpu.memory_space<vmem>>) target_semaphore(%806 : memref<!tpu.dma_semaphore, #tpu.memory_space<semaphore_mem>>)
      %c56_i32_442 = arith.constant 56 : i32
      %807 = arith.addi %358, %c56_i32_442 : i32
      %808 = arith.index_cast %807 : i32 to index
      %809 = memref.load %arg1[%808] : memref<64xi32, #tpu.memory_space<smem>>
      %c0_i32_443 = arith.constant 0 : i32
      %810 = tpu.memref_slice %arg2[%809, %c0_i32_443] : memref<512x128xf32, #tpu.memory_space<any>> -> memref<1x128xf32, #tpu.memory_space<any>>
      %c56_i32_444 = arith.constant 56 : i32
      %c0_i32_445 = arith.constant 0 : i32
      %811 = tpu.memref_slice %arg6[%357, %c56_i32_444, %c0_i32_445] : memref<2x64x128xf32, #tpu.memory_space<vmem>> -> memref<1x1x128xf32, #tpu.memory_space<vmem>>
      %812 = tpu.memref_squeeze %811 : memref<1x1x128xf32, #tpu.memory_space<vmem>> -> memref<1x128xf32, #tpu.memory_space<vmem>>
      %813 = tpu.memref_slice %arg7[%357] : memref<2x!tpu.dma_semaphore, #tpu.memory_space<semaphore_mem>> -> memref<1x!tpu.dma_semaphore, #tpu.memory_space<semaphore_mem>>
      %814 = tpu.memref_squeeze %813 : memref<1x!tpu.dma_semaphore, #tpu.memory_space<semaphore_mem>> -> memref<!tpu.dma_semaphore, #tpu.memory_space<semaphore_mem>>
      tpu.enqueue_dma source(%810 : memref<1x128xf32, #tpu.memory_space<any>>) target(%812 : memref<1x128xf32, #tpu.memory_space<vmem>>) target_semaphore(%814 : memref<!tpu.dma_semaphore, #tpu.memory_space<semaphore_mem>>)
      %c57_i32_446 = arith.constant 57 : i32
      %815 = arith.addi %358, %c57_i32_446 : i32
      %816 = arith.index_cast %815 : i32 to index
      %817 = memref.load %arg1[%816] : memref<64xi32, #tpu.memory_space<smem>>
      %c0_i32_447 = arith.constant 0 : i32
      %818 = tpu.memref_slice %arg2[%817, %c0_i32_447] : memref<512x128xf32, #tpu.memory_space<any>> -> memref<1x128xf32, #tpu.memory_space<any>>
      %c57_i32_448 = arith.constant 57 : i32
      %c0_i32_449 = arith.constant 0 : i32
      %819 = tpu.memref_slice %arg6[%357, %c57_i32_448, %c0_i32_449] : memref<2x64x128xf32, #tpu.memory_space<vmem>> -> memref<1x1x128xf32, #tpu.memory_space<vmem>>
      %820 = tpu.memref_squeeze %819 : memref<1x1x128xf32, #tpu.memory_space<vmem>> -> memref<1x128xf32, #tpu.memory_space<vmem>>
      %821 = tpu.memref_slice %arg7[%357] : memref<2x!tpu.dma_semaphore, #tpu.memory_space<semaphore_mem>> -> memref<1x!tpu.dma_semaphore, #tpu.memory_space<semaphore_mem>>
      %822 = tpu.memref_squeeze %821 : memref<1x!tpu.dma_semaphore, #tpu.memory_space<semaphore_mem>> -> memref<!tpu.dma_semaphore, #tpu.memory_space<semaphore_mem>>
      tpu.enqueue_dma source(%818 : memref<1x128xf32, #tpu.memory_space<any>>) target(%820 : memref<1x128xf32, #tpu.memory_space<vmem>>) target_semaphore(%822 : memref<!tpu.dma_semaphore, #tpu.memory_space<semaphore_mem>>)
      %c58_i32_450 = arith.constant 58 : i32
      %823 = arith.addi %358, %c58_i32_450 : i32
      %824 = arith.index_cast %823 : i32 to index
      %825 = memref.load %arg1[%824] : memref<64xi32, #tpu.memory_space<smem>>
      %c0_i32_451 = arith.constant 0 : i32
      %826 = tpu.memref_slice %arg2[%825, %c0_i32_451] : memref<512x128xf32, #tpu.memory_space<any>> -> memref<1x128xf32, #tpu.memory_space<any>>
      %c58_i32_452 = arith.constant 58 : i32
      %c0_i32_453 = arith.constant 0 : i32
      %827 = tpu.memref_slice %arg6[%357, %c58_i32_452, %c0_i32_453] : memref<2x64x128xf32, #tpu.memory_space<vmem>> -> memref<1x1x128xf32, #tpu.memory_space<vmem>>
      %828 = tpu.memref_squeeze %827 : memref<1x1x128xf32, #tpu.memory_space<vmem>> -> memref<1x128xf32, #tpu.memory_space<vmem>>
      %829 = tpu.memref_slice %arg7[%357] : memref<2x!tpu.dma_semaphore, #tpu.memory_space<semaphore_mem>> -> memref<1x!tpu.dma_semaphore, #tpu.memory_space<semaphore_mem>>
      %830 = tpu.memref_squeeze %829 : memref<1x!tpu.dma_semaphore, #tpu.memory_space<semaphore_mem>> -> memref<!tpu.dma_semaphore, #tpu.memory_space<semaphore_mem>>
      tpu.enqueue_dma source(%826 : memref<1x128xf32, #tpu.memory_space<any>>) target(%828 : memref<1x128xf32, #tpu.memory_space<vmem>>) target_semaphore(%830 : memref<!tpu.dma_semaphore, #tpu.memory_space<semaphore_mem>>)
      %c59_i32_454 = arith.constant 59 : i32
      %831 = arith.addi %358, %c59_i32_454 : i32
      %832 = arith.index_cast %831 : i32 to index
      %833 = memref.load %arg1[%832] : memref<64xi32, #tpu.memory_space<smem>>
      %c0_i32_455 = arith.constant 0 : i32
      %834 = tpu.memref_slice %arg2[%833, %c0_i32_455] : memref<512x128xf32, #tpu.memory_space<any>> -> memref<1x128xf32, #tpu.memory_space<any>>
      %c59_i32_456 = arith.constant 59 : i32
      %c0_i32_457 = arith.constant 0 : i32
      %835 = tpu.memref_slice %arg6[%357, %c59_i32_456, %c0_i32_457] : memref<2x64x128xf32, #tpu.memory_space<vmem>> -> memref<1x1x128xf32, #tpu.memory_space<vmem>>
      %836 = tpu.memref_squeeze %835 : memref<1x1x128xf32, #tpu.memory_space<vmem>> -> memref<1x128xf32, #tpu.memory_space<vmem>>
      %837 = tpu.memref_slice %arg7[%357] : memref<2x!tpu.dma_semaphore, #tpu.memory_space<semaphore_mem>> -> memref<1x!tpu.dma_semaphore, #tpu.memory_space<semaphore_mem>>
      %838 = tpu.memref_squeeze %837 : memref<1x!tpu.dma_semaphore, #tpu.memory_space<semaphore_mem>> -> memref<!tpu.dma_semaphore, #tpu.memory_space<semaphore_mem>>
      tpu.enqueue_dma source(%834 : memref<1x128xf32, #tpu.memory_space<any>>) target(%836 : memref<1x128xf32, #tpu.memory_space<vmem>>) target_semaphore(%838 : memref<!tpu.dma_semaphore, #tpu.memory_space<semaphore_mem>>)
      %c60_i32_458 = arith.constant 60 : i32
      %839 = arith.addi %358, %c60_i32_458 : i32
      %840 = arith.index_cast %839 : i32 to index
      %841 = memref.load %arg1[%840] : memref<64xi32, #tpu.memory_space<smem>>
      %c0_i32_459 = arith.constant 0 : i32
      %842 = tpu.memref_slice %arg2[%841, %c0_i32_459] : memref<512x128xf32, #tpu.memory_space<any>> -> memref<1x128xf32, #tpu.memory_space<any>>
      %c60_i32_460 = arith.constant 60 : i32
      %c0_i32_461 = arith.constant 0 : i32
      %843 = tpu.memref_slice %arg6[%357, %c60_i32_460, %c0_i32_461] : memref<2x64x128xf32, #tpu.memory_space<vmem>> -> memref<1x1x128xf32, #tpu.memory_space<vmem>>
      %844 = tpu.memref_squeeze %843 : memref<1x1x128xf32, #tpu.memory_space<vmem>> -> memref<1x128xf32, #tpu.memory_space<vmem>>
      %845 = tpu.memref_slice %arg7[%357] : memref<2x!tpu.dma_semaphore, #tpu.memory_space<semaphore_mem>> -> memref<1x!tpu.dma_semaphore, #tpu.memory_space<semaphore_mem>>
      %846 = tpu.memref_squeeze %845 : memref<1x!tpu.dma_semaphore, #tpu.memory_space<semaphore_mem>> -> memref<!tpu.dma_semaphore, #tpu.memory_space<semaphore_mem>>
      tpu.enqueue_dma source(%842 : memref<1x128xf32, #tpu.memory_space<any>>) target(%844 : memref<1x128xf32, #tpu.memory_space<vmem>>) target_semaphore(%846 : memref<!tpu.dma_semaphore, #tpu.memory_space<semaphore_mem>>)
      %c61_i32_462 = arith.constant 61 : i32
      %847 = arith.addi %358, %c61_i32_462 : i32
      %848 = arith.index_cast %847 : i32 to index
      %849 = memref.load %arg1[%848] : memref<64xi32, #tpu.memory_space<smem>>
      %c0_i32_463 = arith.constant 0 : i32
      %850 = tpu.memref_slice %arg2[%849, %c0_i32_463] : memref<512x128xf32, #tpu.memory_space<any>> -> memref<1x128xf32, #tpu.memory_space<any>>
      %c61_i32_464 = arith.constant 61 : i32
      %c0_i32_465 = arith.constant 0 : i32
      %851 = tpu.memref_slice %arg6[%357, %c61_i32_464, %c0_i32_465] : memref<2x64x128xf32, #tpu.memory_space<vmem>> -> memref<1x1x128xf32, #tpu.memory_space<vmem>>
      %852 = tpu.memref_squeeze %851 : memref<1x1x128xf32, #tpu.memory_space<vmem>> -> memref<1x128xf32, #tpu.memory_space<vmem>>
      %853 = tpu.memref_slice %arg7[%357] : memref<2x!tpu.dma_semaphore, #tpu.memory_space<semaphore_mem>> -> memref<1x!tpu.dma_semaphore, #tpu.memory_space<semaphore_mem>>
      %854 = tpu.memref_squeeze %853 : memref<1x!tpu.dma_semaphore, #tpu.memory_space<semaphore_mem>> -> memref<!tpu.dma_semaphore, #tpu.memory_space<semaphore_mem>>
      tpu.enqueue_dma source(%850 : memref<1x128xf32, #tpu.memory_space<any>>) target(%852 : memref<1x128xf32, #tpu.memory_space<vmem>>) target_semaphore(%854 : memref<!tpu.dma_semaphore, #tpu.memory_space<semaphore_mem>>)
      %c62_i32_466 = arith.constant 62 : i32
      %855 = arith.addi %358, %c62_i32_466 : i32
      %856 = arith.index_cast %855 : i32 to index
      %857 = memref.load %arg1[%856] : memref<64xi32, #tpu.memory_space<smem>>
      %c0_i32_467 = arith.constant 0 : i32
      %858 = tpu.memref_slice %arg2[%857, %c0_i32_467] : memref<512x128xf32, #tpu.memory_space<any>> -> memref<1x128xf32, #tpu.memory_space<any>>
      %c62_i32_468 = arith.constant 62 : i32
      %c0_i32_469 = arith.constant 0 : i32
      %859 = tpu.memref_slice %arg6[%357, %c62_i32_468, %c0_i32_469] : memref<2x64x128xf32, #tpu.memory_space<vmem>> -> memref<1x1x128xf32, #tpu.memory_space<vmem>>
      %860 = tpu.memref_squeeze %859 : memref<1x1x128xf32, #tpu.memory_space<vmem>> -> memref<1x128xf32, #tpu.memory_space<vmem>>
      %861 = tpu.memref_slice %arg7[%357] : memref<2x!tpu.dma_semaphore, #tpu.memory_space<semaphore_mem>> -> memref<1x!tpu.dma_semaphore, #tpu.memory_space<semaphore_mem>>
      %862 = tpu.memref_squeeze %861 : memref<1x!tpu.dma_semaphore, #tpu.memory_space<semaphore_mem>> -> memref<!tpu.dma_semaphore, #tpu.memory_space<semaphore_mem>>
      tpu.enqueue_dma source(%858 : memref<1x128xf32, #tpu.memory_space<any>>) target(%860 : memref<1x128xf32, #tpu.memory_space<vmem>>) target_semaphore(%862 : memref<!tpu.dma_semaphore, #tpu.memory_space<semaphore_mem>>)
      %c63_i32_470 = arith.constant 63 : i32
      %863 = arith.addi %358, %c63_i32_470 : i32
      %864 = arith.index_cast %863 : i32 to index
      %865 = memref.load %arg1[%864] : memref<64xi32, #tpu.memory_space<smem>>
      %c0_i32_471 = arith.constant 0 : i32
      %866 = tpu.memref_slice %arg2[%865, %c0_i32_471] : memref<512x128xf32, #tpu.memory_space<any>> -> memref<1x128xf32, #tpu.memory_space<any>>
      %c63_i32_472 = arith.constant 63 : i32
      %c0_i32_473 = arith.constant 0 : i32
      %867 = tpu.memref_slice %arg6[%357, %c63_i32_472, %c0_i32_473] : memref<2x64x128xf32, #tpu.memory_space<vmem>> -> memref<1x1x128xf32, #tpu.memory_space<vmem>>
      %868 = tpu.memref_squeeze %867 : memref<1x1x128xf32, #tpu.memory_space<vmem>> -> memref<1x128xf32, #tpu.memory_space<vmem>>
      %869 = tpu.memref_slice %arg7[%357] : memref<2x!tpu.dma_semaphore, #tpu.memory_space<semaphore_mem>> -> memref<1x!tpu.dma_semaphore, #tpu.memory_space<semaphore_mem>>
      %870 = tpu.memref_squeeze %869 : memref<1x!tpu.dma_semaphore, #tpu.memory_space<semaphore_mem>> -> memref<!tpu.dma_semaphore, #tpu.memory_space<semaphore_mem>>
      tpu.enqueue_dma source(%866 : memref<1x128xf32, #tpu.memory_space<any>>) target(%868 : memref<1x128xf32, #tpu.memory_space<vmem>>) target_semaphore(%870 : memref<!tpu.dma_semaphore, #tpu.memory_space<semaphore_mem>>)
    } else {
    }
    %c2_i32 = arith.constant 2 : i32
    %c0_i32_3 = arith.constant 0 : i32
    %7 = arith.cmpi eq, %c2_i32, %c0_i32_3 : i32
    %c1_i32_4 = arith.constant 1 : i32
    %8 = arith.select %7, %c1_i32_4, %c2_i32 : i32
    %9 = arith.remsi %arg0, %8 : i32
    %c0_i32_5 = arith.constant 0 : i32
    %10 = arith.cmpi ne, %9, %c0_i32_5 : i32
    %c0_i32_6 = arith.constant 0 : i32
    %11 = arith.cmpi slt, %9, %c0_i32_6 : i32
    %c0_i32_7 = arith.constant 0 : i32
    %12 = arith.cmpi slt, %8, %c0_i32_7 : i32
    %13 = arith.xori %11, %12 : i1
    %14 = arith.andi %13, %10 : i1
    %15 = arith.addi %9, %8 : i32
    %16 = arith.select %14, %15, %9 : i32
    %c0_i32_8 = arith.constant 0 : i32
    %c0_i32_9 = arith.constant 0 : i32
    %17 = tpu.memref_slice %arg2[%c0_i32_8, %c0_i32_9] : memref<512x128xf32, #tpu.memory_space<any>> -> memref<1x128xf32, #tpu.memory_space<any>>
    %c0_i32_10 = arith.constant 0 : i32
    %c0_i32_11 = arith.constant 0 : i32
    %18 = tpu.memref_slice %arg6[%16, %c0_i32_10, %c0_i32_11] : memref<2x64x128xf32, #tpu.memory_space<vmem>> -> memref<1x1x128xf32, #tpu.memory_space<vmem>>
    %19 = tpu.memref_squeeze %18 : memref<1x1x128xf32, #tpu.memory_space<vmem>> -> memref<1x128xf32, #tpu.memory_space<vmem>>
    %20 = tpu.memref_slice %arg7[%16] : memref<2x!tpu.dma_semaphore, #tpu.memory_space<semaphore_mem>> -> memref<1x!tpu.dma_semaphore, #tpu.memory_space<semaphore_mem>>
    %21 = tpu.memref_squeeze %20 : memref<1x!tpu.dma_semaphore, #tpu.memory_space<semaphore_mem>> -> memref<!tpu.dma_semaphore, #tpu.memory_space<semaphore_mem>>
    tpu.wait_dma2 semaphore(%21 : memref<!tpu.dma_semaphore, #tpu.memory_space<semaphore_mem>>) src(%17 : memref<1x128xf32, #tpu.memory_space<any>>) dst(%19 : memref<1x128xf32, #tpu.memory_space<vmem>>)
    %c0_i32_12 = arith.constant 0 : i32
    %c0_i32_13 = arith.constant 0 : i32
    %22 = tpu.memref_slice %arg2[%c0_i32_12, %c0_i32_13] : memref<512x128xf32, #tpu.memory_space<any>> -> memref<1x128xf32, #tpu.memory_space<any>>
    %c1_i32_14 = arith.constant 1 : i32
    %c0_i32_15 = arith.constant 0 : i32
    %23 = tpu.memref_slice %arg6[%16, %c1_i32_14, %c0_i32_15] : memref<2x64x128xf32, #tpu.memory_space<vmem>> -> memref<1x1x128xf32, #tpu.memory_space<vmem>>
    %24 = tpu.memref_squeeze %23 : memref<1x1x128xf32, #tpu.memory_space<vmem>> -> memref<1x128xf32, #tpu.memory_space<vmem>>
    %25 = tpu.memref_slice %arg7[%16] : memref<2x!tpu.dma_semaphore, #tpu.memory_space<semaphore_mem>> -> memref<1x!tpu.dma_semaphore, #tpu.memory_space<semaphore_mem>>
    %26 = tpu.memref_squeeze %25 : memref<1x!tpu.dma_semaphore, #tpu.memory_space<semaphore_mem>> -> memref<!tpu.dma_semaphore, #tpu.memory_space<semaphore_mem>>
    tpu.wait_dma2 semaphore(%26 : memref<!tpu.dma_semaphore, #tpu.memory_space<semaphore_mem>>) src(%22 : memref<1x128xf32, #tpu.memory_space<any>>) dst(%24 : memref<1x128xf32, #tpu.memory_space<vmem>>)
    %c0_i32_16 = arith.constant 0 : i32
    %c0_i32_17 = arith.constant 0 : i32
    %27 = tpu.memref_slice %arg2[%c0_i32_16, %c0_i32_17] : memref<512x128xf32, #tpu.memory_space<any>> -> memref<1x128xf32, #tpu.memory_space<any>>
    %c2_i32_18 = arith.constant 2 : i32
    %c0_i32_19 = arith.constant 0 : i32
    %28 = tpu.memref_slice %arg6[%16, %c2_i32_18, %c0_i32_19] : memref<2x64x128xf32, #tpu.memory_space<vmem>> -> memref<1x1x128xf32, #tpu.memory_space<vmem>>
    %29 = tpu.memref_squeeze %28 : memref<1x1x128xf32, #tpu.memory_space<vmem>> -> memref<1x128xf32, #tpu.memory_space<vmem>>
    %30 = tpu.memref_slice %arg7[%16] : memref<2x!tpu.dma_semaphore, #tpu.memory_space<semaphore_mem>> -> memref<1x!tpu.dma_semaphore, #tpu.memory_space<semaphore_mem>>
    %31 = tpu.memref_squeeze %30 : memref<1x!tpu.dma_semaphore, #tpu.memory_space<semaphore_mem>> -> memref<!tpu.dma_semaphore, #tpu.memory_space<semaphore_mem>>
    tpu.wait_dma2 semaphore(%31 : memref<!tpu.dma_semaphore, #tpu.memory_space<semaphore_mem>>) src(%27 : memref<1x128xf32, #tpu.memory_space<any>>) dst(%29 : memref<1x128xf32, #tpu.memory_space<vmem>>)
    %c0_i32_20 = arith.constant 0 : i32
    %c0_i32_21 = arith.constant 0 : i32
    %32 = tpu.memref_slice %arg2[%c0_i32_20, %c0_i32_21] : memref<512x128xf32, #tpu.memory_space<any>> -> memref<1x128xf32, #tpu.memory_space<any>>
    %c3_i32 = arith.constant 3 : i32
    %c0_i32_22 = arith.constant 0 : i32
    %33 = tpu.memref_slice %arg6[%16, %c3_i32, %c0_i32_22] : memref<2x64x128xf32, #tpu.memory_space<vmem>> -> memref<1x1x128xf32, #tpu.memory_space<vmem>>
    %34 = tpu.memref_squeeze %33 : memref<1x1x128xf32, #tpu.memory_space<vmem>> -> memref<1x128xf32, #tpu.memory_space<vmem>>
    %35 = tpu.memref_slice %arg7[%16] : memref<2x!tpu.dma_semaphore, #tpu.memory_space<semaphore_mem>> -> memref<1x!tpu.dma_semaphore, #tpu.memory_space<semaphore_mem>>
    %36 = tpu.memref_squeeze %35 : memref<1x!tpu.dma_semaphore, #tpu.memory_space<semaphore_mem>> -> memref<!tpu.dma_semaphore, #tpu.memory_space<semaphore_mem>>
    tpu.wait_dma2 semaphore(%36 : memref<!tpu.dma_semaphore, #tpu.memory_space<semaphore_mem>>) src(%32 : memref<1x128xf32, #tpu.memory_space<any>>) dst(%34 : memref<1x128xf32, #tpu.memory_space<vmem>>)
    %c0_i32_23 = arith.constant 0 : i32
    %c0_i32_24 = arith.constant 0 : i32
    %37 = tpu.memref_slice %arg2[%c0_i32_23, %c0_i32_24] : memref<512x128xf32, #tpu.memory_space<any>> -> memref<1x128xf32, #tpu.memory_space<any>>
    %c4_i32 = arith.constant 4 : i32
    %c0_i32_25 = arith.constant 0 : i32
    %38 = tpu.memref_slice %arg6[%16, %c4_i32, %c0_i32_25] : memref<2x64x128xf32, #tpu.memory_space<vmem>> -> memref<1x1x128xf32, #tpu.memory_space<vmem>>
    %39 = tpu.memref_squeeze %38 : memref<1x1x128xf32, #tpu.memory_space<vmem>> -> memref<1x128xf32, #tpu.memory_space<vmem>>
    %40 = tpu.memref_slice %arg7[%16] : memref<2x!tpu.dma_semaphore, #tpu.memory_space<semaphore_mem>> -> memref<1x!tpu.dma_semaphore, #tpu.memory_space<semaphore_mem>>
    %41 = tpu.memref_squeeze %40 : memref<1x!tpu.dma_semaphore, #tpu.memory_space<semaphore_mem>> -> memref<!tpu.dma_semaphore, #tpu.memory_space<semaphore_mem>>
    tpu.wait_dma2 semaphore(%41 : memref<!tpu.dma_semaphore, #tpu.memory_space<semaphore_mem>>) src(%37 : memref<1x128xf32, #tpu.memory_space<any>>) dst(%39 : memref<1x128xf32, #tpu.memory_space<vmem>>)
    %c0_i32_26 = arith.constant 0 : i32
    %c0_i32_27 = arith.constant 0 : i32
    %42 = tpu.memref_slice %arg2[%c0_i32_26, %c0_i32_27] : memref<512x128xf32, #tpu.memory_space<any>> -> memref<1x128xf32, #tpu.memory_space<any>>
    %c5_i32 = arith.constant 5 : i32
    %c0_i32_28 = arith.constant 0 : i32
    %43 = tpu.memref_slice %arg6[%16, %c5_i32, %c0_i32_28] : memref<2x64x128xf32, #tpu.memory_space<vmem>> -> memref<1x1x128xf32, #tpu.memory_space<vmem>>
    %44 = tpu.memref_squeeze %43 : memref<1x1x128xf32, #tpu.memory_space<vmem>> -> memref<1x128xf32, #tpu.memory_space<vmem>>
    %45 = tpu.memref_slice %arg7[%16] : memref<2x!tpu.dma_semaphore, #tpu.memory_space<semaphore_mem>> -> memref<1x!tpu.dma_semaphore, #tpu.memory_space<semaphore_mem>>
    %46 = tpu.memref_squeeze %45 : memref<1x!tpu.dma_semaphore, #tpu.memory_space<semaphore_mem>> -> memref<!tpu.dma_semaphore, #tpu.memory_space<semaphore_mem>>
    tpu.wait_dma2 semaphore(%46 : memref<!tpu.dma_semaphore, #tpu.memory_space<semaphore_mem>>) src(%42 : memref<1x128xf32, #tpu.memory_space<any>>) dst(%44 : memref<1x128xf32, #tpu.memory_space<vmem>>)
    %c0_i32_29 = arith.constant 0 : i32
    %c0_i32_30 = arith.constant 0 : i32
    %47 = tpu.memref_slice %arg2[%c0_i32_29, %c0_i32_30] : memref<512x128xf32, #tpu.memory_space<any>> -> memref<1x128xf32, #tpu.memory_space<any>>
    %c6_i32 = arith.constant 6 : i32
    %c0_i32_31 = arith.constant 0 : i32
    %48 = tpu.memref_slice %arg6[%16, %c6_i32, %c0_i32_31] : memref<2x64x128xf32, #tpu.memory_space<vmem>> -> memref<1x1x128xf32, #tpu.memory_space<vmem>>
    %49 = tpu.memref_squeeze %48 : memref<1x1x128xf32, #tpu.memory_space<vmem>> -> memref<1x128xf32, #tpu.memory_space<vmem>>
    %50 = tpu.memref_slice %arg7[%16] : memref<2x!tpu.dma_semaphore, #tpu.memory_space<semaphore_mem>> -> memref<1x!tpu.dma_semaphore, #tpu.memory_space<semaphore_mem>>
    %51 = tpu.memref_squeeze %50 : memref<1x!tpu.dma_semaphore, #tpu.memory_space<semaphore_mem>> -> memref<!tpu.dma_semaphore, #tpu.memory_space<semaphore_mem>>
    tpu.wait_dma2 semaphore(%51 : memref<!tpu.dma_semaphore, #tpu.memory_space<semaphore_mem>>) src(%47 : memref<1x128xf32, #tpu.memory_space<any>>) dst(%49 : memref<1x128xf32, #tpu.memory_space<vmem>>)
    %c0_i32_32 = arith.constant 0 : i32
    %c0_i32_33 = arith.constant 0 : i32
    %52 = tpu.memref_slice %arg2[%c0_i32_32, %c0_i32_33] : memref<512x128xf32, #tpu.memory_space<any>> -> memref<1x128xf32, #tpu.memory_space<any>>
    %c7_i32 = arith.constant 7 : i32
    %c0_i32_34 = arith.constant 0 : i32
    %53 = tpu.memref_slice %arg6[%16, %c7_i32, %c0_i32_34] : memref<2x64x128xf32, #tpu.memory_space<vmem>> -> memref<1x1x128xf32, #tpu.memory_space<vmem>>
    %54 = tpu.memref_squeeze %53 : memref<1x1x128xf32, #tpu.memory_space<vmem>> -> memref<1x128xf32, #tpu.memory_space<vmem>>
    %55 = tpu.memref_slice %arg7[%16] : memref<2x!tpu.dma_semaphore, #tpu.memory_space<semaphore_mem>> -> memref<1x!tpu.dma_semaphore, #tpu.memory_space<semaphore_mem>>
    %56 = tpu.memref_squeeze %55 : memref<1x!tpu.dma_semaphore, #tpu.memory_space<semaphore_mem>> -> memref<!tpu.dma_semaphore, #tpu.memory_space<semaphore_mem>>
    tpu.wait_dma2 semaphore(%56 : memref<!tpu.dma_semaphore, #tpu.memory_space<semaphore_mem>>) src(%52 : memref<1x128xf32, #tpu.memory_space<any>>) dst(%54 : memref<1x128xf32, #tpu.memory_space<vmem>>)
    %c0_i32_35 = arith.constant 0 : i32
    %c0_i32_36 = arith.constant 0 : i32
    %57 = tpu.memref_slice %arg2[%c0_i32_35, %c0_i32_36] : memref<512x128xf32, #tpu.memory_space<any>> -> memref<1x128xf32, #tpu.memory_space<any>>
    %c8_i32 = arith.constant 8 : i32
    %c0_i32_37 = arith.constant 0 : i32
    %58 = tpu.memref_slice %arg6[%16, %c8_i32, %c0_i32_37] : memref<2x64x128xf32, #tpu.memory_space<vmem>> -> memref<1x1x128xf32, #tpu.memory_space<vmem>>
    %59 = tpu.memref_squeeze %58 : memref<1x1x128xf32, #tpu.memory_space<vmem>> -> memref<1x128xf32, #tpu.memory_space<vmem>>
    %60 = tpu.memref_slice %arg7[%16] : memref<2x!tpu.dma_semaphore, #tpu.memory_space<semaphore_mem>> -> memref<1x!tpu.dma_semaphore, #tpu.memory_space<semaphore_mem>>
    %61 = tpu.memref_squeeze %60 : memref<1x!tpu.dma_semaphore, #tpu.memory_space<semaphore_mem>> -> memref<!tpu.dma_semaphore, #tpu.memory_space<semaphore_mem>>
    tpu.wait_dma2 semaphore(%61 : memref<!tpu.dma_semaphore, #tpu.memory_space<semaphore_mem>>) src(%57 : memref<1x128xf32, #tpu.memory_space<any>>) dst(%59 : memref<1x128xf32, #tpu.memory_space<vmem>>)
    %c0_i32_38 = arith.constant 0 : i32
    %c0_i32_39 = arith.constant 0 : i32
    %62 = tpu.memref_slice %arg2[%c0_i32_38, %c0_i32_39] : memref<512x128xf32, #tpu.memory_space<any>> -> memref<1x128xf32, #tpu.memory_space<any>>
    %c9_i32 = arith.constant 9 : i32
    %c0_i32_40 = arith.constant 0 : i32
    %63 = tpu.memref_slice %arg6[%16, %c9_i32, %c0_i32_40] : memref<2x64x128xf32, #tpu.memory_space<vmem>> -> memref<1x1x128xf32, #tpu.memory_space<vmem>>
    %64 = tpu.memref_squeeze %63 : memref<1x1x128xf32, #tpu.memory_space<vmem>> -> memref<1x128xf32, #tpu.memory_space<vmem>>
    %65 = tpu.memref_slice %arg7[%16] : memref<2x!tpu.dma_semaphore, #tpu.memory_space<semaphore_mem>> -> memref<1x!tpu.dma_semaphore, #tpu.memory_space<semaphore_mem>>
    %66 = tpu.memref_squeeze %65 : memref<1x!tpu.dma_semaphore, #tpu.memory_space<semaphore_mem>> -> memref<!tpu.dma_semaphore, #tpu.memory_space<semaphore_mem>>
    tpu.wait_dma2 semaphore(%66 : memref<!tpu.dma_semaphore, #tpu.memory_space<semaphore_mem>>) src(%62 : memref<1x128xf32, #tpu.memory_space<any>>) dst(%64 : memref<1x128xf32, #tpu.memory_space<vmem>>)
    %c0_i32_41 = arith.constant 0 : i32
    %c0_i32_42 = arith.constant 0 : i32
    %67 = tpu.memref_slice %arg2[%c0_i32_41, %c0_i32_42] : memref<512x128xf32, #tpu.memory_space<any>> -> memref<1x128xf32, #tpu.memory_space<any>>
    %c10_i32 = arith.constant 10 : i32
    %c0_i32_43 = arith.constant 0 : i32
    %68 = tpu.memref_slice %arg6[%16, %c10_i32, %c0_i32_43] : memref<2x64x128xf32, #tpu.memory_space<vmem>> -> memref<1x1x128xf32, #tpu.memory_space<vmem>>
    %69 = tpu.memref_squeeze %68 : memref<1x1x128xf32, #tpu.memory_space<vmem>> -> memref<1x128xf32, #tpu.memory_space<vmem>>
    %70 = tpu.memref_slice %arg7[%16] : memref<2x!tpu.dma_semaphore, #tpu.memory_space<semaphore_mem>> -> memref<1x!tpu.dma_semaphore, #tpu.memory_space<semaphore_mem>>
    %71 = tpu.memref_squeeze %70 : memref<1x!tpu.dma_semaphore, #tpu.memory_space<semaphore_mem>> -> memref<!tpu.dma_semaphore, #tpu.memory_space<semaphore_mem>>
    tpu.wait_dma2 semaphore(%71 : memref<!tpu.dma_semaphore, #tpu.memory_space<semaphore_mem>>) src(%67 : memref<1x128xf32, #tpu.memory_space<any>>) dst(%69 : memref<1x128xf32, #tpu.memory_space<vmem>>)
    %c0_i32_44 = arith.constant 0 : i32
    %c0_i32_45 = arith.constant 0 : i32
    %72 = tpu.memref_slice %arg2[%c0_i32_44, %c0_i32_45] : memref<512x128xf32, #tpu.memory_space<any>> -> memref<1x128xf32, #tpu.memory_space<any>>
    %c11_i32 = arith.constant 11 : i32
    %c0_i32_46 = arith.constant 0 : i32
    %73 = tpu.memref_slice %arg6[%16, %c11_i32, %c0_i32_46] : memref<2x64x128xf32, #tpu.memory_space<vmem>> -> memref<1x1x128xf32, #tpu.memory_space<vmem>>
    %74 = tpu.memref_squeeze %73 : memref<1x1x128xf32, #tpu.memory_space<vmem>> -> memref<1x128xf32, #tpu.memory_space<vmem>>
    %75 = tpu.memref_slice %arg7[%16] : memref<2x!tpu.dma_semaphore, #tpu.memory_space<semaphore_mem>> -> memref<1x!tpu.dma_semaphore, #tpu.memory_space<semaphore_mem>>
    %76 = tpu.memref_squeeze %75 : memref<1x!tpu.dma_semaphore, #tpu.memory_space<semaphore_mem>> -> memref<!tpu.dma_semaphore, #tpu.memory_space<semaphore_mem>>
    tpu.wait_dma2 semaphore(%76 : memref<!tpu.dma_semaphore, #tpu.memory_space<semaphore_mem>>) src(%72 : memref<1x128xf32, #tpu.memory_space<any>>) dst(%74 : memref<1x128xf32, #tpu.memory_space<vmem>>)
    %c0_i32_47 = arith.constant 0 : i32
    %c0_i32_48 = arith.constant 0 : i32
    %77 = tpu.memref_slice %arg2[%c0_i32_47, %c0_i32_48] : memref<512x128xf32, #tpu.memory_space<any>> -> memref<1x128xf32, #tpu.memory_space<any>>
    %c12_i32 = arith.constant 12 : i32
    %c0_i32_49 = arith.constant 0 : i32
    %78 = tpu.memref_slice %arg6[%16, %c12_i32, %c0_i32_49] : memref<2x64x128xf32, #tpu.memory_space<vmem>> -> memref<1x1x128xf32, #tpu.memory_space<vmem>>
    %79 = tpu.memref_squeeze %78 : memref<1x1x128xf32, #tpu.memory_space<vmem>> -> memref<1x128xf32, #tpu.memory_space<vmem>>
    %80 = tpu.memref_slice %arg7[%16] : memref<2x!tpu.dma_semaphore, #tpu.memory_space<semaphore_mem>> -> memref<1x!tpu.dma_semaphore, #tpu.memory_space<semaphore_mem>>
    %81 = tpu.memref_squeeze %80 : memref<1x!tpu.dma_semaphore, #tpu.memory_space<semaphore_mem>> -> memref<!tpu.dma_semaphore, #tpu.memory_space<semaphore_mem>>
    tpu.wait_dma2 semaphore(%81 : memref<!tpu.dma_semaphore, #tpu.memory_space<semaphore_mem>>) src(%77 : memref<1x128xf32, #tpu.memory_space<any>>) dst(%79 : memref<1x128xf32, #tpu.memory_space<vmem>>)
    %c0_i32_50 = arith.constant 0 : i32
    %c0_i32_51 = arith.constant 0 : i32
    %82 = tpu.memref_slice %arg2[%c0_i32_50, %c0_i32_51] : memref<512x128xf32, #tpu.memory_space<any>> -> memref<1x128xf32, #tpu.memory_space<any>>
    %c13_i32 = arith.constant 13 : i32
    %c0_i32_52 = arith.constant 0 : i32
    %83 = tpu.memref_slice %arg6[%16, %c13_i32, %c0_i32_52] : memref<2x64x128xf32, #tpu.memory_space<vmem>> -> memref<1x1x128xf32, #tpu.memory_space<vmem>>
    %84 = tpu.memref_squeeze %83 : memref<1x1x128xf32, #tpu.memory_space<vmem>> -> memref<1x128xf32, #tpu.memory_space<vmem>>
    %85 = tpu.memref_slice %arg7[%16] : memref<2x!tpu.dma_semaphore, #tpu.memory_space<semaphore_mem>> -> memref<1x!tpu.dma_semaphore, #tpu.memory_space<semaphore_mem>>
    %86 = tpu.memref_squeeze %85 : memref<1x!tpu.dma_semaphore, #tpu.memory_space<semaphore_mem>> -> memref<!tpu.dma_semaphore, #tpu.memory_space<semaphore_mem>>
    tpu.wait_dma2 semaphore(%86 : memref<!tpu.dma_semaphore, #tpu.memory_space<semaphore_mem>>) src(%82 : memref<1x128xf32, #tpu.memory_space<any>>) dst(%84 : memref<1x128xf32, #tpu.memory_space<vmem>>)
    %c0_i32_53 = arith.constant 0 : i32
    %c0_i32_54 = arith.constant 0 : i32
    %87 = tpu.memref_slice %arg2[%c0_i32_53, %c0_i32_54] : memref<512x128xf32, #tpu.memory_space<any>> -> memref<1x128xf32, #tpu.memory_space<any>>
    %c14_i32 = arith.constant 14 : i32
    %c0_i32_55 = arith.constant 0 : i32
    %88 = tpu.memref_slice %arg6[%16, %c14_i32, %c0_i32_55] : memref<2x64x128xf32, #tpu.memory_space<vmem>> -> memref<1x1x128xf32, #tpu.memory_space<vmem>>
    %89 = tpu.memref_squeeze %88 : memref<1x1x128xf32, #tpu.memory_space<vmem>> -> memref<1x128xf32, #tpu.memory_space<vmem>>
    %90 = tpu.memref_slice %arg7[%16] : memref<2x!tpu.dma_semaphore, #tpu.memory_space<semaphore_mem>> -> memref<1x!tpu.dma_semaphore, #tpu.memory_space<semaphore_mem>>
    %91 = tpu.memref_squeeze %90 : memref<1x!tpu.dma_semaphore, #tpu.memory_space<semaphore_mem>> -> memref<!tpu.dma_semaphore, #tpu.memory_space<semaphore_mem>>
    tpu.wait_dma2 semaphore(%91 : memref<!tpu.dma_semaphore, #tpu.memory_space<semaphore_mem>>) src(%87 : memref<1x128xf32, #tpu.memory_space<any>>) dst(%89 : memref<1x128xf32, #tpu.memory_space<vmem>>)
    %c0_i32_56 = arith.constant 0 : i32
    %c0_i32_57 = arith.constant 0 : i32
    %92 = tpu.memref_slice %arg2[%c0_i32_56, %c0_i32_57] : memref<512x128xf32, #tpu.memory_space<any>> -> memref<1x128xf32, #tpu.memory_space<any>>
    %c15_i32 = arith.constant 15 : i32
    %c0_i32_58 = arith.constant 0 : i32
    %93 = tpu.memref_slice %arg6[%16, %c15_i32, %c0_i32_58] : memref<2x64x128xf32, #tpu.memory_space<vmem>> -> memref<1x1x128xf32, #tpu.memory_space<vmem>>
    %94 = tpu.memref_squeeze %93 : memref<1x1x128xf32, #tpu.memory_space<vmem>> -> memref<1x128xf32, #tpu.memory_space<vmem>>
    %95 = tpu.memref_slice %arg7[%16] : memref<2x!tpu.dma_semaphore, #tpu.memory_space<semaphore_mem>> -> memref<1x!tpu.dma_semaphore, #tpu.memory_space<semaphore_mem>>
    %96 = tpu.memref_squeeze %95 : memref<1x!tpu.dma_semaphore, #tpu.memory_space<semaphore_mem>> -> memref<!tpu.dma_semaphore, #tpu.memory_space<semaphore_mem>>
    tpu.wait_dma2 semaphore(%96 : memref<!tpu.dma_semaphore, #tpu.memory_space<semaphore_mem>>) src(%92 : memref<1x128xf32, #tpu.memory_space<any>>) dst(%94 : memref<1x128xf32, #tpu.memory_space<vmem>>)
    %c0_i32_59 = arith.constant 0 : i32
    %c0_i32_60 = arith.constant 0 : i32
    %97 = tpu.memref_slice %arg2[%c0_i32_59, %c0_i32_60] : memref<512x128xf32, #tpu.memory_space<any>> -> memref<1x128xf32, #tpu.memory_space<any>>
    %c16_i32 = arith.constant 16 : i32
    %c0_i32_61 = arith.constant 0 : i32
    %98 = tpu.memref_slice %arg6[%16, %c16_i32, %c0_i32_61] : memref<2x64x128xf32, #tpu.memory_space<vmem>> -> memref<1x1x128xf32, #tpu.memory_space<vmem>>
    %99 = tpu.memref_squeeze %98 : memref<1x1x128xf32, #tpu.memory_space<vmem>> -> memref<1x128xf32, #tpu.memory_space<vmem>>
    %100 = tpu.memref_slice %arg7[%16] : memref<2x!tpu.dma_semaphore, #tpu.memory_space<semaphore_mem>> -> memref<1x!tpu.dma_semaphore, #tpu.memory_space<semaphore_mem>>
    %101 = tpu.memref_squeeze %100 : memref<1x!tpu.dma_semaphore, #tpu.memory_space<semaphore_mem>> -> memref<!tpu.dma_semaphore, #tpu.memory_space<semaphore_mem>>
    tpu.wait_dma2 semaphore(%101 : memref<!tpu.dma_semaphore, #tpu.memory_space<semaphore_mem>>) src(%97 : memref<1x128xf32, #tpu.memory_space<any>>) dst(%99 : memref<1x128xf32, #tpu.memory_space<vmem>>)
    %c0_i32_62 = arith.constant 0 : i32
    %c0_i32_63 = arith.constant 0 : i32
    %102 = tpu.memref_slice %arg2[%c0_i32_62, %c0_i32_63] : memref<512x128xf32, #tpu.memory_space<any>> -> memref<1x128xf32, #tpu.memory_space<any>>
    %c17_i32 = arith.constant 17 : i32
    %c0_i32_64 = arith.constant 0 : i32
    %103 = tpu.memref_slice %arg6[%16, %c17_i32, %c0_i32_64] : memref<2x64x128xf32, #tpu.memory_space<vmem>> -> memref<1x1x128xf32, #tpu.memory_space<vmem>>
    %104 = tpu.memref_squeeze %103 : memref<1x1x128xf32, #tpu.memory_space<vmem>> -> memref<1x128xf32, #tpu.memory_space<vmem>>
    %105 = tpu.memref_slice %arg7[%16] : memref<2x!tpu.dma_semaphore, #tpu.memory_space<semaphore_mem>> -> memref<1x!tpu.dma_semaphore, #tpu.memory_space<semaphore_mem>>
    %106 = tpu.memref_squeeze %105 : memref<1x!tpu.dma_semaphore, #tpu.memory_space<semaphore_mem>> -> memref<!tpu.dma_semaphore, #tpu.memory_space<semaphore_mem>>
    tpu.wait_dma2 semaphore(%106 : memref<!tpu.dma_semaphore, #tpu.memory_space<semaphore_mem>>) src(%102 : memref<1x128xf32, #tpu.memory_space<any>>) dst(%104 : memref<1x128xf32, #tpu.memory_space<vmem>>)
    %c0_i32_65 = arith.constant 0 : i32
    %c0_i32_66 = arith.constant 0 : i32
    %107 = tpu.memref_slice %arg2[%c0_i32_65, %c0_i32_66] : memref<512x128xf32, #tpu.memory_space<any>> -> memref<1x128xf32, #tpu.memory_space<any>>
    %c18_i32 = arith.constant 18 : i32
    %c0_i32_67 = arith.constant 0 : i32
    %108 = tpu.memref_slice %arg6[%16, %c18_i32, %c0_i32_67] : memref<2x64x128xf32, #tpu.memory_space<vmem>> -> memref<1x1x128xf32, #tpu.memory_space<vmem>>
    %109 = tpu.memref_squeeze %108 : memref<1x1x128xf32, #tpu.memory_space<vmem>> -> memref<1x128xf32, #tpu.memory_space<vmem>>
    %110 = tpu.memref_slice %arg7[%16] : memref<2x!tpu.dma_semaphore, #tpu.memory_space<semaphore_mem>> -> memref<1x!tpu.dma_semaphore, #tpu.memory_space<semaphore_mem>>
    %111 = tpu.memref_squeeze %110 : memref<1x!tpu.dma_semaphore, #tpu.memory_space<semaphore_mem>> -> memref<!tpu.dma_semaphore, #tpu.memory_space<semaphore_mem>>
    tpu.wait_dma2 semaphore(%111 : memref<!tpu.dma_semaphore, #tpu.memory_space<semaphore_mem>>) src(%107 : memref<1x128xf32, #tpu.memory_space<any>>) dst(%109 : memref<1x128xf32, #tpu.memory_space<vmem>>)
    %c0_i32_68 = arith.constant 0 : i32
    %c0_i32_69 = arith.constant 0 : i32
    %112 = tpu.memref_slice %arg2[%c0_i32_68, %c0_i32_69] : memref<512x128xf32, #tpu.memory_space<any>> -> memref<1x128xf32, #tpu.memory_space<any>>
    %c19_i32 = arith.constant 19 : i32
    %c0_i32_70 = arith.constant 0 : i32
    %113 = tpu.memref_slice %arg6[%16, %c19_i32, %c0_i32_70] : memref<2x64x128xf32, #tpu.memory_space<vmem>> -> memref<1x1x128xf32, #tpu.memory_space<vmem>>
    %114 = tpu.memref_squeeze %113 : memref<1x1x128xf32, #tpu.memory_space<vmem>> -> memref<1x128xf32, #tpu.memory_space<vmem>>
    %115 = tpu.memref_slice %arg7[%16] : memref<2x!tpu.dma_semaphore, #tpu.memory_space<semaphore_mem>> -> memref<1x!tpu.dma_semaphore, #tpu.memory_space<semaphore_mem>>
    %116 = tpu.memref_squeeze %115 : memref<1x!tpu.dma_semaphore, #tpu.memory_space<semaphore_mem>> -> memref<!tpu.dma_semaphore, #tpu.memory_space<semaphore_mem>>
    tpu.wait_dma2 semaphore(%116 : memref<!tpu.dma_semaphore, #tpu.memory_space<semaphore_mem>>) src(%112 : memref<1x128xf32, #tpu.memory_space<any>>) dst(%114 : memref<1x128xf32, #tpu.memory_space<vmem>>)
    %c0_i32_71 = arith.constant 0 : i32
    %c0_i32_72 = arith.constant 0 : i32
    %117 = tpu.memref_slice %arg2[%c0_i32_71, %c0_i32_72] : memref<512x128xf32, #tpu.memory_space<any>> -> memref<1x128xf32, #tpu.memory_space<any>>
    %c20_i32 = arith.constant 20 : i32
    %c0_i32_73 = arith.constant 0 : i32
    %118 = tpu.memref_slice %arg6[%16, %c20_i32, %c0_i32_73] : memref<2x64x128xf32, #tpu.memory_space<vmem>> -> memref<1x1x128xf32, #tpu.memory_space<vmem>>
    %119 = tpu.memref_squeeze %118 : memref<1x1x128xf32, #tpu.memory_space<vmem>> -> memref<1x128xf32, #tpu.memory_space<vmem>>
    %120 = tpu.memref_slice %arg7[%16] : memref<2x!tpu.dma_semaphore, #tpu.memory_space<semaphore_mem>> -> memref<1x!tpu.dma_semaphore, #tpu.memory_space<semaphore_mem>>
    %121 = tpu.memref_squeeze %120 : memref<1x!tpu.dma_semaphore, #tpu.memory_space<semaphore_mem>> -> memref<!tpu.dma_semaphore, #tpu.memory_space<semaphore_mem>>
    tpu.wait_dma2 semaphore(%121 : memref<!tpu.dma_semaphore, #tpu.memory_space<semaphore_mem>>) src(%117 : memref<1x128xf32, #tpu.memory_space<any>>) dst(%119 : memref<1x128xf32, #tpu.memory_space<vmem>>)
    %c0_i32_74 = arith.constant 0 : i32
    %c0_i32_75 = arith.constant 0 : i32
    %122 = tpu.memref_slice %arg2[%c0_i32_74, %c0_i32_75] : memref<512x128xf32, #tpu.memory_space<any>> -> memref<1x128xf32, #tpu.memory_space<any>>
    %c21_i32 = arith.constant 21 : i32
    %c0_i32_76 = arith.constant 0 : i32
    %123 = tpu.memref_slice %arg6[%16, %c21_i32, %c0_i32_76] : memref<2x64x128xf32, #tpu.memory_space<vmem>> -> memref<1x1x128xf32, #tpu.memory_space<vmem>>
    %124 = tpu.memref_squeeze %123 : memref<1x1x128xf32, #tpu.memory_space<vmem>> -> memref<1x128xf32, #tpu.memory_space<vmem>>
    %125 = tpu.memref_slice %arg7[%16] : memref<2x!tpu.dma_semaphore, #tpu.memory_space<semaphore_mem>> -> memref<1x!tpu.dma_semaphore, #tpu.memory_space<semaphore_mem>>
    %126 = tpu.memref_squeeze %125 : memref<1x!tpu.dma_semaphore, #tpu.memory_space<semaphore_mem>> -> memref<!tpu.dma_semaphore, #tpu.memory_space<semaphore_mem>>
    tpu.wait_dma2 semaphore(%126 : memref<!tpu.dma_semaphore, #tpu.memory_space<semaphore_mem>>) src(%122 : memref<1x128xf32, #tpu.memory_space<any>>) dst(%124 : memref<1x128xf32, #tpu.memory_space<vmem>>)
    %c0_i32_77 = arith.constant 0 : i32
    %c0_i32_78 = arith.constant 0 : i32
    %127 = tpu.memref_slice %arg2[%c0_i32_77, %c0_i32_78] : memref<512x128xf32, #tpu.memory_space<any>> -> memref<1x128xf32, #tpu.memory_space<any>>
    %c22_i32 = arith.constant 22 : i32
    %c0_i32_79 = arith.constant 0 : i32
    %128 = tpu.memref_slice %arg6[%16, %c22_i32, %c0_i32_79] : memref<2x64x128xf32, #tpu.memory_space<vmem>> -> memref<1x1x128xf32, #tpu.memory_space<vmem>>
    %129 = tpu.memref_squeeze %128 : memref<1x1x128xf32, #tpu.memory_space<vmem>> -> memref<1x128xf32, #tpu.memory_space<vmem>>
    %130 = tpu.memref_slice %arg7[%16] : memref<2x!tpu.dma_semaphore, #tpu.memory_space<semaphore_mem>> -> memref<1x!tpu.dma_semaphore, #tpu.memory_space<semaphore_mem>>
    %131 = tpu.memref_squeeze %130 : memref<1x!tpu.dma_semaphore, #tpu.memory_space<semaphore_mem>> -> memref<!tpu.dma_semaphore, #tpu.memory_space<semaphore_mem>>
    tpu.wait_dma2 semaphore(%131 : memref<!tpu.dma_semaphore, #tpu.memory_space<semaphore_mem>>) src(%127 : memref<1x128xf32, #tpu.memory_space<any>>) dst(%129 : memref<1x128xf32, #tpu.memory_space<vmem>>)
    %c0_i32_80 = arith.constant 0 : i32
    %c0_i32_81 = arith.constant 0 : i32
    %132 = tpu.memref_slice %arg2[%c0_i32_80, %c0_i32_81] : memref<512x128xf32, #tpu.memory_space<any>> -> memref<1x128xf32, #tpu.memory_space<any>>
    %c23_i32 = arith.constant 23 : i32
    %c0_i32_82 = arith.constant 0 : i32
    %133 = tpu.memref_slice %arg6[%16, %c23_i32, %c0_i32_82] : memref<2x64x128xf32, #tpu.memory_space<vmem>> -> memref<1x1x128xf32, #tpu.memory_space<vmem>>
    %134 = tpu.memref_squeeze %133 : memref<1x1x128xf32, #tpu.memory_space<vmem>> -> memref<1x128xf32, #tpu.memory_space<vmem>>
    %135 = tpu.memref_slice %arg7[%16] : memref<2x!tpu.dma_semaphore, #tpu.memory_space<semaphore_mem>> -> memref<1x!tpu.dma_semaphore, #tpu.memory_space<semaphore_mem>>
    %136 = tpu.memref_squeeze %135 : memref<1x!tpu.dma_semaphore, #tpu.memory_space<semaphore_mem>> -> memref<!tpu.dma_semaphore, #tpu.memory_space<semaphore_mem>>
    tpu.wait_dma2 semaphore(%136 : memref<!tpu.dma_semaphore, #tpu.memory_space<semaphore_mem>>) src(%132 : memref<1x128xf32, #tpu.memory_space<any>>) dst(%134 : memref<1x128xf32, #tpu.memory_space<vmem>>)
    %c0_i32_83 = arith.constant 0 : i32
    %c0_i32_84 = arith.constant 0 : i32
    %137 = tpu.memref_slice %arg2[%c0_i32_83, %c0_i32_84] : memref<512x128xf32, #tpu.memory_space<any>> -> memref<1x128xf32, #tpu.memory_space<any>>
    %c24_i32 = arith.constant 24 : i32
    %c0_i32_85 = arith.constant 0 : i32
    %138 = tpu.memref_slice %arg6[%16, %c24_i32, %c0_i32_85] : memref<2x64x128xf32, #tpu.memory_space<vmem>> -> memref<1x1x128xf32, #tpu.memory_space<vmem>>
    %139 = tpu.memref_squeeze %138 : memref<1x1x128xf32, #tpu.memory_space<vmem>> -> memref<1x128xf32, #tpu.memory_space<vmem>>
    %140 = tpu.memref_slice %arg7[%16] : memref<2x!tpu.dma_semaphore, #tpu.memory_space<semaphore_mem>> -> memref<1x!tpu.dma_semaphore, #tpu.memory_space<semaphore_mem>>
    %141 = tpu.memref_squeeze %140 : memref<1x!tpu.dma_semaphore, #tpu.memory_space<semaphore_mem>> -> memref<!tpu.dma_semaphore, #tpu.memory_space<semaphore_mem>>
    tpu.wait_dma2 semaphore(%141 : memref<!tpu.dma_semaphore, #tpu.memory_space<semaphore_mem>>) src(%137 : memref<1x128xf32, #tpu.memory_space<any>>) dst(%139 : memref<1x128xf32, #tpu.memory_space<vmem>>)
    %c0_i32_86 = arith.constant 0 : i32
    %c0_i32_87 = arith.constant 0 : i32
    %142 = tpu.memref_slice %arg2[%c0_i32_86, %c0_i32_87] : memref<512x128xf32, #tpu.memory_space<any>> -> memref<1x128xf32, #tpu.memory_space<any>>
    %c25_i32 = arith.constant 25 : i32
    %c0_i32_88 = arith.constant 0 : i32
    %143 = tpu.memref_slice %arg6[%16, %c25_i32, %c0_i32_88] : memref<2x64x128xf32, #tpu.memory_space<vmem>> -> memref<1x1x128xf32, #tpu.memory_space<vmem>>
    %144 = tpu.memref_squeeze %143 : memref<1x1x128xf32, #tpu.memory_space<vmem>> -> memref<1x128xf32, #tpu.memory_space<vmem>>
    %145 = tpu.memref_slice %arg7[%16] : memref<2x!tpu.dma_semaphore, #tpu.memory_space<semaphore_mem>> -> memref<1x!tpu.dma_semaphore, #tpu.memory_space<semaphore_mem>>
    %146 = tpu.memref_squeeze %145 : memref<1x!tpu.dma_semaphore, #tpu.memory_space<semaphore_mem>> -> memref<!tpu.dma_semaphore, #tpu.memory_space<semaphore_mem>>
    tpu.wait_dma2 semaphore(%146 : memref<!tpu.dma_semaphore, #tpu.memory_space<semaphore_mem>>) src(%142 : memref<1x128xf32, #tpu.memory_space<any>>) dst(%144 : memref<1x128xf32, #tpu.memory_space<vmem>>)
    %c0_i32_89 = arith.constant 0 : i32
    %c0_i32_90 = arith.constant 0 : i32
    %147 = tpu.memref_slice %arg2[%c0_i32_89, %c0_i32_90] : memref<512x128xf32, #tpu.memory_space<any>> -> memref<1x128xf32, #tpu.memory_space<any>>
    %c26_i32 = arith.constant 26 : i32
    %c0_i32_91 = arith.constant 0 : i32
    %148 = tpu.memref_slice %arg6[%16, %c26_i32, %c0_i32_91] : memref<2x64x128xf32, #tpu.memory_space<vmem>> -> memref<1x1x128xf32, #tpu.memory_space<vmem>>
    %149 = tpu.memref_squeeze %148 : memref<1x1x128xf32, #tpu.memory_space<vmem>> -> memref<1x128xf32, #tpu.memory_space<vmem>>
    %150 = tpu.memref_slice %arg7[%16] : memref<2x!tpu.dma_semaphore, #tpu.memory_space<semaphore_mem>> -> memref<1x!tpu.dma_semaphore, #tpu.memory_space<semaphore_mem>>
    %151 = tpu.memref_squeeze %150 : memref<1x!tpu.dma_semaphore, #tpu.memory_space<semaphore_mem>> -> memref<!tpu.dma_semaphore, #tpu.memory_space<semaphore_mem>>
    tpu.wait_dma2 semaphore(%151 : memref<!tpu.dma_semaphore, #tpu.memory_space<semaphore_mem>>) src(%147 : memref<1x128xf32, #tpu.memory_space<any>>) dst(%149 : memref<1x128xf32, #tpu.memory_space<vmem>>)
    %c0_i32_92 = arith.constant 0 : i32
    %c0_i32_93 = arith.constant 0 : i32
    %152 = tpu.memref_slice %arg2[%c0_i32_92, %c0_i32_93] : memref<512x128xf32, #tpu.memory_space<any>> -> memref<1x128xf32, #tpu.memory_space<any>>
    %c27_i32 = arith.constant 27 : i32
    %c0_i32_94 = arith.constant 0 : i32
    %153 = tpu.memref_slice %arg6[%16, %c27_i32, %c0_i32_94] : memref<2x64x128xf32, #tpu.memory_space<vmem>> -> memref<1x1x128xf32, #tpu.memory_space<vmem>>
    %154 = tpu.memref_squeeze %153 : memref<1x1x128xf32, #tpu.memory_space<vmem>> -> memref<1x128xf32, #tpu.memory_space<vmem>>
    %155 = tpu.memref_slice %arg7[%16] : memref<2x!tpu.dma_semaphore, #tpu.memory_space<semaphore_mem>> -> memref<1x!tpu.dma_semaphore, #tpu.memory_space<semaphore_mem>>
    %156 = tpu.memref_squeeze %155 : memref<1x!tpu.dma_semaphore, #tpu.memory_space<semaphore_mem>> -> memref<!tpu.dma_semaphore, #tpu.memory_space<semaphore_mem>>
    tpu.wait_dma2 semaphore(%156 : memref<!tpu.dma_semaphore, #tpu.memory_space<semaphore_mem>>) src(%152 : memref<1x128xf32, #tpu.memory_space<any>>) dst(%154 : memref<1x128xf32, #tpu.memory_space<vmem>>)
    %c0_i32_95 = arith.constant 0 : i32
    %c0_i32_96 = arith.constant 0 : i32
    %157 = tpu.memref_slice %arg2[%c0_i32_95, %c0_i32_96] : memref<512x128xf32, #tpu.memory_space<any>> -> memref<1x128xf32, #tpu.memory_space<any>>
    %c28_i32 = arith.constant 28 : i32
    %c0_i32_97 = arith.constant 0 : i32
    %158 = tpu.memref_slice %arg6[%16, %c28_i32, %c0_i32_97] : memref<2x64x128xf32, #tpu.memory_space<vmem>> -> memref<1x1x128xf32, #tpu.memory_space<vmem>>
    %159 = tpu.memref_squeeze %158 : memref<1x1x128xf32, #tpu.memory_space<vmem>> -> memref<1x128xf32, #tpu.memory_space<vmem>>
    %160 = tpu.memref_slice %arg7[%16] : memref<2x!tpu.dma_semaphore, #tpu.memory_space<semaphore_mem>> -> memref<1x!tpu.dma_semaphore, #tpu.memory_space<semaphore_mem>>
    %161 = tpu.memref_squeeze %160 : memref<1x!tpu.dma_semaphore, #tpu.memory_space<semaphore_mem>> -> memref<!tpu.dma_semaphore, #tpu.memory_space<semaphore_mem>>
    tpu.wait_dma2 semaphore(%161 : memref<!tpu.dma_semaphore, #tpu.memory_space<semaphore_mem>>) src(%157 : memref<1x128xf32, #tpu.memory_space<any>>) dst(%159 : memref<1x128xf32, #tpu.memory_space<vmem>>)
    %c0_i32_98 = arith.constant 0 : i32
    %c0_i32_99 = arith.constant 0 : i32
    %162 = tpu.memref_slice %arg2[%c0_i32_98, %c0_i32_99] : memref<512x128xf32, #tpu.memory_space<any>> -> memref<1x128xf32, #tpu.memory_space<any>>
    %c29_i32 = arith.constant 29 : i32
    %c0_i32_100 = arith.constant 0 : i32
    %163 = tpu.memref_slice %arg6[%16, %c29_i32, %c0_i32_100] : memref<2x64x128xf32, #tpu.memory_space<vmem>> -> memref<1x1x128xf32, #tpu.memory_space<vmem>>
    %164 = tpu.memref_squeeze %163 : memref<1x1x128xf32, #tpu.memory_space<vmem>> -> memref<1x128xf32, #tpu.memory_space<vmem>>
    %165 = tpu.memref_slice %arg7[%16] : memref<2x!tpu.dma_semaphore, #tpu.memory_space<semaphore_mem>> -> memref<1x!tpu.dma_semaphore, #tpu.memory_space<semaphore_mem>>
    %166 = tpu.memref_squeeze %165 : memref<1x!tpu.dma_semaphore, #tpu.memory_space<semaphore_mem>> -> memref<!tpu.dma_semaphore, #tpu.memory_space<semaphore_mem>>
    tpu.wait_dma2 semaphore(%166 : memref<!tpu.dma_semaphore, #tpu.memory_space<semaphore_mem>>) src(%162 : memref<1x128xf32, #tpu.memory_space<any>>) dst(%164 : memref<1x128xf32, #tpu.memory_space<vmem>>)
    %c0_i32_101 = arith.constant 0 : i32
    %c0_i32_102 = arith.constant 0 : i32
    %167 = tpu.memref_slice %arg2[%c0_i32_101, %c0_i32_102] : memref<512x128xf32, #tpu.memory_space<any>> -> memref<1x128xf32, #tpu.memory_space<any>>
    %c30_i32 = arith.constant 30 : i32
    %c0_i32_103 = arith.constant 0 : i32
    %168 = tpu.memref_slice %arg6[%16, %c30_i32, %c0_i32_103] : memref<2x64x128xf32, #tpu.memory_space<vmem>> -> memref<1x1x128xf32, #tpu.memory_space<vmem>>
    %169 = tpu.memref_squeeze %168 : memref<1x1x128xf32, #tpu.memory_space<vmem>> -> memref<1x128xf32, #tpu.memory_space<vmem>>
    %170 = tpu.memref_slice %arg7[%16] : memref<2x!tpu.dma_semaphore, #tpu.memory_space<semaphore_mem>> -> memref<1x!tpu.dma_semaphore, #tpu.memory_space<semaphore_mem>>
    %171 = tpu.memref_squeeze %170 : memref<1x!tpu.dma_semaphore, #tpu.memory_space<semaphore_mem>> -> memref<!tpu.dma_semaphore, #tpu.memory_space<semaphore_mem>>
    tpu.wait_dma2 semaphore(%171 : memref<!tpu.dma_semaphore, #tpu.memory_space<semaphore_mem>>) src(%167 : memref<1x128xf32, #tpu.memory_space<any>>) dst(%169 : memref<1x128xf32, #tpu.memory_space<vmem>>)
    %c0_i32_104 = arith.constant 0 : i32
    %c0_i32_105 = arith.constant 0 : i32
    %172 = tpu.memref_slice %arg2[%c0_i32_104, %c0_i32_105] : memref<512x128xf32, #tpu.memory_space<any>> -> memref<1x128xf32, #tpu.memory_space<any>>
    %c31_i32 = arith.constant 31 : i32
    %c0_i32_106 = arith.constant 0 : i32
    %173 = tpu.memref_slice %arg6[%16, %c31_i32, %c0_i32_106] : memref<2x64x128xf32, #tpu.memory_space<vmem>> -> memref<1x1x128xf32, #tpu.memory_space<vmem>>
    %174 = tpu.memref_squeeze %173 : memref<1x1x128xf32, #tpu.memory_space<vmem>> -> memref<1x128xf32, #tpu.memory_space<vmem>>
    %175 = tpu.memref_slice %arg7[%16] : memref<2x!tpu.dma_semaphore, #tpu.memory_space<semaphore_mem>> -> memref<1x!tpu.dma_semaphore, #tpu.memory_space<semaphore_mem>>
    %176 = tpu.memref_squeeze %175 : memref<1x!tpu.dma_semaphore, #tpu.memory_space<semaphore_mem>> -> memref<!tpu.dma_semaphore, #tpu.memory_space<semaphore_mem>>
    tpu.wait_dma2 semaphore(%176 : memref<!tpu.dma_semaphore, #tpu.memory_space<semaphore_mem>>) src(%172 : memref<1x128xf32, #tpu.memory_space<any>>) dst(%174 : memref<1x128xf32, #tpu.memory_space<vmem>>)
    %c0_i32_107 = arith.constant 0 : i32
    %c0_i32_108 = arith.constant 0 : i32
    %177 = tpu.memref_slice %arg2[%c0_i32_107, %c0_i32_108] : memref<512x128xf32, #tpu.memory_space<any>> -> memref<1x128xf32, #tpu.memory_space<any>>
    %c32_i32 = arith.constant 32 : i32
    %c0_i32_109 = arith.constant 0 : i32
    %178 = tpu.memref_slice %arg6[%16, %c32_i32, %c0_i32_109] : memref<2x64x128xf32, #tpu.memory_space<vmem>> -> memref<1x1x128xf32, #tpu.memory_space<vmem>>
    %179 = tpu.memref_squeeze %178 : memref<1x1x128xf32, #tpu.memory_space<vmem>> -> memref<1x128xf32, #tpu.memory_space<vmem>>
    %180 = tpu.memref_slice %arg7[%16] : memref<2x!tpu.dma_semaphore, #tpu.memory_space<semaphore_mem>> -> memref<1x!tpu.dma_semaphore, #tpu.memory_space<semaphore_mem>>
    %181 = tpu.memref_squeeze %180 : memref<1x!tpu.dma_semaphore, #tpu.memory_space<semaphore_mem>> -> memref<!tpu.dma_semaphore, #tpu.memory_space<semaphore_mem>>
    tpu.wait_dma2 semaphore(%181 : memref<!tpu.dma_semaphore, #tpu.memory_space<semaphore_mem>>) src(%177 : memref<1x128xf32, #tpu.memory_space<any>>) dst(%179 : memref<1x128xf32, #tpu.memory_space<vmem>>)
    %c0_i32_110 = arith.constant 0 : i32
    %c0_i32_111 = arith.constant 0 : i32
    %182 = tpu.memref_slice %arg2[%c0_i32_110, %c0_i32_111] : memref<512x128xf32, #tpu.memory_space<any>> -> memref<1x128xf32, #tpu.memory_space<any>>
    %c33_i32 = arith.constant 33 : i32
    %c0_i32_112 = arith.constant 0 : i32
    %183 = tpu.memref_slice %arg6[%16, %c33_i32, %c0_i32_112] : memref<2x64x128xf32, #tpu.memory_space<vmem>> -> memref<1x1x128xf32, #tpu.memory_space<vmem>>
    %184 = tpu.memref_squeeze %183 : memref<1x1x128xf32, #tpu.memory_space<vmem>> -> memref<1x128xf32, #tpu.memory_space<vmem>>
    %185 = tpu.memref_slice %arg7[%16] : memref<2x!tpu.dma_semaphore, #tpu.memory_space<semaphore_mem>> -> memref<1x!tpu.dma_semaphore, #tpu.memory_space<semaphore_mem>>
    %186 = tpu.memref_squeeze %185 : memref<1x!tpu.dma_semaphore, #tpu.memory_space<semaphore_mem>> -> memref<!tpu.dma_semaphore, #tpu.memory_space<semaphore_mem>>
    tpu.wait_dma2 semaphore(%186 : memref<!tpu.dma_semaphore, #tpu.memory_space<semaphore_mem>>) src(%182 : memref<1x128xf32, #tpu.memory_space<any>>) dst(%184 : memref<1x128xf32, #tpu.memory_space<vmem>>)
    %c0_i32_113 = arith.constant 0 : i32
    %c0_i32_114 = arith.constant 0 : i32
    %187 = tpu.memref_slice %arg2[%c0_i32_113, %c0_i32_114] : memref<512x128xf32, #tpu.memory_space<any>> -> memref<1x128xf32, #tpu.memory_space<any>>
    %c34_i32 = arith.constant 34 : i32
    %c0_i32_115 = arith.constant 0 : i32
    %188 = tpu.memref_slice %arg6[%16, %c34_i32, %c0_i32_115] : memref<2x64x128xf32, #tpu.memory_space<vmem>> -> memref<1x1x128xf32, #tpu.memory_space<vmem>>
    %189 = tpu.memref_squeeze %188 : memref<1x1x128xf32, #tpu.memory_space<vmem>> -> memref<1x128xf32, #tpu.memory_space<vmem>>
    %190 = tpu.memref_slice %arg7[%16] : memref<2x!tpu.dma_semaphore, #tpu.memory_space<semaphore_mem>> -> memref<1x!tpu.dma_semaphore, #tpu.memory_space<semaphore_mem>>
    %191 = tpu.memref_squeeze %190 : memref<1x!tpu.dma_semaphore, #tpu.memory_space<semaphore_mem>> -> memref<!tpu.dma_semaphore, #tpu.memory_space<semaphore_mem>>
    tpu.wait_dma2 semaphore(%191 : memref<!tpu.dma_semaphore, #tpu.memory_space<semaphore_mem>>) src(%187 : memref<1x128xf32, #tpu.memory_space<any>>) dst(%189 : memref<1x128xf32, #tpu.memory_space<vmem>>)
    %c0_i32_116 = arith.constant 0 : i32
    %c0_i32_117 = arith.constant 0 : i32
    %192 = tpu.memref_slice %arg2[%c0_i32_116, %c0_i32_117] : memref<512x128xf32, #tpu.memory_space<any>> -> memref<1x128xf32, #tpu.memory_space<any>>
    %c35_i32 = arith.constant 35 : i32
    %c0_i32_118 = arith.constant 0 : i32
    %193 = tpu.memref_slice %arg6[%16, %c35_i32, %c0_i32_118] : memref<2x64x128xf32, #tpu.memory_space<vmem>> -> memref<1x1x128xf32, #tpu.memory_space<vmem>>
    %194 = tpu.memref_squeeze %193 : memref<1x1x128xf32, #tpu.memory_space<vmem>> -> memref<1x128xf32, #tpu.memory_space<vmem>>
    %195 = tpu.memref_slice %arg7[%16] : memref<2x!tpu.dma_semaphore, #tpu.memory_space<semaphore_mem>> -> memref<1x!tpu.dma_semaphore, #tpu.memory_space<semaphore_mem>>
    %196 = tpu.memref_squeeze %195 : memref<1x!tpu.dma_semaphore, #tpu.memory_space<semaphore_mem>> -> memref<!tpu.dma_semaphore, #tpu.memory_space<semaphore_mem>>
    tpu.wait_dma2 semaphore(%196 : memref<!tpu.dma_semaphore, #tpu.memory_space<semaphore_mem>>) src(%192 : memref<1x128xf32, #tpu.memory_space<any>>) dst(%194 : memref<1x128xf32, #tpu.memory_space<vmem>>)
    %c0_i32_119 = arith.constant 0 : i32
    %c0_i32_120 = arith.constant 0 : i32
    %197 = tpu.memref_slice %arg2[%c0_i32_119, %c0_i32_120] : memref<512x128xf32, #tpu.memory_space<any>> -> memref<1x128xf32, #tpu.memory_space<any>>
    %c36_i32 = arith.constant 36 : i32
    %c0_i32_121 = arith.constant 0 : i32
    %198 = tpu.memref_slice %arg6[%16, %c36_i32, %c0_i32_121] : memref<2x64x128xf32, #tpu.memory_space<vmem>> -> memref<1x1x128xf32, #tpu.memory_space<vmem>>
    %199 = tpu.memref_squeeze %198 : memref<1x1x128xf32, #tpu.memory_space<vmem>> -> memref<1x128xf32, #tpu.memory_space<vmem>>
    %200 = tpu.memref_slice %arg7[%16] : memref<2x!tpu.dma_semaphore, #tpu.memory_space<semaphore_mem>> -> memref<1x!tpu.dma_semaphore, #tpu.memory_space<semaphore_mem>>
    %201 = tpu.memref_squeeze %200 : memref<1x!tpu.dma_semaphore, #tpu.memory_space<semaphore_mem>> -> memref<!tpu.dma_semaphore, #tpu.memory_space<semaphore_mem>>
    tpu.wait_dma2 semaphore(%201 : memref<!tpu.dma_semaphore, #tpu.memory_space<semaphore_mem>>) src(%197 : memref<1x128xf32, #tpu.memory_space<any>>) dst(%199 : memref<1x128xf32, #tpu.memory_space<vmem>>)
    %c0_i32_122 = arith.constant 0 : i32
    %c0_i32_123 = arith.constant 0 : i32
    %202 = tpu.memref_slice %arg2[%c0_i32_122, %c0_i32_123] : memref<512x128xf32, #tpu.memory_space<any>> -> memref<1x128xf32, #tpu.memory_space<any>>
    %c37_i32 = arith.constant 37 : i32
    %c0_i32_124 = arith.constant 0 : i32
    %203 = tpu.memref_slice %arg6[%16, %c37_i32, %c0_i32_124] : memref<2x64x128xf32, #tpu.memory_space<vmem>> -> memref<1x1x128xf32, #tpu.memory_space<vmem>>
    %204 = tpu.memref_squeeze %203 : memref<1x1x128xf32, #tpu.memory_space<vmem>> -> memref<1x128xf32, #tpu.memory_space<vmem>>
    %205 = tpu.memref_slice %arg7[%16] : memref<2x!tpu.dma_semaphore, #tpu.memory_space<semaphore_mem>> -> memref<1x!tpu.dma_semaphore, #tpu.memory_space<semaphore_mem>>
    %206 = tpu.memref_squeeze %205 : memref<1x!tpu.dma_semaphore, #tpu.memory_space<semaphore_mem>> -> memref<!tpu.dma_semaphore, #tpu.memory_space<semaphore_mem>>
    tpu.wait_dma2 semaphore(%206 : memref<!tpu.dma_semaphore, #tpu.memory_space<semaphore_mem>>) src(%202 : memref<1x128xf32, #tpu.memory_space<any>>) dst(%204 : memref<1x128xf32, #tpu.memory_space<vmem>>)
    %c0_i32_125 = arith.constant 0 : i32
    %c0_i32_126 = arith.constant 0 : i32
    %207 = tpu.memref_slice %arg2[%c0_i32_125, %c0_i32_126] : memref<512x128xf32, #tpu.memory_space<any>> -> memref<1x128xf32, #tpu.memory_space<any>>
    %c38_i32 = arith.constant 38 : i32
    %c0_i32_127 = arith.constant 0 : i32
    %208 = tpu.memref_slice %arg6[%16, %c38_i32, %c0_i32_127] : memref<2x64x128xf32, #tpu.memory_space<vmem>> -> memref<1x1x128xf32, #tpu.memory_space<vmem>>
    %209 = tpu.memref_squeeze %208 : memref<1x1x128xf32, #tpu.memory_space<vmem>> -> memref<1x128xf32, #tpu.memory_space<vmem>>
    %210 = tpu.memref_slice %arg7[%16] : memref<2x!tpu.dma_semaphore, #tpu.memory_space<semaphore_mem>> -> memref<1x!tpu.dma_semaphore, #tpu.memory_space<semaphore_mem>>
    %211 = tpu.memref_squeeze %210 : memref<1x!tpu.dma_semaphore, #tpu.memory_space<semaphore_mem>> -> memref<!tpu.dma_semaphore, #tpu.memory_space<semaphore_mem>>
    tpu.wait_dma2 semaphore(%211 : memref<!tpu.dma_semaphore, #tpu.memory_space<semaphore_mem>>) src(%207 : memref<1x128xf32, #tpu.memory_space<any>>) dst(%209 : memref<1x128xf32, #tpu.memory_space<vmem>>)
    %c0_i32_128 = arith.constant 0 : i32
    %c0_i32_129 = arith.constant 0 : i32
    %212 = tpu.memref_slice %arg2[%c0_i32_128, %c0_i32_129] : memref<512x128xf32, #tpu.memory_space<any>> -> memref<1x128xf32, #tpu.memory_space<any>>
    %c39_i32 = arith.constant 39 : i32
    %c0_i32_130 = arith.constant 0 : i32
    %213 = tpu.memref_slice %arg6[%16, %c39_i32, %c0_i32_130] : memref<2x64x128xf32, #tpu.memory_space<vmem>> -> memref<1x1x128xf32, #tpu.memory_space<vmem>>
    %214 = tpu.memref_squeeze %213 : memref<1x1x128xf32, #tpu.memory_space<vmem>> -> memref<1x128xf32, #tpu.memory_space<vmem>>
    %215 = tpu.memref_slice %arg7[%16] : memref<2x!tpu.dma_semaphore, #tpu.memory_space<semaphore_mem>> -> memref<1x!tpu.dma_semaphore, #tpu.memory_space<semaphore_mem>>
    %216 = tpu.memref_squeeze %215 : memref<1x!tpu.dma_semaphore, #tpu.memory_space<semaphore_mem>> -> memref<!tpu.dma_semaphore, #tpu.memory_space<semaphore_mem>>
    tpu.wait_dma2 semaphore(%216 : memref<!tpu.dma_semaphore, #tpu.memory_space<semaphore_mem>>) src(%212 : memref<1x128xf32, #tpu.memory_space<any>>) dst(%214 : memref<1x128xf32, #tpu.memory_space<vmem>>)
    %c0_i32_131 = arith.constant 0 : i32
    %c0_i32_132 = arith.constant 0 : i32
    %217 = tpu.memref_slice %arg2[%c0_i32_131, %c0_i32_132] : memref<512x128xf32, #tpu.memory_space<any>> -> memref<1x128xf32, #tpu.memory_space<any>>
    %c40_i32 = arith.constant 40 : i32
    %c0_i32_133 = arith.constant 0 : i32
    %218 = tpu.memref_slice %arg6[%16, %c40_i32, %c0_i32_133] : memref<2x64x128xf32, #tpu.memory_space<vmem>> -> memref<1x1x128xf32, #tpu.memory_space<vmem>>
    %219 = tpu.memref_squeeze %218 : memref<1x1x128xf32, #tpu.memory_space<vmem>> -> memref<1x128xf32, #tpu.memory_space<vmem>>
    %220 = tpu.memref_slice %arg7[%16] : memref<2x!tpu.dma_semaphore, #tpu.memory_space<semaphore_mem>> -> memref<1x!tpu.dma_semaphore, #tpu.memory_space<semaphore_mem>>
    %221 = tpu.memref_squeeze %220 : memref<1x!tpu.dma_semaphore, #tpu.memory_space<semaphore_mem>> -> memref<!tpu.dma_semaphore, #tpu.memory_space<semaphore_mem>>
    tpu.wait_dma2 semaphore(%221 : memref<!tpu.dma_semaphore, #tpu.memory_space<semaphore_mem>>) src(%217 : memref<1x128xf32, #tpu.memory_space<any>>) dst(%219 : memref<1x128xf32, #tpu.memory_space<vmem>>)
    %c0_i32_134 = arith.constant 0 : i32
    %c0_i32_135 = arith.constant 0 : i32
    %222 = tpu.memref_slice %arg2[%c0_i32_134, %c0_i32_135] : memref<512x128xf32, #tpu.memory_space<any>> -> memref<1x128xf32, #tpu.memory_space<any>>
    %c41_i32 = arith.constant 41 : i32
    %c0_i32_136 = arith.constant 0 : i32
    %223 = tpu.memref_slice %arg6[%16, %c41_i32, %c0_i32_136] : memref<2x64x128xf32, #tpu.memory_space<vmem>> -> memref<1x1x128xf32, #tpu.memory_space<vmem>>
    %224 = tpu.memref_squeeze %223 : memref<1x1x128xf32, #tpu.memory_space<vmem>> -> memref<1x128xf32, #tpu.memory_space<vmem>>
    %225 = tpu.memref_slice %arg7[%16] : memref<2x!tpu.dma_semaphore, #tpu.memory_space<semaphore_mem>> -> memref<1x!tpu.dma_semaphore, #tpu.memory_space<semaphore_mem>>
    %226 = tpu.memref_squeeze %225 : memref<1x!tpu.dma_semaphore, #tpu.memory_space<semaphore_mem>> -> memref<!tpu.dma_semaphore, #tpu.memory_space<semaphore_mem>>
    tpu.wait_dma2 semaphore(%226 : memref<!tpu.dma_semaphore, #tpu.memory_space<semaphore_mem>>) src(%222 : memref<1x128xf32, #tpu.memory_space<any>>) dst(%224 : memref<1x128xf32, #tpu.memory_space<vmem>>)
    %c0_i32_137 = arith.constant 0 : i32
    %c0_i32_138 = arith.constant 0 : i32
    %227 = tpu.memref_slice %arg2[%c0_i32_137, %c0_i32_138] : memref<512x128xf32, #tpu.memory_space<any>> -> memref<1x128xf32, #tpu.memory_space<any>>
    %c42_i32 = arith.constant 42 : i32
    %c0_i32_139 = arith.constant 0 : i32
    %228 = tpu.memref_slice %arg6[%16, %c42_i32, %c0_i32_139] : memref<2x64x128xf32, #tpu.memory_space<vmem>> -> memref<1x1x128xf32, #tpu.memory_space<vmem>>
    %229 = tpu.memref_squeeze %228 : memref<1x1x128xf32, #tpu.memory_space<vmem>> -> memref<1x128xf32, #tpu.memory_space<vmem>>
    %230 = tpu.memref_slice %arg7[%16] : memref<2x!tpu.dma_semaphore, #tpu.memory_space<semaphore_mem>> -> memref<1x!tpu.dma_semaphore, #tpu.memory_space<semaphore_mem>>
    %231 = tpu.memref_squeeze %230 : memref<1x!tpu.dma_semaphore, #tpu.memory_space<semaphore_mem>> -> memref<!tpu.dma_semaphore, #tpu.memory_space<semaphore_mem>>
    tpu.wait_dma2 semaphore(%231 : memref<!tpu.dma_semaphore, #tpu.memory_space<semaphore_mem>>) src(%227 : memref<1x128xf32, #tpu.memory_space<any>>) dst(%229 : memref<1x128xf32, #tpu.memory_space<vmem>>)
    %c0_i32_140 = arith.constant 0 : i32
    %c0_i32_141 = arith.constant 0 : i32
    %232 = tpu.memref_slice %arg2[%c0_i32_140, %c0_i32_141] : memref<512x128xf32, #tpu.memory_space<any>> -> memref<1x128xf32, #tpu.memory_space<any>>
    %c43_i32 = arith.constant 43 : i32
    %c0_i32_142 = arith.constant 0 : i32
    %233 = tpu.memref_slice %arg6[%16, %c43_i32, %c0_i32_142] : memref<2x64x128xf32, #tpu.memory_space<vmem>> -> memref<1x1x128xf32, #tpu.memory_space<vmem>>
    %234 = tpu.memref_squeeze %233 : memref<1x1x128xf32, #tpu.memory_space<vmem>> -> memref<1x128xf32, #tpu.memory_space<vmem>>
    %235 = tpu.memref_slice %arg7[%16] : memref<2x!tpu.dma_semaphore, #tpu.memory_space<semaphore_mem>> -> memref<1x!tpu.dma_semaphore, #tpu.memory_space<semaphore_mem>>
    %236 = tpu.memref_squeeze %235 : memref<1x!tpu.dma_semaphore, #tpu.memory_space<semaphore_mem>> -> memref<!tpu.dma_semaphore, #tpu.memory_space<semaphore_mem>>
    tpu.wait_dma2 semaphore(%236 : memref<!tpu.dma_semaphore, #tpu.memory_space<semaphore_mem>>) src(%232 : memref<1x128xf32, #tpu.memory_space<any>>) dst(%234 : memref<1x128xf32, #tpu.memory_space<vmem>>)
    %c0_i32_143 = arith.constant 0 : i32
    %c0_i32_144 = arith.constant 0 : i32
    %237 = tpu.memref_slice %arg2[%c0_i32_143, %c0_i32_144] : memref<512x128xf32, #tpu.memory_space<any>> -> memref<1x128xf32, #tpu.memory_space<any>>
    %c44_i32 = arith.constant 44 : i32
    %c0_i32_145 = arith.constant 0 : i32
    %238 = tpu.memref_slice %arg6[%16, %c44_i32, %c0_i32_145] : memref<2x64x128xf32, #tpu.memory_space<vmem>> -> memref<1x1x128xf32, #tpu.memory_space<vmem>>
    %239 = tpu.memref_squeeze %238 : memref<1x1x128xf32, #tpu.memory_space<vmem>> -> memref<1x128xf32, #tpu.memory_space<vmem>>
    %240 = tpu.memref_slice %arg7[%16] : memref<2x!tpu.dma_semaphore, #tpu.memory_space<semaphore_mem>> -> memref<1x!tpu.dma_semaphore, #tpu.memory_space<semaphore_mem>>
    %241 = tpu.memref_squeeze %240 : memref<1x!tpu.dma_semaphore, #tpu.memory_space<semaphore_mem>> -> memref<!tpu.dma_semaphore, #tpu.memory_space<semaphore_mem>>
    tpu.wait_dma2 semaphore(%241 : memref<!tpu.dma_semaphore, #tpu.memory_space<semaphore_mem>>) src(%237 : memref<1x128xf32, #tpu.memory_space<any>>) dst(%239 : memref<1x128xf32, #tpu.memory_space<vmem>>)
    %c0_i32_146 = arith.constant 0 : i32
    %c0_i32_147 = arith.constant 0 : i32
    %242 = tpu.memref_slice %arg2[%c0_i32_146, %c0_i32_147] : memref<512x128xf32, #tpu.memory_space<any>> -> memref<1x128xf32, #tpu.memory_space<any>>
    %c45_i32 = arith.constant 45 : i32
    %c0_i32_148 = arith.constant 0 : i32
    %243 = tpu.memref_slice %arg6[%16, %c45_i32, %c0_i32_148] : memref<2x64x128xf32, #tpu.memory_space<vmem>> -> memref<1x1x128xf32, #tpu.memory_space<vmem>>
    %244 = tpu.memref_squeeze %243 : memref<1x1x128xf32, #tpu.memory_space<vmem>> -> memref<1x128xf32, #tpu.memory_space<vmem>>
    %245 = tpu.memref_slice %arg7[%16] : memref<2x!tpu.dma_semaphore, #tpu.memory_space<semaphore_mem>> -> memref<1x!tpu.dma_semaphore, #tpu.memory_space<semaphore_mem>>
    %246 = tpu.memref_squeeze %245 : memref<1x!tpu.dma_semaphore, #tpu.memory_space<semaphore_mem>> -> memref<!tpu.dma_semaphore, #tpu.memory_space<semaphore_mem>>
    tpu.wait_dma2 semaphore(%246 : memref<!tpu.dma_semaphore, #tpu.memory_space<semaphore_mem>>) src(%242 : memref<1x128xf32, #tpu.memory_space<any>>) dst(%244 : memref<1x128xf32, #tpu.memory_space<vmem>>)
    %c0_i32_149 = arith.constant 0 : i32
    %c0_i32_150 = arith.constant 0 : i32
    %247 = tpu.memref_slice %arg2[%c0_i32_149, %c0_i32_150] : memref<512x128xf32, #tpu.memory_space<any>> -> memref<1x128xf32, #tpu.memory_space<any>>
    %c46_i32 = arith.constant 46 : i32
    %c0_i32_151 = arith.constant 0 : i32
    %248 = tpu.memref_slice %arg6[%16, %c46_i32, %c0_i32_151] : memref<2x64x128xf32, #tpu.memory_space<vmem>> -> memref<1x1x128xf32, #tpu.memory_space<vmem>>
    %249 = tpu.memref_squeeze %248 : memref<1x1x128xf32, #tpu.memory_space<vmem>> -> memref<1x128xf32, #tpu.memory_space<vmem>>
    %250 = tpu.memref_slice %arg7[%16] : memref<2x!tpu.dma_semaphore, #tpu.memory_space<semaphore_mem>> -> memref<1x!tpu.dma_semaphore, #tpu.memory_space<semaphore_mem>>
    %251 = tpu.memref_squeeze %250 : memref<1x!tpu.dma_semaphore, #tpu.memory_space<semaphore_mem>> -> memref<!tpu.dma_semaphore, #tpu.memory_space<semaphore_mem>>
    tpu.wait_dma2 semaphore(%251 : memref<!tpu.dma_semaphore, #tpu.memory_space<semaphore_mem>>) src(%247 : memref<1x128xf32, #tpu.memory_space<any>>) dst(%249 : memref<1x128xf32, #tpu.memory_space<vmem>>)
    %c0_i32_152 = arith.constant 0 : i32
    %c0_i32_153 = arith.constant 0 : i32
    %252 = tpu.memref_slice %arg2[%c0_i32_152, %c0_i32_153] : memref<512x128xf32, #tpu.memory_space<any>> -> memref<1x128xf32, #tpu.memory_space<any>>
    %c47_i32 = arith.constant 47 : i32
    %c0_i32_154 = arith.constant 0 : i32
    %253 = tpu.memref_slice %arg6[%16, %c47_i32, %c0_i32_154] : memref<2x64x128xf32, #tpu.memory_space<vmem>> -> memref<1x1x128xf32, #tpu.memory_space<vmem>>
    %254 = tpu.memref_squeeze %253 : memref<1x1x128xf32, #tpu.memory_space<vmem>> -> memref<1x128xf32, #tpu.memory_space<vmem>>
    %255 = tpu.memref_slice %arg7[%16] : memref<2x!tpu.dma_semaphore, #tpu.memory_space<semaphore_mem>> -> memref<1x!tpu.dma_semaphore, #tpu.memory_space<semaphore_mem>>
    %256 = tpu.memref_squeeze %255 : memref<1x!tpu.dma_semaphore, #tpu.memory_space<semaphore_mem>> -> memref<!tpu.dma_semaphore, #tpu.memory_space<semaphore_mem>>
    tpu.wait_dma2 semaphore(%256 : memref<!tpu.dma_semaphore, #tpu.memory_space<semaphore_mem>>) src(%252 : memref<1x128xf32, #tpu.memory_space<any>>) dst(%254 : memref<1x128xf32, #tpu.memory_space<vmem>>)
    %c0_i32_155 = arith.constant 0 : i32
    %c0_i32_156 = arith.constant 0 : i32
    %257 = tpu.memref_slice %arg2[%c0_i32_155, %c0_i32_156] : memref<512x128xf32, #tpu.memory_space<any>> -> memref<1x128xf32, #tpu.memory_space<any>>
    %c48_i32 = arith.constant 48 : i32
    %c0_i32_157 = arith.constant 0 : i32
    %258 = tpu.memref_slice %arg6[%16, %c48_i32, %c0_i32_157] : memref<2x64x128xf32, #tpu.memory_space<vmem>> -> memref<1x1x128xf32, #tpu.memory_space<vmem>>
    %259 = tpu.memref_squeeze %258 : memref<1x1x128xf32, #tpu.memory_space<vmem>> -> memref<1x128xf32, #tpu.memory_space<vmem>>
    %260 = tpu.memref_slice %arg7[%16] : memref<2x!tpu.dma_semaphore, #tpu.memory_space<semaphore_mem>> -> memref<1x!tpu.dma_semaphore, #tpu.memory_space<semaphore_mem>>
    %261 = tpu.memref_squeeze %260 : memref<1x!tpu.dma_semaphore, #tpu.memory_space<semaphore_mem>> -> memref<!tpu.dma_semaphore, #tpu.memory_space<semaphore_mem>>
    tpu.wait_dma2 semaphore(%261 : memref<!tpu.dma_semaphore, #tpu.memory_space<semaphore_mem>>) src(%257 : memref<1x128xf32, #tpu.memory_space<any>>) dst(%259 : memref<1x128xf32, #tpu.memory_space<vmem>>)
    %c0_i32_158 = arith.constant 0 : i32
    %c0_i32_159 = arith.constant 0 : i32
    %262 = tpu.memref_slice %arg2[%c0_i32_158, %c0_i32_159] : memref<512x128xf32, #tpu.memory_space<any>> -> memref<1x128xf32, #tpu.memory_space<any>>
    %c49_i32 = arith.constant 49 : i32
    %c0_i32_160 = arith.constant 0 : i32
    %263 = tpu.memref_slice %arg6[%16, %c49_i32, %c0_i32_160] : memref<2x64x128xf32, #tpu.memory_space<vmem>> -> memref<1x1x128xf32, #tpu.memory_space<vmem>>
    %264 = tpu.memref_squeeze %263 : memref<1x1x128xf32, #tpu.memory_space<vmem>> -> memref<1x128xf32, #tpu.memory_space<vmem>>
    %265 = tpu.memref_slice %arg7[%16] : memref<2x!tpu.dma_semaphore, #tpu.memory_space<semaphore_mem>> -> memref<1x!tpu.dma_semaphore, #tpu.memory_space<semaphore_mem>>
    %266 = tpu.memref_squeeze %265 : memref<1x!tpu.dma_semaphore, #tpu.memory_space<semaphore_mem>> -> memref<!tpu.dma_semaphore, #tpu.memory_space<semaphore_mem>>
    tpu.wait_dma2 semaphore(%266 : memref<!tpu.dma_semaphore, #tpu.memory_space<semaphore_mem>>) src(%262 : memref<1x128xf32, #tpu.memory_space<any>>) dst(%264 : memref<1x128xf32, #tpu.memory_space<vmem>>)
    %c0_i32_161 = arith.constant 0 : i32
    %c0_i32_162 = arith.constant 0 : i32
    %267 = tpu.memref_slice %arg2[%c0_i32_161, %c0_i32_162] : memref<512x128xf32, #tpu.memory_space<any>> -> memref<1x128xf32, #tpu.memory_space<any>>
    %c50_i32 = arith.constant 50 : i32
    %c0_i32_163 = arith.constant 0 : i32
    %268 = tpu.memref_slice %arg6[%16, %c50_i32, %c0_i32_163] : memref<2x64x128xf32, #tpu.memory_space<vmem>> -> memref<1x1x128xf32, #tpu.memory_space<vmem>>
    %269 = tpu.memref_squeeze %268 : memref<1x1x128xf32, #tpu.memory_space<vmem>> -> memref<1x128xf32, #tpu.memory_space<vmem>>
    %270 = tpu.memref_slice %arg7[%16] : memref<2x!tpu.dma_semaphore, #tpu.memory_space<semaphore_mem>> -> memref<1x!tpu.dma_semaphore, #tpu.memory_space<semaphore_mem>>
    %271 = tpu.memref_squeeze %270 : memref<1x!tpu.dma_semaphore, #tpu.memory_space<semaphore_mem>> -> memref<!tpu.dma_semaphore, #tpu.memory_space<semaphore_mem>>
    tpu.wait_dma2 semaphore(%271 : memref<!tpu.dma_semaphore, #tpu.memory_space<semaphore_mem>>) src(%267 : memref<1x128xf32, #tpu.memory_space<any>>) dst(%269 : memref<1x128xf32, #tpu.memory_space<vmem>>)
    %c0_i32_164 = arith.constant 0 : i32
    %c0_i32_165 = arith.constant 0 : i32
    %272 = tpu.memref_slice %arg2[%c0_i32_164, %c0_i32_165] : memref<512x128xf32, #tpu.memory_space<any>> -> memref<1x128xf32, #tpu.memory_space<any>>
    %c51_i32 = arith.constant 51 : i32
    %c0_i32_166 = arith.constant 0 : i32
    %273 = tpu.memref_slice %arg6[%16, %c51_i32, %c0_i32_166] : memref<2x64x128xf32, #tpu.memory_space<vmem>> -> memref<1x1x128xf32, #tpu.memory_space<vmem>>
    %274 = tpu.memref_squeeze %273 : memref<1x1x128xf32, #tpu.memory_space<vmem>> -> memref<1x128xf32, #tpu.memory_space<vmem>>
    %275 = tpu.memref_slice %arg7[%16] : memref<2x!tpu.dma_semaphore, #tpu.memory_space<semaphore_mem>> -> memref<1x!tpu.dma_semaphore, #tpu.memory_space<semaphore_mem>>
    %276 = tpu.memref_squeeze %275 : memref<1x!tpu.dma_semaphore, #tpu.memory_space<semaphore_mem>> -> memref<!tpu.dma_semaphore, #tpu.memory_space<semaphore_mem>>
    tpu.wait_dma2 semaphore(%276 : memref<!tpu.dma_semaphore, #tpu.memory_space<semaphore_mem>>) src(%272 : memref<1x128xf32, #tpu.memory_space<any>>) dst(%274 : memref<1x128xf32, #tpu.memory_space<vmem>>)
    %c0_i32_167 = arith.constant 0 : i32
    %c0_i32_168 = arith.constant 0 : i32
    %277 = tpu.memref_slice %arg2[%c0_i32_167, %c0_i32_168] : memref<512x128xf32, #tpu.memory_space<any>> -> memref<1x128xf32, #tpu.memory_space<any>>
    %c52_i32 = arith.constant 52 : i32
    %c0_i32_169 = arith.constant 0 : i32
    %278 = tpu.memref_slice %arg6[%16, %c52_i32, %c0_i32_169] : memref<2x64x128xf32, #tpu.memory_space<vmem>> -> memref<1x1x128xf32, #tpu.memory_space<vmem>>
    %279 = tpu.memref_squeeze %278 : memref<1x1x128xf32, #tpu.memory_space<vmem>> -> memref<1x128xf32, #tpu.memory_space<vmem>>
    %280 = tpu.memref_slice %arg7[%16] : memref<2x!tpu.dma_semaphore, #tpu.memory_space<semaphore_mem>> -> memref<1x!tpu.dma_semaphore, #tpu.memory_space<semaphore_mem>>
    %281 = tpu.memref_squeeze %280 : memref<1x!tpu.dma_semaphore, #tpu.memory_space<semaphore_mem>> -> memref<!tpu.dma_semaphore, #tpu.memory_space<semaphore_mem>>
    tpu.wait_dma2 semaphore(%281 : memref<!tpu.dma_semaphore, #tpu.memory_space<semaphore_mem>>) src(%277 : memref<1x128xf32, #tpu.memory_space<any>>) dst(%279 : memref<1x128xf32, #tpu.memory_space<vmem>>)
    %c0_i32_170 = arith.constant 0 : i32
    %c0_i32_171 = arith.constant 0 : i32
    %282 = tpu.memref_slice %arg2[%c0_i32_170, %c0_i32_171] : memref<512x128xf32, #tpu.memory_space<any>> -> memref<1x128xf32, #tpu.memory_space<any>>
    %c53_i32 = arith.constant 53 : i32
    %c0_i32_172 = arith.constant 0 : i32
    %283 = tpu.memref_slice %arg6[%16, %c53_i32, %c0_i32_172] : memref<2x64x128xf32, #tpu.memory_space<vmem>> -> memref<1x1x128xf32, #tpu.memory_space<vmem>>
    %284 = tpu.memref_squeeze %283 : memref<1x1x128xf32, #tpu.memory_space<vmem>> -> memref<1x128xf32, #tpu.memory_space<vmem>>
    %285 = tpu.memref_slice %arg7[%16] : memref<2x!tpu.dma_semaphore, #tpu.memory_space<semaphore_mem>> -> memref<1x!tpu.dma_semaphore, #tpu.memory_space<semaphore_mem>>
    %286 = tpu.memref_squeeze %285 : memref<1x!tpu.dma_semaphore, #tpu.memory_space<semaphore_mem>> -> memref<!tpu.dma_semaphore, #tpu.memory_space<semaphore_mem>>
    tpu.wait_dma2 semaphore(%286 : memref<!tpu.dma_semaphore, #tpu.memory_space<semaphore_mem>>) src(%282 : memref<1x128xf32, #tpu.memory_space<any>>) dst(%284 : memref<1x128xf32, #tpu.memory_space<vmem>>)
    %c0_i32_173 = arith.constant 0 : i32
    %c0_i32_174 = arith.constant 0 : i32
    %287 = tpu.memref_slice %arg2[%c0_i32_173, %c0_i32_174] : memref<512x128xf32, #tpu.memory_space<any>> -> memref<1x128xf32, #tpu.memory_space<any>>
    %c54_i32 = arith.constant 54 : i32
    %c0_i32_175 = arith.constant 0 : i32
    %288 = tpu.memref_slice %arg6[%16, %c54_i32, %c0_i32_175] : memref<2x64x128xf32, #tpu.memory_space<vmem>> -> memref<1x1x128xf32, #tpu.memory_space<vmem>>
    %289 = tpu.memref_squeeze %288 : memref<1x1x128xf32, #tpu.memory_space<vmem>> -> memref<1x128xf32, #tpu.memory_space<vmem>>
    %290 = tpu.memref_slice %arg7[%16] : memref<2x!tpu.dma_semaphore, #tpu.memory_space<semaphore_mem>> -> memref<1x!tpu.dma_semaphore, #tpu.memory_space<semaphore_mem>>
    %291 = tpu.memref_squeeze %290 : memref<1x!tpu.dma_semaphore, #tpu.memory_space<semaphore_mem>> -> memref<!tpu.dma_semaphore, #tpu.memory_space<semaphore_mem>>
    tpu.wait_dma2 semaphore(%291 : memref<!tpu.dma_semaphore, #tpu.memory_space<semaphore_mem>>) src(%287 : memref<1x128xf32, #tpu.memory_space<any>>) dst(%289 : memref<1x128xf32, #tpu.memory_space<vmem>>)
    %c0_i32_176 = arith.constant 0 : i32
    %c0_i32_177 = arith.constant 0 : i32
    %292 = tpu.memref_slice %arg2[%c0_i32_176, %c0_i32_177] : memref<512x128xf32, #tpu.memory_space<any>> -> memref<1x128xf32, #tpu.memory_space<any>>
    %c55_i32 = arith.constant 55 : i32
    %c0_i32_178 = arith.constant 0 : i32
    %293 = tpu.memref_slice %arg6[%16, %c55_i32, %c0_i32_178] : memref<2x64x128xf32, #tpu.memory_space<vmem>> -> memref<1x1x128xf32, #tpu.memory_space<vmem>>
    %294 = tpu.memref_squeeze %293 : memref<1x1x128xf32, #tpu.memory_space<vmem>> -> memref<1x128xf32, #tpu.memory_space<vmem>>
    %295 = tpu.memref_slice %arg7[%16] : memref<2x!tpu.dma_semaphore, #tpu.memory_space<semaphore_mem>> -> memref<1x!tpu.dma_semaphore, #tpu.memory_space<semaphore_mem>>
    %296 = tpu.memref_squeeze %295 : memref<1x!tpu.dma_semaphore, #tpu.memory_space<semaphore_mem>> -> memref<!tpu.dma_semaphore, #tpu.memory_space<semaphore_mem>>
    tpu.wait_dma2 semaphore(%296 : memref<!tpu.dma_semaphore, #tpu.memory_space<semaphore_mem>>) src(%292 : memref<1x128xf32, #tpu.memory_space<any>>) dst(%294 : memref<1x128xf32, #tpu.memory_space<vmem>>)
    %c0_i32_179 = arith.constant 0 : i32
    %c0_i32_180 = arith.constant 0 : i32
    %297 = tpu.memref_slice %arg2[%c0_i32_179, %c0_i32_180] : memref<512x128xf32, #tpu.memory_space<any>> -> memref<1x128xf32, #tpu.memory_space<any>>
    %c56_i32 = arith.constant 56 : i32
    %c0_i32_181 = arith.constant 0 : i32
    %298 = tpu.memref_slice %arg6[%16, %c56_i32, %c0_i32_181] : memref<2x64x128xf32, #tpu.memory_space<vmem>> -> memref<1x1x128xf32, #tpu.memory_space<vmem>>
    %299 = tpu.memref_squeeze %298 : memref<1x1x128xf32, #tpu.memory_space<vmem>> -> memref<1x128xf32, #tpu.memory_space<vmem>>
    %300 = tpu.memref_slice %arg7[%16] : memref<2x!tpu.dma_semaphore, #tpu.memory_space<semaphore_mem>> -> memref<1x!tpu.dma_semaphore, #tpu.memory_space<semaphore_mem>>
    %301 = tpu.memref_squeeze %300 : memref<1x!tpu.dma_semaphore, #tpu.memory_space<semaphore_mem>> -> memref<!tpu.dma_semaphore, #tpu.memory_space<semaphore_mem>>
    tpu.wait_dma2 semaphore(%301 : memref<!tpu.dma_semaphore, #tpu.memory_space<semaphore_mem>>) src(%297 : memref<1x128xf32, #tpu.memory_space<any>>) dst(%299 : memref<1x128xf32, #tpu.memory_space<vmem>>)
    %c0_i32_182 = arith.constant 0 : i32
    %c0_i32_183 = arith.constant 0 : i32
    %302 = tpu.memref_slice %arg2[%c0_i32_182, %c0_i32_183] : memref<512x128xf32, #tpu.memory_space<any>> -> memref<1x128xf32, #tpu.memory_space<any>>
    %c57_i32 = arith.constant 57 : i32
    %c0_i32_184 = arith.constant 0 : i32
    %303 = tpu.memref_slice %arg6[%16, %c57_i32, %c0_i32_184] : memref<2x64x128xf32, #tpu.memory_space<vmem>> -> memref<1x1x128xf32, #tpu.memory_space<vmem>>
    %304 = tpu.memref_squeeze %303 : memref<1x1x128xf32, #tpu.memory_space<vmem>> -> memref<1x128xf32, #tpu.memory_space<vmem>>
    %305 = tpu.memref_slice %arg7[%16] : memref<2x!tpu.dma_semaphore, #tpu.memory_space<semaphore_mem>> -> memref<1x!tpu.dma_semaphore, #tpu.memory_space<semaphore_mem>>
    %306 = tpu.memref_squeeze %305 : memref<1x!tpu.dma_semaphore, #tpu.memory_space<semaphore_mem>> -> memref<!tpu.dma_semaphore, #tpu.memory_space<semaphore_mem>>
    tpu.wait_dma2 semaphore(%306 : memref<!tpu.dma_semaphore, #tpu.memory_space<semaphore_mem>>) src(%302 : memref<1x128xf32, #tpu.memory_space<any>>) dst(%304 : memref<1x128xf32, #tpu.memory_space<vmem>>)
    %c0_i32_185 = arith.constant 0 : i32
    %c0_i32_186 = arith.constant 0 : i32
    %307 = tpu.memref_slice %arg2[%c0_i32_185, %c0_i32_186] : memref<512x128xf32, #tpu.memory_space<any>> -> memref<1x128xf32, #tpu.memory_space<any>>
    %c58_i32 = arith.constant 58 : i32
    %c0_i32_187 = arith.constant 0 : i32
    %308 = tpu.memref_slice %arg6[%16, %c58_i32, %c0_i32_187] : memref<2x64x128xf32, #tpu.memory_space<vmem>> -> memref<1x1x128xf32, #tpu.memory_space<vmem>>
    %309 = tpu.memref_squeeze %308 : memref<1x1x128xf32, #tpu.memory_space<vmem>> -> memref<1x128xf32, #tpu.memory_space<vmem>>
    %310 = tpu.memref_slice %arg7[%16] : memref<2x!tpu.dma_semaphore, #tpu.memory_space<semaphore_mem>> -> memref<1x!tpu.dma_semaphore, #tpu.memory_space<semaphore_mem>>
    %311 = tpu.memref_squeeze %310 : memref<1x!tpu.dma_semaphore, #tpu.memory_space<semaphore_mem>> -> memref<!tpu.dma_semaphore, #tpu.memory_space<semaphore_mem>>
    tpu.wait_dma2 semaphore(%311 : memref<!tpu.dma_semaphore, #tpu.memory_space<semaphore_mem>>) src(%307 : memref<1x128xf32, #tpu.memory_space<any>>) dst(%309 : memref<1x128xf32, #tpu.memory_space<vmem>>)
    %c0_i32_188 = arith.constant 0 : i32
    %c0_i32_189 = arith.constant 0 : i32
    %312 = tpu.memref_slice %arg2[%c0_i32_188, %c0_i32_189] : memref<512x128xf32, #tpu.memory_space<any>> -> memref<1x128xf32, #tpu.memory_space<any>>
    %c59_i32 = arith.constant 59 : i32
    %c0_i32_190 = arith.constant 0 : i32
    %313 = tpu.memref_slice %arg6[%16, %c59_i32, %c0_i32_190] : memref<2x64x128xf32, #tpu.memory_space<vmem>> -> memref<1x1x128xf32, #tpu.memory_space<vmem>>
    %314 = tpu.memref_squeeze %313 : memref<1x1x128xf32, #tpu.memory_space<vmem>> -> memref<1x128xf32, #tpu.memory_space<vmem>>
    %315 = tpu.memref_slice %arg7[%16] : memref<2x!tpu.dma_semaphore, #tpu.memory_space<semaphore_mem>> -> memref<1x!tpu.dma_semaphore, #tpu.memory_space<semaphore_mem>>
    %316 = tpu.memref_squeeze %315 : memref<1x!tpu.dma_semaphore, #tpu.memory_space<semaphore_mem>> -> memref<!tpu.dma_semaphore, #tpu.memory_space<semaphore_mem>>
    tpu.wait_dma2 semaphore(%316 : memref<!tpu.dma_semaphore, #tpu.memory_space<semaphore_mem>>) src(%312 : memref<1x128xf32, #tpu.memory_space<any>>) dst(%314 : memref<1x128xf32, #tpu.memory_space<vmem>>)
    %c0_i32_191 = arith.constant 0 : i32
    %c0_i32_192 = arith.constant 0 : i32
    %317 = tpu.memref_slice %arg2[%c0_i32_191, %c0_i32_192] : memref<512x128xf32, #tpu.memory_space<any>> -> memref<1x128xf32, #tpu.memory_space<any>>
    %c60_i32 = arith.constant 60 : i32
    %c0_i32_193 = arith.constant 0 : i32
    %318 = tpu.memref_slice %arg6[%16, %c60_i32, %c0_i32_193] : memref<2x64x128xf32, #tpu.memory_space<vmem>> -> memref<1x1x128xf32, #tpu.memory_space<vmem>>
    %319 = tpu.memref_squeeze %318 : memref<1x1x128xf32, #tpu.memory_space<vmem>> -> memref<1x128xf32, #tpu.memory_space<vmem>>
    %320 = tpu.memref_slice %arg7[%16] : memref<2x!tpu.dma_semaphore, #tpu.memory_space<semaphore_mem>> -> memref<1x!tpu.dma_semaphore, #tpu.memory_space<semaphore_mem>>
    %321 = tpu.memref_squeeze %320 : memref<1x!tpu.dma_semaphore, #tpu.memory_space<semaphore_mem>> -> memref<!tpu.dma_semaphore, #tpu.memory_space<semaphore_mem>>
    tpu.wait_dma2 semaphore(%321 : memref<!tpu.dma_semaphore, #tpu.memory_space<semaphore_mem>>) src(%317 : memref<1x128xf32, #tpu.memory_space<any>>) dst(%319 : memref<1x128xf32, #tpu.memory_space<vmem>>)
    %c0_i32_194 = arith.constant 0 : i32
    %c0_i32_195 = arith.constant 0 : i32
    %322 = tpu.memref_slice %arg2[%c0_i32_194, %c0_i32_195] : memref<512x128xf32, #tpu.memory_space<any>> -> memref<1x128xf32, #tpu.memory_space<any>>
    %c61_i32 = arith.constant 61 : i32
    %c0_i32_196 = arith.constant 0 : i32
    %323 = tpu.memref_slice %arg6[%16, %c61_i32, %c0_i32_196] : memref<2x64x128xf32, #tpu.memory_space<vmem>> -> memref<1x1x128xf32, #tpu.memory_space<vmem>>
    %324 = tpu.memref_squeeze %323 : memref<1x1x128xf32, #tpu.memory_space<vmem>> -> memref<1x128xf32, #tpu.memory_space<vmem>>
    %325 = tpu.memref_slice %arg7[%16] : memref<2x!tpu.dma_semaphore, #tpu.memory_space<semaphore_mem>> -> memref<1x!tpu.dma_semaphore, #tpu.memory_space<semaphore_mem>>
    %326 = tpu.memref_squeeze %325 : memref<1x!tpu.dma_semaphore, #tpu.memory_space<semaphore_mem>> -> memref<!tpu.dma_semaphore, #tpu.memory_space<semaphore_mem>>
    tpu.wait_dma2 semaphore(%326 : memref<!tpu.dma_semaphore, #tpu.memory_space<semaphore_mem>>) src(%322 : memref<1x128xf32, #tpu.memory_space<any>>) dst(%324 : memref<1x128xf32, #tpu.memory_space<vmem>>)
    %c0_i32_197 = arith.constant 0 : i32
    %c0_i32_198 = arith.constant 0 : i32
    %327 = tpu.memref_slice %arg2[%c0_i32_197, %c0_i32_198] : memref<512x128xf32, #tpu.memory_space<any>> -> memref<1x128xf32, #tpu.memory_space<any>>
    %c62_i32 = arith.constant 62 : i32
    %c0_i32_199 = arith.constant 0 : i32
    %328 = tpu.memref_slice %arg6[%16, %c62_i32, %c0_i32_199] : memref<2x64x128xf32, #tpu.memory_space<vmem>> -> memref<1x1x128xf32, #tpu.memory_space<vmem>>
    %329 = tpu.memref_squeeze %328 : memref<1x1x128xf32, #tpu.memory_space<vmem>> -> memref<1x128xf32, #tpu.memory_space<vmem>>
    %330 = tpu.memref_slice %arg7[%16] : memref<2x!tpu.dma_semaphore, #tpu.memory_space<semaphore_mem>> -> memref<1x!tpu.dma_semaphore, #tpu.memory_space<semaphore_mem>>
    %331 = tpu.memref_squeeze %330 : memref<1x!tpu.dma_semaphore, #tpu.memory_space<semaphore_mem>> -> memref<!tpu.dma_semaphore, #tpu.memory_space<semaphore_mem>>
    tpu.wait_dma2 semaphore(%331 : memref<!tpu.dma_semaphore, #tpu.memory_space<semaphore_mem>>) src(%327 : memref<1x128xf32, #tpu.memory_space<any>>) dst(%329 : memref<1x128xf32, #tpu.memory_space<vmem>>)
    %c0_i32_200 = arith.constant 0 : i32
    %c0_i32_201 = arith.constant 0 : i32
    %332 = tpu.memref_slice %arg2[%c0_i32_200, %c0_i32_201] : memref<512x128xf32, #tpu.memory_space<any>> -> memref<1x128xf32, #tpu.memory_space<any>>
    %c63_i32 = arith.constant 63 : i32
    %c0_i32_202 = arith.constant 0 : i32
    %333 = tpu.memref_slice %arg6[%16, %c63_i32, %c0_i32_202] : memref<2x64x128xf32, #tpu.memory_space<vmem>> -> memref<1x1x128xf32, #tpu.memory_space<vmem>>
    %334 = tpu.memref_squeeze %333 : memref<1x1x128xf32, #tpu.memory_space<vmem>> -> memref<1x128xf32, #tpu.memory_space<vmem>>
    %335 = tpu.memref_slice %arg7[%16] : memref<2x!tpu.dma_semaphore, #tpu.memory_space<semaphore_mem>> -> memref<1x!tpu.dma_semaphore, #tpu.memory_space<semaphore_mem>>
    %336 = tpu.memref_squeeze %335 : memref<1x!tpu.dma_semaphore, #tpu.memory_space<semaphore_mem>> -> memref<!tpu.dma_semaphore, #tpu.memory_space<semaphore_mem>>
    tpu.wait_dma2 semaphore(%336 : memref<!tpu.dma_semaphore, #tpu.memory_space<semaphore_mem>>) src(%332 : memref<1x128xf32, #tpu.memory_space<any>>) dst(%334 : memref<1x128xf32, #tpu.memory_space<vmem>>)
    %337 = arith.index_cast %16 : i32 to index
    %c0 = arith.constant 0 : index
    %c0_203 = arith.constant 0 : index
    %338 = vector.load %arg6[%337, %c0, %c0_203] : memref<2x64x128xf32, #tpu.memory_space<vmem>>, vector<1x64x128xf32>
    %339 = vector.shape_cast %338 : vector<1x64x128xf32> to vector<64x128xf32>
    %c0_204 = arith.constant 0 : index
    %c0_205 = arith.constant 0 : index
    %340 = vector.load %arg3[%c0_204, %c0_205] : memref<128x512xf32, #tpu.memory_space<vmem>>, vector<128x512xf32>
    %cst = arith.constant dense<0.000000e+00> : vector<64x512xf32>
    %341 = tpu.matmul %339, %340, %cst {dimension_numbers = #tpu.dot_dimension_numbers<[1], [0], [0], [1], [0, 0, 1, 1], [], []>} : vector<64x128xf32>, vector<128x512xf32>, vector<64x512xf32> -> vector<64x512xf32>
    %c0_206 = arith.constant 0 : index
    %c0_207 = arith.constant 0 : index
    %342 = vector.load %arg4[%c0_206, %c0_207] : memref<1x512xf32, #tpu.memory_space<vmem>>, vector<1x512xf32>
    %343 = vector.broadcast %342 : vector<1x512xf32> to vector<64x512xf32>
    %344 = arith.addf %341, %343 : vector<64x512xf32>
    %c0_208 = arith.constant 0 : index
    %c0_209 = arith.constant 0 : index
    %345 = vector.load %arg5[%c0_208, %c0_209] : memref<64x512xf32, #tpu.memory_space<vmem>>, vector<64x512xf32>
    tpu.vector_store %arg5[%c0_208, %c0_209], %344 {strides = array<i32>} : memref<64x512xf32, #tpu.memory_space<vmem>>, vector<64x512xf32>,
    return
  }
  func.func @transform_1(%arg0: i32, %arg1: memref<64xi32, #tpu.memory_space<smem>>) -> (i32, i32) {
    %c0_i32 = arith.constant 0 : i32
    %c0_i32_0 = arith.constant 0 : i32
    %c0_i32_1 = arith.constant 0 : i32
    return %c0_i32, %c0_i32_0 : i32, i32
  }
  func.func @transform_2(%arg0: i32, %arg1: memref<64xi32, #tpu.memory_space<smem>>) -> (i32, i32) {
    %c0_i32 = arith.constant 0 : i32
    %c0_i32_0 = arith.constant 0 : i32
    %c0_i32_1 = arith.constant 0 : i32
    return %c0_i32, %c0_i32_0 : i32, i32
  }
  func.func @transform_3(%arg0: i32, %arg1: memref<64xi32, #tpu.memory_space<smem>>) -> (i32, i32) {
    %c0_i32 = arith.constant 0 : i32
    %c0_i32_0 = arith.constant 0 : i32
    return %arg0, %c0_i32 : i32, i32
  }
}

</mosaic_0001>

<llo_original>
// kernel: tpu_custom_call.1
$region0: #{tpu_custom_call.1}
  #allocation0 [shape = 'u32[]', space=smem, size = 0x4, offset = 0x4, fixed_abs, tag = 'smem constant byte address 0x4 - core index']
  #allocation1 [shape = 'u32[144,128]{1,0:T(1,128)}', space=vmem, size = 0x12000, scoped, tag = 'internal scratch']
  #allocation2 [shape = 'f32[2,64,128]{2,1,0:T(8,128)}', space=vmem, size = 0x10000, scoped, tag = 'scratch operand']
  #allocation3 [shape = 's32[2]{0}', space=sflag, size = 0x8, scoped, tag = 'scratch operand']
  #allocation4 [shape = 's32[1]{0}', space=sflag, size = 0x4, scoped, tag = 'scoped memory for tpu_custom_call.1']
  #allocation5 [shape = 'u8[512]{0}', space=smem, size = 0x200, scoped, tag = 'prefetched SMEM operand 0']
  #allocation10 [shape = 's32[]', space=sflag, size = 0x4, offset = 0, fixed_abs, tag = 'sflag constant byte address 0x0 - dummy sync flag']
  #allocation11 [shape = 's32[]', space=sflag, size = 0x4, offset = 0, fixed_abs, tag = 'sflag constant byte address 0x0 - dummy sync flag']
  #allocation12 [shape = 'u32[]', space=smem, size = 0x4, offset = 0x44, fixed_abs, tag = 'smem constant byte address 0x44 - assertion arg 0']
  #allocation13 [shape = 'u32[]', space=smem, size = 0x4, offset = 0x48, fixed_abs, tag = 'smem constant byte address 0x48 - assertion arg 1']
  #allocation14 [shape = 's32[]', space=sflag, size = 0x4, offset = 0, fixed_abs, tag = 'sflag constant byte address 0x0 - dummy sync flag']
  #allocation15 [shape = 's32[]', space=sflag, size = 0x4, offset = 0, fixed_abs, tag = 'sflag constant byte address 0x0 - dummy sync flag']
  #allocation16 [shape = 's32[]', space=sflag, size = 0x4, offset = 0, fixed_abs, tag = 'sflag constant byte address 0x0 - dummy sync flag']
  #allocation17 [shape = 's32[]', space=sflag, size = 0x4, offset = 0, fixed_abs, tag = 'sflag constant byte address 0x0 - dummy sync flag']
  #allocation18 [shape = 's32[]', space=sflag, size = 0x4, offset = 0, fixed_abs, tag = 'sflag constant byte address 0x0 - dummy sync flag']
  #allocation19 [shape = 's32[]', space=sflag, size = 0x4, offset = 0, fixed_abs, tag = 'sflag constant byte address 0x0 - dummy sync flag']
  #allocation20 [shape = 's32[]', space=sflag, size = 0x4, offset = 0, fixed_abs, tag = 'sflag constant byte address 0x0 - dummy sync flag']
  #allocation21 [shape = 's32[]', space=sflag, size = 0x4, offset = 0, fixed_abs, tag = 'sflag constant byte address 0x0 - dummy sync flag']
  #allocation22 [shape = 's32[]', space=sflag, size = 0x4, offset = 0, fixed_abs, tag = 'sflag constant byte address 0x0 - dummy sync flag']
  #allocation23 [shape = 's32[]', space=sflag, size = 0x4, offset = 0, fixed_abs, tag = 'sflag constant byte address 0x0 - dummy sync flag']
  #allocation24 [shape = 's32[]', space=sflag, size = 0x4, offset = 0, fixed_abs, tag = 'sflag constant byte address 0x0 - dummy sync flag']
  #allocation25 [shape = 's32[]', space=sflag, size = 0x4, offset = 0, fixed_abs, tag = 'sflag constant byte address 0x0 - dummy sync flag']
  #allocation26 [shape = 's32[]', space=sflag, size = 0x4, offset = 0, fixed_abs, tag = 'sflag constant byte address 0x0 - dummy sync flag']
  #allocation27 [shape = 's32[]', space=sflag, size = 0x4, offset = 0, fixed_abs, tag = 'sflag constant byte address 0x0 - dummy sync flag']
  #allocation28 [shape = 's32[]', space=sflag, size = 0x4, offset = 0, fixed_abs, tag = 'sflag constant byte address 0x0 - dummy sync flag']
  #allocation29 [shape = 's32[]', space=sflag, size = 0x4, offset = 0, fixed_abs, tag = 'sflag constant byte address 0x0 - dummy sync flag']
  #allocation30 [shape = 's32[]', space=sflag, size = 0x4, offset = 0, fixed_abs, tag = 'sflag constant byte address 0x0 - dummy sync flag']
  #allocation31 [shape = 's32[]', space=sflag, size = 0x4, offset = 0, fixed_abs, tag = 'sflag constant byte address 0x0 - dummy sync flag']
  #allocation32 [shape = 's32[]', space=sflag, size = 0x4, offset = 0, fixed_abs, tag = 'sflag constant byte address 0x0 - dummy sync flag']
  #allocation33 [shape = 's32[]', space=sflag, size = 0x4, offset = 0, fixed_abs, tag = 'sflag constant byte address 0x0 - dummy sync flag']
  #allocation34 [shape = 's32[]', space=sflag, size = 0x4, offset = 0, fixed_abs, tag = 'sflag constant byte address 0x0 - dummy sync flag']
  #allocation35 [shape = 's32[]', space=sflag, size = 0x4, offset = 0, fixed_abs, tag = 'sflag constant byte address 0x0 - dummy sync flag']
  #allocation36 [shape = 's32[]', space=sflag, size = 0x4, offset = 0, fixed_abs, tag = 'sflag constant byte address 0x0 - dummy sync flag']
  #allocation37 [shape = 's32[]', space=sflag, size = 0x4, offset = 0, fixed_abs, tag = 'sflag constant byte address 0x0 - dummy sync flag']
  #allocation38 [shape = 's32[]', space=sflag, size = 0x4, offset = 0, fixed_abs, tag = 'sflag constant byte address 0x0 - dummy sync flag']
  #allocation39 [shape = 's32[]', space=sflag, size = 0x4, offset = 0, fixed_abs, tag = 'sflag constant byte address 0x0 - dummy sync flag']
  #allocation40 [shape = 's32[]', space=sflag, size = 0x4, offset = 0, fixed_abs, tag = 'sflag constant byte address 0x0 - dummy sync flag']
  #allocation41 [shape = 's32[]', space=sflag, size = 0x4, offset = 0, fixed_abs, tag = 'sflag constant byte address 0x0 - dummy sync flag']
  #allocation42 [shape = 's32[]', space=sflag, size = 0x4, offset = 0, fixed_abs, tag = 'sflag constant byte address 0x0 - dummy sync flag']
  #allocation43 [shape = 's32[]', space=sflag, size = 0x4, offset = 0, fixed_abs, tag = 'sflag constant byte address 0x0 - dummy sync flag']
  #allocation44 [shape = 's32[]', space=sflag, size = 0x4, offset = 0, fixed_abs, tag = 'sflag constant byte address 0x0 - dummy sync flag']
  #allocation45 [shape = 's32[]', space=sflag, size = 0x4, offset = 0, fixed_abs, tag = 'sflag constant byte address 0x0 - dummy sync flag']
  #allocation46 [shape = 's32[]', space=sflag, size = 0x4, offset = 0, fixed_abs, tag = 'sflag constant byte address 0x0 - dummy sync flag']
  #allocation47 [shape = 's32[]', space=sflag, size = 0x4, offset = 0, fixed_abs, tag = 'sflag constant byte address 0x0 - dummy sync flag']
  #allocation48 [shape = 's32[]', space=sflag, size = 0x4, offset = 0, fixed_abs, tag = 'sflag constant byte address 0x0 - dummy sync flag']
  #allocation49 [shape = 's32[]', space=sflag, size = 0x4, offset = 0, fixed_abs, tag = 'sflag constant byte address 0x0 - dummy sync flag']
  #allocation50 [shape = 's32[]', space=sflag, size = 0x4, offset = 0, fixed_abs, tag = 'sflag constant byte address 0x0 - dummy sync flag']
  #allocation51 [shape = 's32[]', space=sflag, size = 0x4, offset = 0, fixed_abs, tag = 'sflag constant byte address 0x0 - dummy sync flag']
  #allocation52 [shape = 's32[]', space=sflag, size = 0x4, offset = 0, fixed_abs, tag = 'sflag constant byte address 0x0 - dummy sync flag']
  #allocation53 [shape = 's32[]', space=sflag, size = 0x4, offset = 0, fixed_abs, tag = 'sflag constant byte address 0x0 - dummy sync flag']
  #allocation54 [shape = 's32[]', space=sflag, size = 0x4, offset = 0, fixed_abs, tag = 'sflag constant byte address 0x0 - dummy sync flag']
  #allocation55 [shape = 's32[]', space=sflag, size = 0x4, offset = 0, fixed_abs, tag = 'sflag constant byte address 0x0 - dummy sync flag']
  #allocation56 [shape = 's32[]', space=sflag, size = 0x4, offset = 0, fixed_abs, tag = 'sflag constant byte address 0x0 - dummy sync flag']
  #allocation57 [shape = 's32[]', space=sflag, size = 0x4, offset = 0, fixed_abs, tag = 'sflag constant byte address 0x0 - dummy sync flag']
  #allocation58 [shape = 's32[]', space=sflag, size = 0x4, offset = 0, fixed_abs, tag = 'sflag constant byte address 0x0 - dummy sync flag']
  #allocation59 [shape = 's32[]', space=sflag, size = 0x4, offset = 0, fixed_abs, tag = 'sflag constant byte address 0x0 - dummy sync flag']
  #allocation60 [shape = 's32[]', space=sflag, size = 0x4, offset = 0, fixed_abs, tag = 'sflag constant byte address 0x0 - dummy sync flag']
  #allocation61 [shape = 's32[]', space=sflag, size = 0x4, offset = 0, fixed_abs, tag = 'sflag constant byte address 0x0 - dummy sync flag']
  #allocation62 [shape = 's32[]', space=sflag, size = 0x4, offset = 0, fixed_abs, tag = 'sflag constant byte address 0x0 - dummy sync flag']
  #allocation63 [shape = 's32[]', space=sflag, size = 0x4, offset = 0, fixed_abs, tag = 'sflag constant byte address 0x0 - dummy sync flag']
  #allocation64 [shape = 's32[]', space=sflag, size = 0x4, offset = 0, fixed_abs, tag = 'sflag constant byte address 0x0 - dummy sync flag']
  #allocation65 [shape = 's32[]', space=sflag, size = 0x4, offset = 0, fixed_abs, tag = 'sflag constant byte address 0x0 - dummy sync flag']
  #allocation66 [shape = 's32[]', space=sflag, size = 0x4, offset = 0, fixed_abs, tag = 'sflag constant byte address 0x0 - dummy sync flag']
  #allocation67 [shape = 's32[]', space=sflag, size = 0x4, offset = 0, fixed_abs, tag = 'sflag constant byte address 0x0 - dummy sync flag']
  #allocation68 [shape = 's32[]', space=sflag, size = 0x4, offset = 0, fixed_abs, tag = 'sflag constant byte address 0x0 - dummy sync flag']
  #allocation69 [shape = 's32[]', space=sflag, size = 0x4, offset = 0, fixed_abs, tag = 'sflag constant byte address 0x0 - dummy sync flag']
  #allocation70 [shape = 's32[]', space=sflag, size = 0x4, offset = 0, fixed_abs, tag = 'sflag constant byte address 0x0 - dummy sync flag']
  #allocation71 [shape = 's32[]', space=sflag, size = 0x4, offset = 0, fixed_abs, tag = 'sflag constant byte address 0x0 - dummy sync flag']
  #allocation72 [shape = 's32[]', space=sflag, size = 0x4, offset = 0, fixed_abs, tag = 'sflag constant byte address 0x0 - dummy sync flag']
  #allocation73 [shape = 's32[]', space=sflag, size = 0x4, offset = 0, fixed_abs, tag = 'sflag constant byte address 0x0 - dummy sync flag']
  #allocation74 [shape = 's32[]', space=sflag, size = 0x4, offset = 0, fixed_abs, tag = 'sflag constant byte address 0x0 - dummy sync flag']
  #allocation75 [shape = 's32[]', space=sflag, size = 0x4, offset = 0, fixed_abs, tag = 'sflag constant byte address 0x0 - dummy sync flag']
  #allocation76 [shape = 's32[]', space=sflag, size = 0x4, offset = 0, fixed_abs, tag = 'sflag constant byte address 0x0 - dummy sync flag']
  #allocation77 [shape = 's32[]', space=sflag, size = 0x4, offset = 0, fixed_abs, tag = 'sflag constant byte address 0x0 - dummy sync flag']
  #allocation78 [shape = 's32[]', space=sflag, size = 0x4, offset = 0, fixed_abs, tag = 'sflag constant byte address 0x0 - dummy sync flag']
  #allocation79 [shape = 's32[]', space=sflag, size = 0x4, offset = 0, fixed_abs, tag = 'sflag constant byte address 0x0 - dummy sync flag']
  #allocation80 [shape = 's32[]', space=sflag, size = 0x4, offset = 0, fixed_abs, tag = 'sflag constant byte address 0x0 - dummy sync flag']
  #allocation81 [shape = 's32[]', space=sflag, size = 0x4, offset = 0, fixed_abs, tag = 'sflag constant byte address 0x0 - dummy sync flag']
  #allocation82 [shape = 's32[]', space=sflag, size = 0x4, offset = 0, fixed_abs, tag = 'sflag constant byte address 0x0 - dummy sync flag']
  #allocation83 [shape = 's32[]', space=sflag, size = 0x4, offset = 0, fixed_abs, tag = 'sflag constant byte address 0x0 - dummy sync flag']
  #allocation84 [shape = 's32[]', space=sflag, size = 0x4, offset = 0, fixed_abs, tag = 'sflag constant byte address 0x0 - dummy sync flag']
  #allocation85 [shape = 's32[]', space=sflag, size = 0x4, offset = 0, fixed_abs, tag = 'sflag constant byte address 0x0 - dummy sync flag']
  #allocation86 [shape = 's32[]', space=sflag, size = 0x4, offset = 0, fixed_abs, tag = 'sflag constant byte address 0x0 - dummy sync flag']
  #allocation87 [shape = 's32[]', space=sflag, size = 0x4, offset = 0, fixed_abs, tag = 'sflag constant byte address 0x0 - dummy sync flag']
  #allocation88 [shape = 's32[]', space=sflag, size = 0x4, offset = 0, fixed_abs, tag = 'sflag constant byte address 0x0 - dummy sync flag']
  #allocation89 [shape = 's32[]', space=sflag, size = 0x4, offset = 0, fixed_abs, tag = 'sflag constant byte address 0x0 - dummy sync flag']
  #allocation90 [shape = 's32[]', space=sflag, size = 0x4, offset = 0, fixed_abs, tag = 'sflag constant byte address 0x0 - dummy sync flag']
  #allocation91 [shape = 's32[]', space=sflag, size = 0x4, offset = 0, fixed_abs, tag = 'sflag constant byte address 0x0 - dummy sync flag']
  #allocation92 [shape = 's32[]', space=sflag, size = 0x4, offset = 0, fixed_abs, tag = 'sflag constant byte address 0x0 - dummy sync flag']
  #allocation93 [shape = 's32[]', space=sflag, size = 0x4, offset = 0, fixed_abs, tag = 'sflag constant byte address 0x0 - dummy sync flag']
  #allocation94 [shape = 's32[]', space=sflag, size = 0x4, offset = 0, fixed_abs, tag = 'sflag constant byte address 0x0 - dummy sync flag']
  #allocation95 [shape = 's32[]', space=sflag, size = 0x4, offset = 0, fixed_abs, tag = 'sflag constant byte address 0x0 - dummy sync flag']
  #allocation96 [shape = 's32[]', space=sflag, size = 0x4, offset = 0, fixed_abs, tag = 'sflag constant byte address 0x0 - dummy sync flag']
  #allocation97 [shape = 's32[]', space=sflag, size = 0x4, offset = 0, fixed_abs, tag = 'sflag constant byte address 0x0 - dummy sync flag']
  #allocation98 [shape = 's32[]', space=sflag, size = 0x4, offset = 0, fixed_abs, tag = 'sflag constant byte address 0x0 - dummy sync flag']
  #allocation99 [shape = 's32[]', space=sflag, size = 0x4, offset = 0, fixed_abs, tag = 'sflag constant byte address 0x0 - dummy sync flag']
  #allocation100 [shape = 's32[]', space=sflag, size = 0x4, offset = 0, fixed_abs, tag = 'sflag constant byte address 0x0 - dummy sync flag']
  #allocation101 [shape = 's32[]', space=sflag, size = 0x4, offset = 0, fixed_abs, tag = 'sflag constant byte address 0x0 - dummy sync flag']
  #allocation102 [shape = 's32[]', space=sflag, size = 0x4, offset = 0, fixed_abs, tag = 'sflag constant byte address 0x0 - dummy sync flag']
  #allocation103 [shape = 's32[]', space=sflag, size = 0x4, offset = 0, fixed_abs, tag = 'sflag constant byte address 0x0 - dummy sync flag']
  #allocation104 [shape = 's32[]', space=sflag, size = 0x4, offset = 0, fixed_abs, tag = 'sflag constant byte address 0x0 - dummy sync flag']
  #allocation105 [shape = 's32[]', space=sflag, size = 0x4, offset = 0, fixed_abs, tag = 'sflag constant byte address 0x0 - dummy sync flag']
  #allocation106 [shape = 's32[]', space=sflag, size = 0x4, offset = 0, fixed_abs, tag = 'sflag constant byte address 0x0 - dummy sync flag']
  #allocation107 [shape = 's32[]', space=sflag, size = 0x4, offset = 0, fixed_abs, tag = 'sflag constant byte address 0x0 - dummy sync flag']
  #allocation108 [shape = 's32[]', space=sflag, size = 0x4, offset = 0, fixed_abs, tag = 'sflag constant byte address 0x0 - dummy sync flag']
  #allocation109 [shape = 's32[]', space=sflag, size = 0x4, offset = 0, fixed_abs, tag = 'sflag constant byte address 0x0 - dummy sync flag']
  #allocation110 [shape = 's32[]', space=sflag, size = 0x4, offset = 0, fixed_abs, tag = 'sflag constant byte address 0x0 - dummy sync flag']
  #allocation111 [shape = 's32[]', space=sflag, size = 0x4, offset = 0, fixed_abs, tag = 'sflag constant byte address 0x0 - dummy sync flag']
  #allocation112 [shape = 's32[]', space=sflag, size = 0x4, offset = 0, fixed_abs, tag = 'sflag constant byte address 0x0 - dummy sync flag']
  #allocation113 [shape = 's32[]', space=sflag, size = 0x4, offset = 0, fixed_abs, tag = 'sflag constant byte address 0x0 - dummy sync flag']
  #allocation114 [shape = 's32[]', space=sflag, size = 0x4, offset = 0, fixed_abs, tag = 'sflag constant byte address 0x0 - dummy sync flag']
  #allocation115 [shape = 's32[]', space=sflag, size = 0x4, offset = 0, fixed_abs, tag = 'sflag constant byte address 0x0 - dummy sync flag']
  #allocation116 [shape = 's32[]', space=sflag, size = 0x4, offset = 0, fixed_abs, tag = 'sflag constant byte address 0x0 - dummy sync flag']
  #allocation117 [shape = 's32[]', space=sflag, size = 0x4, offset = 0, fixed_abs, tag = 'sflag constant byte address 0x0 - dummy sync flag']
  #allocation118 [shape = 's32[]', space=sflag, size = 0x4, offset = 0, fixed_abs, tag = 'sflag constant byte address 0x0 - dummy sync flag']
  #allocation119 [shape = 's32[]', space=sflag, size = 0x4, offset = 0, fixed_abs, tag = 'sflag constant byte address 0x0 - dummy sync flag']
  #allocation120 [shape = 's32[]', space=sflag, size = 0x4, offset = 0, fixed_abs, tag = 'sflag constant byte address 0x0 - dummy sync flag']
  #allocation121 [shape = 's32[]', space=sflag, size = 0x4, offset = 0, fixed_abs, tag = 'sflag constant byte address 0x0 - dummy sync flag']
  #allocation122 [shape = 's32[]', space=sflag, size = 0x4, offset = 0, fixed_abs, tag = 'sflag constant byte address 0x0 - dummy sync flag']
  #allocation123 [shape = 's32[]', space=sflag, size = 0x4, offset = 0, fixed_abs, tag = 'sflag constant byte address 0x0 - dummy sync flag']
  #allocation124 [shape = 's32[]', space=sflag, size = 0x4, offset = 0, fixed_abs, tag = 'sflag constant byte address 0x0 - dummy sync flag']
  #allocation125 [shape = 's32[]', space=sflag, size = 0x4, offset = 0, fixed_abs, tag = 'sflag constant byte address 0x0 - dummy sync flag']
  #allocation126 [shape = 's32[]', space=sflag, size = 0x4, offset = 0, fixed_abs, tag = 'sflag constant byte address 0x0 - dummy sync flag']
  #allocation127 [shape = 's32[]', space=sflag, size = 0x4, offset = 0, fixed_abs, tag = 'sflag constant byte address 0x0 - dummy sync flag']
  #allocation128 [shape = 's32[]', space=sflag, size = 0x4, offset = 0, fixed_abs, tag = 'sflag constant byte address 0x0 - dummy sync flag']
  #allocation129 [shape = 's32[]', space=sflag, size = 0x4, offset = 0, fixed_abs, tag = 'sflag constant byte address 0x0 - dummy sync flag']
  #allocation130 [shape = 's32[]', space=sflag, size = 0x4, offset = 0, fixed_abs, tag = 'sflag constant byte address 0x0 - dummy sync flag']
  #allocation131 [shape = 's32[]', space=sflag, size = 0x4, offset = 0, fixed_abs, tag = 'sflag constant byte address 0x0 - dummy sync flag']
  #allocation132 [shape = 's32[]', space=sflag, size = 0x4, offset = 0, fixed_abs, tag = 'sflag constant byte address 0x0 - dummy sync flag']
  #allocation133 [shape = 's32[]', space=sflag, size = 0x4, offset = 0, fixed_abs, tag = 'sflag constant byte address 0x0 - dummy sync flag']
  #allocation134 [shape = 's32[]', space=sflag, size = 0x4, offset = 0, fixed_abs, tag = 'sflag constant byte address 0x0 - dummy sync flag']
  #allocation135 [shape = 's32[]', space=sflag, size = 0x4, offset = 0, fixed_abs, tag = 'sflag constant byte address 0x0 - dummy sync flag']
  #allocation136 [shape = 's32[]', space=sflag, size = 0x4, offset = 0, fixed_abs, tag = 'sflag constant byte address 0x0 - dummy sync flag']
  #allocation137 [shape = 's32[]', space=sflag, size = 0x4, offset = 0, fixed_abs, tag = 'sflag constant byte address 0x0 - dummy sync flag']
  #allocation138 [shape = 's32[]', space=sflag, size = 0x4, offset = 0, fixed_abs, tag = 'sflag constant byte address 0x0 - dummy sync flag']
  #allocation139 [shape = 's32[]', space=sflag, size = 0x4, offset = 0, fixed_abs, tag = 'sflag constant byte address 0x0 - dummy sync flag']
  #allocation140 [shape = 's32[]', space=sflag, size = 0x4, offset = 0, fixed_abs, tag = 'sflag constant byte address 0x0 - dummy sync flag']
  #allocation141 [shape = 's32[]', space=sflag, size = 0x4, offset = 0, fixed_abs, tag = 'sflag constant byte address 0x0 - dummy sync flag']
  #allocation142 [shape = 's32[]', space=sflag, size = 0x4, offset = 0, fixed_abs, tag = 'sflag constant byte address 0x0 - dummy sync flag']
  #allocation143 [shape = 's32[]', space=sflag, size = 0x4, offset = 0, fixed_abs, tag = 'sflag constant byte address 0x0 - dummy sync flag']
  #allocation144 [shape = 's32[]', space=sflag, size = 0x4, offset = 0, fixed_abs, tag = 'sflag constant byte address 0x0 - dummy sync flag']
  #allocation145 [shape = 's32[]', space=sflag, size = 0x4, offset = 0, fixed_abs, tag = 'sflag constant byte address 0x0 - dummy sync flag']
  #allocation146 [shape = 's32[]', space=sflag, size = 0x4, offset = 0, fixed_abs, tag = 'sflag constant byte address 0x0 - dummy sync flag']
  #allocation147 [shape = 's32[]', space=sflag, size = 0x4, offset = 0, fixed_abs, tag = 'sflag constant byte address 0x0 - dummy sync flag']
  #allocation148 [shape = 's32[]', space=sflag, size = 0x4, offset = 0, fixed_abs, tag = 'sflag constant byte address 0x0 - dummy sync flag']
  #allocation149 [shape = 's32[]', space=sflag, size = 0x4, offset = 0, fixed_abs, tag = 'sflag constant byte address 0x0 - dummy sync flag']
  #allocation150 [shape = 's32[]', space=sflag, size = 0x4, offset = 0, fixed_abs, tag = 'sflag constant byte address 0x0 - dummy sync flag']
  #allocation151 [shape = 's32[]', space=sflag, size = 0x4, offset = 0, fixed_abs, tag = 'sflag constant byte address 0x0 - dummy sync flag']
  #allocation152 [shape = 's32[]', space=sflag, size = 0x4, offset = 0, fixed_abs, tag = 'sflag constant byte address 0x0 - dummy sync flag']
  #allocation153 [shape = 's32[]', space=sflag, size = 0x4, offset = 0, fixed_abs, tag = 'sflag constant byte address 0x0 - dummy sync flag']
  #allocation154 [shape = 's32[]', space=sflag, size = 0x4, offset = 0, fixed_abs, tag = 'sflag constant byte address 0x0 - dummy sync flag']
  #allocation155 [shape = 's32[]', space=sflag, size = 0x4, offset = 0, fixed_abs, tag = 'sflag constant byte address 0x0 - dummy sync flag']
  #allocation156 [shape = 's32[]', space=sflag, size = 0x4, offset = 0, fixed_abs, tag = 'sflag constant byte address 0x0 - dummy sync flag']
  #allocation157 [shape = 's32[]', space=sflag, size = 0x4, offset = 0, fixed_abs, tag = 'sflag constant byte address 0x0 - dummy sync flag']
  #allocation158 [shape = 's32[]', space=sflag, size = 0x4, offset = 0, fixed_abs, tag = 'sflag constant byte address 0x0 - dummy sync flag']
  #allocation159 [shape = 's32[]', space=sflag, size = 0x4, offset = 0, fixed_abs, tag = 'sflag constant byte address 0x0 - dummy sync flag']
  #allocation160 [shape = 's32[]', space=sflag, size = 0x4, offset = 0, fixed_abs, tag = 'sflag constant byte address 0x0 - dummy sync flag']
  #allocation161 [shape = 's32[]', space=sflag, size = 0x4, offset = 0, fixed_abs, tag = 'sflag constant byte address 0x0 - dummy sync flag']
  #allocation162 [shape = 's32[]', space=sflag, size = 0x4, offset = 0, fixed_abs, tag = 'sflag constant byte address 0x0 - dummy sync flag']
  #allocation163 [shape = 's32[]', space=sflag, size = 0x4, offset = 0, fixed_abs, tag = 'sflag constant byte address 0x0 - dummy sync flag']
  #allocation164 [shape = 's32[]', space=sflag, size = 0x4, offset = 0, fixed_abs, tag = 'sflag constant byte address 0x0 - dummy sync flag']
  #allocation165 [shape = 's32[]', space=sflag, size = 0x4, offset = 0, fixed_abs, tag = 'sflag constant byte address 0x0 - dummy sync flag']
  #allocation166 [shape = 's32[]', space=sflag, size = 0x4, offset = 0, fixed_abs, tag = 'sflag constant byte address 0x0 - dummy sync flag']
  #allocation167 [shape = 's32[]', space=sflag, size = 0x4, offset = 0, fixed_abs, tag = 'sflag constant byte address 0x0 - dummy sync flag']
  #allocation168 [shape = 's32[]', space=sflag, size = 0x4, offset = 0, fixed_abs, tag = 'sflag constant byte address 0x0 - dummy sync flag']
  #allocation169 [shape = 's32[]', space=sflag, size = 0x4, offset = 0, fixed_abs, tag = 'sflag constant byte address 0x0 - dummy sync flag']
  #allocation170 [shape = 's32[]', space=sflag, size = 0x4, offset = 0, fixed_abs, tag = 'sflag constant byte address 0x0 - dummy sync flag']
  #allocation171 [shape = 's32[]', space=sflag, size = 0x4, offset = 0, fixed_abs, tag = 'sflag constant byte address 0x0 - dummy sync flag']
  #allocation172 [shape = 's32[]', space=sflag, size = 0x4, offset = 0, fixed_abs, tag = 'sflag constant byte address 0x0 - dummy sync flag']
  #allocation173 [shape = 's32[]', space=sflag, size = 0x4, offset = 0, fixed_abs, tag = 'sflag constant byte address 0x0 - dummy sync flag']
  #allocation174 [shape = 's32[]', space=sflag, size = 0x4, offset = 0, fixed_abs, tag = 'sflag constant byte address 0x0 - dummy sync flag']
  #allocation175 [shape = 's32[]', space=sflag, size = 0x4, offset = 0, fixed_abs, tag = 'sflag constant byte address 0x0 - dummy sync flag']
  #allocation176 [shape = 's32[]', space=sflag, size = 0x4, offset = 0, fixed_abs, tag = 'sflag constant byte address 0x0 - dummy sync flag']
  #allocation177 [shape = 's32[]', space=sflag, size = 0x4, offset = 0, fixed_abs, tag = 'sflag constant byte address 0x0 - dummy sync flag']
  #allocation178 [shape = 's32[]', space=sflag, size = 0x4, offset = 0, fixed_abs, tag = 'sflag constant byte address 0x0 - dummy sync flag']
  #allocation179 [shape = 's32[]', space=sflag, size = 0x4, offset = 0, fixed_abs, tag = 'sflag constant byte address 0x0 - dummy sync flag']
  #allocation180 [shape = 's32[]', space=sflag, size = 0x4, offset = 0, fixed_abs, tag = 'sflag constant byte address 0x0 - dummy sync flag']
  #allocation181 [shape = 's32[]', space=sflag, size = 0x4, offset = 0, fixed_abs, tag = 'sflag constant byte address 0x0 - dummy sync flag']
  #allocation182 [shape = 's32[]', space=sflag, size = 0x4, offset = 0, fixed_abs, tag = 'sflag constant byte address 0x0 - dummy sync flag']
  #allocation183 [shape = 's32[]', space=sflag, size = 0x4, offset = 0, fixed_abs, tag = 'sflag constant byte address 0x0 - dummy sync flag']
  #allocation184 [shape = 's32[]', space=sflag, size = 0x4, offset = 0, fixed_abs, tag = 'sflag constant byte address 0x0 - dummy sync flag']
  #allocation185 [shape = 's32[]', space=sflag, size = 0x4, offset = 0, fixed_abs, tag = 'sflag constant byte address 0x0 - dummy sync flag']
  #allocation186 [shape = 's32[]', space=sflag, size = 0x4, offset = 0, fixed_abs, tag = 'sflag constant byte address 0x0 - dummy sync flag']
  #allocation187 [shape = 's32[]', space=sflag, size = 0x4, offset = 0, fixed_abs, tag = 'sflag constant byte address 0x0 - dummy sync flag']
  #allocation188 [shape = 's32[]', space=sflag, size = 0x4, offset = 0, fixed_abs, tag = 'sflag constant byte address 0x0 - dummy sync flag']
  #allocation189 [shape = 's32[]', space=sflag, size = 0x4, offset = 0, fixed_abs, tag = 'sflag constant byte address 0x0 - dummy sync flag']
  #allocation190 [shape = 's32[]', space=sflag, size = 0x4, offset = 0, fixed_abs, tag = 'sflag constant byte address 0x0 - dummy sync flag']
  #allocation191 [shape = 's32[]', space=sflag, size = 0x4, offset = 0, fixed_abs, tag = 'sflag constant byte address 0x0 - dummy sync flag']
  #allocation192 [shape = 's32[]', space=sflag, size = 0x4, offset = 0, fixed_abs, tag = 'sflag constant byte address 0x0 - dummy sync flag']
  #allocation193 [shape = 's32[]', space=sflag, size = 0x4, offset = 0, fixed_abs, tag = 'sflag constant byte address 0x0 - dummy sync flag']
  #allocation194 [shape = 's32[]', space=sflag, size = 0x4, offset = 0, fixed_abs, tag = 'sflag constant byte address 0x0 - dummy sync flag']
  #allocation195 [shape = 's32[]', space=sflag, size = 0x4, offset = 0, fixed_abs, tag = 'sflag constant byte address 0x0 - dummy sync flag']
  #allocation196 [shape = 's32[]', space=sflag, size = 0x4, offset = 0, fixed_abs, tag = 'sflag constant byte address 0x0 - dummy sync flag']
  #allocation197 [shape = 's32[]', space=sflag, size = 0x4, offset = 0, fixed_abs, tag = 'sflag constant byte address 0x0 - dummy sync flag']
  #allocation198 [shape = 's32[]', space=sflag, size = 0x4, offset = 0, fixed_abs, tag = 'sflag constant byte address 0x0 - dummy sync flag']
  #allocation199 [shape = 's32[]', space=sflag, size = 0x4, offset = 0, fixed_abs, tag = 'sflag constant byte address 0x0 - dummy sync flag']
  #allocation200 [shape = 's32[]', space=sflag, size = 0x4, offset = 0, fixed_abs, tag = 'sflag constant byte address 0x0 - dummy sync flag']
  #allocation201 [shape = 's32[]', space=sflag, size = 0x4, offset = 0, fixed_abs, tag = 'sflag constant byte address 0x0 - dummy sync flag']
  #allocation202 [shape = 's32[]', space=sflag, size = 0x4, offset = 0, fixed_abs, tag = 'sflag constant byte address 0x0 - dummy sync flag']
  #allocation203 [shape = 's32[]', space=sflag, size = 0x4, offset = 0, fixed_abs, tag = 'sflag constant byte address 0x0 - dummy sync flag']
  #allocation204 [shape = 's32[]', space=sflag, size = 0x4, offset = 0, fixed_abs, tag = 'sflag constant byte address 0x0 - dummy sync flag']
  #allocation205 [shape = 's32[]', space=sflag, size = 0x4, offset = 0, fixed_abs, tag = 'sflag constant byte address 0x0 - dummy sync flag']
  #allocation206 [shape = 's32[]', space=sflag, size = 0x4, offset = 0, fixed_abs, tag = 'sflag constant byte address 0x0 - dummy sync flag']
  #allocation207 [shape = 's32[]', space=sflag, size = 0x4, offset = 0, fixed_abs, tag = 'sflag constant byte address 0x0 - dummy sync flag']
  #allocation208 [shape = 's32[]', space=sflag, size = 0x4, offset = 0, fixed_abs, tag = 'sflag constant byte address 0x0 - dummy sync flag']
  #allocation209 [shape = 's32[]', space=sflag, size = 0x4, offset = 0, fixed_abs, tag = 'sflag constant byte address 0x0 - dummy sync flag']
  #allocation210 [shape = 's32[]', space=sflag, size = 0x4, offset = 0, fixed_abs, tag = 'sflag constant byte address 0x0 - dummy sync flag']
  #allocation211 [shape = 's32[]', space=sflag, size = 0x4, offset = 0, fixed_abs, tag = 'sflag constant byte address 0x0 - dummy sync flag']
  #allocation212 [shape = 's32[]', space=sflag, size = 0x4, offset = 0, fixed_abs, tag = 'sflag constant byte address 0x0 - dummy sync flag']
  #allocation213 [shape = 's32[]', space=sflag, size = 0x4, offset = 0, fixed_abs, tag = 'sflag constant byte address 0x0 - dummy sync flag']
  #allocation214 [shape = 's32[]', space=sflag, size = 0x4, offset = 0, fixed_abs, tag = 'sflag constant byte address 0x0 - dummy sync flag']
  #allocation215 [shape = 's32[]', space=sflag, size = 0x4, offset = 0, fixed_abs, tag = 'sflag constant byte address 0x0 - dummy sync flag']
  #allocation216 [shape = 's32[]', space=sflag, size = 0x4, offset = 0, fixed_abs, tag = 'sflag constant byte address 0x0 - dummy sync flag']
  #allocation217 [shape = 's32[]', space=sflag, size = 0x4, offset = 0, fixed_abs, tag = 'sflag constant byte address 0x0 - dummy sync flag']
  #allocation218 [shape = 's32[]', space=sflag, size = 0x4, offset = 0, fixed_abs, tag = 'sflag constant byte address 0x0 - dummy sync flag']
  #allocation219 [shape = 's32[]', space=sflag, size = 0x4, offset = 0, fixed_abs, tag = 'sflag constant byte address 0x0 - dummy sync flag']
  #allocation220 [shape = 's32[]', space=sflag, size = 0x4, offset = 0, fixed_abs, tag = 'sflag constant byte address 0x0 - dummy sync flag']
  #allocation221 [shape = 's32[]', space=sflag, size = 0x4, offset = 0, fixed_abs, tag = 'sflag constant byte address 0x0 - dummy sync flag']
  #allocation222 [shape = 's32[]', space=sflag, size = 0x4, offset = 0, fixed_abs, tag = 'sflag constant byte address 0x0 - dummy sync flag']
  #allocation223 [shape = 's32[]', space=sflag, size = 0x4, offset = 0, fixed_abs, tag = 'sflag constant byte address 0x0 - dummy sync flag']
  #allocation224 [shape = 's32[]', space=sflag, size = 0x4, offset = 0, fixed_abs, tag = 'sflag constant byte address 0x0 - dummy sync flag']
  #allocation225 [shape = 's32[]', space=sflag, size = 0x4, offset = 0, fixed_abs, tag = 'sflag constant byte address 0x0 - dummy sync flag']
  #allocation226 [shape = 's32[]', space=sflag, size = 0x4, offset = 0, fixed_abs, tag = 'sflag constant byte address 0x0 - dummy sync flag']
  #allocation227 [shape = 's32[]', space=sflag, size = 0x4, offset = 0, fixed_abs, tag = 'sflag constant byte address 0x0 - dummy sync flag']
  #allocation228 [shape = 's32[]', space=sflag, size = 0x4, offset = 0, fixed_abs, tag = 'sflag constant byte address 0x0 - dummy sync flag']
  #allocation229 [shape = 's32[]', space=sflag, size = 0x4, offset = 0, fixed_abs, tag = 'sflag constant byte address 0x0 - dummy sync flag']
  #allocation230 [shape = 's32[]', space=sflag, size = 0x4, offset = 0, fixed_abs, tag = 'sflag constant byte address 0x0 - dummy sync flag']
  #allocation231 [shape = 's32[]', space=sflag, size = 0x4, offset = 0, fixed_abs, tag = 'sflag constant byte address 0x0 - dummy sync flag']
  #allocation232 [shape = 's32[]', space=sflag, size = 0x4, offset = 0, fixed_abs, tag = 'sflag constant byte address 0x0 - dummy sync flag']
  #allocation233 [shape = 's32[]', space=sflag, size = 0x4, offset = 0, fixed_abs, tag = 'sflag constant byte address 0x0 - dummy sync flag']
  #allocation234 [shape = 's32[]', space=sflag, size = 0x4, offset = 0, fixed_abs, tag = 'sflag constant byte address 0x0 - dummy sync flag']
  #allocation235 [shape = 's32[]', space=sflag, size = 0x4, offset = 0, fixed_abs, tag = 'sflag constant byte address 0x0 - dummy sync flag']
  #allocation236 [shape = 's32[]', space=sflag, size = 0x4, offset = 0, fixed_abs, tag = 'sflag constant byte address 0x0 - dummy sync flag']
  #allocation237 [shape = 's32[]', space=sflag, size = 0x4, offset = 0, fixed_abs, tag = 'sflag constant byte address 0x0 - dummy sync flag']
  #allocation238 [shape = 's32[]', space=sflag, size = 0x4, offset = 0, fixed_abs, tag = 'sflag constant byte address 0x0 - dummy sync flag']
  #allocation239 [shape = 's32[]', space=sflag, size = 0x4, offset = 0, fixed_abs, tag = 'sflag constant byte address 0x0 - dummy sync flag']
  #allocation240 [shape = 's32[]', space=sflag, size = 0x4, offset = 0, fixed_abs, tag = 'sflag constant byte address 0x0 - dummy sync flag']
  #allocation241 [shape = 's32[]', space=sflag, size = 0x4, offset = 0, fixed_abs, tag = 'sflag constant byte address 0x0 - dummy sync flag']
  #allocation242 [shape = 's32[]', space=sflag, size = 0x4, offset = 0, fixed_abs, tag = 'sflag constant byte address 0x0 - dummy sync flag']
  #allocation243 [shape = 's32[]', space=sflag, size = 0x4, offset = 0, fixed_abs, tag = 'sflag constant byte address 0x0 - dummy sync flag']
  #allocation244 [shape = 's32[]', space=sflag, size = 0x4, offset = 0, fixed_abs, tag = 'sflag constant byte address 0x0 - dummy sync flag']
  #allocation245 [shape = 's32[]', space=sflag, size = 0x4, offset = 0, fixed_abs, tag = 'sflag constant byte address 0x0 - dummy sync flag']
  #allocation246 [shape = 's32[]', space=sflag, size = 0x4, offset = 0, fixed_abs, tag = 'sflag constant byte address 0x0 - dummy sync flag']
  #allocation247 [shape = 's32[]', space=sflag, size = 0x4, offset = 0, fixed_abs, tag = 'sflag constant byte address 0x0 - dummy sync flag']
  #allocation248 [shape = 's32[]', space=sflag, size = 0x4, offset = 0, fixed_abs, tag = 'sflag constant byte address 0x0 - dummy sync flag']
  #allocation249 [shape = 's32[]', space=sflag, size = 0x4, offset = 0, fixed_abs, tag = 'sflag constant byte address 0x0 - dummy sync flag']
  #allocation250 [shape = 's32[]', space=sflag, size = 0x4, offset = 0, fixed_abs, tag = 'sflag constant byte address 0x0 - dummy sync flag']
  #allocation251 [shape = 's32[]', space=sflag, size = 0x4, offset = 0, fixed_abs, tag = 'sflag constant byte address 0x0 - dummy sync flag']
  #allocation252 [shape = 's32[]', space=sflag, size = 0x4, offset = 0, fixed_abs, tag = 'sflag constant byte address 0x0 - dummy sync flag']
  #allocation253 [shape = 's32[]', space=sflag, size = 0x4, offset = 0, fixed_abs, tag = 'sflag constant byte address 0x0 - dummy sync flag']
  #allocation254 [shape = 's32[]', space=sflag, size = 0x4, offset = 0, fixed_abs, tag = 'sflag constant byte address 0x0 - dummy sync flag']
  #allocation255 [shape = 's32[]', space=sflag, size = 0x4, offset = 0, fixed_abs, tag = 'sflag constant byte address 0x0 - dummy sync flag']
  #allocation256 [shape = 's32[]', space=sflag, size = 0x4, offset = 0, fixed_abs, tag = 'sflag constant byte address 0x0 - dummy sync flag']
  #allocation257 [shape = 's32[]', space=sflag, size = 0x4, offset = 0, fixed_abs, tag = 'sflag constant byte address 0x0 - dummy sync flag']
  #allocation258 [shape = 's32[]', space=sflag, size = 0x4, offset = 0, fixed_abs, tag = 'sflag constant byte address 0x0 - dummy sync flag']
  #allocation259 [shape = 's32[]', space=sflag, size = 0x4, offset = 0, fixed_abs, tag = 'sflag constant byte address 0x0 - dummy sync flag']
  #allocation260 [shape = 's32[]', space=sflag, size = 0x4, offset = 0, fixed_abs, tag = 'sflag constant byte address 0x0 - dummy sync flag']
  #allocation261 [shape = 's32[]', space=sflag, size = 0x4, offset = 0, fixed_abs, tag = 'sflag constant byte address 0x0 - dummy sync flag']
  #allocation262 [shape = 's32[]', space=sflag, size = 0x4, offset = 0, fixed_abs, tag = 'sflag constant byte address 0x0 - dummy sync flag']
  #allocation263 [shape = 's32[]', space=sflag, size = 0x4, offset = 0, fixed_abs, tag = 'sflag constant byte address 0x0 - dummy sync flag']
  #allocation264 [shape = 's32[]', space=sflag, size = 0x4, offset = 0, fixed_abs, tag = 'sflag constant byte address 0x0 - dummy sync flag']
  #allocation265 [shape = 's32[]', space=sflag, size = 0x4, offset = 0, fixed_abs, tag = 'sflag constant byte address 0x0 - dummy sync flag']
  #allocation266 [shape = 's32[]', space=sflag, size = 0x4, offset = 0, fixed_abs, tag = 'sflag constant byte address 0x0 - dummy sync flag']
  #allocation267 [shape = 's32[]', space=sflag, size = 0x4, offset = 0, fixed_abs, tag = 'sflag constant byte address 0x0 - dummy sync flag']
  %s0 = inlined_call_operand.hbm [shape: s32[64], index: 0, kind: input, shape index: {}]
  %s1 = inlined_call_operand.hbm [shape: f32[512,128], index: 1, kind: input, shape index: {}]
  %s2 = inlined_call_operand.hbm [shape: f32[128,512], index: 2, kind: input, shape index: {}]
  %s3 = inlined_call_operand.vmem [shape: f32[1,512], index: 3, kind: input, shape index: {}]
  %s4 = inlined_call_operand.hbm [shape: f32[64,512], index: 4, kind: output, shape index: {}]
  %s5 = sld [smem:[#allocation0]]
  $region542: #{tpu_custom_call.1} parent=0
    _
  %s7 = ssub.s32 1, %s5
  %s8 = scalar_select 0, %s7, %s5
  %10 = dma.hbm_to_smem %s0, 16, [#allocation5], [#allocation4]
  %11 = dma.done [#allocation4], 16
  %12 = sfence
  $region1: #{tpu_custom_call.1} parent=0
    #allocation6 [shape = 'u8[262144]{0}', space=vmem, size = 0x40000, scoped, tag = 'input window, operand 2, single buffered']
    #allocation7 [shape = 's32[1]{0}', space=sflag, size = 0x4, scoped, tag = 'scoped memory for tpu_custom_call.1']
    #allocation8 [shape = 's32[1]{0}', space=sflag, size = 0x4, scoped, tag = 'scoped memory for tpu_custom_call.1']
    #allocation9 [shape = 'u8[131072]{0}', space=vmem, size = 0x20000, scoped, tag = 'output window, operand 0, single buffered']
    %13 = vsyncpa [#allocation7], 0
    %14 = vsyncpa [#allocation8], 0
    // Predicated region
    $region2: #{tpu_custom_call.1} parent=1 // pred_check
      _
    $region3: #{tpu_custom_call.1} parent=1 // pred_check_branch
      %16 = sbr.rel (0) target = $region5
    $region4: #{tpu_custom_call.1} parent=1 // pred_region
      %s18 = ssub.s32 8192, 8192
      %19 = vsyncadd [#allocation7], %s18
      %s20 = sshll.u32 [#allocation6], 4
      %s21 = int_to_ptr.vmem [resolvable:$true] %s20
      %26 = dma.hbm_to_vmem [thread:$0]  %s2, 8192, %s21, [#allocation7], 512, 512, 32
    $region5: #{tpu_custom_call.1} parent=1 // pred_fallthru
      _
    // Predicated region
    $region6: #{tpu_custom_call.1} parent=1 // pred_check
      _
    $region7: #{tpu_custom_call.1} parent=1 // pred_check_branch
      %28 = sbr.rel (0) target = $region9
    $region8: #{tpu_custom_call.1} parent=1 // pred_region
      _
    $region9: #{tpu_custom_call.1} parent=1 // pred_fallthru
      _
    // Predicated region
    $region10: #{tpu_custom_call.1} parent=1 // pred_check
      _
    $region11: #{tpu_custom_call.1} parent=1 // pred_check_branch
      %30 = sbr.rel (0) target = $region13
    $region12: #{tpu_custom_call.1} parent=1 // pred_region
      %31 = dma.done [#allocation7], 8192
    $region13: #{tpu_custom_call.1} parent=1 // pred_fallthru
      _
    %p32 = scmp.eq.s32.totalorder 0, 0
    // Predicated region
    $region14: #{tpu_custom_call.1} parent=1 // pred_check
      %p33 = pneg %p32
    $region15: #{tpu_custom_call.1} parent=1 // pred_check_branch
      %35 = sbr.rel (%p33) target = $region17
    $region16: #{tpu_custom_call.1} parent=1 // pred_region
      %s36 = sld [smem:[#allocation5]]
      %s37 = smul.addr %s36, 16
      %s38 = scalar_lea.hbm %s1, %s37
      // Predicated region
      $region18: #{tpu_custom_call.1} parent=16 // pred_check
        _
      $region19: #{tpu_custom_call.1} parent=16 // pred_check_branch
        %40 = sbr.rel target = $region21
      $region20: #{tpu_custom_call.1} parent=16 // pred_region
        %41 = sst [smem:[#allocation12]] [#allocation11]
        %42 = sst [smem:[#allocation13]] [#allocation10]
      $region21: #{tpu_custom_call.1} parent=16 // pred_fallthru
        _
      %44 = shalt.err (0)
      %s46 = sshll.u32 [#allocation2], 4
      %s47 = int_to_ptr.vmem [resolvable:$true] %s46
      %49 = dma.hbm_to_vmem [thread:$0]  %s38, 16, %s47, [#allocation3]
      %s50 = sld [smem:[#allocation5 + $0x1]]
      %s51 = smul.addr %s50, 16
      %s52 = scalar_lea.hbm %s1, %s51
      %s53 = scalar_lea.vmem [#allocation2], 1
      // Predicated region
      $region22: #{tpu_custom_call.1} parent=16 // pred_check
        _
      $region23: #{tpu_custom_call.1} parent=16 // pred_check_branch
        %55 = sbr.rel target = $region25
      $region24: #{tpu_custom_call.1} parent=16 // pred_region
        %56 = sst [smem:[#allocation12]] [#allocation15]
        %57 = sst [smem:[#allocation13]] [#allocation14]
      $region25: #{tpu_custom_call.1} parent=16 // pred_fallthru
        _
      %59 = shalt.err (0)
      %s61 = sshll.u32 %s53, 4
      %s62 = int_to_ptr.vmem [resolvable:$true] %s61
      %64 = dma.hbm_to_vmem [thread:$0]  %s52, 16, %s62, [#allocation3]
      %s65 = sld [smem:[#allocation5 + $0x2]]
      %s66 = smul.addr %s65, 16
      %s67 = scalar_lea.hbm %s1, %s66
      %s68 = scalar_lea.vmem [#allocation2], 2
      // Predicated region
      $region26: #{tpu_custom_call.1} parent=16 // pred_check
        _
      $region27: #{tpu_custom_call.1} parent=16 // pred_check_branch
        %70 = sbr.rel target = $region29
      $region28: #{tpu_custom_call.1} parent=16 // pred_region
        %71 = sst [smem:[#allocation12]] [#allocation17]
        %72 = sst [smem:[#allocation13]] [#allocation16]
      $region29: #{tpu_custom_call.1} parent=16 // pred_fallthru
        _
      %74 = shalt.err (0)
      %s76 = sshll.u32 %s68, 4
      %s77 = int_to_ptr.vmem [resolvable:$true] %s76
      %79 = dma.hbm_to_vmem [thread:$0]  %s67, 16, %s77, [#allocation3]
      %s80 = sld [smem:[#allocation5 + $0x3]]
      %s81 = smul.addr %s80, 16
      %s82 = scalar_lea.hbm %s1, %s81
      %s83 = scalar_lea.vmem [#allocation2], 3
      // Predicated region
      $region30: #{tpu_custom_call.1} parent=16 // pred_check
        _
      $region31: #{tpu_custom_call.1} parent=16 // pred_check_branch
        %85 = sbr.rel target = $region33
      $region32: #{tpu_custom_call.1} parent=16 // pred_region
        %86 = sst [smem:[#allocation12]] [#allocation19]
        %87 = sst [smem:[#allocation13]] [#allocation18]
      $region33: #{tpu_custom_call.1} parent=16 // pred_fallthru
        _
      %89 = shalt.err (0)
      %s91 = sshll.u32 %s83, 4
      %s92 = int_to_ptr.vmem [resolvable:$true] %s91
      %94 = dma.hbm_to_vmem [thread:$0]  %s82, 16, %s92, [#allocation3]
      %s95 = sld [smem:[#allocation5 + $0x4]]
      %s96 = smul.addr %s95, 16
      %s97 = scalar_lea.hbm %s1, %s96
      %s98 = scalar_lea.vmem [#allocation2], 4
      // Predicated region
      $region34: #{tpu_custom_call.1} parent=16 // pred_check
        _
      $region35: #{tpu_custom_call.1} parent=16 // pred_check_branch
        %100 = sbr.rel target = $region37
      $region36: #{tpu_custom_call.1} parent=16 // pred_region
        %101 = sst [smem:[#allocation12]] [#allocation21]
        %102 = sst [smem:[#allocation13]] [#allocation20]
      $region37: #{tpu_custom_call.1} parent=16 // pred_fallthru
        _
      %104 = shalt.err (0)
      %s106 = sshll.u32 %s98, 4
      %s107 = int_to_ptr.vmem [resolvable:$true] %s106
      %109 = dma.hbm_to_vmem [thread:$0]  %s97, 16, %s107, [#allocation3]
      %s110 = sld [smem:[#allocation5 + $0x5]]
      %s111 = smul.addr %s110, 16
      %s112 = scalar_lea.hbm %s1, %s111
      %s113 = scalar_lea.vmem [#allocation2], 5
      // Predicated region
      $region38: #{tpu_custom_call.1} parent=16 // pred_check
        _
      $region39: #{tpu_custom_call.1} parent=16 // pred_check_branch
        %115 = sbr.rel target = $region41
      $region40: #{tpu_custom_call.1} parent=16 // pred_region
        %116 = sst [smem:[#allocation12]] [#allocation23]
        %117 = sst [smem:[#allocation13]] [#allocation22]
      $region41: #{tpu_custom_call.1} parent=16 // pred_fallthru
        _
      %119 = shalt.err (0)
      %s121 = sshll.u32 %s113, 4
      %s122 = int_to_ptr.vmem [resolvable:$true] %s121
      %124 = dma.hbm_to_vmem [thread:$0]  %s112, 16, %s122, [#allocation3]
      %s125 = sld [smem:[#allocation5 + $0x6]]
      %s126 = smul.addr %s125, 16
      %s127 = scalar_lea.hbm %s1, %s126
      %s128 = scalar_lea.vmem [#allocation2], 6
      // Predicated region
      $region42: #{tpu_custom_call.1} parent=16 // pred_check
        _
      $region43: #{tpu_custom_call.1} parent=16 // pred_check_branch
        %130 = sbr.rel target = $region45
      $region44: #{tpu_custom_call.1} parent=16 // pred_region
        %131 = sst [smem:[#allocation12]] [#allocation25]
        %132 = sst [smem:[#allocation13]] [#allocation24]
      $region45: #{tpu_custom_call.1} parent=16 // pred_fallthru
        _
      %134 = shalt.err (0)
      %s136 = sshll.u32 %s128, 4
      %s137 = int_to_ptr.vmem [resolvable:$true] %s136
      %139 = dma.hbm_to_vmem [thread:$0]  %s127, 16, %s137, [#allocation3]
      %s140 = sld [smem:[#allocation5 + $0x7]]
      %s141 = smul.addr %s140, 16
      %s142 = scalar_lea.hbm %s1, %s141
      %s143 = scalar_lea.vmem [#allocation2], 7
      // Predicated region
      $region46: #{tpu_custom_call.1} parent=16 // pred_check
        _
      $region47: #{tpu_custom_call.1} parent=16 // pred_check_branch
        %145 = sbr.rel target = $region49
      $region48: #{tpu_custom_call.1} parent=16 // pred_region
        %146 = sst [smem:[#allocation12]] [#allocation27]
        %147 = sst [smem:[#allocation13]] [#allocation26]
      $region49: #{tpu_custom_call.1} parent=16 // pred_fallthru
        _
      %149 = shalt.err (0)
      %s151 = sshll.u32 %s143, 4
      %s152 = int_to_ptr.vmem [resolvable:$true] %s151
      %154 = dma.hbm_to_vmem [thread:$0]  %s142, 16, %s152, [#allocation3]
      %s155 = sld [smem:[#allocation5 + $0x8]]
      %s156 = smul.addr %s155, 16
      %s157 = scalar_lea.hbm %s1, %s156
      %s158 = scalar_lea.vmem [#allocation2], 8
      // Predicated region
      $region50: #{tpu_custom_call.1} parent=16 // pred_check
        _
      $region51: #{tpu_custom_call.1} parent=16 // pred_check_branch
        %160 = sbr.rel target = $region53
      $region52: #{tpu_custom_call.1} parent=16 // pred_region
        %161 = sst [smem:[#allocation12]] [#allocation29]
        %162 = sst [smem:[#allocation13]] [#allocation28]
      $region53: #{tpu_custom_call.1} parent=16 // pred_fallthru
        _
      %164 = shalt.err (0)
      %s166 = sshll.u32 %s158, 4
      %s167 = int_to_ptr.vmem [resolvable:$true] %s166
      %169 = dma.hbm_to_vmem [thread:$0]  %s157, 16, %s167, [#allocation3]
      %s170 = sld [smem:[#allocation5 + $0x9]]
      %s171 = smul.addr %s170, 16
      %s172 = scalar_lea.hbm %s1, %s171
      %s173 = scalar_lea.vmem [#allocation2], 9
      // Predicated region
      $region54: #{tpu_custom_call.1} parent=16 // pred_check
        _
      $region55: #{tpu_custom_call.1} parent=16 // pred_check_branch
        %175 = sbr.rel target = $region57
      $region56: #{tpu_custom_call.1} parent=16 // pred_region
        %176 = sst [smem:[#allocation12]] [#allocation31]
        %177 = sst [smem:[#allocation13]] [#allocation30]
      $region57: #{tpu_custom_call.1} parent=16 // pred_fallthru
        _
      %179 = shalt.err (0)
      %s181 = sshll.u32 %s173, 4
      %s182 = int_to_ptr.vmem [resolvable:$true] %s181
      %184 = dma.hbm_to_vmem [thread:$0]  %s172, 16, %s182, [#allocation3]
      %s185 = sld [smem:[#allocation5 + $0xa]]
      %s186 = smul.addr %s185, 16
      %s187 = scalar_lea.hbm %s1, %s186
      %s188 = scalar_lea.vmem [#allocation2], 10
      // Predicated region
      $region58: #{tpu_custom_call.1} parent=16 // pred_check
        _
      $region59: #{tpu_custom_call.1} parent=16 // pred_check_branch
        %190 = sbr.rel target = $region61
      $region60: #{tpu_custom_call.1} parent=16 // pred_region
        %191 = sst [smem:[#allocation12]] [#allocation33]
        %192 = sst [smem:[#allocation13]] [#allocation32]
      $region61: #{tpu_custom_call.1} parent=16 // pred_fallthru
        _
      %194 = shalt.err (0)
      %s196 = sshll.u32 %s188, 4
      %s197 = int_to_ptr.vmem [resolvable:$true] %s196
      %199 = dma.hbm_to_vmem [thread:$0]  %s187, 16, %s197, [#allocation3]
      %s200 = sld [smem:[#allocation5 + $0xb]]
      %s201 = smul.addr %s200, 16
      %s202 = scalar_lea.hbm %s1, %s201
      %s203 = scalar_lea.vmem [#allocation2], 11
      // Predicated region
      $region62: #{tpu_custom_call.1} parent=16 // pred_check
        _
      $region63: #{tpu_custom_call.1} parent=16 // pred_check_branch
        %205 = sbr.rel target = $region65
      $region64: #{tpu_custom_call.1} parent=16 // pred_region
        %206 = sst [smem:[#allocation12]] [#allocation35]
        %207 = sst [smem:[#allocation13]] [#allocation34]
      $region65: #{tpu_custom_call.1} parent=16 // pred_fallthru
        _
      %209 = shalt.err (0)
      %s211 = sshll.u32 %s203, 4
      %s212 = int_to_ptr.vmem [resolvable:$true] %s211
      %214 = dma.hbm_to_vmem [thread:$0]  %s202, 16, %s212, [#allocation3]
      %s215 = sld [smem:[#allocation5 + $0xc]]
      %s216 = smul.addr %s215, 16
      %s217 = scalar_lea.hbm %s1, %s216
      %s218 = scalar_lea.vmem [#allocation2], 12
      // Predicated region
      $region66: #{tpu_custom_call.1} parent=16 // pred_check
        _
      $region67: #{tpu_custom_call.1} parent=16 // pred_check_branch
        %220 = sbr.rel target = $region69
      $region68: #{tpu_custom_call.1} parent=16 // pred_region
        %221 = sst [smem:[#allocation12]] [#allocation37]
        %222 = sst [smem:[#allocation13]] [#allocation36]
      $region69: #{tpu_custom_call.1} parent=16 // pred_fallthru
        _
      %224 = shalt.err (0)
      %s226 = sshll.u32 %s218, 4
      %s227 = int_to_ptr.vmem [resolvable:$true] %s226
      %229 = dma.hbm_to_vmem [thread:$0]  %s217, 16, %s227, [#allocation3]
      %s230 = sld [smem:[#allocation5 + $0xd]]
      %s231 = smul.addr %s230, 16
      %s232 = scalar_lea.hbm %s1, %s231
      %s233 = scalar_lea.vmem [#allocation2], 13
      // Predicated region
      $region70: #{tpu_custom_call.1} parent=16 // pred_check
        _
      $region71: #{tpu_custom_call.1} parent=16 // pred_check_branch
        %235 = sbr.rel target = $region73
      $region72: #{tpu_custom_call.1} parent=16 // pred_region
        %236 = sst [smem:[#allocation12]] [#allocation39]
        %237 = sst [smem:[#allocation13]] [#allocation38]
      $region73: #{tpu_custom_call.1} parent=16 // pred_fallthru
        _
      %239 = shalt.err (0)
      %s241 = sshll.u32 %s233, 4
      %s242 = int_to_ptr.vmem [resolvable:$true] %s241
      %244 = dma.hbm_to_vmem [thread:$0]  %s232, 16, %s242, [#allocation3]
      %s245 = sld [smem:[#allocation5 + $0xe]]
      %s246 = smul.addr %s245, 16
      %s247 = scalar_lea.hbm %s1, %s246
      %s248 = scalar_lea.vmem [#allocation2], 14
      // Predicated region
      $region74: #{tpu_custom_call.1} parent=16 // pred_check
        _
      $region75: #{tpu_custom_call.1} parent=16 // pred_check_branch
        %250 = sbr.rel target = $region77
      $region76: #{tpu_custom_call.1} parent=16 // pred_region
        %251 = sst [smem:[#allocation12]] [#allocation41]
        %252 = sst [smem:[#allocation13]] [#allocation40]
      $region77: #{tpu_custom_call.1} parent=16 // pred_fallthru
        _
      %254 = shalt.err (0)
      %s256 = sshll.u32 %s248, 4
      %s257 = int_to_ptr.vmem [resolvable:$true] %s256
      %259 = dma.hbm_to_vmem [thread:$0]  %s247, 16, %s257, [#allocation3]
      %s260 = sld [smem:[#allocation5 + $0xf]]
      %s261 = smul.addr %s260, 16
      %s262 = scalar_lea.hbm %s1, %s261
      %s263 = scalar_lea.vmem [#allocation2], 15
      // Predicated region
      $region78: #{tpu_custom_call.1} parent=16 // pred_check
        _
      $region79: #{tpu_custom_call.1} parent=16 // pred_check_branch
        %265 = sbr.rel target = $region81
      $region80: #{tpu_custom_call.1} parent=16 // pred_region
        %266 = sst [smem:[#allocation12]] [#allocation43]
        %267 = sst [smem:[#allocation13]] [#allocation42]
      $region81: #{tpu_custom_call.1} parent=16 // pred_fallthru
        _
      %269 = shalt.err (0)
      %s271 = sshll.u32 %s263, 4
      %s272 = int_to_ptr.vmem [resolvable:$true] %s271
      %274 = dma.hbm_to_vmem [thread:$0]  %s262, 16, %s272, [#allocation3]
      %s275 = sld [smem:[#allocation5 + $0x10]]
      %s276 = smul.addr %s275, 16
      %s277 = scalar_lea.hbm %s1, %s276
      %s278 = scalar_lea.vmem [#allocation2], 16
      // Predicated region
      $region82: #{tpu_custom_call.1} parent=16 // pred_check
        _
      $region83: #{tpu_custom_call.1} parent=16 // pred_check_branch
        %280 = sbr.rel target = $region85
      $region84: #{tpu_custom_call.1} parent=16 // pred_region
        %281 = sst [smem:[#allocation12]] [#allocation45]
        %282 = sst [smem:[#allocation13]] [#allocation44]
      $region85: #{tpu_custom_call.1} parent=16 // pred_fallthru
        _
      %284 = shalt.err (0)
      %s286 = sshll.u32 %s278, 4
      %s287 = int_to_ptr.vmem [resolvable:$true] %s286
      %289 = dma.hbm_to_vmem [thread:$0]  %s277, 16, %s287, [#allocation3]
      %s290 = sld [smem:[#allocation5 + $0x11]]
      %s291 = smul.addr %s290, 16
      %s292 = scalar_lea.hbm %s1, %s291
      %s293 = scalar_lea.vmem [#allocation2], 17
      // Predicated region
      $region86: #{tpu_custom_call.1} parent=16 // pred_check
        _
      $region87: #{tpu_custom_call.1} parent=16 // pred_check_branch
        %295 = sbr.rel target = $region89
      $region88: #{tpu_custom_call.1} parent=16 // pred_region
        %296 = sst [smem:[#allocation12]] [#allocation47]
        %297 = sst [smem:[#allocation13]] [#allocation46]
      $region89: #{tpu_custom_call.1} parent=16 // pred_fallthru
        _
      %299 = shalt.err (0)
      %s301 = sshll.u32 %s293, 4
      %s302 = int_to_ptr.vmem [resolvable:$true] %s301
      %304 = dma.hbm_to_vmem [thread:$0]  %s292, 16, %s302, [#allocation3]
      %s305 = sld [smem:[#allocation5 + $0x12]]
      %s306 = smul.addr %s305, 16
      %s307 = scalar_lea.hbm %s1, %s306
      %s308 = scalar_lea.vmem [#allocation2], 18
      // Predicated region
      $region90: #{tpu_custom_call.1} parent=16 // pred_check
        _
      $region91: #{tpu_custom_call.1} parent=16 // pred_check_branch
        %310 = sbr.rel target = $region93
      $region92: #{tpu_custom_call.1} parent=16 // pred_region
        %311 = sst [smem:[#allocation12]] [#allocation49]
        %312 = sst [smem:[#allocation13]] [#allocation48]
      $region93: #{tpu_custom_call.1} parent=16 // pred_fallthru
        _
      %314 = shalt.err (0)
      %s316 = sshll.u32 %s308, 4
      %s317 = int_to_ptr.vmem [resolvable:$true] %s316
      %319 = dma.hbm_to_vmem [thread:$0]  %s307, 16, %s317, [#allocation3]
      %s320 = sld [smem:[#allocation5 + $0x13]]
      %s321 = smul.addr %s320, 16
      %s322 = scalar_lea.hbm %s1, %s321
      %s323 = scalar_lea.vmem [#allocation2], 19
      // Predicated region
      $region94: #{tpu_custom_call.1} parent=16 // pred_check
        _
      $region95: #{tpu_custom_call.1} parent=16 // pred_check_branch
        %325 = sbr.rel target = $region97
      $region96: #{tpu_custom_call.1} parent=16 // pred_region
        %326 = sst [smem:[#allocation12]] [#allocation51]
        %327 = sst [smem:[#allocation13]] [#allocation50]
      $region97: #{tpu_custom_call.1} parent=16 // pred_fallthru
        _
      %329 = shalt.err (0)
      %s331 = sshll.u32 %s323, 4
      %s332 = int_to_ptr.vmem [resolvable:$true] %s331
      %334 = dma.hbm_to_vmem [thread:$0]  %s322, 16, %s332, [#allocation3]
      %s335 = sld [smem:[#allocation5 + $0x14]]
      %s336 = smul.addr %s335, 16
      %s337 = scalar_lea.hbm %s1, %s336
      %s338 = scalar_lea.vmem [#allocation2], 20
      // Predicated region
      $region98: #{tpu_custom_call.1} parent=16 // pred_check
        _
      $region99: #{tpu_custom_call.1} parent=16 // pred_check_branch
        %340 = sbr.rel target = $region101
      $region100: #{tpu_custom_call.1} parent=16 // pred_region
        %341 = sst [smem:[#allocation12]] [#allocation53]
        %342 = sst [smem:[#allocation13]] [#allocation52]
      $region101: #{tpu_custom_call.1} parent=16 // pred_fallthru
        _
      %344 = shalt.err (0)
      %s346 = sshll.u32 %s338, 4
      %s347 = int_to_ptr.vmem [resolvable:$true] %s346
      %349 = dma.hbm_to_vmem [thread:$0]  %s337, 16, %s347, [#allocation3]
      %s350 = sld [smem:[#allocation5 + $0x15]]
      %s351 = smul.addr %s350, 16
      %s352 = scalar_lea.hbm %s1, %s351
      %s353 = scalar_lea.vmem [#allocation2], 21
      // Predicated region
      $region102: #{tpu_custom_call.1} parent=16 // pred_check
        _
      $region103: #{tpu_custom_call.1} parent=16 // pred_check_branch
        %355 = sbr.rel target = $region105
      $region104: #{tpu_custom_call.1} parent=16 // pred_region
        %356 = sst [smem:[#allocation12]] [#allocation55]
        %357 = sst [smem:[#allocation13]] [#allocation54]
      $region105: #{tpu_custom_call.1} parent=16 // pred_fallthru
        _
      %359 = shalt.err (0)
      %s361 = sshll.u32 %s353, 4
      %s362 = int_to_ptr.vmem [resolvable:$true] %s361
      %364 = dma.hbm_to_vmem [thread:$0]  %s352, 16, %s362, [#allocation3]
      %s365 = sld [smem:[#allocation5 + $0x16]]
      %s366 = smul.addr %s365, 16
      %s367 = scalar_lea.hbm %s1, %s366
      %s368 = scalar_lea.vmem [#allocation2], 22
      // Predicated region
      $region106: #{tpu_custom_call.1} parent=16 // pred_check
        _
      $region107: #{tpu_custom_call.1} parent=16 // pred_check_branch
        %370 = sbr.rel target = $region109
      $region108: #{tpu_custom_call.1} parent=16 // pred_region
        %371 = sst [smem:[#allocation12]] [#allocation57]
        %372 = sst [smem:[#allocation13]] [#allocation56]
      $region109: #{tpu_custom_call.1} parent=16 // pred_fallthru
        _
      %374 = shalt.err (0)
      %s376 = sshll.u32 %s368, 4
      %s377 = int_to_ptr.vmem [resolvable:$true] %s376
      %379 = dma.hbm_to_vmem [thread:$0]  %s367, 16, %s377, [#allocation3]
      %s380 = sld [smem:[#allocation5 + $0x17]]
      %s381 = smul.addr %s380, 16
      %s382 = scalar_lea.hbm %s1, %s381
      %s383 = scalar_lea.vmem [#allocation2], 23
      // Predicated region
      $region110: #{tpu_custom_call.1} parent=16 // pred_check
        _
      $region111: #{tpu_custom_call.1} parent=16 // pred_check_branch
        %385 = sbr.rel target = $region113
      $region112: #{tpu_custom_call.1} parent=16 // pred_region
        %386 = sst [smem:[#allocation12]] [#allocation59]
        %387 = sst [smem:[#allocation13]] [#allocation58]
      $region113: #{tpu_custom_call.1} parent=16 // pred_fallthru
        _
      %389 = shalt.err (0)
      %s391 = sshll.u32 %s383, 4
      %s392 = int_to_ptr.vmem [resolvable:$true] %s391
      %394 = dma.hbm_to_vmem [thread:$0]  %s382, 16, %s392, [#allocation3]
      %s395 = sld [smem:[#allocation5 + $0x18]]
      %s396 = smul.addr %s395, 16
      %s397 = scalar_lea.hbm %s1, %s396
      %s398 = scalar_lea.vmem [#allocation2], 24
      // Predicated region
      $region114: #{tpu_custom_call.1} parent=16 // pred_check
        _
      $region115: #{tpu_custom_call.1} parent=16 // pred_check_branch
        %400 = sbr.rel target = $region117
      $region116: #{tpu_custom_call.1} parent=16 // pred_region
        %401 = sst [smem:[#allocation12]] [#allocation61]
        %402 = sst [smem:[#allocation13]] [#allocation60]
      $region117: #{tpu_custom_call.1} parent=16 // pred_fallthru
        _
      %404 = shalt.err (0)
      %s406 = sshll.u32 %s398, 4
      %s407 = int_to_ptr.vmem [resolvable:$true] %s406
      %409 = dma.hbm_to_vmem [thread:$0]  %s397, 16, %s407, [#allocation3]
      %s410 = sld [smem:[#allocation5 + $0x19]]
      %s411 = smul.addr %s410, 16
      %s412 = scalar_lea.hbm %s1, %s411
      %s413 = scalar_lea.vmem [#allocation2], 25
      // Predicated region
      $region118: #{tpu_custom_call.1} parent=16 // pred_check
        _
      $region119: #{tpu_custom_call.1} parent=16 // pred_check_branch
        %415 = sbr.rel target = $region121
      $region120: #{tpu_custom_call.1} parent=16 // pred_region
        %416 = sst [smem:[#allocation12]] [#allocation63]
        %417 = sst [smem:[#allocation13]] [#allocation62]
      $region121: #{tpu_custom_call.1} parent=16 // pred_fallthru
        _
      %419 = shalt.err (0)
      %s421 = sshll.u32 %s413, 4
      %s422 = int_to_ptr.vmem [resolvable:$true] %s421
      %424 = dma.hbm_to_vmem [thread:$0]  %s412, 16, %s422, [#allocation3]
      %s425 = sld [smem:[#allocation5 + $0x1a]]
      %s426 = smul.addr %s425, 16
      %s427 = scalar_lea.hbm %s1, %s426
      %s428 = scalar_lea.vmem [#allocation2], 26
      // Predicated region
      $region122: #{tpu_custom_call.1} parent=16 // pred_check
        _
      $region123: #{tpu_custom_call.1} parent=16 // pred_check_branch
        %430 = sbr.rel target = $region125
      $region124: #{tpu_custom_call.1} parent=16 // pred_region
        %431 = sst [smem:[#allocation12]] [#allocation65]
        %432 = sst [smem:[#allocation13]] [#allocation64]
      $region125: #{tpu_custom_call.1} parent=16 // pred_fallthru
        _
      %434 = shalt.err (0)
      %s436 = sshll.u32 %s428, 4
      %s437 = int_to_ptr.vmem [resolvable:$true] %s436
      %439 = dma.hbm_to_vmem [thread:$0]  %s427, 16, %s437, [#allocation3]
      %s440 = sld [smem:[#allocation5 + $0x1b]]
      %s441 = smul.addr %s440, 16
      %s442 = scalar_lea.hbm %s1, %s441
      %s443 = scalar_lea.vmem [#allocation2], 27
      // Predicated region
      $region126: #{tpu_custom_call.1} parent=16 // pred_check
        _
      $region127: #{tpu_custom_call.1} parent=16 // pred_check_branch
        %445 = sbr.rel target = $region129
      $region128: #{tpu_custom_call.1} parent=16 // pred_region
        %446 = sst [smem:[#allocation12]] [#allocation67]
        %447 = sst [smem:[#allocation13]] [#allocation66]
      $region129: #{tpu_custom_call.1} parent=16 // pred_fallthru
        _
      %449 = shalt.err (0)
      %s451 = sshll.u32 %s443, 4
      %s452 = int_to_ptr.vmem [resolvable:$true] %s451
      %454 = dma.hbm_to_vmem [thread:$0]  %s442, 16, %s452, [#allocation3]
      %s455 = sld [smem:[#allocation5 + $0x1c]]
      %s456 = smul.addr %s455, 16
      %s457 = scalar_lea.hbm %s1, %s456
      %s458 = scalar_lea.vmem [#allocation2], 28
      // Predicated region
      $region130: #{tpu_custom_call.1} parent=16 // pred_check
        _
      $region131: #{tpu_custom_call.1} parent=16 // pred_check_branch
        %460 = sbr.rel target = $region133
      $region132: #{tpu_custom_call.1} parent=16 // pred_region
        %461 = sst [smem:[#allocation12]] [#allocation69]
        %462 = sst [smem:[#allocation13]] [#allocation68]
      $region133: #{tpu_custom_call.1} parent=16 // pred_fallthru
        _
      %464 = shalt.err (0)
      %s466 = sshll.u32 %s458, 4
      %s467 = int_to_ptr.vmem [resolvable:$true] %s466
      %469 = dma.hbm_to_vmem [thread:$0]  %s457, 16, %s467, [#allocation3]
      %s470 = sld [smem:[#allocation5 + $0x1d]]
      %s471 = smul.addr %s470, 16
      %s472 = scalar_lea.hbm %s1, %s471
      %s473 = scalar_lea.vmem [#allocation2], 29
      // Predicated region
      $region134: #{tpu_custom_call.1} parent=16 // pred_check
        _
      $region135: #{tpu_custom_call.1} parent=16 // pred_check_branch
        %475 = sbr.rel target = $region137
      $region136: #{tpu_custom_call.1} parent=16 // pred_region
        %476 = sst [smem:[#allocation12]] [#allocation71]
        %477 = sst [smem:[#allocation13]] [#allocation70]
      $region137: #{tpu_custom_call.1} parent=16 // pred_fallthru
        _
      %479 = shalt.err (0)
      %s481 = sshll.u32 %s473, 4
      %s482 = int_to_ptr.vmem [resolvable:$true] %s481
      %484 = dma.hbm_to_vmem [thread:$0]  %s472, 16, %s482, [#allocation3]
      %s485 = sld [smem:[#allocation5 + $0x1e]]
      %s486 = smul.addr %s485, 16
      %s487 = scalar_lea.hbm %s1, %s486
      %s488 = scalar_lea.vmem [#allocation2], 30
      // Predicated region
      $region138: #{tpu_custom_call.1} parent=16 // pred_check
        _
      $region139: #{tpu_custom_call.1} parent=16 // pred_check_branch
        %490 = sbr.rel target = $region141
      $region140: #{tpu_custom_call.1} parent=16 // pred_region
        %491 = sst [smem:[#allocation12]] [#allocation73]
        %492 = sst [smem:[#allocation13]] [#allocation72]
      $region141: #{tpu_custom_call.1} parent=16 // pred_fallthru
        _
      %494 = shalt.err (0)
      %s496 = sshll.u32 %s488, 4
      %s497 = int_to_ptr.vmem [resolvable:$true] %s496
      %499 = dma.hbm_to_vmem [thread:$0]  %s487, 16, %s497, [#allocation3]
      %s500 = sld [smem:[#allocation5 + $0x1f]]
      %s501 = smul.addr %s500, 16
      %s502 = scalar_lea.hbm %s1, %s501
      %s503 = scalar_lea.vmem [#allocation2], 31
      // Predicated region
      $region142: #{tpu_custom_call.1} parent=16 // pred_check
        _
      $region143: #{tpu_custom_call.1} parent=16 // pred_check_branch
        %505 = sbr.rel target = $region145
      $region144: #{tpu_custom_call.1} parent=16 // pred_region
        %506 = sst [smem:[#allocation12]] [#allocation75]
        %507 = sst [smem:[#allocation13]] [#allocation74]
      $region145: #{tpu_custom_call.1} parent=16 // pred_fallthru
        _
      %509 = shalt.err (0)
      %s511 = sshll.u32 %s503, 4
      %s512 = int_to_ptr.vmem [resolvable:$true] %s511
      %514 = dma.hbm_to_vmem [thread:$0]  %s502, 16, %s512, [#allocation3]
      %s515 = sld [smem:[#allocation5 + $0x20]]
      %s516 = smul.addr %s515, 16
      %s517 = scalar_lea.hbm %s1, %s516
      %s518 = scalar_lea.vmem [#allocation2], 32
      // Predicated region
      $region146: #{tpu_custom_call.1} parent=16 // pred_check
        _
      $region147: #{tpu_custom_call.1} parent=16 // pred_check_branch
        %520 = sbr.rel target = $region149
      $region148: #{tpu_custom_call.1} parent=16 // pred_region
        %521 = sst [smem:[#allocation12]] [#allocation77]
        %522 = sst [smem:[#allocation13]] [#allocation76]
      $region149: #{tpu_custom_call.1} parent=16 // pred_fallthru
        _
      %524 = shalt.err (0)
      %s526 = sshll.u32 %s518, 4
      %s527 = int_to_ptr.vmem [resolvable:$true] %s526
      %529 = dma.hbm_to_vmem [thread:$0]  %s517, 16, %s527, [#allocation3]
      %s530 = sld [smem:[#allocation5 + $0x21]]
      %s531 = smul.addr %s530, 16
      %s532 = scalar_lea.hbm %s1, %s531
      %s533 = scalar_lea.vmem [#allocation2], 33
      // Predicated region
      $region150: #{tpu_custom_call.1} parent=16 // pred_check
        _
      $region151: #{tpu_custom_call.1} parent=16 // pred_check_branch
        %535 = sbr.rel target = $region153
      $region152: #{tpu_custom_call.1} parent=16 // pred_region
        %536 = sst [smem:[#allocation12]] [#allocation79]
        %537 = sst [smem:[#allocation13]] [#allocation78]
      $region153: #{tpu_custom_call.1} parent=16 // pred_fallthru
        _
      %539 = shalt.err (0)
      %s541 = sshll.u32 %s533, 4
      %s542 = int_to_ptr.vmem [resolvable:$true] %s541
      %544 = dma.hbm_to_vmem [thread:$0]  %s532, 16, %s542, [#allocation3]
      %s545 = sld [smem:[#allocation5 + $0x22]]
      %s546 = smul.addr %s545, 16
      %s547 = scalar_lea.hbm %s1, %s546
      %s548 = scalar_lea.vmem [#allocation2], 34
      // Predicated region
      $region154: #{tpu_custom_call.1} parent=16 // pred_check
        _
      $region155: #{tpu_custom_call.1} parent=16 // pred_check_branch
        %550 = sbr.rel target = $region157
      $region156: #{tpu_custom_call.1} parent=16 // pred_region
        %551 = sst [smem:[#allocation12]] [#allocation81]
        %552 = sst [smem:[#allocation13]] [#allocation80]
      $region157: #{tpu_custom_call.1} parent=16 // pred_fallthru
        _
      %554 = shalt.err (0)
      %s556 = sshll.u32 %s548, 4
      %s557 = int_to_ptr.vmem [resolvable:$true] %s556
      %559 = dma.hbm_to_vmem [thread:$0]  %s547, 16, %s557, [#allocation3]
      %s560 = sld [smem:[#allocation5 + $0x23]]
      %s561 = smul.addr %s560, 16
      %s562 = scalar_lea.hbm %s1, %s561
      %s563 = scalar_lea.vmem [#allocation2], 35
      // Predicated region
      $region158: #{tpu_custom_call.1} parent=16 // pred_check
        _
      $region159: #{tpu_custom_call.1} parent=16 // pred_check_branch
        %565 = sbr.rel target = $region161
      $region160: #{tpu_custom_call.1} parent=16 // pred_region
        %566 = sst [smem:[#allocation12]] [#allocation83]
        %567 = sst [smem:[#allocation13]] [#allocation82]
      $region161: #{tpu_custom_call.1} parent=16 // pred_fallthru
        _
      %569 = shalt.err (0)
      %s571 = sshll.u32 %s563, 4
      %s572 = int_to_ptr.vmem [resolvable:$true] %s571
      %574 = dma.hbm_to_vmem [thread:$0]  %s562, 16, %s572, [#allocation3]
      %s575 = sld [smem:[#allocation5 + $0x24]]
      %s576 = smul.addr %s575, 16
      %s577 = scalar_lea.hbm %s1, %s576
      %s578 = scalar_lea.vmem [#allocation2], 36
      // Predicated region
      $region162: #{tpu_custom_call.1} parent=16 // pred_check
        _
      $region163: #{tpu_custom_call.1} parent=16 // pred_check_branch
        %580 = sbr.rel target = $region165
      $region164: #{tpu_custom_call.1} parent=16 // pred_region
        %581 = sst [smem:[#allocation12]] [#allocation85]
        %582 = sst [smem:[#allocation13]] [#allocation84]
      $region165: #{tpu_custom_call.1} parent=16 // pred_fallthru
        _
      %584 = shalt.err (0)
      %s586 = sshll.u32 %s578, 4
      %s587 = int_to_ptr.vmem [resolvable:$true] %s586
      %589 = dma.hbm_to_vmem [thread:$0]  %s577, 16, %s587, [#allocation3]
      %s590 = sld [smem:[#allocation5 + $0x25]]
      %s591 = smul.addr %s590, 16
      %s592 = scalar_lea.hbm %s1, %s591
      %s593 = scalar_lea.vmem [#allocation2], 37
      // Predicated region
      $region166: #{tpu_custom_call.1} parent=16 // pred_check
        _
      $region167: #{tpu_custom_call.1} parent=16 // pred_check_branch
        %595 = sbr.rel target = $region169
      $region168: #{tpu_custom_call.1} parent=16 // pred_region
        %596 = sst [smem:[#allocation12]] [#allocation87]
        %597 = sst [smem:[#allocation13]] [#allocation86]
      $region169: #{tpu_custom_call.1} parent=16 // pred_fallthru
        _
      %599 = shalt.err (0)
      %s601 = sshll.u32 %s593, 4
      %s602 = int_to_ptr.vmem [resolvable:$true] %s601
      %604 = dma.hbm_to_vmem [thread:$0]  %s592, 16, %s602, [#allocation3]
      %s605 = sld [smem:[#allocation5 + $0x26]]
      %s606 = smul.addr %s605, 16
      %s607 = scalar_lea.hbm %s1, %s606
      %s608 = scalar_lea.vmem [#allocation2], 38
      // Predicated region
      $region170: #{tpu_custom_call.1} parent=16 // pred_check
        _
      $region171: #{tpu_custom_call.1} parent=16 // pred_check_branch
        %610 = sbr.rel target = $region173
      $region172: #{tpu_custom_call.1} parent=16 // pred_region
        %611 = sst [smem:[#allocation12]] [#allocation89]
        %612 = sst [smem:[#allocation13]] [#allocation88]
      $region173: #{tpu_custom_call.1} parent=16 // pred_fallthru
        _
      %614 = shalt.err (0)
      %s616 = sshll.u32 %s608, 4
      %s617 = int_to_ptr.vmem [resolvable:$true] %s616
      %619 = dma.hbm_to_vmem [thread:$0]  %s607, 16, %s617, [#allocation3]
      %s620 = sld [smem:[#allocation5 + $0x27]]
      %s621 = smul.addr %s620, 16
      %s622 = scalar_lea.hbm %s1, %s621
      %s623 = scalar_lea.vmem [#allocation2], 39
      // Predicated region
      $region174: #{tpu_custom_call.1} parent=16 // pred_check
        _
      $region175: #{tpu_custom_call.1} parent=16 // pred_check_branch
        %625 = sbr.rel target = $region177
      $region176: #{tpu_custom_call.1} parent=16 // pred_region
        %626 = sst [smem:[#allocation12]] [#allocation91]
        %627 = sst [smem:[#allocation13]] [#allocation90]
      $region177: #{tpu_custom_call.1} parent=16 // pred_fallthru
        _
      %629 = shalt.err (0)
      %s631 = sshll.u32 %s623, 4
      %s632 = int_to_ptr.vmem [resolvable:$true] %s631
      %634 = dma.hbm_to_vmem [thread:$0]  %s622, 16, %s632, [#allocation3]
      %s635 = sld [smem:[#allocation5 + $0x28]]
      %s636 = smul.addr %s635, 16
      %s637 = scalar_lea.hbm %s1, %s636
      %s638 = scalar_lea.vmem [#allocation2], 40
      // Predicated region
      $region178: #{tpu_custom_call.1} parent=16 // pred_check
        _
      $region179: #{tpu_custom_call.1} parent=16 // pred_check_branch
        %640 = sbr.rel target = $region181
      $region180: #{tpu_custom_call.1} parent=16 // pred_region
        %641 = sst [smem:[#allocation12]] [#allocation93]
        %642 = sst [smem:[#allocation13]] [#allocation92]
      $region181: #{tpu_custom_call.1} parent=16 // pred_fallthru
        _
      %644 = shalt.err (0)
      %s646 = sshll.u32 %s638, 4
      %s647 = int_to_ptr.vmem [resolvable:$true] %s646
      %649 = dma.hbm_to_vmem [thread:$0]  %s637, 16, %s647, [#allocation3]
      %s650 = sld [smem:[#allocation5 + $0x29]]
      %s651 = smul.addr %s650, 16
      %s652 = scalar_lea.hbm %s1, %s651
      %s653 = scalar_lea.vmem [#allocation2], 41
      // Predicated region
      $region182: #{tpu_custom_call.1} parent=16 // pred_check
        _
      $region183: #{tpu_custom_call.1} parent=16 // pred_check_branch
        %655 = sbr.rel target = $region185
      $region184: #{tpu_custom_call.1} parent=16 // pred_region
        %656 = sst [smem:[#allocation12]] [#allocation95]
        %657 = sst [smem:[#allocation13]] [#allocation94]
      $region185: #{tpu_custom_call.1} parent=16 // pred_fallthru
        _
      %659 = shalt.err (0)
      %s661 = sshll.u32 %s653, 4
      %s662 = int_to_ptr.vmem [resolvable:$true] %s661
      %664 = dma.hbm_to_vmem [thread:$0]  %s652, 16, %s662, [#allocation3]
      %s665 = sld [smem:[#allocation5 + $0x2a]]
      %s666 = smul.addr %s665, 16
      %s667 = scalar_lea.hbm %s1, %s666
      %s668 = scalar_lea.vmem [#allocation2], 42
      // Predicated region
      $region186: #{tpu_custom_call.1} parent=16 // pred_check
        _
      $region187: #{tpu_custom_call.1} parent=16 // pred_check_branch
        %670 = sbr.rel target = $region189
      $region188: #{tpu_custom_call.1} parent=16 // pred_region
        %671 = sst [smem:[#allocation12]] [#allocation97]
        %672 = sst [smem:[#allocation13]] [#allocation96]
      $region189: #{tpu_custom_call.1} parent=16 // pred_fallthru
        _
      %674 = shalt.err (0)
      %s676 = sshll.u32 %s668, 4
      %s677 = int_to_ptr.vmem [resolvable:$true] %s676
      %679 = dma.hbm_to_vmem [thread:$0]  %s667, 16, %s677, [#allocation3]
      %s680 = sld [smem:[#allocation5 + $0x2b]]
      %s681 = smul.addr %s680, 16
      %s682 = scalar_lea.hbm %s1, %s681
      %s683 = scalar_lea.vmem [#allocation2], 43
      // Predicated region
      $region190: #{tpu_custom_call.1} parent=16 // pred_check
        _
      $region191: #{tpu_custom_call.1} parent=16 // pred_check_branch
        %685 = sbr.rel target = $region193
      $region192: #{tpu_custom_call.1} parent=16 // pred_region
        %686 = sst [smem:[#allocation12]] [#allocation99]
        %687 = sst [smem:[#allocation13]] [#allocation98]
      $region193: #{tpu_custom_call.1} parent=16 // pred_fallthru
        _
      %689 = shalt.err (0)
      %s691 = sshll.u32 %s683, 4
      %s692 = int_to_ptr.vmem [resolvable:$true] %s691
      %694 = dma.hbm_to_vmem [thread:$0]  %s682, 16, %s692, [#allocation3]
      %s695 = sld [smem:[#allocation5 + $0x2c]]
      %s696 = smul.addr %s695, 16
      %s697 = scalar_lea.hbm %s1, %s696
      %s698 = scalar_lea.vmem [#allocation2], 44
      // Predicated region
      $region194: #{tpu_custom_call.1} parent=16 // pred_check
        _
      $region195: #{tpu_custom_call.1} parent=16 // pred_check_branch
        %700 = sbr.rel target = $region197
      $region196: #{tpu_custom_call.1} parent=16 // pred_region
        %701 = sst [smem:[#allocation12]] [#allocation101]
        %702 = sst [smem:[#allocation13]] [#allocation100]
      $region197: #{tpu_custom_call.1} parent=16 // pred_fallthru
        _
      %704 = shalt.err (0)
      %s706 = sshll.u32 %s698, 4
      %s707 = int_to_ptr.vmem [resolvable:$true] %s706
      %709 = dma.hbm_to_vmem [thread:$0]  %s697, 16, %s707, [#allocation3]
      %s710 = sld [smem:[#allocation5 + $0x2d]]
      %s711 = smul.addr %s710, 16
      %s712 = scalar_lea.hbm %s1, %s711
      %s713 = scalar_lea.vmem [#allocation2], 45
      // Predicated region
      $region198: #{tpu_custom_call.1} parent=16 // pred_check
        _
      $region199: #{tpu_custom_call.1} parent=16 // pred_check_branch
        %715 = sbr.rel target = $region201
      $region200: #{tpu_custom_call.1} parent=16 // pred_region
        %716 = sst [smem:[#allocation12]] [#allocation103]
        %717 = sst [smem:[#allocation13]] [#allocation102]
      $region201: #{tpu_custom_call.1} parent=16 // pred_fallthru
        _
      %719 = shalt.err (0)
      %s721 = sshll.u32 %s713, 4
      %s722 = int_to_ptr.vmem [resolvable:$true] %s721
      %724 = dma.hbm_to_vmem [thread:$0]  %s712, 16, %s722, [#allocation3]
      %s725 = sld [smem:[#allocation5 + $0x2e]]
      %s726 = smul.addr %s725, 16
      %s727 = scalar_lea.hbm %s1, %s726
      %s728 = scalar_lea.vmem [#allocation2], 46
      // Predicated region
      $region202: #{tpu_custom_call.1} parent=16 // pred_check
        _
      $region203: #{tpu_custom_call.1} parent=16 // pred_check_branch
        %730 = sbr.rel target = $region205
      $region204: #{tpu_custom_call.1} parent=16 // pred_region
        %731 = sst [smem:[#allocation12]] [#allocation105]
        %732 = sst [smem:[#allocation13]] [#allocation104]
      $region205: #{tpu_custom_call.1} parent=16 // pred_fallthru
        _
      %734 = shalt.err (0)
      %s736 = sshll.u32 %s728, 4
      %s737 = int_to_ptr.vmem [resolvable:$true] %s736
      %739 = dma.hbm_to_vmem [thread:$0]  %s727, 16, %s737, [#allocation3]
      %s740 = sld [smem:[#allocation5 + $0x2f]]
      %s741 = smul.addr %s740, 16
      %s742 = scalar_lea.hbm %s1, %s741
      %s743 = scalar_lea.vmem [#allocation2], 47
      // Predicated region
      $region206: #{tpu_custom_call.1} parent=16 // pred_check
        _
      $region207: #{tpu_custom_call.1} parent=16 // pred_check_branch
        %745 = sbr.rel target = $region209
      $region208: #{tpu_custom_call.1} parent=16 // pred_region
        %746 = sst [smem:[#allocation12]] [#allocation107]
        %747 = sst [smem:[#allocation13]] [#allocation106]
      $region209: #{tpu_custom_call.1} parent=16 // pred_fallthru
        _
      %749 = shalt.err (0)
      %s751 = sshll.u32 %s743, 4
      %s752 = int_to_ptr.vmem [resolvable:$true] %s751
      %754 = dma.hbm_to_vmem [thread:$0]  %s742, 16, %s752, [#allocation3]
      %s755 = sld [smem:[#allocation5 + $0x30]]
      %s756 = smul.addr %s755, 16
      %s757 = scalar_lea.hbm %s1, %s756
      %s758 = scalar_lea.vmem [#allocation2], 48
      // Predicated region
      $region210: #{tpu_custom_call.1} parent=16 // pred_check
        _
      $region211: #{tpu_custom_call.1} parent=16 // pred_check_branch
        %760 = sbr.rel target = $region213
      $region212: #{tpu_custom_call.1} parent=16 // pred_region
        %761 = sst [smem:[#allocation12]] [#allocation109]
        %762 = sst [smem:[#allocation13]] [#allocation108]
      $region213: #{tpu_custom_call.1} parent=16 // pred_fallthru
        _
      %764 = shalt.err (0)
      %s766 = sshll.u32 %s758, 4
      %s767 = int_to_ptr.vmem [resolvable:$true] %s766
      %769 = dma.hbm_to_vmem [thread:$0]  %s757, 16, %s767, [#allocation3]
      %s770 = sld [smem:[#allocation5 + $0x31]]
      %s771 = smul.addr %s770, 16
      %s772 = scalar_lea.hbm %s1, %s771
      %s773 = scalar_lea.vmem [#allocation2], 49
      // Predicated region
      $region214: #{tpu_custom_call.1} parent=16 // pred_check
        _
      $region215: #{tpu_custom_call.1} parent=16 // pred_check_branch
        %775 = sbr.rel target = $region217
      $region216: #{tpu_custom_call.1} parent=16 // pred_region
        %776 = sst [smem:[#allocation12]] [#allocation111]
        %777 = sst [smem:[#allocation13]] [#allocation110]
      $region217: #{tpu_custom_call.1} parent=16 // pred_fallthru
        _
      %779 = shalt.err (0)
      %s781 = sshll.u32 %s773, 4
      %s782 = int_to_ptr.vmem [resolvable:$true] %s781
      %784 = dma.hbm_to_vmem [thread:$0]  %s772, 16, %s782, [#allocation3]
      %s785 = sld [smem:[#allocation5 + $0x32]]
      %s786 = smul.addr %s785, 16
      %s787 = scalar_lea.hbm %s1, %s786
      %s788 = scalar_lea.vmem [#allocation2], 50
      // Predicated region
      $region218: #{tpu_custom_call.1} parent=16 // pred_check
        _
      $region219: #{tpu_custom_call.1} parent=16 // pred_check_branch
        %790 = sbr.rel target = $region221
      $region220: #{tpu_custom_call.1} parent=16 // pred_region
        %791 = sst [smem:[#allocation12]] [#allocation113]
        %792 = sst [smem:[#allocation13]] [#allocation112]
      $region221: #{tpu_custom_call.1} parent=16 // pred_fallthru
        _
      %794 = shalt.err (0)
      %s796 = sshll.u32 %s788, 4
      %s797 = int_to_ptr.vmem [resolvable:$true] %s796
      %799 = dma.hbm_to_vmem [thread:$0]  %s787, 16, %s797, [#allocation3]
      %s800 = sld [smem:[#allocation5 + $0x33]]
      %s801 = smul.addr %s800, 16
      %s802 = scalar_lea.hbm %s1, %s801
      %s803 = scalar_lea.vmem [#allocation2], 51
      // Predicated region
      $region222: #{tpu_custom_call.1} parent=16 // pred_check
        _
      $region223: #{tpu_custom_call.1} parent=16 // pred_check_branch
        %805 = sbr.rel target = $region225
      $region224: #{tpu_custom_call.1} parent=16 // pred_region
        %806 = sst [smem:[#allocation12]] [#allocation115]
        %807 = sst [smem:[#allocation13]] [#allocation114]
      $region225: #{tpu_custom_call.1} parent=16 // pred_fallthru
        _
      %809 = shalt.err (0)
      %s811 = sshll.u32 %s803, 4
      %s812 = int_to_ptr.vmem [resolvable:$true] %s811
      %814 = dma.hbm_to_vmem [thread:$0]  %s802, 16, %s812, [#allocation3]
      %s815 = sld [smem:[#allocation5 + $0x34]]
      %s816 = smul.addr %s815, 16
      %s817 = scalar_lea.hbm %s1, %s816
      %s818 = scalar_lea.vmem [#allocation2], 52
      // Predicated region
      $region226: #{tpu_custom_call.1} parent=16 // pred_check
        _
      $region227: #{tpu_custom_call.1} parent=16 // pred_check_branch
        %820 = sbr.rel target = $region229
      $region228: #{tpu_custom_call.1} parent=16 // pred_region
        %821 = sst [smem:[#allocation12]] [#allocation117]
        %822 = sst [smem:[#allocation13]] [#allocation116]
      $region229: #{tpu_custom_call.1} parent=16 // pred_fallthru
        _
      %824 = shalt.err (0)
      %s826 = sshll.u32 %s818, 4
      %s827 = int_to_ptr.vmem [resolvable:$true] %s826
      %829 = dma.hbm_to_vmem [thread:$0]  %s817, 16, %s827, [#allocation3]
      %s830 = sld [smem:[#allocation5 + $0x35]]
      %s831 = smul.addr %s830, 16
      %s832 = scalar_lea.hbm %s1, %s831
      %s833 = scalar_lea.vmem [#allocation2], 53
      // Predicated region
      $region230: #{tpu_custom_call.1} parent=16 // pred_check
        _
      $region231: #{tpu_custom_call.1} parent=16 // pred_check_branch
        %835 = sbr.rel target = $region233
      $region232: #{tpu_custom_call.1} parent=16 // pred_region
        %836 = sst [smem:[#allocation12]] [#allocation119]
        %837 = sst [smem:[#allocation13]] [#allocation118]
      $region233: #{tpu_custom_call.1} parent=16 // pred_fallthru
        _
      %839 = shalt.err (0)
      %s841 = sshll.u32 %s833, 4
      %s842 = int_to_ptr.vmem [resolvable:$true] %s841
      %844 = dma.hbm_to_vmem [thread:$0]  %s832, 16, %s842, [#allocation3]
      %s845 = sld [smem:[#allocation5 + $0x36]]
      %s846 = smul.addr %s845, 16
      %s847 = scalar_lea.hbm %s1, %s846
      %s848 = scalar_lea.vmem [#allocation2], 54
      // Predicated region
      $region234: #{tpu_custom_call.1} parent=16 // pred_check
        _
      $region235: #{tpu_custom_call.1} parent=16 // pred_check_branch
        %850 = sbr.rel target = $region237
      $region236: #{tpu_custom_call.1} parent=16 // pred_region
        %851 = sst [smem:[#allocation12]] [#allocation121]
        %852 = sst [smem:[#allocation13]] [#allocation120]
      $region237: #{tpu_custom_call.1} parent=16 // pred_fallthru
        _
      %854 = shalt.err (0)
      %s856 = sshll.u32 %s848, 4
      %s857 = int_to_ptr.vmem [resolvable:$true] %s856
      %859 = dma.hbm_to_vmem [thread:$0]  %s847, 16, %s857, [#allocation3]
      %s860 = sld [smem:[#allocation5 + $0x37]]
      %s861 = smul.addr %s860, 16
      %s862 = scalar_lea.hbm %s1, %s861
      %s863 = scalar_lea.vmem [#allocation2], 55
      // Predicated region
      $region238: #{tpu_custom_call.1} parent=16 // pred_check
        _
      $region239: #{tpu_custom_call.1} parent=16 // pred_check_branch
        %865 = sbr.rel target = $region241
      $region240: #{tpu_custom_call.1} parent=16 // pred_region
        %866 = sst [smem:[#allocation12]] [#allocation123]
        %867 = sst [smem:[#allocation13]] [#allocation122]
      $region241: #{tpu_custom_call.1} parent=16 // pred_fallthru
        _
      %869 = shalt.err (0)
      %s871 = sshll.u32 %s863, 4
      %s872 = int_to_ptr.vmem [resolvable:$true] %s871
      %874 = dma.hbm_to_vmem [thread:$0]  %s862, 16, %s872, [#allocation3]
      %s875 = sld [smem:[#allocation5 + $0x38]]
      %s876 = smul.addr %s875, 16
      %s877 = scalar_lea.hbm %s1, %s876
      %s878 = scalar_lea.vmem [#allocation2], 56
      // Predicated region
      $region242: #{tpu_custom_call.1} parent=16 // pred_check
        _
      $region243: #{tpu_custom_call.1} parent=16 // pred_check_branch
        %880 = sbr.rel target = $region245
      $region244: #{tpu_custom_call.1} parent=16 // pred_region
        %881 = sst [smem:[#allocation12]] [#allocation125]
        %882 = sst [smem:[#allocation13]] [#allocation124]
      $region245: #{tpu_custom_call.1} parent=16 // pred_fallthru
        _
      %884 = shalt.err (0)
      %s886 = sshll.u32 %s878, 4
      %s887 = int_to_ptr.vmem [resolvable:$true] %s886
      %889 = dma.hbm_to_vmem [thread:$0]  %s877, 16, %s887, [#allocation3]
      %s890 = sld [smem:[#allocation5 + $0x39]]
      %s891 = smul.addr %s890, 16
      %s892 = scalar_lea.hbm %s1, %s891
      %s893 = scalar_lea.vmem [#allocation2], 57
      // Predicated region
      $region246: #{tpu_custom_call.1} parent=16 // pred_check
        _
      $region247: #{tpu_custom_call.1} parent=16 // pred_check_branch
        %895 = sbr.rel target = $region249
      $region248: #{tpu_custom_call.1} parent=16 // pred_region
        %896 = sst [smem:[#allocation12]] [#allocation127]
        %897 = sst [smem:[#allocation13]] [#allocation126]
      $region249: #{tpu_custom_call.1} parent=16 // pred_fallthru
        _
      %899 = shalt.err (0)
      %s901 = sshll.u32 %s893, 4
      %s902 = int_to_ptr.vmem [resolvable:$true] %s901
      %904 = dma.hbm_to_vmem [thread:$0]  %s892, 16, %s902, [#allocation3]
      %s905 = sld [smem:[#allocation5 + $0x3a]]
      %s906 = smul.addr %s905, 16
      %s907 = scalar_lea.hbm %s1, %s906
      %s908 = scalar_lea.vmem [#allocation2], 58
      // Predicated region
      $region250: #{tpu_custom_call.1} parent=16 // pred_check
        _
      $region251: #{tpu_custom_call.1} parent=16 // pred_check_branch
        %910 = sbr.rel target = $region253
      $region252: #{tpu_custom_call.1} parent=16 // pred_region
        %911 = sst [smem:[#allocation12]] [#allocation129]
        %912 = sst [smem:[#allocation13]] [#allocation128]
      $region253: #{tpu_custom_call.1} parent=16 // pred_fallthru
        _
      %914 = shalt.err (0)
      %s916 = sshll.u32 %s908, 4
      %s917 = int_to_ptr.vmem [resolvable:$true] %s916
      %919 = dma.hbm_to_vmem [thread:$0]  %s907, 16, %s917, [#allocation3]
      %s920 = sld [smem:[#allocation5 + $0x3b]]
      %s921 = smul.addr %s920, 16
      %s922 = scalar_lea.hbm %s1, %s921
      %s923 = scalar_lea.vmem [#allocation2], 59
      // Predicated region
      $region254: #{tpu_custom_call.1} parent=16 // pred_check
        _
      $region255: #{tpu_custom_call.1} parent=16 // pred_check_branch
        %925 = sbr.rel target = $region257
      $region256: #{tpu_custom_call.1} parent=16 // pred_region
        %926 = sst [smem:[#allocation12]] [#allocation131]
        %927 = sst [smem:[#allocation13]] [#allocation130]
      $region257: #{tpu_custom_call.1} parent=16 // pred_fallthru
        _
      %929 = shalt.err (0)
      %s931 = sshll.u32 %s923, 4
      %s932 = int_to_ptr.vmem [resolvable:$true] %s931
      %934 = dma.hbm_to_vmem [thread:$0]  %s922, 16, %s932, [#allocation3]
      %s935 = sld [smem:[#allocation5 + $0x3c]]
      %s936 = smul.addr %s935, 16
      %s937 = scalar_lea.hbm %s1, %s936
      %s938 = scalar_lea.vmem [#allocation2], 60
      // Predicated region
      $region258: #{tpu_custom_call.1} parent=16 // pred_check
        _
      $region259: #{tpu_custom_call.1} parent=16 // pred_check_branch
        %940 = sbr.rel target = $region261
      $region260: #{tpu_custom_call.1} parent=16 // pred_region
        %941 = sst [smem:[#allocation12]] [#allocation133]
        %942 = sst [smem:[#allocation13]] [#allocation132]
      $region261: #{tpu_custom_call.1} parent=16 // pred_fallthru
        _
      %944 = shalt.err (0)
      %s946 = sshll.u32 %s938, 4
      %s947 = int_to_ptr.vmem [resolvable:$true] %s946
      %949 = dma.hbm_to_vmem [thread:$0]  %s937, 16, %s947, [#allocation3]
      %s950 = sld [smem:[#allocation5 + $0x3d]]
      %s951 = smul.addr %s950, 16
      %s952 = scalar_lea.hbm %s1, %s951
      %s953 = scalar_lea.vmem [#allocation2], 61
      // Predicated region
      $region262: #{tpu_custom_call.1} parent=16 // pred_check
        _
      $region263: #{tpu_custom_call.1} parent=16 // pred_check_branch
        %955 = sbr.rel target = $region265
      $region264: #{tpu_custom_call.1} parent=16 // pred_region
        %956 = sst [smem:[#allocation12]] [#allocation135]
        %957 = sst [smem:[#allocation13]] [#allocation134]
      $region265: #{tpu_custom_call.1} parent=16 // pred_fallthru
        _
      %959 = shalt.err (0)
      %s961 = sshll.u32 %s953, 4
      %s962 = int_to_ptr.vmem [resolvable:$true] %s961
      %964 = dma.hbm_to_vmem [thread:$0]  %s952, 16, %s962, [#allocation3]
      %s965 = sld [smem:[#allocation5 + $0x3e]]
      %s966 = smul.addr %s965, 16
      %s967 = scalar_lea.hbm %s1, %s966
      %s968 = scalar_lea.vmem [#allocation2], 62
      // Predicated region
      $region266: #{tpu_custom_call.1} parent=16 // pred_check
        _
      $region267: #{tpu_custom_call.1} parent=16 // pred_check_branch
        %970 = sbr.rel target = $region269
      $region268: #{tpu_custom_call.1} parent=16 // pred_region
        %971 = sst [smem:[#allocation12]] [#allocation137]
        %972 = sst [smem:[#allocation13]] [#allocation136]
      $region269: #{tpu_custom_call.1} parent=16 // pred_fallthru
        _
      %974 = shalt.err (0)
      %s976 = sshll.u32 %s968, 4
      %s977 = int_to_ptr.vmem [resolvable:$true] %s976
      %979 = dma.hbm_to_vmem [thread:$0]  %s967, 16, %s977, [#allocation3]
      %s980 = sld [smem:[#allocation5 + $0x3f]]
      %s981 = smul.addr %s980, 16
      %s982 = scalar_lea.hbm %s1, %s981
      %s983 = scalar_lea.vmem [#allocation2], 63
      // Predicated region
      $region270: #{tpu_custom_call.1} parent=16 // pred_check
        _
      $region271: #{tpu_custom_call.1} parent=16 // pred_check_branch
        %985 = sbr.rel target = $region273
      $region272: #{tpu_custom_call.1} parent=16 // pred_region
        %986 = sst [smem:[#allocation12]] [#allocation139]
        %987 = sst [smem:[#allocation13]] [#allocation138]
      $region273: #{tpu_custom_call.1} parent=16 // pred_fallthru
        _
      %989 = shalt.err (0)
      %s991 = sshll.u32 %s983, 4
      %s992 = int_to_ptr.vmem [resolvable:$true] %s991
      %994 = dma.hbm_to_vmem [thread:$0]  %s982, 16, %s992, [#allocation3]
    $region17: #{tpu_custom_call.1} parent=1 // pred_fallthru
      _
    %s995 = sadd.s32 0, 1
    %p996 = scmp.lt.s32.totalorder %s995, 1
    // Predicated region
    $region274: #{tpu_custom_call.1} parent=1 // pred_check
      %p997 = pneg %p996
    $region275: #{tpu_custom_call.1} parent=1 // pred_check_branch
      %999 = sbr.rel (%p997) target = $region277
    $region276: #{tpu_custom_call.1} parent=1 // pred_region
      %p1000 = scmp.lt.s32.totalorder %s995, 0
      %s1001 = ssub.s32 0, %s995
      %s1002 = scalar_select %p1000, %s1001, %s995
      %s1003 = sand.u32 %s1002, 1
      %s1004 = ssub.s32 0, %s1003
      %s1005 = scalar_select %p1000, %s1004, %s1003
      %p1006 = scmp.ne.s32.totalorder %s1005, 0
      %p1007 = scmp.lt.s32.totalorder %s1005, 0
      %p1008 = pnand %p1007, %p1006
      %p1009 = pneg %p1008
      %s1010 = sadd.s32 %s1005, 2
      %s1011 = scalar_select %p1009, %s1010, %s1005
      %s1012 = smul.u32 %s995, 64
      %s1013 = sld [smem:[#allocation5 + %s1012]]
      %s1014 = smul.addr %s1013, 16
      %s1015 = scalar_lea.hbm %s1, %s1014
      %s1016 = smul.u32 %s1011, 64
      %s1017 = scalar_lea.vmem [#allocation2], %s1016
      %s1018 = scalar_lea.sflag [#allocation3], %s1011
      // Predicated region
      $region278: #{tpu_custom_call.1} parent=276 // pred_check
        _
      $region279: #{tpu_custom_call.1} parent=276 // pred_check_branch
        %1020 = sbr.rel target = $region281
      $region280: #{tpu_custom_call.1} parent=276 // pred_region
        %1021 = sst [smem:[#allocation12]] [#allocation141]
        %1022 = sst [smem:[#allocation13]] [#allocation140]
      $region281: #{tpu_custom_call.1} parent=276 // pred_fallthru
        _
      %1024 = shalt.err (0)
      %s1026 = sshll.u32 %s1017, 4
      %s1027 = int_to_ptr.vmem [resolvable:$true] %s1026
      %1029 = dma.hbm_to_vmem [thread:$0]  %s1015, 16, %s1027, %s1018
      %s1030 = sadd.s32 %s1012, 1
      %s1031 = sld [smem:[#allocation5 + %s1030]]
      %s1032 = smul.addr %s1031, 16
      %s1033 = scalar_lea.hbm %s1, %s1032
      %s1034 = sadd.s32 1, %s1016
      %s1035 = scalar_lea.vmem [#allocation2], %s1034
      // Predicated region
      $region282: #{tpu_custom_call.1} parent=276 // pred_check
        _
      $region283: #{tpu_custom_call.1} parent=276 // pred_check_branch
        %1037 = sbr.rel target = $region285
      $region284: #{tpu_custom_call.1} parent=276 // pred_region
        %1038 = sst [smem:[#allocation12]] [#allocation143]
        %1039 = sst [smem:[#allocation13]] [#allocation142]
      $region285: #{tpu_custom_call.1} parent=276 // pred_fallthru
        _
      %1041 = shalt.err (0)
      %s1043 = sshll.u32 %s1035, 4
      %s1044 = int_to_ptr.vmem [resolvable:$true] %s1043
      %1046 = dma.hbm_to_vmem [thread:$0]  %s1033, 16, %s1044, %s1018
      %s1047 = sadd.s32 %s1012, 2
      %s1048 = sld [smem:[#allocation5 + %s1047]]
      %s1049 = smul.addr %s1048, 16
      %s1050 = scalar_lea.hbm %s1, %s1049
      %s1051 = sadd.s32 2, %s1016
      %s1052 = scalar_lea.vmem [#allocation2], %s1051
      // Predicated region
      $region286: #{tpu_custom_call.1} parent=276 // pred_check
        _
      $region287: #{tpu_custom_call.1} parent=276 // pred_check_branch
        %1054 = sbr.rel target = $region289
      $region288: #{tpu_custom_call.1} parent=276 // pred_region
        %1055 = sst [smem:[#allocation12]] [#allocation145]
        %1056 = sst [smem:[#allocation13]] [#allocation144]
      $region289: #{tpu_custom_call.1} parent=276 // pred_fallthru
        _
      %1058 = shalt.err (0)
      %s1060 = sshll.u32 %s1052, 4
      %s1061 = int_to_ptr.vmem [resolvable:$true] %s1060
      %1063 = dma.hbm_to_vmem [thread:$0]  %s1050, 16, %s1061, %s1018
      %s1064 = sadd.s32 %s1012, 3
      %s1065 = sld [smem:[#allocation5 + %s1064]]
      %s1066 = smul.addr %s1065, 16
      %s1067 = scalar_lea.hbm %s1, %s1066
      %s1068 = sadd.s32 3, %s1016
      %s1069 = scalar_lea.vmem [#allocation2], %s1068
      // Predicated region
      $region290: #{tpu_custom_call.1} parent=276 // pred_check
        _
      $region291: #{tpu_custom_call.1} parent=276 // pred_check_branch
        %1071 = sbr.rel target = $region293
      $region292: #{tpu_custom_call.1} parent=276 // pred_region
        %1072 = sst [smem:[#allocation12]] [#allocation147]
        %1073 = sst [smem:[#allocation13]] [#allocation146]
      $region293: #{tpu_custom_call.1} parent=276 // pred_fallthru
        _
      %1075 = shalt.err (0)
      %s1077 = sshll.u32 %s1069, 4
      %s1078 = int_to_ptr.vmem [resolvable:$true] %s1077
      %1080 = dma.hbm_to_vmem [thread:$0]  %s1067, 16, %s1078, %s1018
      %s1081 = sadd.s32 %s1012, 4
      %s1082 = sld [smem:[#allocation5 + %s1081]]
      %s1083 = smul.addr %s1082, 16
      %s1084 = scalar_lea.hbm %s1, %s1083
      %s1085 = sadd.s32 4, %s1016
      %s1086 = scalar_lea.vmem [#allocation2], %s1085
      // Predicated region
      $region294: #{tpu_custom_call.1} parent=276 // pred_check
        _
      $region295: #{tpu_custom_call.1} parent=276 // pred_check_branch
        %1088 = sbr.rel target = $region297
      $region296: #{tpu_custom_call.1} parent=276 // pred_region
        %1089 = sst [smem:[#allocation12]] [#allocation149]
        %1090 = sst [smem:[#allocation13]] [#allocation148]
      $region297: #{tpu_custom_call.1} parent=276 // pred_fallthru
        _
      %1092 = shalt.err (0)
      %s1094 = sshll.u32 %s1086, 4
      %s1095 = int_to_ptr.vmem [resolvable:$true] %s1094
      %1097 = dma.hbm_to_vmem [thread:$0]  %s1084, 16, %s1095, %s1018
      %s1098 = sadd.s32 %s1012, 5
      %s1099 = sld [smem:[#allocation5 + %s1098]]
      %s1100 = smul.addr %s1099, 16
      %s1101 = scalar_lea.hbm %s1, %s1100
      %s1102 = sadd.s32 5, %s1016
      %s1103 = scalar_lea.vmem [#allocation2], %s1102
      // Predicated region
      $region298: #{tpu_custom_call.1} parent=276 // pred_check
        _
      $region299: #{tpu_custom_call.1} parent=276 // pred_check_branch
        %1105 = sbr.rel target = $region301
      $region300: #{tpu_custom_call.1} parent=276 // pred_region
        %1106 = sst [smem:[#allocation12]] [#allocation151]
        %1107 = sst [smem:[#allocation13]] [#allocation150]
      $region301: #{tpu_custom_call.1} parent=276 // pred_fallthru
        _
      %1109 = shalt.err (0)
      %s1111 = sshll.u32 %s1103, 4
      %s1112 = int_to_ptr.vmem [resolvable:$true] %s1111
      %1114 = dma.hbm_to_vmem [thread:$0]  %s1101, 16, %s1112, %s1018
      %s1115 = sadd.s32 %s1012, 6
      %s1116 = sld [smem:[#allocation5 + %s1115]]
      %s1117 = smul.addr %s1116, 16
      %s1118 = scalar_lea.hbm %s1, %s1117
      %s1119 = sadd.s32 6, %s1016
      %s1120 = scalar_lea.vmem [#allocation2], %s1119
      // Predicated region
      $region302: #{tpu_custom_call.1} parent=276 // pred_check
        _
      $region303: #{tpu_custom_call.1} parent=276 // pred_check_branch
        %1122 = sbr.rel target = $region305
      $region304: #{tpu_custom_call.1} parent=276 // pred_region
        %1123 = sst [smem:[#allocation12]] [#allocation153]
        %1124 = sst [smem:[#allocation13]] [#allocation152]
      $region305: #{tpu_custom_call.1} parent=276 // pred_fallthru
        _
      %1126 = shalt.err (0)
      %s1128 = sshll.u32 %s1120, 4
      %s1129 = int_to_ptr.vmem [resolvable:$true] %s1128
      %1131 = dma.hbm_to_vmem [thread:$0]  %s1118, 16, %s1129, %s1018
      %s1132 = sadd.s32 %s1012, 7
      %s1133 = sld [smem:[#allocation5 + %s1132]]
      %s1134 = smul.addr %s1133, 16
      %s1135 = scalar_lea.hbm %s1, %s1134
      %s1136 = sadd.s32 7, %s1016
      %s1137 = scalar_lea.vmem [#allocation2], %s1136
      // Predicated region
      $region306: #{tpu_custom_call.1} parent=276 // pred_check
        _
      $region307: #{tpu_custom_call.1} parent=276 // pred_check_branch
        %1139 = sbr.rel target = $region309
      $region308: #{tpu_custom_call.1} parent=276 // pred_region
        %1140 = sst [smem:[#allocation12]] [#allocation155]
        %1141 = sst [smem:[#allocation13]] [#allocation154]
      $region309: #{tpu_custom_call.1} parent=276 // pred_fallthru
        _
      %1143 = shalt.err (0)
      %s1145 = sshll.u32 %s1137, 4
      %s1146 = int_to_ptr.vmem [resolvable:$true] %s1145
      %1148 = dma.hbm_to_vmem [thread:$0]  %s1135, 16, %s1146, %s1018
      %s1149 = sadd.s32 %s1012, 8
      %s1150 = sld [smem:[#allocation5 + %s1149]]
      %s1151 = smul.addr %s1150, 16
      %s1152 = scalar_lea.hbm %s1, %s1151
      %s1153 = sadd.s32 8, %s1016
      %s1154 = scalar_lea.vmem [#allocation2], %s1153
      // Predicated region
      $region310: #{tpu_custom_call.1} parent=276 // pred_check
        _
      $region311: #{tpu_custom_call.1} parent=276 // pred_check_branch
        %1156 = sbr.rel target = $region313
      $region312: #{tpu_custom_call.1} parent=276 // pred_region
        %1157 = sst [smem:[#allocation12]] [#allocation157]
        %1158 = sst [smem:[#allocation13]] [#allocation156]
      $region313: #{tpu_custom_call.1} parent=276 // pred_fallthru
        _
      %1160 = shalt.err (0)
      %s1162 = sshll.u32 %s1154, 4
      %s1163 = int_to_ptr.vmem [resolvable:$true] %s1162
      %1165 = dma.hbm_to_vmem [thread:$0]  %s1152, 16, %s1163, %s1018
      %s1166 = sadd.s32 %s1012, 9
      %s1167 = sld [smem:[#allocation5 + %s1166]]
      %s1168 = smul.addr %s1167, 16
      %s1169 = scalar_lea.hbm %s1, %s1168
      %s1170 = sadd.s32 9, %s1016
      %s1171 = scalar_lea.vmem [#allocation2], %s1170
      // Predicated region
      $region314: #{tpu_custom_call.1} parent=276 // pred_check
        _
      $region315: #{tpu_custom_call.1} parent=276 // pred_check_branch
        %1173 = sbr.rel target = $region317
      $region316: #{tpu_custom_call.1} parent=276 // pred_region
        %1174 = sst [smem:[#allocation12]] [#allocation159]
        %1175 = sst [smem:[#allocation13]] [#allocation158]
      $region317: #{tpu_custom_call.1} parent=276 // pred_fallthru
        _
      %1177 = shalt.err (0)
      %s1179 = sshll.u32 %s1171, 4
      %s1180 = int_to_ptr.vmem [resolvable:$true] %s1179
      %1182 = dma.hbm_to_vmem [thread:$0]  %s1169, 16, %s1180, %s1018
      %s1183 = sadd.s32 %s1012, 10
      %s1184 = sld [smem:[#allocation5 + %s1183]]
      %s1185 = smul.addr %s1184, 16
      %s1186 = scalar_lea.hbm %s1, %s1185
      %s1187 = sadd.s32 10, %s1016
      %s1188 = scalar_lea.vmem [#allocation2], %s1187
      // Predicated region
      $region318: #{tpu_custom_call.1} parent=276 // pred_check
        _
      $region319: #{tpu_custom_call.1} parent=276 // pred_check_branch
        %1190 = sbr.rel target = $region321
      $region320: #{tpu_custom_call.1} parent=276 // pred_region
        %1191 = sst [smem:[#allocation12]] [#allocation161]
        %1192 = sst [smem:[#allocation13]] [#allocation160]
      $region321: #{tpu_custom_call.1} parent=276 // pred_fallthru
        _
      %1194 = shalt.err (0)
      %s1196 = sshll.u32 %s1188, 4
      %s1197 = int_to_ptr.vmem [resolvable:$true] %s1196
      %1199 = dma.hbm_to_vmem [thread:$0]  %s1186, 16, %s1197, %s1018
      %s1200 = sadd.s32 %s1012, 11
      %s1201 = sld [smem:[#allocation5 + %s1200]]
      %s1202 = smul.addr %s1201, 16
      %s1203 = scalar_lea.hbm %s1, %s1202
      %s1204 = sadd.s32 11, %s1016
      %s1205 = scalar_lea.vmem [#allocation2], %s1204
      // Predicated region
      $region322: #{tpu_custom_call.1} parent=276 // pred_check
        _
      $region323: #{tpu_custom_call.1} parent=276 // pred_check_branch
        %1207 = sbr.rel target = $region325
      $region324: #{tpu_custom_call.1} parent=276 // pred_region
        %1208 = sst [smem:[#allocation12]] [#allocation163]
        %1209 = sst [smem:[#allocation13]] [#allocation162]
      $region325: #{tpu_custom_call.1} parent=276 // pred_fallthru
        _
      %1211 = shalt.err (0)
      %s1213 = sshll.u32 %s1205, 4
      %s1214 = int_to_ptr.vmem [resolvable:$true] %s1213
      %1216 = dma.hbm_to_vmem [thread:$0]  %s1203, 16, %s1214, %s1018
      %s1217 = sadd.s32 %s1012, 12
      %s1218 = sld [smem:[#allocation5 + %s1217]]
      %s1219 = smul.addr %s1218, 16
      %s1220 = scalar_lea.hbm %s1, %s1219
      %s1221 = sadd.s32 12, %s1016
      %s1222 = scalar_lea.vmem [#allocation2], %s1221
      // Predicated region
      $region326: #{tpu_custom_call.1} parent=276 // pred_check
        _
      $region327: #{tpu_custom_call.1} parent=276 // pred_check_branch
        %1224 = sbr.rel target = $region329
      $region328: #{tpu_custom_call.1} parent=276 // pred_region
        %1225 = sst [smem:[#allocation12]] [#allocation165]
        %1226 = sst [smem:[#allocation13]] [#allocation164]
      $region329: #{tpu_custom_call.1} parent=276 // pred_fallthru
        _
      %1228 = shalt.err (0)
      %s1230 = sshll.u32 %s1222, 4
      %s1231 = int_to_ptr.vmem [resolvable:$true] %s1230
      %1233 = dma.hbm_to_vmem [thread:$0]  %s1220, 16, %s1231, %s1018
      %s1234 = sadd.s32 %s1012, 13
      %s1235 = sld [smem:[#allocation5 + %s1234]]
      %s1236 = smul.addr %s1235, 16
      %s1237 = scalar_lea.hbm %s1, %s1236
      %s1238 = sadd.s32 13, %s1016
      %s1239 = scalar_lea.vmem [#allocation2], %s1238
      // Predicated region
      $region330: #{tpu_custom_call.1} parent=276 // pred_check
        _
      $region331: #{tpu_custom_call.1} parent=276 // pred_check_branch
        %1241 = sbr.rel target = $region333
      $region332: #{tpu_custom_call.1} parent=276 // pred_region
        %1242 = sst [smem:[#allocation12]] [#allocation167]
        %1243 = sst [smem:[#allocation13]] [#allocation166]
      $region333: #{tpu_custom_call.1} parent=276 // pred_fallthru
        _
      %1245 = shalt.err (0)
      %s1247 = sshll.u32 %s1239, 4
      %s1248 = int_to_ptr.vmem [resolvable:$true] %s1247
      %1250 = dma.hbm_to_vmem [thread:$0]  %s1237, 16, %s1248, %s1018
      %s1251 = sadd.s32 %s1012, 14
      %s1252 = sld [smem:[#allocation5 + %s1251]]
      %s1253 = smul.addr %s1252, 16
      %s1254 = scalar_lea.hbm %s1, %s1253
      %s1255 = sadd.s32 14, %s1016
      %s1256 = scalar_lea.vmem [#allocation2], %s1255
      // Predicated region
      $region334: #{tpu_custom_call.1} parent=276 // pred_check
        _
      $region335: #{tpu_custom_call.1} parent=276 // pred_check_branch
        %1258 = sbr.rel target = $region337
      $region336: #{tpu_custom_call.1} parent=276 // pred_region
        %1259 = sst [smem:[#allocation12]] [#allocation169]
        %1260 = sst [smem:[#allocation13]] [#allocation168]
      $region337: #{tpu_custom_call.1} parent=276 // pred_fallthru
        _
      %1262 = shalt.err (0)
      %s1264 = sshll.u32 %s1256, 4
      %s1265 = int_to_ptr.vmem [resolvable:$true] %s1264
      %1267 = dma.hbm_to_vmem [thread:$0]  %s1254, 16, %s1265, %s1018
      %s1268 = sadd.s32 %s1012, 15
      %s1269 = sld [smem:[#allocation5 + %s1268]]
      %s1270 = smul.addr %s1269, 16
      %s1271 = scalar_lea.hbm %s1, %s1270
      %s1272 = sadd.s32 15, %s1016
      %s1273 = scalar_lea.vmem [#allocation2], %s1272
      // Predicated region
      $region338: #{tpu_custom_call.1} parent=276 // pred_check
        _
      $region339: #{tpu_custom_call.1} parent=276 // pred_check_branch
        %1275 = sbr.rel target = $region341
      $region340: #{tpu_custom_call.1} parent=276 // pred_region
        %1276 = sst [smem:[#allocation12]] [#allocation171]
        %1277 = sst [smem:[#allocation13]] [#allocation170]
      $region341: #{tpu_custom_call.1} parent=276 // pred_fallthru
        _
      %1279 = shalt.err (0)
      %s1281 = sshll.u32 %s1273, 4
      %s1282 = int_to_ptr.vmem [resolvable:$true] %s1281
      %1284 = dma.hbm_to_vmem [thread:$0]  %s1271, 16, %s1282, %s1018
      %s1285 = sadd.s32 %s1012, 16
      %s1286 = sld [smem:[#allocation5 + %s1285]]
      %s1287 = smul.addr %s1286, 16
      %s1288 = scalar_lea.hbm %s1, %s1287
      %s1289 = sadd.s32 16, %s1016
      %s1290 = scalar_lea.vmem [#allocation2], %s1289
      // Predicated region
      $region342: #{tpu_custom_call.1} parent=276 // pred_check
        _
      $region343: #{tpu_custom_call.1} parent=276 // pred_check_branch
        %1292 = sbr.rel target = $region345
      $region344: #{tpu_custom_call.1} parent=276 // pred_region
        %1293 = sst [smem:[#allocation12]] [#allocation173]
        %1294 = sst [smem:[#allocation13]] [#allocation172]
      $region345: #{tpu_custom_call.1} parent=276 // pred_fallthru
        _
      %1296 = shalt.err (0)
      %s1298 = sshll.u32 %s1290, 4
      %s1299 = int_to_ptr.vmem [resolvable:$true] %s1298
      %1301 = dma.hbm_to_vmem [thread:$0]  %s1288, 16, %s1299, %s1018
      %s1302 = sadd.s32 %s1012, 17
      %s1303 = sld [smem:[#allocation5 + %s1302]]
      %s1304 = smul.addr %s1303, 16
      %s1305 = scalar_lea.hbm %s1, %s1304
      %s1306 = sadd.s32 17, %s1016
      %s1307 = scalar_lea.vmem [#allocation2], %s1306
      // Predicated region
      $region346: #{tpu_custom_call.1} parent=276 // pred_check
        _
      $region347: #{tpu_custom_call.1} parent=276 // pred_check_branch
        %1309 = sbr.rel target = $region349
      $region348: #{tpu_custom_call.1} parent=276 // pred_region
        %1310 = sst [smem:[#allocation12]] [#allocation175]
        %1311 = sst [smem:[#allocation13]] [#allocation174]
      $region349: #{tpu_custom_call.1} parent=276 // pred_fallthru
        _
      %1313 = shalt.err (0)
      %s1315 = sshll.u32 %s1307, 4
      %s1316 = int_to_ptr.vmem [resolvable:$true] %s1315
      %1318 = dma.hbm_to_vmem [thread:$0]  %s1305, 16, %s1316, %s1018
      %s1319 = sadd.s32 %s1012, 18
      %s1320 = sld [smem:[#allocation5 + %s1319]]
      %s1321 = smul.addr %s1320, 16
      %s1322 = scalar_lea.hbm %s1, %s1321
      %s1323 = sadd.s32 18, %s1016
      %s1324 = scalar_lea.vmem [#allocation2], %s1323
      // Predicated region
      $region350: #{tpu_custom_call.1} parent=276 // pred_check
        _
      $region351: #{tpu_custom_call.1} parent=276 // pred_check_branch
        %1326 = sbr.rel target = $region353
      $region352: #{tpu_custom_call.1} parent=276 // pred_region
        %1327 = sst [smem:[#allocation12]] [#allocation177]
        %1328 = sst [smem:[#allocation13]] [#allocation176]
      $region353: #{tpu_custom_call.1} parent=276 // pred_fallthru
        _
      %1330 = shalt.err (0)
      %s1332 = sshll.u32 %s1324, 4
      %s1333 = int_to_ptr.vmem [resolvable:$true] %s1332
      %1335 = dma.hbm_to_vmem [thread:$0]  %s1322, 16, %s1333, %s1018
      %s1336 = sadd.s32 %s1012, 19
      %s1337 = sld [smem:[#allocation5 + %s1336]]
      %s1338 = smul.addr %s1337, 16
      %s1339 = scalar_lea.hbm %s1, %s1338
      %s1340 = sadd.s32 19, %s1016
      %s1341 = scalar_lea.vmem [#allocation2], %s1340
      // Predicated region
      $region354: #{tpu_custom_call.1} parent=276 // pred_check
        _
      $region355: #{tpu_custom_call.1} parent=276 // pred_check_branch
        %1343 = sbr.rel target = $region357
      $region356: #{tpu_custom_call.1} parent=276 // pred_region
        %1344 = sst [smem:[#allocation12]] [#allocation179]
        %1345 = sst [smem:[#allocation13]] [#allocation178]
      $region357: #{tpu_custom_call.1} parent=276 // pred_fallthru
        _
      %1347 = shalt.err (0)
      %s1349 = sshll.u32 %s1341, 4
      %s1350 = int_to_ptr.vmem [resolvable:$true] %s1349
      %1352 = dma.hbm_to_vmem [thread:$0]  %s1339, 16, %s1350, %s1018
      %s1353 = sadd.s32 %s1012, 20
      %s1354 = sld [smem:[#allocation5 + %s1353]]
      %s1355 = smul.addr %s1354, 16
      %s1356 = scalar_lea.hbm %s1, %s1355
      %s1357 = sadd.s32 20, %s1016
      %s1358 = scalar_lea.vmem [#allocation2], %s1357
      // Predicated region
      $region358: #{tpu_custom_call.1} parent=276 // pred_check
        _
      $region359: #{tpu_custom_call.1} parent=276 // pred_check_branch
        %1360 = sbr.rel target = $region361
      $region360: #{tpu_custom_call.1} parent=276 // pred_region
        %1361 = sst [smem:[#allocation12]] [#allocation181]
        %1362 = sst [smem:[#allocation13]] [#allocation180]
      $region361: #{tpu_custom_call.1} parent=276 // pred_fallthru
        _
      %1364 = shalt.err (0)
      %s1366 = sshll.u32 %s1358, 4
      %s1367 = int_to_ptr.vmem [resolvable:$true] %s1366
      %1369 = dma.hbm_to_vmem [thread:$0]  %s1356, 16, %s1367, %s1018
      %s1370 = sadd.s32 %s1012, 21
      %s1371 = sld [smem:[#allocation5 + %s1370]]
      %s1372 = smul.addr %s1371, 16
      %s1373 = scalar_lea.hbm %s1, %s1372
      %s1374 = sadd.s32 21, %s1016
      %s1375 = scalar_lea.vmem [#allocation2], %s1374
      // Predicated region
      $region362: #{tpu_custom_call.1} parent=276 // pred_check
        _
      $region363: #{tpu_custom_call.1} parent=276 // pred_check_branch
        %1377 = sbr.rel target = $region365
      $region364: #{tpu_custom_call.1} parent=276 // pred_region
        %1378 = sst [smem:[#allocation12]] [#allocation183]
        %1379 = sst [smem:[#allocation13]] [#allocation182]
      $region365: #{tpu_custom_call.1} parent=276 // pred_fallthru
        _
      %1381 = shalt.err (0)
      %s1383 = sshll.u32 %s1375, 4
      %s1384 = int_to_ptr.vmem [resolvable:$true] %s1383
      %1386 = dma.hbm_to_vmem [thread:$0]  %s1373, 16, %s1384, %s1018
      %s1387 = sadd.s32 %s1012, 22
      %s1388 = sld [smem:[#allocation5 + %s1387]]
      %s1389 = smul.addr %s1388, 16
      %s1390 = scalar_lea.hbm %s1, %s1389
      %s1391 = sadd.s32 22, %s1016
      %s1392 = scalar_lea.vmem [#allocation2], %s1391
      // Predicated region
      $region366: #{tpu_custom_call.1} parent=276 // pred_check
        _
      $region367: #{tpu_custom_call.1} parent=276 // pred_check_branch
        %1394 = sbr.rel target = $region369
      $region368: #{tpu_custom_call.1} parent=276 // pred_region
        %1395 = sst [smem:[#allocation12]] [#allocation185]
        %1396 = sst [smem:[#allocation13]] [#allocation184]
      $region369: #{tpu_custom_call.1} parent=276 // pred_fallthru
        _
      %1398 = shalt.err (0)
      %s1400 = sshll.u32 %s1392, 4
      %s1401 = int_to_ptr.vmem [resolvable:$true] %s1400
      %1403 = dma.hbm_to_vmem [thread:$0]  %s1390, 16, %s1401, %s1018
      %s1404 = sadd.s32 %s1012, 23
      %s1405 = sld [smem:[#allocation5 + %s1404]]
      %s1406 = smul.addr %s1405, 16
      %s1407 = scalar_lea.hbm %s1, %s1406
      %s1408 = sadd.s32 23, %s1016
      %s1409 = scalar_lea.vmem [#allocation2], %s1408
      // Predicated region
      $region370: #{tpu_custom_call.1} parent=276 // pred_check
        _
      $region371: #{tpu_custom_call.1} parent=276 // pred_check_branch
        %1411 = sbr.rel target = $region373
      $region372: #{tpu_custom_call.1} parent=276 // pred_region
        %1412 = sst [smem:[#allocation12]] [#allocation187]
        %1413 = sst [smem:[#allocation13]] [#allocation186]
      $region373: #{tpu_custom_call.1} parent=276 // pred_fallthru
        _
      %1415 = shalt.err (0)
      %s1417 = sshll.u32 %s1409, 4
      %s1418 = int_to_ptr.vmem [resolvable:$true] %s1417
      %1420 = dma.hbm_to_vmem [thread:$0]  %s1407, 16, %s1418, %s1018
      %s1421 = sadd.s32 %s1012, 24
      %s1422 = sld [smem:[#allocation5 + %s1421]]
      %s1423 = smul.addr %s1422, 16
      %s1424 = scalar_lea.hbm %s1, %s1423
      %s1425 = sadd.s32 24, %s1016
      %s1426 = scalar_lea.vmem [#allocation2], %s1425
      // Predicated region
      $region374: #{tpu_custom_call.1} parent=276 // pred_check
        _
      $region375: #{tpu_custom_call.1} parent=276 // pred_check_branch
        %1428 = sbr.rel target = $region377
      $region376: #{tpu_custom_call.1} parent=276 // pred_region
        %1429 = sst [smem:[#allocation12]] [#allocation189]
        %1430 = sst [smem:[#allocation13]] [#allocation188]
      $region377: #{tpu_custom_call.1} parent=276 // pred_fallthru
        _
      %1432 = shalt.err (0)
      %s1434 = sshll.u32 %s1426, 4
      %s1435 = int_to_ptr.vmem [resolvable:$true] %s1434
      %1437 = dma.hbm_to_vmem [thread:$0]  %s1424, 16, %s1435, %s1018
      %s1438 = sadd.s32 %s1012, 25
      %s1439 = sld [smem:[#allocation5 + %s1438]]
      %s1440 = smul.addr %s1439, 16
      %s1441 = scalar_lea.hbm %s1, %s1440
      %s1442 = sadd.s32 25, %s1016
      %s1443 = scalar_lea.vmem [#allocation2], %s1442
      // Predicated region
      $region378: #{tpu_custom_call.1} parent=276 // pred_check
        _
      $region379: #{tpu_custom_call.1} parent=276 // pred_check_branch
        %1445 = sbr.rel target = $region381
      $region380: #{tpu_custom_call.1} parent=276 // pred_region
        %1446 = sst [smem:[#allocation12]] [#allocation191]
        %1447 = sst [smem:[#allocation13]] [#allocation190]
      $region381: #{tpu_custom_call.1} parent=276 // pred_fallthru
        _
      %1449 = shalt.err (0)
      %s1451 = sshll.u32 %s1443, 4
      %s1452 = int_to_ptr.vmem [resolvable:$true] %s1451
      %1454 = dma.hbm_to_vmem [thread:$0]  %s1441, 16, %s1452, %s1018
      %s1455 = sadd.s32 %s1012, 26
      %s1456 = sld [smem:[#allocation5 + %s1455]]
      %s1457 = smul.addr %s1456, 16
      %s1458 = scalar_lea.hbm %s1, %s1457
      %s1459 = sadd.s32 26, %s1016
      %s1460 = scalar_lea.vmem [#allocation2], %s1459
      // Predicated region
      $region382: #{tpu_custom_call.1} parent=276 // pred_check
        _
      $region383: #{tpu_custom_call.1} parent=276 // pred_check_branch
        %1462 = sbr.rel target = $region385
      $region384: #{tpu_custom_call.1} parent=276 // pred_region
        %1463 = sst [smem:[#allocation12]] [#allocation193]
        %1464 = sst [smem:[#allocation13]] [#allocation192]
      $region385: #{tpu_custom_call.1} parent=276 // pred_fallthru
        _
      %1466 = shalt.err (0)
      %s1468 = sshll.u32 %s1460, 4
      %s1469 = int_to_ptr.vmem [resolvable:$true] %s1468
      %1471 = dma.hbm_to_vmem [thread:$0]  %s1458, 16, %s1469, %s1018
      %s1472 = sadd.s32 %s1012, 27
      %s1473 = sld [smem:[#allocation5 + %s1472]]
      %s1474 = smul.addr %s1473, 16
      %s1475 = scalar_lea.hbm %s1, %s1474
      %s1476 = sadd.s32 27, %s1016
      %s1477 = scalar_lea.vmem [#allocation2], %s1476
      // Predicated region
      $region386: #{tpu_custom_call.1} parent=276 // pred_check
        _
      $region387: #{tpu_custom_call.1} parent=276 // pred_check_branch
        %1479 = sbr.rel target = $region389
      $region388: #{tpu_custom_call.1} parent=276 // pred_region
        %1480 = sst [smem:[#allocation12]] [#allocation195]
        %1481 = sst [smem:[#allocation13]] [#allocation194]
      $region389: #{tpu_custom_call.1} parent=276 // pred_fallthru
        _
      %1483 = shalt.err (0)
      %s1485 = sshll.u32 %s1477, 4
      %s1486 = int_to_ptr.vmem [resolvable:$true] %s1485
      %1488 = dma.hbm_to_vmem [thread:$0]  %s1475, 16, %s1486, %s1018
      %s1489 = sadd.s32 %s1012, 28
      %s1490 = sld [smem:[#allocation5 + %s1489]]
      %s1491 = smul.addr %s1490, 16
      %s1492 = scalar_lea.hbm %s1, %s1491
      %s1493 = sadd.s32 28, %s1016
      %s1494 = scalar_lea.vmem [#allocation2], %s1493
      // Predicated region
      $region390: #{tpu_custom_call.1} parent=276 // pred_check
        _
      $region391: #{tpu_custom_call.1} parent=276 // pred_check_branch
        %1496 = sbr.rel target = $region393
      $region392: #{tpu_custom_call.1} parent=276 // pred_region
        %1497 = sst [smem:[#allocation12]] [#allocation197]
        %1498 = sst [smem:[#allocation13]] [#allocation196]
      $region393: #{tpu_custom_call.1} parent=276 // pred_fallthru
        _
      %1500 = shalt.err (0)
      %s1502 = sshll.u32 %s1494, 4
      %s1503 = int_to_ptr.vmem [resolvable:$true] %s1502
      %1505 = dma.hbm_to_vmem [thread:$0]  %s1492, 16, %s1503, %s1018
      %s1506 = sadd.s32 %s1012, 29
      %s1507 = sld [smem:[#allocation5 + %s1506]]
      %s1508 = smul.addr %s1507, 16
      %s1509 = scalar_lea.hbm %s1, %s1508
      %s1510 = sadd.s32 29, %s1016
      %s1511 = scalar_lea.vmem [#allocation2], %s1510
      // Predicated region
      $region394: #{tpu_custom_call.1} parent=276 // pred_check
        _
      $region395: #{tpu_custom_call.1} parent=276 // pred_check_branch
        %1513 = sbr.rel target = $region397
      $region396: #{tpu_custom_call.1} parent=276 // pred_region
        %1514 = sst [smem:[#allocation12]] [#allocation199]
        %1515 = sst [smem:[#allocation13]] [#allocation198]
      $region397: #{tpu_custom_call.1} parent=276 // pred_fallthru
        _
      %1517 = shalt.err (0)
      %s1519 = sshll.u32 %s1511, 4
      %s1520 = int_to_ptr.vmem [resolvable:$true] %s1519
      %1522 = dma.hbm_to_vmem [thread:$0]  %s1509, 16, %s1520, %s1018
      %s1523 = sadd.s32 %s1012, 30
      %s1524 = sld [smem:[#allocation5 + %s1523]]
      %s1525 = smul.addr %s1524, 16
      %s1526 = scalar_lea.hbm %s1, %s1525
      %s1527 = sadd.s32 30, %s1016
      %s1528 = scalar_lea.vmem [#allocation2], %s1527
      // Predicated region
      $region398: #{tpu_custom_call.1} parent=276 // pred_check
        _
      $region399: #{tpu_custom_call.1} parent=276 // pred_check_branch
        %1530 = sbr.rel target = $region401
      $region400: #{tpu_custom_call.1} parent=276 // pred_region
        %1531 = sst [smem:[#allocation12]] [#allocation201]
        %1532 = sst [smem:[#allocation13]] [#allocation200]
      $region401: #{tpu_custom_call.1} parent=276 // pred_fallthru
        _
      %1534 = shalt.err (0)
      %s1536 = sshll.u32 %s1528, 4
      %s1537 = int_to_ptr.vmem [resolvable:$true] %s1536
      %1539 = dma.hbm_to_vmem [thread:$0]  %s1526, 16, %s1537, %s1018
      %s1540 = sadd.s32 %s1012, 31
      %s1541 = sld [smem:[#allocation5 + %s1540]]
      %s1542 = smul.addr %s1541, 16
      %s1543 = scalar_lea.hbm %s1, %s1542
      %s1544 = sadd.s32 31, %s1016
      %s1545 = scalar_lea.vmem [#allocation2], %s1544
      // Predicated region
      $region402: #{tpu_custom_call.1} parent=276 // pred_check
        _
      $region403: #{tpu_custom_call.1} parent=276 // pred_check_branch
        %1547 = sbr.rel target = $region405
      $region404: #{tpu_custom_call.1} parent=276 // pred_region
        %1548 = sst [smem:[#allocation12]] [#allocation203]
        %1549 = sst [smem:[#allocation13]] [#allocation202]
      $region405: #{tpu_custom_call.1} parent=276 // pred_fallthru
        _
      %1551 = shalt.err (0)
      %s1553 = sshll.u32 %s1545, 4
      %s1554 = int_to_ptr.vmem [resolvable:$true] %s1553
      %1556 = dma.hbm_to_vmem [thread:$0]  %s1543, 16, %s1554, %s1018
      %s1557 = sadd.s32 %s1012, 32
      %s1558 = sld [smem:[#allocation5 + %s1557]]
      %s1559 = smul.addr %s1558, 16
      %s1560 = scalar_lea.hbm %s1, %s1559
      %s1561 = sadd.s32 32, %s1016
      %s1562 = scalar_lea.vmem [#allocation2], %s1561
      // Predicated region
      $region406: #{tpu_custom_call.1} parent=276 // pred_check
        _
      $region407: #{tpu_custom_call.1} parent=276 // pred_check_branch
        %1564 = sbr.rel target = $region409
      $region408: #{tpu_custom_call.1} parent=276 // pred_region
        %1565 = sst [smem:[#allocation12]] [#allocation205]
        %1566 = sst [smem:[#allocation13]] [#allocation204]
      $region409: #{tpu_custom_call.1} parent=276 // pred_fallthru
        _
      %1568 = shalt.err (0)
      %s1570 = sshll.u32 %s1562, 4
      %s1571 = int_to_ptr.vmem [resolvable:$true] %s1570
      %1573 = dma.hbm_to_vmem [thread:$0]  %s1560, 16, %s1571, %s1018
      %s1574 = sadd.s32 %s1012, 33
      %s1575 = sld [smem:[#allocation5 + %s1574]]
      %s1576 = smul.addr %s1575, 16
      %s1577 = scalar_lea.hbm %s1, %s1576
      %s1578 = sadd.s32 33, %s1016
      %s1579 = scalar_lea.vmem [#allocation2], %s1578
      // Predicated region
      $region410: #{tpu_custom_call.1} parent=276 // pred_check
        _
      $region411: #{tpu_custom_call.1} parent=276 // pred_check_branch
        %1581 = sbr.rel target = $region413
      $region412: #{tpu_custom_call.1} parent=276 // pred_region
        %1582 = sst [smem:[#allocation12]] [#allocation207]
        %1583 = sst [smem:[#allocation13]] [#allocation206]
      $region413: #{tpu_custom_call.1} parent=276 // pred_fallthru
        _
      %1585 = shalt.err (0)
      %s1587 = sshll.u32 %s1579, 4
      %s1588 = int_to_ptr.vmem [resolvable:$true] %s1587
      %1590 = dma.hbm_to_vmem [thread:$0]  %s1577, 16, %s1588, %s1018
      %s1591 = sadd.s32 %s1012, 34
      %s1592 = sld [smem:[#allocation5 + %s1591]]
      %s1593 = smul.addr %s1592, 16
      %s1594 = scalar_lea.hbm %s1, %s1593
      %s1595 = sadd.s32 34, %s1016
      %s1596 = scalar_lea.vmem [#allocation2], %s1595
      // Predicated region
      $region414: #{tpu_custom_call.1} parent=276 // pred_check
        _
      $region415: #{tpu_custom_call.1} parent=276 // pred_check_branch
        %1598 = sbr.rel target = $region417
      $region416: #{tpu_custom_call.1} parent=276 // pred_region
        %1599 = sst [smem:[#allocation12]] [#allocation209]
        %1600 = sst [smem:[#allocation13]] [#allocation208]
      $region417: #{tpu_custom_call.1} parent=276 // pred_fallthru
        _
      %1602 = shalt.err (0)
      %s1604 = sshll.u32 %s1596, 4
      %s1605 = int_to_ptr.vmem [resolvable:$true] %s1604
      %1607 = dma.hbm_to_vmem [thread:$0]  %s1594, 16, %s1605, %s1018
      %s1608 = sadd.s32 %s1012, 35
      %s1609 = sld [smem:[#allocation5 + %s1608]]
      %s1610 = smul.addr %s1609, 16
      %s1611 = scalar_lea.hbm %s1, %s1610
      %s1612 = sadd.s32 35, %s1016
      %s1613 = scalar_lea.vmem [#allocation2], %s1612
      // Predicated region
      $region418: #{tpu_custom_call.1} parent=276 // pred_check
        _
      $region419: #{tpu_custom_call.1} parent=276 // pred_check_branch
        %1615 = sbr.rel target = $region421
      $region420: #{tpu_custom_call.1} parent=276 // pred_region
        %1616 = sst [smem:[#allocation12]] [#allocation211]
        %1617 = sst [smem:[#allocation13]] [#allocation210]
      $region421: #{tpu_custom_call.1} parent=276 // pred_fallthru
        _
      %1619 = shalt.err (0)
      %s1621 = sshll.u32 %s1613, 4
      %s1622 = int_to_ptr.vmem [resolvable:$true] %s1621
      %1624 = dma.hbm_to_vmem [thread:$0]  %s1611, 16, %s1622, %s1018
      %s1625 = sadd.s32 %s1012, 36
      %s1626 = sld [smem:[#allocation5 + %s1625]]
      %s1627 = smul.addr %s1626, 16
      %s1628 = scalar_lea.hbm %s1, %s1627
      %s1629 = sadd.s32 36, %s1016
      %s1630 = scalar_lea.vmem [#allocation2], %s1629
      // Predicated region
      $region422: #{tpu_custom_call.1} parent=276 // pred_check
        _
      $region423: #{tpu_custom_call.1} parent=276 // pred_check_branch
        %1632 = sbr.rel target = $region425
      $region424: #{tpu_custom_call.1} parent=276 // pred_region
        %1633 = sst [smem:[#allocation12]] [#allocation213]
        %1634 = sst [smem:[#allocation13]] [#allocation212]
      $region425: #{tpu_custom_call.1} parent=276 // pred_fallthru
        _
      %1636 = shalt.err (0)
      %s1638 = sshll.u32 %s1630, 4
      %s1639 = int_to_ptr.vmem [resolvable:$true] %s1638
      %1641 = dma.hbm_to_vmem [thread:$0]  %s1628, 16, %s1639, %s1018
      %s1642 = sadd.s32 %s1012, 37
      %s1643 = sld [smem:[#allocation5 + %s1642]]
      %s1644 = smul.addr %s1643, 16
      %s1645 = scalar_lea.hbm %s1, %s1644
      %s1646 = sadd.s32 37, %s1016
      %s1647 = scalar_lea.vmem [#allocation2], %s1646
      // Predicated region
      $region426: #{tpu_custom_call.1} parent=276 // pred_check
        _
      $region427: #{tpu_custom_call.1} parent=276 // pred_check_branch
        %1649 = sbr.rel target = $region429
      $region428: #{tpu_custom_call.1} parent=276 // pred_region
        %1650 = sst [smem:[#allocation12]] [#allocation215]
        %1651 = sst [smem:[#allocation13]] [#allocation214]
      $region429: #{tpu_custom_call.1} parent=276 // pred_fallthru
        _
      %1653 = shalt.err (0)
      %s1655 = sshll.u32 %s1647, 4
      %s1656 = int_to_ptr.vmem [resolvable:$true] %s1655
      %1658 = dma.hbm_to_vmem [thread:$0]  %s1645, 16, %s1656, %s1018
      %s1659 = sadd.s32 %s1012, 38
      %s1660 = sld [smem:[#allocation5 + %s1659]]
      %s1661 = smul.addr %s1660, 16
      %s1662 = scalar_lea.hbm %s1, %s1661
      %s1663 = sadd.s32 38, %s1016
      %s1664 = scalar_lea.vmem [#allocation2], %s1663
      // Predicated region
      $region430: #{tpu_custom_call.1} parent=276 // pred_check
        _
      $region431: #{tpu_custom_call.1} parent=276 // pred_check_branch
        %1666 = sbr.rel target = $region433
      $region432: #{tpu_custom_call.1} parent=276 // pred_region
        %1667 = sst [smem:[#allocation12]] [#allocation217]
        %1668 = sst [smem:[#allocation13]] [#allocation216]
      $region433: #{tpu_custom_call.1} parent=276 // pred_fallthru
        _
      %1670 = shalt.err (0)
      %s1672 = sshll.u32 %s1664, 4
      %s1673 = int_to_ptr.vmem [resolvable:$true] %s1672
      %1675 = dma.hbm_to_vmem [thread:$0]  %s1662, 16, %s1673, %s1018
      %s1676 = sadd.s32 %s1012, 39
      %s1677 = sld [smem:[#allocation5 + %s1676]]
      %s1678 = smul.addr %s1677, 16
      %s1679 = scalar_lea.hbm %s1, %s1678
      %s1680 = sadd.s32 39, %s1016
      %s1681 = scalar_lea.vmem [#allocation2], %s1680
      // Predicated region
      $region434: #{tpu_custom_call.1} parent=276 // pred_check
        _
      $region435: #{tpu_custom_call.1} parent=276 // pred_check_branch
        %1683 = sbr.rel target = $region437
      $region436: #{tpu_custom_call.1} parent=276 // pred_region
        %1684 = sst [smem:[#allocation12]] [#allocation219]
        %1685 = sst [smem:[#allocation13]] [#allocation218]
      $region437: #{tpu_custom_call.1} parent=276 // pred_fallthru
        _
      %1687 = shalt.err (0)
      %s1689 = sshll.u32 %s1681, 4
      %s1690 = int_to_ptr.vmem [resolvable:$true] %s1689
      %1692 = dma.hbm_to_vmem [thread:$0]  %s1679, 16, %s1690, %s1018
      %s1693 = sadd.s32 %s1012, 40
      %s1694 = sld [smem:[#allocation5 + %s1693]]
      %s1695 = smul.addr %s1694, 16
      %s1696 = scalar_lea.hbm %s1, %s1695
      %s1697 = sadd.s32 40, %s1016
      %s1698 = scalar_lea.vmem [#allocation2], %s1697
      // Predicated region
      $region438: #{tpu_custom_call.1} parent=276 // pred_check
        _
      $region439: #{tpu_custom_call.1} parent=276 // pred_check_branch
        %1700 = sbr.rel target = $region441
      $region440: #{tpu_custom_call.1} parent=276 // pred_region
        %1701 = sst [smem:[#allocation12]] [#allocation221]
        %1702 = sst [smem:[#allocation13]] [#allocation220]
      $region441: #{tpu_custom_call.1} parent=276 // pred_fallthru
        _
      %1704 = shalt.err (0)
      %s1706 = sshll.u32 %s1698, 4
      %s1707 = int_to_ptr.vmem [resolvable:$true] %s1706
      %1709 = dma.hbm_to_vmem [thread:$0]  %s1696, 16, %s1707, %s1018
      %s1710 = sadd.s32 %s1012, 41
      %s1711 = sld [smem:[#allocation5 + %s1710]]
      %s1712 = smul.addr %s1711, 16
      %s1713 = scalar_lea.hbm %s1, %s1712
      %s1714 = sadd.s32 41, %s1016
      %s1715 = scalar_lea.vmem [#allocation2], %s1714
      // Predicated region
      $region442: #{tpu_custom_call.1} parent=276 // pred_check
        _
      $region443: #{tpu_custom_call.1} parent=276 // pred_check_branch
        %1717 = sbr.rel target = $region445
      $region444: #{tpu_custom_call.1} parent=276 // pred_region
        %1718 = sst [smem:[#allocation12]] [#allocation223]
        %1719 = sst [smem:[#allocation13]] [#allocation222]
      $region445: #{tpu_custom_call.1} parent=276 // pred_fallthru
        _
      %1721 = shalt.err (0)
      %s1723 = sshll.u32 %s1715, 4
      %s1724 = int_to_ptr.vmem [resolvable:$true] %s1723
      %1726 = dma.hbm_to_vmem [thread:$0]  %s1713, 16, %s1724, %s1018
      %s1727 = sadd.s32 %s1012, 42
      %s1728 = sld [smem:[#allocation5 + %s1727]]
      %s1729 = smul.addr %s1728, 16
      %s1730 = scalar_lea.hbm %s1, %s1729
      %s1731 = sadd.s32 42, %s1016
      %s1732 = scalar_lea.vmem [#allocation2], %s1731
      // Predicated region
      $region446: #{tpu_custom_call.1} parent=276 // pred_check
        _
      $region447: #{tpu_custom_call.1} parent=276 // pred_check_branch
        %1734 = sbr.rel target = $region449
      $region448: #{tpu_custom_call.1} parent=276 // pred_region
        %1735 = sst [smem:[#allocation12]] [#allocation225]
        %1736 = sst [smem:[#allocation13]] [#allocation224]
      $region449: #{tpu_custom_call.1} parent=276 // pred_fallthru
        _
      %1738 = shalt.err (0)
      %s1740 = sshll.u32 %s1732, 4
      %s1741 = int_to_ptr.vmem [resolvable:$true] %s1740
      %1743 = dma.hbm_to_vmem [thread:$0]  %s1730, 16, %s1741, %s1018
      %s1744 = sadd.s32 %s1012, 43
      %s1745 = sld [smem:[#allocation5 + %s1744]]
      %s1746 = smul.addr %s1745, 16
      %s1747 = scalar_lea.hbm %s1, %s1746
      %s1748 = sadd.s32 43, %s1016
      %s1749 = scalar_lea.vmem [#allocation2], %s1748
      // Predicated region
      $region450: #{tpu_custom_call.1} parent=276 // pred_check
        _
      $region451: #{tpu_custom_call.1} parent=276 // pred_check_branch
        %1751 = sbr.rel target = $region453
      $region452: #{tpu_custom_call.1} parent=276 // pred_region
        %1752 = sst [smem:[#allocation12]] [#allocation227]
        %1753 = sst [smem:[#allocation13]] [#allocation226]
      $region453: #{tpu_custom_call.1} parent=276 // pred_fallthru
        _
      %1755 = shalt.err (0)
      %s1757 = sshll.u32 %s1749, 4
      %s1758 = int_to_ptr.vmem [resolvable:$true] %s1757
      %1760 = dma.hbm_to_vmem [thread:$0]  %s1747, 16, %s1758, %s1018
      %s1761 = sadd.s32 %s1012, 44
      %s1762 = sld [smem:[#allocation5 + %s1761]]
      %s1763 = smul.addr %s1762, 16
      %s1764 = scalar_lea.hbm %s1, %s1763
      %s1765 = sadd.s32 44, %s1016
      %s1766 = scalar_lea.vmem [#allocation2], %s1765
      // Predicated region
      $region454: #{tpu_custom_call.1} parent=276 // pred_check
        _
      $region455: #{tpu_custom_call.1} parent=276 // pred_check_branch
        %1768 = sbr.rel target = $region457
      $region456: #{tpu_custom_call.1} parent=276 // pred_region
        %1769 = sst [smem:[#allocation12]] [#allocation229]
        %1770 = sst [smem:[#allocation13]] [#allocation228]
      $region457: #{tpu_custom_call.1} parent=276 // pred_fallthru
        _
      %1772 = shalt.err (0)
      %s1774 = sshll.u32 %s1766, 4
      %s1775 = int_to_ptr.vmem [resolvable:$true] %s1774
      %1777 = dma.hbm_to_vmem [thread:$0]  %s1764, 16, %s1775, %s1018
      %s1778 = sadd.s32 %s1012, 45
      %s1779 = sld [smem:[#allocation5 + %s1778]]
      %s1780 = smul.addr %s1779, 16
      %s1781 = scalar_lea.hbm %s1, %s1780
      %s1782 = sadd.s32 45, %s1016
      %s1783 = scalar_lea.vmem [#allocation2], %s1782
      // Predicated region
      $region458: #{tpu_custom_call.1} parent=276 // pred_check
        _
      $region459: #{tpu_custom_call.1} parent=276 // pred_check_branch
        %1785 = sbr.rel target = $region461
      $region460: #{tpu_custom_call.1} parent=276 // pred_region
        %1786 = sst [smem:[#allocation12]] [#allocation231]
        %1787 = sst [smem:[#allocation13]] [#allocation230]
      $region461: #{tpu_custom_call.1} parent=276 // pred_fallthru
        _
      %1789 = shalt.err (0)
      %s1791 = sshll.u32 %s1783, 4
      %s1792 = int_to_ptr.vmem [resolvable:$true] %s1791
      %1794 = dma.hbm_to_vmem [thread:$0]  %s1781, 16, %s1792, %s1018
      %s1795 = sadd.s32 %s1012, 46
      %s1796 = sld [smem:[#allocation5 + %s1795]]
      %s1797 = smul.addr %s1796, 16
      %s1798 = scalar_lea.hbm %s1, %s1797
      %s1799 = sadd.s32 46, %s1016
      %s1800 = scalar_lea.vmem [#allocation2], %s1799
      // Predicated region
      $region462: #{tpu_custom_call.1} parent=276 // pred_check
        _
      $region463: #{tpu_custom_call.1} parent=276 // pred_check_branch
        %1802 = sbr.rel target = $region465
      $region464: #{tpu_custom_call.1} parent=276 // pred_region
        %1803 = sst [smem:[#allocation12]] [#allocation233]
        %1804 = sst [smem:[#allocation13]] [#allocation232]
      $region465: #{tpu_custom_call.1} parent=276 // pred_fallthru
        _
      %1806 = shalt.err (0)
      %s1808 = sshll.u32 %s1800, 4
      %s1809 = int_to_ptr.vmem [resolvable:$true] %s1808
      %1811 = dma.hbm_to_vmem [thread:$0]  %s1798, 16, %s1809, %s1018
      %s1812 = sadd.s32 %s1012, 47
      %s1813 = sld [smem:[#allocation5 + %s1812]]
      %s1814 = smul.addr %s1813, 16
      %s1815 = scalar_lea.hbm %s1, %s1814
      %s1816 = sadd.s32 47, %s1016
      %s1817 = scalar_lea.vmem [#allocation2], %s1816
      // Predicated region
      $region466: #{tpu_custom_call.1} parent=276 // pred_check
        _
      $region467: #{tpu_custom_call.1} parent=276 // pred_check_branch
        %1819 = sbr.rel target = $region469
      $region468: #{tpu_custom_call.1} parent=276 // pred_region
        %1820 = sst [smem:[#allocation12]] [#allocation235]
        %1821 = sst [smem:[#allocation13]] [#allocation234]
      $region469: #{tpu_custom_call.1} parent=276 // pred_fallthru
        _
      %1823 = shalt.err (0)
      %s1825 = sshll.u32 %s1817, 4
      %s1826 = int_to_ptr.vmem [resolvable:$true] %s1825
      %1828 = dma.hbm_to_vmem [thread:$0]  %s1815, 16, %s1826, %s1018
      %s1829 = sadd.s32 %s1012, 48
      %s1830 = sld [smem:[#allocation5 + %s1829]]
      %s1831 = smul.addr %s1830, 16
      %s1832 = scalar_lea.hbm %s1, %s1831
      %s1833 = sadd.s32 48, %s1016
      %s1834 = scalar_lea.vmem [#allocation2], %s1833
      // Predicated region
      $region470: #{tpu_custom_call.1} parent=276 // pred_check
        _
      $region471: #{tpu_custom_call.1} parent=276 // pred_check_branch
        %1836 = sbr.rel target = $region473
      $region472: #{tpu_custom_call.1} parent=276 // pred_region
        %1837 = sst [smem:[#allocation12]] [#allocation237]
        %1838 = sst [smem:[#allocation13]] [#allocation236]
      $region473: #{tpu_custom_call.1} parent=276 // pred_fallthru
        _
      %1840 = shalt.err (0)
      %s1842 = sshll.u32 %s1834, 4
      %s1843 = int_to_ptr.vmem [resolvable:$true] %s1842
      %1845 = dma.hbm_to_vmem [thread:$0]  %s1832, 16, %s1843, %s1018
      %s1846 = sadd.s32 %s1012, 49
      %s1847 = sld [smem:[#allocation5 + %s1846]]
      %s1848 = smul.addr %s1847, 16
      %s1849 = scalar_lea.hbm %s1, %s1848
      %s1850 = sadd.s32 49, %s1016
      %s1851 = scalar_lea.vmem [#allocation2], %s1850
      // Predicated region
      $region474: #{tpu_custom_call.1} parent=276 // pred_check
        _
      $region475: #{tpu_custom_call.1} parent=276 // pred_check_branch
        %1853 = sbr.rel target = $region477
      $region476: #{tpu_custom_call.1} parent=276 // pred_region
        %1854 = sst [smem:[#allocation12]] [#allocation239]
        %1855 = sst [smem:[#allocation13]] [#allocation238]
      $region477: #{tpu_custom_call.1} parent=276 // pred_fallthru
        _
      %1857 = shalt.err (0)
      %s1859 = sshll.u32 %s1851, 4
      %s1860 = int_to_ptr.vmem [resolvable:$true] %s1859
      %1862 = dma.hbm_to_vmem [thread:$0]  %s1849, 16, %s1860, %s1018
      %s1863 = sadd.s32 %s1012, 50
      %s1864 = sld [smem:[#allocation5 + %s1863]]
      %s1865 = smul.addr %s1864, 16
      %s1866 = scalar_lea.hbm %s1, %s1865
      %s1867 = sadd.s32 50, %s1016
      %s1868 = scalar_lea.vmem [#allocation2], %s1867
      // Predicated region
      $region478: #{tpu_custom_call.1} parent=276 // pred_check
        _
      $region479: #{tpu_custom_call.1} parent=276 // pred_check_branch
        %1870 = sbr.rel target = $region481
      $region480: #{tpu_custom_call.1} parent=276 // pred_region
        %1871 = sst [smem:[#allocation12]] [#allocation241]
        %1872 = sst [smem:[#allocation13]] [#allocation240]
      $region481: #{tpu_custom_call.1} parent=276 // pred_fallthru
        _
      %1874 = shalt.err (0)
      %s1876 = sshll.u32 %s1868, 4
      %s1877 = int_to_ptr.vmem [resolvable:$true] %s1876
      %1879 = dma.hbm_to_vmem [thread:$0]  %s1866, 16, %s1877, %s1018
      %s1880 = sadd.s32 %s1012, 51
      %s1881 = sld [smem:[#allocation5 + %s1880]]
      %s1882 = smul.addr %s1881, 16
      %s1883 = scalar_lea.hbm %s1, %s1882
      %s1884 = sadd.s32 51, %s1016
      %s1885 = scalar_lea.vmem [#allocation2], %s1884
      // Predicated region
      $region482: #{tpu_custom_call.1} parent=276 // pred_check
        _
      $region483: #{tpu_custom_call.1} parent=276 // pred_check_branch
        %1887 = sbr.rel target = $region485
      $region484: #{tpu_custom_call.1} parent=276 // pred_region
        %1888 = sst [smem:[#allocation12]] [#allocation243]
        %1889 = sst [smem:[#allocation13]] [#allocation242]
      $region485: #{tpu_custom_call.1} parent=276 // pred_fallthru
        _
      %1891 = shalt.err (0)
      %s1893 = sshll.u32 %s1885, 4
      %s1894 = int_to_ptr.vmem [resolvable:$true] %s1893
      %1896 = dma.hbm_to_vmem [thread:$0]  %s1883, 16, %s1894, %s1018
      %s1897 = sadd.s32 %s1012, 52
      %s1898 = sld [smem:[#allocation5 + %s1897]]
      %s1899 = smul.addr %s1898, 16
      %s1900 = scalar_lea.hbm %s1, %s1899
      %s1901 = sadd.s32 52, %s1016
      %s1902 = scalar_lea.vmem [#allocation2], %s1901
      // Predicated region
      $region486: #{tpu_custom_call.1} parent=276 // pred_check
        _
      $region487: #{tpu_custom_call.1} parent=276 // pred_check_branch
        %1904 = sbr.rel target = $region489
      $region488: #{tpu_custom_call.1} parent=276 // pred_region
        %1905 = sst [smem:[#allocation12]] [#allocation245]
        %1906 = sst [smem:[#allocation13]] [#allocation244]
      $region489: #{tpu_custom_call.1} parent=276 // pred_fallthru
        _
      %1908 = shalt.err (0)
      %s1910 = sshll.u32 %s1902, 4
      %s1911 = int_to_ptr.vmem [resolvable:$true] %s1910
      %1913 = dma.hbm_to_vmem [thread:$0]  %s1900, 16, %s1911, %s1018
      %s1914 = sadd.s32 %s1012, 53
      %s1915 = sld [smem:[#allocation5 + %s1914]]
      %s1916 = smul.addr %s1915, 16
      %s1917 = scalar_lea.hbm %s1, %s1916
      %s1918 = sadd.s32 53, %s1016
      %s1919 = scalar_lea.vmem [#allocation2], %s1918
      // Predicated region
      $region490: #{tpu_custom_call.1} parent=276 // pred_check
        _
      $region491: #{tpu_custom_call.1} parent=276 // pred_check_branch
        %1921 = sbr.rel target = $region493
      $region492: #{tpu_custom_call.1} parent=276 // pred_region
        %1922 = sst [smem:[#allocation12]] [#allocation247]
        %1923 = sst [smem:[#allocation13]] [#allocation246]
      $region493: #{tpu_custom_call.1} parent=276 // pred_fallthru
        _
      %1925 = shalt.err (0)
      %s1927 = sshll.u32 %s1919, 4
      %s1928 = int_to_ptr.vmem [resolvable:$true] %s1927
      %1930 = dma.hbm_to_vmem [thread:$0]  %s1917, 16, %s1928, %s1018
      %s1931 = sadd.s32 %s1012, 54
      %s1932 = sld [smem:[#allocation5 + %s1931]]
      %s1933 = smul.addr %s1932, 16
      %s1934 = scalar_lea.hbm %s1, %s1933
      %s1935 = sadd.s32 54, %s1016
      %s1936 = scalar_lea.vmem [#allocation2], %s1935
      // Predicated region
      $region494: #{tpu_custom_call.1} parent=276 // pred_check
        _
      $region495: #{tpu_custom_call.1} parent=276 // pred_check_branch
        %1938 = sbr.rel target = $region497
      $region496: #{tpu_custom_call.1} parent=276 // pred_region
        %1939 = sst [smem:[#allocation12]] [#allocation249]
        %1940 = sst [smem:[#allocation13]] [#allocation248]
      $region497: #{tpu_custom_call.1} parent=276 // pred_fallthru
        _
      %1942 = shalt.err (0)
      %s1944 = sshll.u32 %s1936, 4
      %s1945 = int_to_ptr.vmem [resolvable:$true] %s1944
      %1947 = dma.hbm_to_vmem [thread:$0]  %s1934, 16, %s1945, %s1018
      %s1948 = sadd.s32 %s1012, 55
      %s1949 = sld [smem:[#allocation5 + %s1948]]
      %s1950 = smul.addr %s1949, 16
      %s1951 = scalar_lea.hbm %s1, %s1950
      %s1952 = sadd.s32 55, %s1016
      %s1953 = scalar_lea.vmem [#allocation2], %s1952
      // Predicated region
      $region498: #{tpu_custom_call.1} parent=276 // pred_check
        _
      $region499: #{tpu_custom_call.1} parent=276 // pred_check_branch
        %1955 = sbr.rel target = $region501
      $region500: #{tpu_custom_call.1} parent=276 // pred_region
        %1956 = sst [smem:[#allocation12]] [#allocation251]
        %1957 = sst [smem:[#allocation13]] [#allocation250]
      $region501: #{tpu_custom_call.1} parent=276 // pred_fallthru
        _
      %1959 = shalt.err (0)
      %s1961 = sshll.u32 %s1953, 4
      %s1962 = int_to_ptr.vmem [resolvable:$true] %s1961
      %1964 = dma.hbm_to_vmem [thread:$0]  %s1951, 16, %s1962, %s1018
      %s1965 = sadd.s32 %s1012, 56
      %s1966 = sld [smem:[#allocation5 + %s1965]]
      %s1967 = smul.addr %s1966, 16
      %s1968 = scalar_lea.hbm %s1, %s1967
      %s1969 = sadd.s32 56, %s1016
      %s1970 = scalar_lea.vmem [#allocation2], %s1969
      // Predicated region
      $region502: #{tpu_custom_call.1} parent=276 // pred_check
        _
      $region503: #{tpu_custom_call.1} parent=276 // pred_check_branch
        %1972 = sbr.rel target = $region505
      $region504: #{tpu_custom_call.1} parent=276 // pred_region
        %1973 = sst [smem:[#allocation12]] [#allocation253]
        %1974 = sst [smem:[#allocation13]] [#allocation252]
      $region505: #{tpu_custom_call.1} parent=276 // pred_fallthru
        _
      %1976 = shalt.err (0)
      %s1978 = sshll.u32 %s1970, 4
      %s1979 = int_to_ptr.vmem [resolvable:$true] %s1978
      %1981 = dma.hbm_to_vmem [thread:$0]  %s1968, 16, %s1979, %s1018
      %s1982 = sadd.s32 %s1012, 57
      %s1983 = sld [smem:[#allocation5 + %s1982]]
      %s1984 = smul.addr %s1983, 16
      %s1985 = scalar_lea.hbm %s1, %s1984
      %s1986 = sadd.s32 57, %s1016
      %s1987 = scalar_lea.vmem [#allocation2], %s1986
      // Predicated region
      $region506: #{tpu_custom_call.1} parent=276 // pred_check
        _
      $region507: #{tpu_custom_call.1} parent=276 // pred_check_branch
        %1989 = sbr.rel target = $region509
      $region508: #{tpu_custom_call.1} parent=276 // pred_region
        %1990 = sst [smem:[#allocation12]] [#allocation255]
        %1991 = sst [smem:[#allocation13]] [#allocation254]
      $region509: #{tpu_custom_call.1} parent=276 // pred_fallthru
        _
      %1993 = shalt.err (0)
      %s1995 = sshll.u32 %s1987, 4
      %s1996 = int_to_ptr.vmem [resolvable:$true] %s1995
      %1998 = dma.hbm_to_vmem [thread:$0]  %s1985, 16, %s1996, %s1018
      %s1999 = sadd.s32 %s1012, 58
      %s2000 = sld [smem:[#allocation5 + %s1999]]
      %s2001 = smul.addr %s2000, 16
      %s2002 = scalar_lea.hbm %s1, %s2001
      %s2003 = sadd.s32 58, %s1016
      %s2004 = scalar_lea.vmem [#allocation2], %s2003
      // Predicated region
      $region510: #{tpu_custom_call.1} parent=276 // pred_check
        _
      $region511: #{tpu_custom_call.1} parent=276 // pred_check_branch
        %2006 = sbr.rel target = $region513
      $region512: #{tpu_custom_call.1} parent=276 // pred_region
        %2007 = sst [smem:[#allocation12]] [#allocation257]
        %2008 = sst [smem:[#allocation13]] [#allocation256]
      $region513: #{tpu_custom_call.1} parent=276 // pred_fallthru
        _
      %2010 = shalt.err (0)
      %s2012 = sshll.u32 %s2004, 4
      %s2013 = int_to_ptr.vmem [resolvable:$true] %s2012
      %2015 = dma.hbm_to_vmem [thread:$0]  %s2002, 16, %s2013, %s1018
      %s2016 = sadd.s32 %s1012, 59
      %s2017 = sld [smem:[#allocation5 + %s2016]]
      %s2018 = smul.addr %s2017, 16
      %s2019 = scalar_lea.hbm %s1, %s2018
      %s2020 = sadd.s32 59, %s1016
      %s2021 = scalar_lea.vmem [#allocation2], %s2020
      // Predicated region
      $region514: #{tpu_custom_call.1} parent=276 // pred_check
        _
      $region515: #{tpu_custom_call.1} parent=276 // pred_check_branch
        %2023 = sbr.rel target = $region517
      $region516: #{tpu_custom_call.1} parent=276 // pred_region
        %2024 = sst [smem:[#allocation12]] [#allocation259]
        %2025 = sst [smem:[#allocation13]] [#allocation258]
      $region517: #{tpu_custom_call.1} parent=276 // pred_fallthru
        _
      %2027 = shalt.err (0)
      %s2029 = sshll.u32 %s2021, 4
      %s2030 = int_to_ptr.vmem [resolvable:$true] %s2029
      %2032 = dma.hbm_to_vmem [thread:$0]  %s2019, 16, %s2030, %s1018
      %s2033 = sadd.s32 %s1012, 60
      %s2034 = sld [smem:[#allocation5 + %s2033]]
      %s2035 = smul.addr %s2034, 16
      %s2036 = scalar_lea.hbm %s1, %s2035
      %s2037 = sadd.s32 60, %s1016
      %s2038 = scalar_lea.vmem [#allocation2], %s2037
      // Predicated region
      $region518: #{tpu_custom_call.1} parent=276 // pred_check
        _
      $region519: #{tpu_custom_call.1} parent=276 // pred_check_branch
        %2040 = sbr.rel target = $region521
      $region520: #{tpu_custom_call.1} parent=276 // pred_region
        %2041 = sst [smem:[#allocation12]] [#allocation261]
        %2042 = sst [smem:[#allocation13]] [#allocation260]
      $region521: #{tpu_custom_call.1} parent=276 // pred_fallthru
        _
      %2044 = shalt.err (0)
      %s2046 = sshll.u32 %s2038, 4
      %s2047 = int_to_ptr.vmem [resolvable:$true] %s2046
      %2049 = dma.hbm_to_vmem [thread:$0]  %s2036, 16, %s2047, %s1018
      %s2050 = sadd.s32 %s1012, 61
      %s2051 = sld [smem:[#allocation5 + %s2050]]
      %s2052 = smul.addr %s2051, 16
      %s2053 = scalar_lea.hbm %s1, %s2052
      %s2054 = sadd.s32 61, %s1016
      %s2055 = scalar_lea.vmem [#allocation2], %s2054
      // Predicated region
      $region522: #{tpu_custom_call.1} parent=276 // pred_check
        _
      $region523: #{tpu_custom_call.1} parent=276 // pred_check_branch
        %2057 = sbr.rel target = $region525
      $region524: #{tpu_custom_call.1} parent=276 // pred_region
        %2058 = sst [smem:[#allocation12]] [#allocation263]
        %2059 = sst [smem:[#allocation13]] [#allocation262]
      $region525: #{tpu_custom_call.1} parent=276 // pred_fallthru
        _
      %2061 = shalt.err (0)
      %s2063 = sshll.u32 %s2055, 4
      %s2064 = int_to_ptr.vmem [resolvable:$true] %s2063
      %2066 = dma.hbm_to_vmem [thread:$0]  %s2053, 16, %s2064, %s1018
      %s2067 = sadd.s32 %s1012, 62
      %s2068 = sld [smem:[#allocation5 + %s2067]]
      %s2069 = smul.addr %s2068, 16
      %s2070 = scalar_lea.hbm %s1, %s2069
      %s2071 = sadd.s32 62, %s1016
      %s2072 = scalar_lea.vmem [#allocation2], %s2071
      // Predicated region
      $region526: #{tpu_custom_call.1} parent=276 // pred_check
        _
      $region527: #{tpu_custom_call.1} parent=276 // pred_check_branch
        %2074 = sbr.rel target = $region529
      $region528: #{tpu_custom_call.1} parent=276 // pred_region
        %2075 = sst [smem:[#allocation12]] [#allocation265]
        %2076 = sst [smem:[#allocation13]] [#allocation264]
      $region529: #{tpu_custom_call.1} parent=276 // pred_fallthru
        _
      %2078 = shalt.err (0)
      %s2080 = sshll.u32 %s2072, 4
      %s2081 = int_to_ptr.vmem [resolvable:$true] %s2080
      %2083 = dma.hbm_to_vmem [thread:$0]  %s2070, 16, %s2081, %s1018
      %s2084 = sadd.s32 %s1012, 63
      %s2085 = sld [smem:[#allocation5 + %s2084]]
      %s2086 = smul.addr %s2085, 16
      %s2087 = scalar_lea.hbm %s1, %s2086
      %s2088 = sadd.s32 63, %s1016
      %s2089 = scalar_lea.vmem [#allocation2], %s2088
      // Predicated region
      $region530: #{tpu_custom_call.1} parent=276 // pred_check
        _
      $region531: #{tpu_custom_call.1} parent=276 // pred_check_branch
        %2091 = sbr.rel target = $region533
      $region532: #{tpu_custom_call.1} parent=276 // pred_region
        %2092 = sst [smem:[#allocation12]] [#allocation267]
        %2093 = sst [smem:[#allocation13]] [#allocation266]
      $region533: #{tpu_custom_call.1} parent=276 // pred_fallthru
        _
      %2095 = shalt.err (0)
      %s2097 = sshll.u32 %s2089, 4
      %s2098 = int_to_ptr.vmem [resolvable:$true] %s2097
      %2100 = dma.hbm_to_vmem [thread:$0]  %s2087, 16, %s2098, %s1018
    $region277: #{tpu_custom_call.1} parent=1 // pred_fallthru
      _
    %s2101 = ssub.s32 0, 0
    %s2102 = ssub.s32 0, 0
    %p2103 = scmp.ne.s32.totalorder 0, 0
    %p2104 = scmp.lt.s32.totalorder 0, 0
    %p2105 = pnand %p2104, %p2103
    %p2106 = pneg %p2105
    %s2107 = sadd.s32 0, 2
    %s2108 = scalar_select %p2106, %s2107, 0
    %s2109 = scalar_lea.sflag [#allocation3], %s2108
    %s2110 = smul.u32 1, 1
    %s2111 = sshll.u32 %s2110, 4
    %2112 = dma.done %s2109, %s2111
    %s2113 = sshll.u32 %s2110, 4
    %2114 = dma.done %s2109, %s2113
    %s2115 = sshll.u32 %s2110, 4
    %2116 = dma.done %s2109, %s2115
    %s2117 = sshll.u32 %s2110, 4
    %2118 = dma.done %s2109, %s2117
    %s2119 = sshll.u32 %s2110, 4
    %2120 = dma.done %s2109, %s2119
    %s2121 = sshll.u32 %s2110, 4
    %2122 = dma.done %s2109, %s2121
    %s2123 = sshll.u32 %s2110, 4
    %2124 = dma.done %s2109, %s2123
    %s2125 = sshll.u32 %s2110, 4
    %2126 = dma.done %s2109, %s2125
    %s2127 = sshll.u32 %s2110, 4
    %2128 = dma.done %s2109, %s2127
    %s2129 = sshll.u32 %s2110, 4
    %2130 = dma.done %s2109, %s2129
    %s2131 = sshll.u32 %s2110, 4
    %2132 = dma.done %s2109, %s2131
    %s2133 = sshll.u32 %s2110, 4
    %2134 = dma.done %s2109, %s2133
    %s2135 = sshll.u32 %s2110, 4
    %2136 = dma.done %s2109, %s2135
    %s2137 = sshll.u32 %s2110, 4
    %2138 = dma.done %s2109, %s2137
    %s2139 = sshll.u32 %s2110, 4
    %2140 = dma.done %s2109, %s2139
    %s2141 = sshll.u32 %s2110, 4
    %2142 = dma.done %s2109, %s2141
    %s2143 = sshll.u32 %s2110, 4
    %2144 = dma.done %s2109, %s2143
    %s2145 = sshll.u32 %s2110, 4
    %2146 = dma.done %s2109, %s2145
    %s2147 = sshll.u32 %s2110, 4
    %2148 = dma.done %s2109, %s2147
    %s2149 = sshll.u32 %s2110, 4
    %2150 = dma.done %s2109, %s2149
    %s2151 = sshll.u32 %s2110, 4
    %2152 = dma.done %s2109, %s2151
    %s2153 = sshll.u32 %s2110, 4
    %2154 = dma.done %s2109, %s2153
    %s2155 = sshll.u32 %s2110, 4
    %2156 = dma.done %s2109, %s2155
    %s2157 = sshll.u32 %s2110, 4
    %2158 = dma.done %s2109, %s2157
    %s2159 = sshll.u32 %s2110, 4
    %2160 = dma.done %s2109, %s2159
    %s2161 = sshll.u32 %s2110, 4
    %2162 = dma.done %s2109, %s2161
    %s2163 = sshll.u32 %s2110, 4
    %2164 = dma.done %s2109, %s2163
    %s2165 = sshll.u32 %s2110, 4
    %2166 = dma.done %s2109, %s2165
    %s2167 = sshll.u32 %s2110, 4
    %2168 = dma.done %s2109, %s2167
    %s2169 = sshll.u32 %s2110, 4
    %2170 = dma.done %s2109, %s2169
    %s2171 = sshll.u32 %s2110, 4
    %2172 = dma.done %s2109, %s2171
    %s2173 = sshll.u32 %s2110, 4
    %2174 = dma.done %s2109, %s2173
    %s2175 = sshll.u32 %s2110, 4
    %2176 = dma.done %s2109, %s2175
    %s2177 = sshll.u32 %s2110, 4
    %2178 = dma.done %s2109, %s2177
    %s2179 = sshll.u32 %s2110, 4
    %2180 = dma.done %s2109, %s2179
    %s2181 = sshll.u32 %s2110, 4
    %2182 = dma.done %s2109, %s2181
    %s2183 = sshll.u32 %s2110, 4
    %2184 = dma.done %s2109, %s2183
    %s2185 = sshll.u32 %s2110, 4
    %2186 = dma.done %s2109, %s2185
    %s2187 = sshll.u32 %s2110, 4
    %2188 = dma.done %s2109, %s2187
    %s2189 = sshll.u32 %s2110, 4
    %2190 = dma.done %s2109, %s2189
    %s2191 = sshll.u32 %s2110, 4
    %2192 = dma.done %s2109, %s2191
    %s2193 = sshll.u32 %s2110, 4
    %2194 = dma.done %s2109, %s2193
    %s2195 = sshll.u32 %s2110, 4
    %2196 = dma.done %s2109, %s2195
    %s2197 = sshll.u32 %s2110, 4
    %2198 = dma.done %s2109, %s2197
    %s2199 = sshll.u32 %s2110, 4
    %2200 = dma.done %s2109, %s2199
    %s2201 = sshll.u32 %s2110, 4
    %2202 = dma.done %s2109, %s2201
    %s2203 = sshll.u32 %s2110, 4
    %2204 = dma.done %s2109, %s2203
    %s2205 = sshll.u32 %s2110, 4
    %2206 = dma.done %s2109, %s2205
    %s2207 = sshll.u32 %s2110, 4
    %2208 = dma.done %s2109, %s2207
    %s2209 = sshll.u32 %s2110, 4
    %2210 = dma.done %s2109, %s2209
    %s2211 = sshll.u32 %s2110, 4
    %2212 = dma.done %s2109, %s2211
    %s2213 = sshll.u32 %s2110, 4
    %2214 = dma.done %s2109, %s2213
    %s2215 = sshll.u32 %s2110, 4
    %2216 = dma.done %s2109, %s2215
    %s2217 = sshll.u32 %s2110, 4
    %2218 = dma.done %s2109, %s2217
    %s2219 = sshll.u32 %s2110, 4
    %2220 = dma.done %s2109, %s2219
    %s2221 = sshll.u32 %s2110, 4
    %2222 = dma.done %s2109, %s2221
    %s2223 = sshll.u32 %s2110, 4
    %2224 = dma.done %s2109, %s2223
    %s2225 = sshll.u32 %s2110, 4
    %2226 = dma.done %s2109, %s2225
    %s2227 = sshll.u32 %s2110, 4
    %2228 = dma.done %s2109, %s2227
    %s2229 = sshll.u32 %s2110, 4
    %2230 = dma.done %s2109, %s2229
    %s2231 = sshll.u32 %s2110, 4
    %2232 = dma.done %s2109, %s2231
    %s2233 = sshll.u32 %s2110, 4
    %2234 = dma.done %s2109, %s2233
    %s2235 = sshll.u32 %s2110, 4
    %2236 = dma.done %s2109, %s2235
    %s2237 = sshll.u32 %s2110, 4
    %2238 = dma.done %s2109, %s2237
    %s2239 = smul.u32 %s2108, 64
    %s2240 = scalar_lea.vmem [#allocation2], %s2239
    %v2241 = vld [vmem:[%s2240] sm:$0xff]
    %v2242 = vld [vmem:[%s2240 + $0x8] sm:$0xff]
    %v2243 = vld [vmem:[%s2240 + $0x10] sm:$0xff]
    %v2244 = vld [vmem:[%s2240 + $0x18] sm:$0xff]
    %v2245 = vld [vmem:[%s2240 + $0x20] sm:$0xff]
    %v2246 = vld [vmem:[%s2240 + $0x28] sm:$0xff]
    %v2247 = vld [vmem:[%s2240 + $0x30] sm:$0xff]
    %v2248 = vld [vmem:[%s2240 + $0x38] sm:$0xff]
    %v2249 = vld [vmem:[#allocation6] sm:$0xff]
    %v2250 = vld [vmem:[#allocation6 + $0x8] sm:$0xff]
    %v2251 = vld [vmem:[#allocation6 + $0x10] sm:$0xff]
    %v2252 = vld [vmem:[#allocation6 + $0x18] sm:$0xff]
    %v2253 = vld [vmem:[#allocation6 + $0x20] sm:$0xff]
    %v2254 = vld [vmem:[#allocation6 + $0x28] sm:$0xff]
    %v2255 = vld [vmem:[#allocation6 + $0x30] sm:$0xff]
    %v2256 = vld [vmem:[#allocation6 + $0x38] sm:$0xff]
    %v2257 = vld [vmem:[#allocation6 + $0x40] sm:$0xff]
    %v2258 = vld [vmem:[#allocation6 + $0x48] sm:$0xff]
    %v2259 = vld [vmem:[#allocation6 + $0x50] sm:$0xff]
    %v2260 = vld [vmem:[#allocation6 + $0x58] sm:$0xff]
    %v2261 = vld [vmem:[#allocation6 + $0x60] sm:$0xff]
    %v2262 = vld [vmem:[#allocation6 + $0x68] sm:$0xff]
    %v2263 = vld [vmem:[#allocation6 + $0x70] sm:$0xff]
    %v2264 = vld [vmem:[#allocation6 + $0x78] sm:$0xff]
    %v2265 = vld [vmem:[#allocation6 + $0x80] sm:$0xff]
    %v2266 = vld [vmem:[#allocation6 + $0x88] sm:$0xff]
    %v2267 = vld [vmem:[#allocation6 + $0x90] sm:$0xff]
    %v2268 = vld [vmem:[#allocation6 + $0x98] sm:$0xff]
    %v2269 = vld [vmem:[#allocation6 + $0xa0] sm:$0xff]
    %v2270 = vld [vmem:[#allocation6 + $0xa8] sm:$0xff]
    %v2271 = vld [vmem:[#allocation6 + $0xb0] sm:$0xff]
    %v2272 = vld [vmem:[#allocation6 + $0xb8] sm:$0xff]
    %v2273 = vld [vmem:[#allocation6 + $0xc0] sm:$0xff]
    %v2274 = vld [vmem:[#allocation6 + $0xc8] sm:$0xff]
    %v2275 = vld [vmem:[#allocation6 + $0xd0] sm:$0xff]
    %v2276 = vld [vmem:[#allocation6 + $0xd8] sm:$0xff]
    %v2277 = vld [vmem:[#allocation6 + $0xe0] sm:$0xff]
    %v2278 = vld [vmem:[#allocation6 + $0xe8] sm:$0xff]
    %v2279 = vld [vmem:[#allocation6 + $0xf0] sm:$0xff]
    %v2280 = vld [vmem:[#allocation6 + $0xf8] sm:$0xff]
    %v2281 = vld [vmem:[#allocation6 + $0x100] sm:$0xff]
    %v2282 = vld [vmem:[#allocation6 + $0x108] sm:$0xff]
    %v2283 = vld [vmem:[#allocation6 + $0x110] sm:$0xff]
    %v2284 = vld [vmem:[#allocation6 + $0x118] sm:$0xff]
    %v2285 = vld [vmem:[#allocation6 + $0x120] sm:$0xff]
    %v2286 = vld [vmem:[#allocation6 + $0x128] sm:$0xff]
    %v2287 = vld [vmem:[#allocation6 + $0x130] sm:$0xff]
    %v2288 = vld [vmem:[#allocation6 + $0x138] sm:$0xff]
    %v2289 = vld [vmem:[#allocation6 + $0x140] sm:$0xff]
    %v2290 = vld [vmem:[#allocation6 + $0x148] sm:$0xff]
    %v2291 = vld [vmem:[#allocation6 + $0x150] sm:$0xff]
    %v2292 = vld [vmem:[#allocation6 + $0x158] sm:$0xff]
    %v2293 = vld [vmem:[#allocation6 + $0x160] sm:$0xff]
    %v2294 = vld [vmem:[#allocation6 + $0x168] sm:$0xff]
    %v2295 = vld [vmem:[#allocation6 + $0x170] sm:$0xff]
    %v2296 = vld [vmem:[#allocation6 + $0x178] sm:$0xff]
    %v2297 = vld [vmem:[#allocation6 + $0x180] sm:$0xff]
    %v2298 = vld [vmem:[#allocation6 + $0x188] sm:$0xff]
    %v2299 = vld [vmem:[#allocation6 + $0x190] sm:$0xff]
    %v2300 = vld [vmem:[#allocation6 + $0x198] sm:$0xff]
    %v2301 = vld [vmem:[#allocation6 + $0x1a0] sm:$0xff]
    %v2302 = vld [vmem:[#allocation6 + $0x1a8] sm:$0xff]
    %v2303 = vld [vmem:[#allocation6 + $0x1b0] sm:$0xff]
    %v2304 = vld [vmem:[#allocation6 + $0x1b8] sm:$0xff]
    %v2305 = vld [vmem:[#allocation6 + $0x1c0] sm:$0xff]
    %v2306 = vld [vmem:[#allocation6 + $0x1c8] sm:$0xff]
    %v2307 = vld [vmem:[#allocation6 + $0x1d0] sm:$0xff]
    %v2308 = vld [vmem:[#allocation6 + $0x1d8] sm:$0xff]
    %v2309 = vld [vmem:[#allocation6 + $0x1e0] sm:$0xff]
    %v2310 = vld [vmem:[#allocation6 + $0x1e8] sm:$0xff]
    %v2311 = vld [vmem:[#allocation6 + $0x1f0] sm:$0xff]
    %v2312 = vld [vmem:[#allocation6 + $0x1f8] sm:$0xff]
    %v2313 = vld [vmem:[%s3] sm:$0xf]
    %v2315 = vlaneseq
    %v2316 = vshrl.u32 %v2315, 7
    %v2317 = vsub.s32 0, %v2316
    %v2318 = vrot.slane %v2313, %v2317
    %v2319 = vlaneseq
    %v2320 = vshrl.u32 %v2319, 7
    %v2321 = vsub.s32 1, %v2320
    %v2322 = vrot.slane %v2313, %v2321
    %v2323 = vlaneseq
    %v2324 = vshrl.u32 %v2323, 7
    %v2325 = vsub.s32 2, %v2324
    %v2326 = vrot.slane %v2313, %v2325
    %v2327 = vlaneseq
    %v2328 = vshrl.u32 %v2327, 7
    %v2329 = vsub.s32 3, %v2328
    %v2330 = vrot.slane %v2313, %v2329
    %2335 = vmatprep.subr.mxu0 %v2250
    %2336 = vmatpush1.msra.mxu0 %v2249
    %2337 = vmatprep.subr.mxu0 %v2254
    %2338 = vmatpush1.msra.mxu0 %v2253
    %2339 = vmatprep.subr.mxu0 %v2258
    %2340 = vmatpush1.msra.mxu0 %v2257
    %2341 = vmatprep.subr.mxu0 %v2262
    %2342 = vmatpush1.msra.mxu0 %v2261
    %2343 = vmatprep.subr.mxu0 %v2266
    %2344 = vmatpush1.msra.mxu0 %v2265
    %2345 = vmatprep.subr.mxu0 %v2270
    %2346 = vmatpush1.msra.mxu0 %v2269
    %2347 = vmatprep.subr.mxu0 %v2274
    %2348 = vmatpush1.msra.mxu0 %v2273
    %2349 = vmatprep.subr.mxu0 %v2278
    %2350 = vmatpush1.msra.mxu0 %v2277
    %2351 = vmatprep.subr.mxu0 %v2282
    %2352 = vmatpush1.msra.mxu0 %v2281
    %2353 = vmatprep.subr.mxu0 %v2286
    %2354 = vmatpush1.msra.mxu0 %v2285
    %2355 = vmatprep.subr.mxu0 %v2290
    %2356 = vmatpush1.msra.mxu0 %v2289
    %2357 = vmatprep.subr.mxu0 %v2294
    %2358 = vmatpush1.msra.mxu0 %v2293
    %2359 = vmatprep.subr.mxu0 %v2298
    %2360 = vmatpush1.msra.mxu0 %v2297
    %2361 = vmatprep.subr.mxu0 %v2302
    %2362 = vmatpush1.msra.mxu0 %v2301
    %2363 = vmatprep.subr.mxu0 %v2306
    %2364 = vmatpush1.msra.mxu0 %v2305
    %2365 = vmatprep.subr.mxu0 %v2310
    %2366 = vmatpush1.msra.mxu0 %v2309
    %2367 = vmatprep.subr.mxu0 0.0
    %2368 = vmatpush1.msra.mxu0 0.0
    %2369 = vmatprep.subr.mxu0 0.0
    %2370 = vmatpush1.msra.mxu0 0.0
    %2371 = vmatprep.subr.mxu0 0.0
    %2372 = vmatpush1.msra.mxu0 0.0
    %2373 = vmatprep.subr.mxu0 0.0
    %2374 = vmatpush1.msra.mxu0 0.0
    %2375 = vmatprep.subr.mxu0 0.0
    %2376 = vmatpush1.msra.mxu0 0.0
    %2377 = vmatprep.subr.mxu0 0.0
    %2378 = vmatpush1.msra.mxu0 0.0
    %2379 = vmatprep.subr.mxu0 0.0
    %2380 = vmatpush1.msra.mxu0 0.0
    %2381 = vmatprep.subr.mxu0 0.0
    %2382 = vmatpush1.msra.mxu0 0.0
    %2383 = vmatprep.subr.mxu0 0.0
    %2384 = vmatpush1.msra.mxu0 0.0
    %2385 = vmatprep.subr.mxu0 0.0
    %2386 = vmatpush1.msra.mxu0 0.0
    %2387 = vmatprep.subr.mxu0 0.0
    %2388 = vmatpush1.msra.mxu0 0.0
    %2389 = vmatprep.subr.mxu0 0.0
    %2390 = vmatpush1.msra.mxu0 0.0
    %2391 = vmatprep.subr.mxu0 0.0
    %2392 = vmatpush1.msra.mxu0 0.0
    %2393 = vmatprep.subr.mxu0 0.0
    %2394 = vmatpush1.msra.mxu0 0.0
    %2395 = vmatprep.subr.mxu0 0.0
    %2396 = vmatpush1.msra.mxu0 0.0
    %2397 = vmatprep.subr.mxu0 0.0
    %2398 = vmatpush1.msra.mxu0 0.0
    %2399 = vmatprep.mubr.f32.mxu0 0.0
    %2400 = vmatmul.mubr.f32.gmra.mrb[0].mxu0 %v2241
    %v2401 = vpop.f32.mrb[0].mxu0
    %v2402 = vadd.f32 %v2318, %v2401
    %v2403 = vpop.f32.mrb[0].mxu0
    %v2404 = vadd.f32 %v2322, %v2403
    %2405 = vmatprep.mubr.f32.mxu0 0.0
    %2406 = vmatmul.mubr.f32.gmra.mrb[0].mxu0 %v2242
    %v2407 = vpop.f32.mrb[0].mxu0
    %v2408 = vadd.f32 %v2318, %v2407
    %v2409 = vpop.f32.mrb[0].mxu0
    %v2410 = vadd.f32 %v2322, %v2409
    %2411 = vmatprep.mubr.f32.mxu0 0.0
    %2412 = vmatmul.mubr.f32.gmra.mrb[0].mxu0 %v2243
    %v2413 = vpop.f32.mrb[0].mxu0
    %v2414 = vadd.f32 %v2318, %v2413
    %v2415 = vpop.f32.mrb[0].mxu0
    %v2416 = vadd.f32 %v2322, %v2415
    %2417 = vmatprep.mubr.f32.mxu0 0.0
    %2418 = vmatmul.mubr.f32.gmra.mrb[0].mxu0 %v2244
    %v2419 = vpop.f32.mrb[0].mxu0
    %v2420 = vadd.f32 %v2318, %v2419
    %v2421 = vpop.f32.mrb[0].mxu0
    %v2422 = vadd.f32 %v2322, %v2421
    %2423 = vmatprep.mubr.f32.mxu0 0.0
    %2424 = vmatmul.mubr.f32.gmra.mrb[0].mxu0 %v2245
    %v2425 = vpop.f32.mrb[0].mxu0
    %v2426 = vadd.f32 %v2318, %v2425
    %v2427 = vpop.f32.mrb[0].mxu0
    %v2428 = vadd.f32 %v2322, %v2427
    %2429 = vmatprep.mubr.f32.mxu0 0.0
    %2430 = vmatmul.mubr.f32.gmra.mrb[0].mxu0 %v2246
    %v2431 = vpop.f32.mrb[0].mxu0
    %v2432 = vadd.f32 %v2318, %v2431
    %v2433 = vpop.f32.mrb[0].mxu0
    %v2434 = vadd.f32 %v2322, %v2433
    %2435 = vmatprep.mubr.f32.mxu0 0.0
    %2436 = vmatmul.mubr.f32.gmra.mrb[0].mxu0 %v2247
    %v2437 = vpop.f32.mrb[0].mxu0
    %v2438 = vadd.f32 %v2318, %v2437
    %v2439 = vpop.f32.mrb[0].mxu0
    %v2440 = vadd.f32 %v2322, %v2439
    %2441 = vmatprep.mubr.f32.mxu0 0.0
    %2442 = vmatmul.mubr.f32.gmra.mrb[0].mxu0 %v2248
    %v2443 = vpop.f32.mrb[0].mxu0
    %v2444 = vadd.f32 %v2318, %v2443
    %v2445 = vpop.f32.mrb[0].mxu0
    %v2446 = vadd.f32 %v2322, %v2445
    %2447 = vdwg.mxu0
    %2448 = vmatprep.subr.mxu0 %v2252
    %2449 = vmatpush1.msra.mxu0 %v2251
    %2450 = vmatprep.subr.mxu0 %v2256
    %2451 = vmatpush1.msra.mxu0 %v2255
    %2452 = vmatprep.subr.mxu0 %v2260
    %2453 = vmatpush1.msra.mxu0 %v2259
    %2454 = vmatprep.subr.mxu0 %v2264
    %2455 = vmatpush1.msra.mxu0 %v2263
    %2456 = vmatprep.subr.mxu0 %v2268
    %2457 = vmatpush1.msra.mxu0 %v2267
    %2458 = vmatprep.subr.mxu0 %v2272
    %2459 = vmatpush1.msra.mxu0 %v2271
    %2460 = vmatprep.subr.mxu0 %v2276
    %2461 = vmatpush1.msra.mxu0 %v2275
    %2462 = vmatprep.subr.mxu0 %v2280
    %2463 = vmatpush1.msra.mxu0 %v2279
    %2464 = vmatprep.subr.mxu0 %v2284
    %2465 = vmatpush1.msra.mxu0 %v2283
    %2466 = vmatprep.subr.mxu0 %v2288
    %2467 = vmatpush1.msra.mxu0 %v2287
    %2468 = vmatprep.subr.mxu0 %v2292
    %2469 = vmatpush1.msra.mxu0 %v2291
    %2470 = vmatprep.subr.mxu0 %v2296
    %2471 = vmatpush1.msra.mxu0 %v2295
    %2472 = vmatprep.subr.mxu0 %v2300
    %2473 = vmatpush1.msra.mxu0 %v2299
    %2474 = vmatprep.subr.mxu0 %v2304
    %2475 = vmatpush1.msra.mxu0 %v2303
    %2476 = vmatprep.subr.mxu0 %v2308
    %2477 = vmatpush1.msra.mxu0 %v2307
    %2478 = vmatprep.subr.mxu0 %v2312
    %2479 = vmatpush1.msra.mxu0 %v2311
    %2480 = vmatprep.subr.mxu0 0.0
    %2481 = vmatpush1.msra.mxu0 0.0
    %2482 = vmatprep.subr.mxu0 0.0
    %2483 = vmatpush1.msra.mxu0 0.0
    %2484 = vmatprep.subr.mxu0 0.0
    %2485 = vmatpush1.msra.mxu0 0.0
    %2486 = vmatprep.subr.mxu0 0.0
    %2487 = vmatpush1.msra.mxu0 0.0
    %2488 = vmatprep.subr.mxu0 0.0
    %2489 = vmatpush1.msra.mxu0 0.0
    %2490 = vmatprep.subr.mxu0 0.0
    %2491 = vmatpush1.msra.mxu0 0.0
    %2492 = vmatprep.subr.mxu0 0.0
    %2493 = vmatpush1.msra.mxu0 0.0
    %2494 = vmatprep.subr.mxu0 0.0
    %2495 = vmatpush1.msra.mxu0 0.0
    %2496 = vmatprep.subr.mxu0 0.0
    %2497 = vmatpush1.msra.mxu0 0.0
    %2498 = vmatprep.subr.mxu0 0.0
    %2499 = vmatpush1.msra.mxu0 0.0
    %2500 = vmatprep.subr.mxu0 0.0
    %2501 = vmatpush1.msra.mxu0 0.0
    %2502 = vmatprep.subr.mxu0 0.0
    %2503 = vmatpush1.msra.mxu0 0.0
    %2504 = vmatprep.subr.mxu0 0.0
    %2505 = vmatpush1.msra.mxu0 0.0
    %2506 = vmatprep.subr.mxu0 0.0
    %2507 = vmatpush1.msra.mxu0 0.0
    %2508 = vmatprep.subr.mxu0 0.0
    %2509 = vmatpush1.msra.mxu0 0.0
    %2510 = vmatprep.subr.mxu0 0.0
    %2511 = vmatpush1.msra.mxu0 0.0
    %2512 = vmatprep.mubr.f32.mxu0 0.0
    %2513 = vmatmul.mubr.f32.gmra.mrb[0].mxu0 %v2241
    %v2514 = vpop.f32.mrb[0].mxu0
    %v2515 = vadd.f32 %v2326, %v2514
    %v2516 = vpop.f32.mrb[0].mxu0
    %v2517 = vadd.f32 %v2330, %v2516
    %2518 = vmatprep.mubr.f32.mxu0 0.0
    %2519 = vmatmul.mubr.f32.gmra.mrb[0].mxu0 %v2242
    %v2520 = vpop.f32.mrb[0].mxu0
    %v2521 = vadd.f32 %v2326, %v2520
    %v2522 = vpop.f32.mrb[0].mxu0
    %v2523 = vadd.f32 %v2330, %v2522
    %2524 = vmatprep.mubr.f32.mxu0 0.0
    %2525 = vmatmul.mubr.f32.gmra.mrb[0].mxu0 %v2243
    %v2526 = vpop.f32.mrb[0].mxu0
    %v2527 = vadd.f32 %v2326, %v2526
    %v2528 = vpop.f32.mrb[0].mxu0
    %v2529 = vadd.f32 %v2330, %v2528
    %2530 = vmatprep.mubr.f32.mxu0 0.0
    %2531 = vmatmul.mubr.f32.gmra.mrb[0].mxu0 %v2244
    %v2532 = vpop.f32.mrb[0].mxu0
    %v2533 = vadd.f32 %v2326, %v2532
    %v2534 = vpop.f32.mrb[0].mxu0
    %v2535 = vadd.f32 %v2330, %v2534
    %2536 = vmatprep.mubr.f32.mxu0 0.0
    %2537 = vmatmul.mubr.f32.gmra.mrb[0].mxu0 %v2245
    %v2538 = vpop.f32.mrb[0].mxu0
    %v2539 = vadd.f32 %v2326, %v2538
    %v2540 = vpop.f32.mrb[0].mxu0
    %v2541 = vadd.f32 %v2330, %v2540
    %2542 = vmatprep.mubr.f32.mxu0 0.0
    %2543 = vmatmul.mubr.f32.gmra.mrb[0].mxu0 %v2246
    %v2544 = vpop.f32.mrb[0].mxu0
    %v2545 = vadd.f32 %v2326, %v2544
    %v2546 = vpop.f32.mrb[0].mxu0
    %v2547 = vadd.f32 %v2330, %v2546
    %2548 = vmatprep.mubr.f32.mxu0 0.0
    %2549 = vmatmul.mubr.f32.gmra.mrb[0].mxu0 %v2247
    %v2550 = vpop.f32.mrb[0].mxu0
    %v2551 = vadd.f32 %v2326, %v2550
    %v2552 = vpop.f32.mrb[0].mxu0
    %v2553 = vadd.f32 %v2330, %v2552
    %2554 = vmatprep.mubr.f32.mxu0 0.0
    %2555 = vmatmul.mubr.f32.gmra.mrb[0].mxu0 %v2248
    %v2556 = vpop.f32.mrb[0].mxu0
    %v2557 = vadd.f32 %v2326, %v2556
    %v2558 = vpop.f32.mrb[0].mxu0
    %v2559 = vadd.f32 %v2330, %v2558
    %2560 = vdwg.mxu0
    %2561 = vst [vmem:[#allocation9] sm:$0xff] %v2402
    %2562 = vst [vmem:[#allocation9 + $0x8] sm:$0xff] %v2404
    %2563 = vst [vmem:[#allocation9 + $0x10] sm:$0xff] %v2515
    %2564 = vst [vmem:[#allocation9 + $0x18] sm:$0xff] %v2517
    %2565 = vst [vmem:[#allocation9 + $0x20] sm:$0xff] %v2408
    %2566 = vst [vmem:[#allocation9 + $0x28] sm:$0xff] %v2410
    %2567 = vst [vmem:[#allocation9 + $0x30] sm:$0xff] %v2521
    %2568 = vst [vmem:[#allocation9 + $0x38] sm:$0xff] %v2523
    %2569 = vst [vmem:[#allocation9 + $0x40] sm:$0xff] %v2414
    %2570 = vst [vmem:[#allocation9 + $0x48] sm:$0xff] %v2416
    %2571 = vst [vmem:[#allocation9 + $0x50] sm:$0xff] %v2527
    %2572 = vst [vmem:[#allocation9 + $0x58] sm:$0xff] %v2529
    %2573 = vst [vmem:[#allocation9 + $0x60] sm:$0xff] %v2420
    %2574 = vst [vmem:[#allocation9 + $0x68] sm:$0xff] %v2422
    %2575 = vst [vmem:[#allocation9 + $0x70] sm:$0xff] %v2533
    %2576 = vst [vmem:[#allocation9 + $0x78] sm:$0xff] %v2535
    %2577 = vst [vmem:[#allocation9 + $0x80] sm:$0xff] %v2426
    %2578 = vst [vmem:[#allocation9 + $0x88] sm:$0xff] %v2428
    %2579 = vst [vmem:[#allocation9 + $0x90] sm:$0xff] %v2539
    %2580 = vst [vmem:[#allocation9 + $0x98] sm:$0xff] %v2541
    %2581 = vst [vmem:[#allocation9 + $0xa0] sm:$0xff] %v2432
    %2582 = vst [vmem:[#allocation9 + $0xa8] sm:$0xff] %v2434
    %2583 = vst [vmem:[#allocation9 + $0xb0] sm:$0xff] %v2545
    %2584 = vst [vmem:[#allocation9 + $0xb8] sm:$0xff] %v2547
    %2585 = vst [vmem:[#allocation9 + $0xc0] sm:$0xff] %v2438
    %2586 = vst [vmem:[#allocation9 + $0xc8] sm:$0xff] %v2440
    %2587 = vst [vmem:[#allocation9 + $0xd0] sm:$0xff] %v2551
    %2588 = vst [vmem:[#allocation9 + $0xd8] sm:$0xff] %v2553
    %2589 = vst [vmem:[#allocation9 + $0xe0] sm:$0xff] %v2444
    %2590 = vst [vmem:[#allocation9 + $0xe8] sm:$0xff] %v2446
    %2591 = vst [vmem:[#allocation9 + $0xf0] sm:$0xff] %v2557
    %2592 = vst [vmem:[#allocation9 + $0xf8] sm:$0xff] %v2559
    // Predicated region
    $region534: #{tpu_custom_call.1} parent=1 // pred_check
      _
    $region535: #{tpu_custom_call.1} parent=1 // pred_check_branch
      %2594 = sbr.rel (0) target = $region537
    $region536: #{tpu_custom_call.1} parent=1 // pred_region
      %s2596 = ssub.s32 4096, 4096
      %2597 = vsyncadd [#allocation8], %s2596
      %s2598 = sshll.u32 [#allocation9], 4
      %s2599 = int_to_ptr.vmem [resolvable:$true] %s2598
      %2604 = dma.vmem_to_hbm [thread:$0]  %s2599, 4096, %s4, [#allocation8], 512, 512, 32
    $region537: #{tpu_custom_call.1} parent=1 // pred_fallthru
      _
    // Predicated region
    $region538: #{tpu_custom_call.1} parent=1 // pred_check
      _
    $region539: #{tpu_custom_call.1} parent=1 // pred_check_branch
      %2606 = sbr.rel (0) target = $region541
    $region540: #{tpu_custom_call.1} parent=1 // pred_region
      %2607 = dma.done [#allocation8], 4096
    $region541: #{tpu_custom_call.1} parent=1 // pred_fallthru
      _
    %2608 = vsyncpa [#allocation7], 1
    %2609 = vsyncpa [#allocation8], 1
  %2610 = vsyncmov [#allocation3]
  %s2611 = vpop.sfrf %2610
  %p2612 = scmp.eq.s32.totalorder %s2611, 0
  %p2613 = pneg %p2612
  %2615 = shalt.err (%p2613)
  %s2616 = scalar_lea.sflag [#allocation3], 1
  %2617 = vsyncmov %s2616
  %s2618 = vpop.sfrf %2617
  %p2619 = scmp.eq.s32.totalorder %s2618, 0
  %p2620 = pneg %p2619
  %2622 = shalt.err (%p2620)

</llo_original>
